<compile_context>
chip_gen: v5e
topology: v5e:2x2
jax: 0.10.0
libtpu: 0.0.40
codegen_flags: <defaults>
</compile_context>

<pallas_src>
import jax
import jax.numpy as jnp
from jax.experimental import pallas as pl
from jax.experimental.pallas import tpu as pltpu

_OUT_PAD = 128  # lane-dense padding for the 2-way classifier output


# --------------------------------------------------------------------------
# Fused kernel: conv stacks + image proj + fusion + attention + pooling + MLP
# (one batch element per grid step)
# --------------------------------------------------------------------------

def _fused_kernel(drug_ref, prot_ref, feat_ref,
                  dw1, db1, dw2, db2, dw3, db3,
                  pw1, pb1, pw2, pb2, pw3, pb3,
                  wip, bip, wf, bf_, wd, bd, wp, bp, wa, ba,
                  w1, b1, w2, b2, w3, b3, wo, bo,
                  o_ref):
    f32, bf16 = jnp.float32, jnp.bfloat16

    def conv_relu(x, w_ref, b_ref):
        # x: (L_in, C_in) f32; w_ref: (K*C_in, C_out) f32 in im2col layout.
        # Shift-and-accumulate: K small matmuls, no im2col concat buffer.
        L_in, C_in = x.shape
        K = w_ref.shape[0] // C_in
        L_out = L_in - K + 1
        s = jnp.dot(x[0:L_out, :], w_ref[0:C_in, :], preferred_element_type=f32)
        for k in range(1, K):
            s = s + jnp.dot(x[k:k + L_out, :],
                            w_ref[k * C_in:(k + 1) * C_in, :],
                            preferred_element_type=f32)
        return jnp.maximum(s + b_ref[...], 0.0)                       # (L_out, C_out)

    def dense(x, w_ref, b_ref):          # f32 weights, f32 compute
        return jnp.dot(x, w_ref[...], preferred_element_type=f32) + b_ref[...]

    def dense_bf16(x, w_ref, b_ref):     # bf16 weights, f32 accumulation
        return jnp.dot(x.astype(bf16), w_ref[...],
                       preferred_element_type=f32) + b_ref[...]

    def lrelu(v):                         # PyTorch default negative_slope = 0.01
        return jnp.where(v >= 0.0, v, 0.01 * v)

    # ---- Conv1d + ReLU stacks (drug / protein), f32 ----
    drugC = conv_relu(conv_relu(conv_relu(drug_ref[...], dw1, db1), dw2, db2), dw3, db3)
    protC = conv_relu(conv_relu(conv_relu(prot_ref[...], pw1, pb1), pw2, pb2), pw3, pb3)
    Ldc, F = drugC.shape
    Lp = protC.shape[0]
    Ld = Ldc + 1                               # conv positions + appended image "position"

    # ---- image projection + fusion + attention projections ----
    img = dense(feat_ref[...], wip, bip)       # (1, F)
    fused_drug = dense(drugC, wf, bf_)         # (Ldc, F)
    fused_img = dense(img, wf, bf_)            # (1, F)
    datt_drug = dense(fused_drug, wd, bd)      # (Ldc, F)
    datt_img = dense(fused_img, wd, bd)        # (1, F)
    patt = dense(protC, wp, bp)                # (Lp, F)

    # ---- pairwise ReLU attention.  The attention_layer matmul is hoisted out of
    # the (Ld, Lp, F) pairwise space via linearity of the mean:
    #   mean_j(relu(d_i + p_j) @ Wa + ba) == (mean_j relu(d_i + p_j)) @ Wa + ba.
    t = jnp.maximum(datt_drug[:, None, :] + patt[None, :, :], 0.0)    # (Ldc, Lp, F)
    Sd = jnp.sum(t, axis=1)                                           # (Ldc, F)
    # image row is part of the drug (Ld) axis and contributes to the protein-side mean
    Sp = jnp.sum(t, axis=0) + jnp.maximum(datt_img + patt, 0.0)       # (Lp, F)
    comp_pre = dense(Sd * (1.0 / Lp), wa, ba)                         # (Ldc, F)
    prot_pre = dense(Sp * (1.0 / Ld), wa, ba)                         # (Lp, F)
    comp_gate = 1.0 / (1.0 + jnp.exp(-comp_pre))                      # exact sigmoid
    prot_gate = 1.0 / (1.0 + jnp.exp(-prot_pre))

    # ---- gating (x*0.5 + x*g == x*(0.5+g)) and max-pooling.
    # Drug MaxPool1d(kernel=Ldc) over length Ldc+1 only covers the conv rows, so the
    # appended image column is dropped (exactly matches the PyTorch forward); its
    # gate would not affect the pooled max and is therefore skipped.
    drug_pool = jnp.max(fused_drug * (0.5 + comp_gate), axis=0, keepdims=True)   # (1, F)
    prot_pool = jnp.max(protC * (0.5 + prot_gate), axis=0, keepdims=True)        # (1, F)

    # ---- MLP head (bf16 weights, f32 accumulation).  fc1 is applied split over the
    # [drug_pool ; prot_pool] halves, avoiding a lane concat.
    h = lrelu(jnp.dot(drug_pool.astype(bf16), w1[0:F, :], preferred_element_type=f32)
              + jnp.dot(prot_pool.astype(bf16), w1[F:2 * F, :], preferred_element_type=f32)
              + b1[...])
    h = lrelu(dense_bf16(h, w2, b2))
    h = lrelu(dense_bf16(h, w3, b3))
    # lane-dense store: columns >= 2 of wo/bo are zero padding
    o_ref[...] = dense_bf16(h, wo, bo)                                # (1, 128)


def _const_spec(shape):
    """Full-array block with a constant index map (fetched once across the grid)."""
    nd = len(shape)
    return pl.BlockSpec(shape, lambda i, _n=nd: (0,) * _n)


def fused_forward(drugembed, protembed, feat, params):
    B, Ld_in, dim = drugembed.shape
    Lp_in = protembed.shape[1]
    (dw1, db1), (dw2, db2), (dw3, db3) = params["drug_cnn"]
    (pw1, pb1), (pw2, pb2), (pw3, pb3) = params["protein_cnn"]
    wip, bip = params["image_projection"]
    wf, bf_ = params["fusion"]
    wd, bd = params["drug_attention"]
    wp, bp = params["protein_attention"]
    wa, ba = params["attention"]
    w1, b1 = params["fc1"]
    w2, b2 = params["fc2"]
    w3, b3 = params["fc3"]
    wo, bo = params["out"]

    n_cls = wo.shape[1]
    wo_p = jnp.pad(wo, ((0, 0), (0, _OUT_PAD - n_cls)))   # pad classifier to 128 lanes
    bo_p = jnp.pad(bo, ((0, 0), (0, _OUT_PAD - n_cls)))
    feat3 = feat.reshape(B, 1, feat.shape[1])

    wargs = (dw1, db1, dw2, db2, dw3, db3,
             pw1, pb1, pw2, pb2, pw3, pb3,
             wip, bip, wf, bf_, wd, bd, wp, bp, wa, ba,
             w1, b1, w2, b2, w3, b3, wo_p, bo_p)

    in_specs = [
        pl.BlockSpec((None, Ld_in, dim), lambda i: (i, 0, 0)),
        pl.BlockSpec((None, Lp_in, dim), lambda i: (i, 0, 0)),
        pl.BlockSpec((None, 1, feat.shape[1]), lambda i: (i, 0, 0)),
    ] + [_const_spec(a.shape) for a in wargs]

    out = pl.pallas_call(
        _fused_kernel,
        out_shape=jax.ShapeDtypeStruct((B, 1, _OUT_PAD), jnp.float32),
        grid=(B,),
        in_specs=in_specs,
        out_specs=pl.BlockSpec((None, 1, _OUT_PAD), lambda i: (i, 0, 0)),
        compiler_params=pltpu.CompilerParams(
            dimension_semantics=("parallel",),          # batch split across TCs on v7x
            vmem_limit_bytes=32 * 1024 * 1024),
    )(drugembed, protembed, feat3, *wargs)
    return out.reshape(B, _OUT_PAD)[:, :n_cls]


# --------------------------------------------------------------------------
# Parameters (deterministic, synthetic)
# --------------------------------------------------------------------------

def init_params(key, cfg):
    dim = cfg["char_dim"]
    conv = cfg["conv"]
    F = conv * 4
    kit = iter(jax.random.split(key, 64))

    def lin(fin, fout, dtype=jnp.float32):
        w = (jax.random.normal(next(kit), (fin, fout), jnp.float32)
             / jnp.sqrt(fin)).astype(dtype)
        b = jax.random.normal(next(kit), (1, fout), jnp.float32) * 0.01
        return w, b

    def convp(cin, cout, K):
        # Conv1d weight pre-flattened to im2col layout [K*C_in, C_out], f32.
        w = jax.random.normal(next(kit), (K * cin, cout), jnp.float32) / jnp.sqrt(cin * K)
        b = jax.random.normal(next(kit), (1, cout), jnp.float32) * 0.01
        return w, b

    params = {}
    # Embeddings (padding_idx=0 row zeroed, as in nn.Embedding)
    params["drug_embed"] = (jax.random.normal(next(kit), (65, dim), jnp.float32)
                            * 0.1).at[0].set(0.0)
    params["protein_embed"] = (jax.random.normal(next(kit), (26, dim), jnp.float32)
                               * 0.1).at[0].set(0.0)
    dk, pk = cfg["drug_kernel"], cfg["protein_kernel"]
    params["drug_cnn"] = [convp(dim, conv, dk[0]),
                          convp(conv, conv * 2, dk[1]),
                          convp(conv * 2, conv * 4, dk[2])]
    params["protein_cnn"] = [convp(dim, conv, pk[0]),
                             convp(conv, conv * 2, pk[1]),
                             convp(conv * 2, conv * 4, pk[2])]
    params["image_backbone"] = lin(3, 512)        # stand-in for ResNet-18 trunk
    params["image_projection"] = lin(512, F)
    params["fusion"] = lin(F, F)
    params["attention"] = lin(F, F)
    params["protein_attention"] = lin(F, F)
    params["drug_attention"] = lin(F, F)
    # MLP head weights in bf16 (dominant HBM/VMEM bytes); biases stay f32.
    params["fc1"] = lin(F * 2, 1024, jnp.bfloat16)
    params["fc2"] = lin(1024, 1024, jnp.bfloat16)
    params["fc3"] = lin(1024, 512, jnp.bfloat16)
    params["out"] = lin(512, 2, jnp.bfloat16)
    return params


# --------------------------------------------------------------------------
# Forward pass (thin glue + one fused Pallas kernel)
# --------------------------------------------------------------------------

def forward(params, drug, protein, drug_image):
    # Embedding lookups (XLA glue), f32 activations.
    drugembed = jnp.take(params["drug_embed"], drug, axis=0)          # (B, Ld_in, dim)
    protembed = jnp.take(params["protein_embed"], protein, axis=0)    # (B, Lp_in, dim)

    # TODO(synk): pretrained torchvision ResNet-18 encoder has no clean Pallas
    # equivalent; replaced by a global-average-pool + Linear(3,512) stand-in computed
    # here in XLA (a contraction of 3 would be ~98% MXU padding inside the kernel).
    gap = jnp.mean(drug_image, axis=(2, 3))                           # (B, 3)
    wib, bib = params["image_backbone"]
    feat = gap @ wib + bib                                            # (B, 512)

    # Single fused kernel: conv stacks + image projection + fusion + attention +
    # gating + pooling + MLP head.  dropout1/2/3 are identity in eval mode.
    return fused_forward(drugembed, protembed, feat, params)          # (B, 2)


# --------------------------------------------------------------------------

if __name__ == "__main__":
    cfg = dict(
        char_dim=16,
        conv=8,                       # conv*4 = 32 feature channels
        drug_max_length=16,
        drug_kernel=(3, 3, 3),        # drug conv output length = 16 - 9 + 3 = 10
        protein_max_length=20,
        protein_kernel=(3, 3, 3),     # protein conv output length = 20 - 9 + 3 = 14
        image_size=16,
    )
    B = 2
    key = jax.random.PRNGKey(0)
    kp, kd, kpr, ki = jax.random.split(key, 4)

    params = init_params(kp, cfg)
    drug = jax.random.randint(kd, (B, cfg["drug_max_length"]), 0, 65, jnp.int32)
    protein = jax.random.randint(kpr, (B, cfg["protein_max_length"]), 0, 26, jnp.int32)
    drug_image = jax.random.normal(
        ki, (B, 3, cfg["image_size"], cfg["image_size"]), jnp.float32)  # NCHW input

    fwd = jax.jit(forward)
    out = jax.block_until_ready(fwd(params, drug, protein, drug_image))
    assert out.shape == (B, 2), out.shape
    print("KERNEL_OK")
</pallas_src>

<mosaic_0001>
module attributes {stable_mosaic.version = 11 : i64} {
  func.func @_fused_kernel(%arg0: i32, %arg1: memref<1x16x16xf32, #tpu.memory_space<vmem>>, %arg2: memref<1x20x16xf32, #tpu.memory_space<vmem>>, %arg3: memref<1x1x512xf32, #tpu.memory_space<vmem>>, %arg4: memref<48x8xf32, #tpu.memory_space<vmem>>, %arg5: memref<1x8xf32, #tpu.memory_space<vmem>>, %arg6: memref<24x16xf32, #tpu.memory_space<vmem>>, %arg7: memref<1x16xf32, #tpu.memory_space<vmem>>, %arg8: memref<48x32xf32, #tpu.memory_space<vmem>>, %arg9: memref<1x32xf32, #tpu.memory_space<vmem>>, %arg10: memref<48x8xf32, #tpu.memory_space<vmem>>, %arg11: memref<1x8xf32, #tpu.memory_space<vmem>>, %arg12: memref<24x16xf32, #tpu.memory_space<vmem>>, %arg13: memref<1x16xf32, #tpu.memory_space<vmem>>, %arg14: memref<48x32xf32, #tpu.memory_space<vmem>>, %arg15: memref<1x32xf32, #tpu.memory_space<vmem>>, %arg16: memref<512x32xf32, #tpu.memory_space<vmem>>, %arg17: memref<1x32xf32, #tpu.memory_space<vmem>>, %arg18: memref<32x32xf32, #tpu.memory_space<vmem>>, %arg19: memref<1x32xf32, #tpu.memory_space<vmem>>, %arg20: memref<32x32xf32, #tpu.memory_space<vmem>>, %arg21: memref<1x32xf32, #tpu.memory_space<vmem>>, %arg22: memref<32x32xf32, #tpu.memory_space<vmem>>, %arg23: memref<1x32xf32, #tpu.memory_space<vmem>>, %arg24: memref<32x32xf32, #tpu.memory_space<vmem>>, %arg25: memref<1x32xf32, #tpu.memory_space<vmem>>, %arg26: memref<64x1024xbf16, #tpu.memory_space<vmem>>, %arg27: memref<1x1024xf32, #tpu.memory_space<vmem>>, %arg28: memref<1024x1024xbf16, #tpu.memory_space<vmem>>, %arg29: memref<1x1024xf32, #tpu.memory_space<vmem>>, %arg30: memref<1024x512xbf16, #tpu.memory_space<vmem>>, %arg31: memref<1x512xf32, #tpu.memory_space<vmem>>, %arg32: memref<512x128xbf16, #tpu.memory_space<vmem>>, %arg33: memref<1x128xf32, #tpu.memory_space<vmem>>, %arg34: memref<1x1x128xf32, #tpu.memory_space<vmem>>) attributes {dimension_semantics = [#tpu.dimension_semantics<parallel>], iteration_bounds = array<i64: 2>, scalar_prefetch = 0 : i64, scratch_operands = 0 : i64, tpu.core_type = #tpu.core_type<tc>, window_params = [{transform_indices = @transform_0, window_bounds = array<i64: 1, 16, 16>}, {transform_indices = @transform_1, window_bounds = array<i64: 1, 20, 16>}, {transform_indices = @transform_2, window_bounds = array<i64: 1, 1, 512>}, {pipeline_mode = #tpu.pipeline_mode<synchronous>, transform_indices = @transform_3, window_bounds = array<i64: 48, 8>}, {pipeline_mode = #tpu.pipeline_mode<synchronous>, transform_indices = @transform_4, window_bounds = array<i64: 1, 8>}, {pipeline_mode = #tpu.pipeline_mode<synchronous>, transform_indices = @transform_5, window_bounds = array<i64: 24, 16>}, {pipeline_mode = #tpu.pipeline_mode<synchronous>, transform_indices = @transform_6, window_bounds = array<i64: 1, 16>}, {pipeline_mode = #tpu.pipeline_mode<synchronous>, transform_indices = @transform_7, window_bounds = array<i64: 48, 32>}, {pipeline_mode = #tpu.pipeline_mode<synchronous>, transform_indices = @transform_8, window_bounds = array<i64: 1, 32>}, {pipeline_mode = #tpu.pipeline_mode<synchronous>, transform_indices = @transform_9, window_bounds = array<i64: 48, 8>}, {pipeline_mode = #tpu.pipeline_mode<synchronous>, transform_indices = @transform_10, window_bounds = array<i64: 1, 8>}, {pipeline_mode = #tpu.pipeline_mode<synchronous>, transform_indices = @transform_11, window_bounds = array<i64: 24, 16>}, {pipeline_mode = #tpu.pipeline_mode<synchronous>, transform_indices = @transform_12, window_bounds = array<i64: 1, 16>}, {pipeline_mode = #tpu.pipeline_mode<synchronous>, transform_indices = @transform_13, window_bounds = array<i64: 48, 32>}, {pipeline_mode = #tpu.pipeline_mode<synchronous>, transform_indices = @transform_14, window_bounds = array<i64: 1, 32>}, {pipeline_mode = #tpu.pipeline_mode<synchronous>, transform_indices = @transform_15, window_bounds = array<i64: 512, 32>}, {pipeline_mode = #tpu.pipeline_mode<synchronous>, transform_indices = @transform_16, window_bounds = array<i64: 1, 32>}, {pipeline_mode = #tpu.pipeline_mode<synchronous>, transform_indices = @transform_17, window_bounds = array<i64: 32, 32>}, {pipeline_mode = #tpu.pipeline_mode<synchronous>, transform_indices = @transform_18, window_bounds = array<i64: 1, 32>}, {pipeline_mode = #tpu.pipeline_mode<synchronous>, transform_indices = @transform_19, window_bounds = array<i64: 32, 32>}, {pipeline_mode = #tpu.pipeline_mode<synchronous>, transform_indices = @transform_20, window_bounds = array<i64: 1, 32>}, {pipeline_mode = #tpu.pipeline_mode<synchronous>, transform_indices = @transform_21, window_bounds = array<i64: 32, 32>}, {pipeline_mode = #tpu.pipeline_mode<synchronous>, transform_indices = @transform_22, window_bounds = array<i64: 1, 32>}, {pipeline_mode = #tpu.pipeline_mode<synchronous>, transform_indices = @transform_23, window_bounds = array<i64: 32, 32>}, {pipeline_mode = #tpu.pipeline_mode<synchronous>, transform_indices = @transform_24, window_bounds = array<i64: 1, 32>}, {pipeline_mode = #tpu.pipeline_mode<synchronous>, transform_indices = @transform_25, window_bounds = array<i64: 64, 1024>}, {pipeline_mode = #tpu.pipeline_mode<synchronous>, transform_indices = @transform_26, window_bounds = array<i64: 1, 1024>}, {pipeline_mode = #tpu.pipeline_mode<synchronous>, transform_indices = @transform_27, window_bounds = array<i64: 1024, 1024>}, {pipeline_mode = #tpu.pipeline_mode<synchronous>, transform_indices = @transform_28, window_bounds = array<i64: 1, 1024>}, {pipeline_mode = #tpu.pipeline_mode<synchronous>, transform_indices = @transform_29, window_bounds = array<i64: 1024, 512>}, {pipeline_mode = #tpu.pipeline_mode<synchronous>, transform_indices = @transform_30, window_bounds = array<i64: 1, 512>}, {pipeline_mode = #tpu.pipeline_mode<synchronous>, transform_indices = @transform_31, window_bounds = array<i64: 512, 128>}, {pipeline_mode = #tpu.pipeline_mode<synchronous>, transform_indices = @transform_32, window_bounds = array<i64: 1, 128>}, {transform_indices = @transform_33, window_bounds = array<i64: 1, 1, 128>}]} {
    %c0 = arith.constant 0 : index
    %c0_0 = arith.constant 0 : index
    %c0_1 = arith.constant 0 : index
    %0 = vector.load %arg1[%c0, %c0_0, %c0_1] : memref<1x16x16xf32, #tpu.memory_space<vmem>>, vector<1x16x16xf32>
    %1 = vector.shape_cast %0 : vector<1x16x16xf32> to vector<16x16xf32>
    %2 = vector.extract_strided_slice %1 {offsets = [0, 0], sizes = [14, 16], strides = [1, 1]} : vector<16x16xf32> to vector<14x16xf32>
    %c0_2 = arith.constant 0 : index
    %c0_3 = arith.constant 0 : index
    %3 = vector.load %arg4[%c0_2, %c0_3] : memref<48x8xf32, #tpu.memory_space<vmem>>, vector<16x8xf32>
    %cst = arith.constant dense<0.000000e+00> : vector<14x8xf32>
    %4 = tpu.matmul %2, %3, %cst {dimension_numbers = #tpu.dot_dimension_numbers<[1], [0], [0], [1], [0, 0, 1, 1], [], []>} : vector<14x16xf32>, vector<16x8xf32>, vector<14x8xf32> -> vector<14x8xf32>
    %5 = vector.extract_strided_slice %1 {offsets = [1, 0], sizes = [14, 16], strides = [1, 1]} : vector<16x16xf32> to vector<14x16xf32>
    %c16 = arith.constant 16 : index
    %c0_4 = arith.constant 0 : index
    %6 = vector.load %arg4[%c16, %c0_4] : memref<48x8xf32, #tpu.memory_space<vmem>>, vector<16x8xf32>
    %cst_5 = arith.constant dense<0.000000e+00> : vector<14x8xf32>
    %7 = tpu.matmul %5, %6, %cst_5 {dimension_numbers = #tpu.dot_dimension_numbers<[1], [0], [0], [1], [0, 0, 1, 1], [], []>} : vector<14x16xf32>, vector<16x8xf32>, vector<14x8xf32> -> vector<14x8xf32>
    %8 = arith.addf %4, %7 : vector<14x8xf32>
    %9 = vector.extract_strided_slice %1 {offsets = [2, 0], sizes = [14, 16], strides = [1, 1]} : vector<16x16xf32> to vector<14x16xf32>
    %c32 = arith.constant 32 : index
    %c0_6 = arith.constant 0 : index
    %10 = vector.load %arg4[%c32, %c0_6] : memref<48x8xf32, #tpu.memory_space<vmem>>, vector<16x8xf32>
    %cst_7 = arith.constant dense<0.000000e+00> : vector<14x8xf32>
    %11 = tpu.matmul %9, %10, %cst_7 {dimension_numbers = #tpu.dot_dimension_numbers<[1], [0], [0], [1], [0, 0, 1, 1], [], []>} : vector<14x16xf32>, vector<16x8xf32>, vector<14x8xf32> -> vector<14x8xf32>
    %12 = arith.addf %8, %11 : vector<14x8xf32>
    %c0_8 = arith.constant 0 : index
    %c0_9 = arith.constant 0 : index
    %13 = vector.load %arg5[%c0_8, %c0_9] : memref<1x8xf32, #tpu.memory_space<vmem>>, vector<1x8xf32>
    %14 = vector.broadcast %13 : vector<1x8xf32> to vector<14x8xf32>
    %15 = arith.addf %12, %14 : vector<14x8xf32>
    %cst_10 = arith.constant 0.000000e+00 : f32
    %16 = vector.broadcast %cst_10 : f32 to vector<14x8xf32>
    %17 = arith.maximumf %15, %16 : vector<14x8xf32>
    %18 = vector.extract_strided_slice %17 {offsets = [0, 0], sizes = [12, 8], strides = [1, 1]} : vector<14x8xf32> to vector<12x8xf32>
    %c0_11 = arith.constant 0 : index
    %c0_12 = arith.constant 0 : index
    %19 = vector.load %arg6[%c0_11, %c0_12] : memref<24x16xf32, #tpu.memory_space<vmem>>, vector<8x16xf32>
    %cst_13 = arith.constant dense<0.000000e+00> : vector<12x16xf32>
    %20 = tpu.matmul %18, %19, %cst_13 {dimension_numbers = #tpu.dot_dimension_numbers<[1], [0], [0], [1], [0, 0, 1, 1], [], []>} : vector<12x8xf32>, vector<8x16xf32>, vector<12x16xf32> -> vector<12x16xf32>
    %21 = vector.extract_strided_slice %17 {offsets = [1, 0], sizes = [12, 8], strides = [1, 1]} : vector<14x8xf32> to vector<12x8xf32>
    %c8 = arith.constant 8 : index
    %c0_14 = arith.constant 0 : index
    %22 = vector.load %arg6[%c8, %c0_14] : memref<24x16xf32, #tpu.memory_space<vmem>>, vector<8x16xf32>
    %cst_15 = arith.constant dense<0.000000e+00> : vector<12x16xf32>
    %23 = tpu.matmul %21, %22, %cst_15 {dimension_numbers = #tpu.dot_dimension_numbers<[1], [0], [0], [1], [0, 0, 1, 1], [], []>} : vector<12x8xf32>, vector<8x16xf32>, vector<12x16xf32> -> vector<12x16xf32>
    %24 = arith.addf %20, %23 : vector<12x16xf32>
    %25 = vector.extract_strided_slice %17 {offsets = [2, 0], sizes = [12, 8], strides = [1, 1]} : vector<14x8xf32> to vector<12x8xf32>
    %c16_16 = arith.constant 16 : index
    %c0_17 = arith.constant 0 : index
    %26 = vector.load %arg6[%c16_16, %c0_17] : memref<24x16xf32, #tpu.memory_space<vmem>>, vector<8x16xf32>
    %cst_18 = arith.constant dense<0.000000e+00> : vector<12x16xf32>
    %27 = tpu.matmul %25, %26, %cst_18 {dimension_numbers = #tpu.dot_dimension_numbers<[1], [0], [0], [1], [0, 0, 1, 1], [], []>} : vector<12x8xf32>, vector<8x16xf32>, vector<12x16xf32> -> vector<12x16xf32>
    %28 = arith.addf %24, %27 : vector<12x16xf32>
    %c0_19 = arith.constant 0 : index
    %c0_20 = arith.constant 0 : index
    %29 = vector.load %arg7[%c0_19, %c0_20] : memref<1x16xf32, #tpu.memory_space<vmem>>, vector<1x16xf32>
    %30 = vector.broadcast %29 : vector<1x16xf32> to vector<12x16xf32>
    %31 = arith.addf %28, %30 : vector<12x16xf32>
    %cst_21 = arith.constant 0.000000e+00 : f32
    %32 = vector.broadcast %cst_21 : f32 to vector<12x16xf32>
    %33 = arith.maximumf %31, %32 : vector<12x16xf32>
    %34 = vector.extract_strided_slice %33 {offsets = [0, 0], sizes = [10, 16], strides = [1, 1]} : vector<12x16xf32> to vector<10x16xf32>
    %c0_22 = arith.constant 0 : index
    %c0_23 = arith.constant 0 : index
    %35 = vector.load %arg8[%c0_22, %c0_23] : memref<48x32xf32, #tpu.memory_space<vmem>>, vector<16x32xf32>
    %cst_24 = arith.constant dense<0.000000e+00> : vector<10x32xf32>
    %36 = tpu.matmul %34, %35, %cst_24 {dimension_numbers = #tpu.dot_dimension_numbers<[1], [0], [0], [1], [0, 0, 1, 1], [], []>} : vector<10x16xf32>, vector<16x32xf32>, vector<10x32xf32> -> vector<10x32xf32>
    %37 = vector.extract_strided_slice %33 {offsets = [1, 0], sizes = [10, 16], strides = [1, 1]} : vector<12x16xf32> to vector<10x16xf32>
    %c16_25 = arith.constant 16 : index
    %c0_26 = arith.constant 0 : index
    %38 = vector.load %arg8[%c16_25, %c0_26] : memref<48x32xf32, #tpu.memory_space<vmem>>, vector<16x32xf32>
    %cst_27 = arith.constant dense<0.000000e+00> : vector<10x32xf32>
    %39 = tpu.matmul %37, %38, %cst_27 {dimension_numbers = #tpu.dot_dimension_numbers<[1], [0], [0], [1], [0, 0, 1, 1], [], []>} : vector<10x16xf32>, vector<16x32xf32>, vector<10x32xf32> -> vector<10x32xf32>
    %40 = arith.addf %36, %39 : vector<10x32xf32>
    %41 = vector.extract_strided_slice %33 {offsets = [2, 0], sizes = [10, 16], strides = [1, 1]} : vector<12x16xf32> to vector<10x16xf32>
    %c32_28 = arith.constant 32 : index
    %c0_29 = arith.constant 0 : index
    %42 = vector.load %arg8[%c32_28, %c0_29] : memref<48x32xf32, #tpu.memory_space<vmem>>, vector<16x32xf32>
    %cst_30 = arith.constant dense<0.000000e+00> : vector<10x32xf32>
    %43 = tpu.matmul %41, %42, %cst_30 {dimension_numbers = #tpu.dot_dimension_numbers<[1], [0], [0], [1], [0, 0, 1, 1], [], []>} : vector<10x16xf32>, vector<16x32xf32>, vector<10x32xf32> -> vector<10x32xf32>
    %44 = arith.addf %40, %43 : vector<10x32xf32>
    %c0_31 = arith.constant 0 : index
    %c0_32 = arith.constant 0 : index
    %45 = vector.load %arg9[%c0_31, %c0_32] : memref<1x32xf32, #tpu.memory_space<vmem>>, vector<1x32xf32>
    %46 = vector.broadcast %45 : vector<1x32xf32> to vector<10x32xf32>
    %47 = arith.addf %44, %46 : vector<10x32xf32>
    %cst_33 = arith.constant 0.000000e+00 : f32
    %48 = vector.broadcast %cst_33 : f32 to vector<10x32xf32>
    %49 = arith.maximumf %47, %48 : vector<10x32xf32>
    %c0_34 = arith.constant 0 : index
    %c0_35 = arith.constant 0 : index
    %c0_36 = arith.constant 0 : index
    %50 = vector.load %arg2[%c0_34, %c0_35, %c0_36] : memref<1x20x16xf32, #tpu.memory_space<vmem>>, vector<1x20x16xf32>
    %51 = vector.shape_cast %50 : vector<1x20x16xf32> to vector<20x16xf32>
    %52 = vector.extract_strided_slice %51 {offsets = [0, 0], sizes = [18, 16], strides = [1, 1]} : vector<20x16xf32> to vector<18x16xf32>
    %c0_37 = arith.constant 0 : index
    %c0_38 = arith.constant 0 : index
    %53 = vector.load %arg10[%c0_37, %c0_38] : memref<48x8xf32, #tpu.memory_space<vmem>>, vector<16x8xf32>
    %cst_39 = arith.constant dense<0.000000e+00> : vector<18x8xf32>
    %54 = tpu.matmul %52, %53, %cst_39 {dimension_numbers = #tpu.dot_dimension_numbers<[1], [0], [0], [1], [0, 0, 1, 1], [], []>} : vector<18x16xf32>, vector<16x8xf32>, vector<18x8xf32> -> vector<18x8xf32>
    %55 = vector.extract_strided_slice %51 {offsets = [1, 0], sizes = [18, 16], strides = [1, 1]} : vector<20x16xf32> to vector<18x16xf32>
    %c16_40 = arith.constant 16 : index
    %c0_41 = arith.constant 0 : index
    %56 = vector.load %arg10[%c16_40, %c0_41] : memref<48x8xf32, #tpu.memory_space<vmem>>, vector<16x8xf32>
    %cst_42 = arith.constant dense<0.000000e+00> : vector<18x8xf32>
    %57 = tpu.matmul %55, %56, %cst_42 {dimension_numbers = #tpu.dot_dimension_numbers<[1], [0], [0], [1], [0, 0, 1, 1], [], []>} : vector<18x16xf32>, vector<16x8xf32>, vector<18x8xf32> -> vector<18x8xf32>
    %58 = arith.addf %54, %57 : vector<18x8xf32>
    %59 = vector.extract_strided_slice %51 {offsets = [2, 0], sizes = [18, 16], strides = [1, 1]} : vector<20x16xf32> to vector<18x16xf32>
    %c32_43 = arith.constant 32 : index
    %c0_44 = arith.constant 0 : index
    %60 = vector.load %arg10[%c32_43, %c0_44] : memref<48x8xf32, #tpu.memory_space<vmem>>, vector<16x8xf32>
    %cst_45 = arith.constant dense<0.000000e+00> : vector<18x8xf32>
    %61 = tpu.matmul %59, %60, %cst_45 {dimension_numbers = #tpu.dot_dimension_numbers<[1], [0], [0], [1], [0, 0, 1, 1], [], []>} : vector<18x16xf32>, vector<16x8xf32>, vector<18x8xf32> -> vector<18x8xf32>
    %62 = arith.addf %58, %61 : vector<18x8xf32>
    %c0_46 = arith.constant 0 : index
    %c0_47 = arith.constant 0 : index
    %63 = vector.load %arg11[%c0_46, %c0_47] : memref<1x8xf32, #tpu.memory_space<vmem>>, vector<1x8xf32>
    %64 = vector.broadcast %63 : vector<1x8xf32> to vector<18x8xf32>
    %65 = arith.addf %62, %64 : vector<18x8xf32>
    %cst_48 = arith.constant 0.000000e+00 : f32
    %66 = vector.broadcast %cst_48 : f32 to vector<18x8xf32>
    %67 = arith.maximumf %65, %66 : vector<18x8xf32>
    %68 = vector.extract_strided_slice %67 {offsets = [0, 0], sizes = [16, 8], strides = [1, 1]} : vector<18x8xf32> to vector<16x8xf32>
    %c0_49 = arith.constant 0 : index
    %c0_50 = arith.constant 0 : index
    %69 = vector.load %arg12[%c0_49, %c0_50] : memref<24x16xf32, #tpu.memory_space<vmem>>, vector<8x16xf32>
    %cst_51 = arith.constant dense<0.000000e+00> : vector<16x16xf32>
    %70 = tpu.matmul %68, %69, %cst_51 {dimension_numbers = #tpu.dot_dimension_numbers<[1], [0], [0], [1], [0, 0, 1, 1], [], []>} : vector<16x8xf32>, vector<8x16xf32>, vector<16x16xf32> -> vector<16x16xf32>
    %71 = vector.extract_strided_slice %67 {offsets = [1, 0], sizes = [16, 8], strides = [1, 1]} : vector<18x8xf32> to vector<16x8xf32>
    %c8_52 = arith.constant 8 : index
    %c0_53 = arith.constant 0 : index
    %72 = vector.load %arg12[%c8_52, %c0_53] : memref<24x16xf32, #tpu.memory_space<vmem>>, vector<8x16xf32>
    %cst_54 = arith.constant dense<0.000000e+00> : vector<16x16xf32>
    %73 = tpu.matmul %71, %72, %cst_54 {dimension_numbers = #tpu.dot_dimension_numbers<[1], [0], [0], [1], [0, 0, 1, 1], [], []>} : vector<16x8xf32>, vector<8x16xf32>, vector<16x16xf32> -> vector<16x16xf32>
    %74 = arith.addf %70, %73 : vector<16x16xf32>
    %75 = vector.extract_strided_slice %67 {offsets = [2, 0], sizes = [16, 8], strides = [1, 1]} : vector<18x8xf32> to vector<16x8xf32>
    %c16_55 = arith.constant 16 : index
    %c0_56 = arith.constant 0 : index
    %76 = vector.load %arg12[%c16_55, %c0_56] : memref<24x16xf32, #tpu.memory_space<vmem>>, vector<8x16xf32>
    %cst_57 = arith.constant dense<0.000000e+00> : vector<16x16xf32>
    %77 = tpu.matmul %75, %76, %cst_57 {dimension_numbers = #tpu.dot_dimension_numbers<[1], [0], [0], [1], [0, 0, 1, 1], [], []>} : vector<16x8xf32>, vector<8x16xf32>, vector<16x16xf32> -> vector<16x16xf32>
    %78 = arith.addf %74, %77 : vector<16x16xf32>
    %c0_58 = arith.constant 0 : index
    %c0_59 = arith.constant 0 : index
    %79 = vector.load %arg13[%c0_58, %c0_59] : memref<1x16xf32, #tpu.memory_space<vmem>>, vector<1x16xf32>
    %80 = vector.broadcast %79 : vector<1x16xf32> to vector<16x16xf32>
    %81 = arith.addf %78, %80 : vector<16x16xf32>
    %cst_60 = arith.constant 0.000000e+00 : f32
    %82 = vector.broadcast %cst_60 : f32 to vector<16x16xf32>
    %83 = arith.maximumf %81, %82 : vector<16x16xf32>
    %84 = vector.extract_strided_slice %83 {offsets = [0, 0], sizes = [14, 16], strides = [1, 1]} : vector<16x16xf32> to vector<14x16xf32>
    %c0_61 = arith.constant 0 : index
    %c0_62 = arith.constant 0 : index
    %85 = vector.load %arg14[%c0_61, %c0_62] : memref<48x32xf32, #tpu.memory_space<vmem>>, vector<16x32xf32>
    %cst_63 = arith.constant dense<0.000000e+00> : vector<14x32xf32>
    %86 = tpu.matmul %84, %85, %cst_63 {dimension_numbers = #tpu.dot_dimension_numbers<[1], [0], [0], [1], [0, 0, 1, 1], [], []>} : vector<14x16xf32>, vector<16x32xf32>, vector<14x32xf32> -> vector<14x32xf32>
    %87 = vector.extract_strided_slice %83 {offsets = [1, 0], sizes = [14, 16], strides = [1, 1]} : vector<16x16xf32> to vector<14x16xf32>
    %c16_64 = arith.constant 16 : index
    %c0_65 = arith.constant 0 : index
    %88 = vector.load %arg14[%c16_64, %c0_65] : memref<48x32xf32, #tpu.memory_space<vmem>>, vector<16x32xf32>
    %cst_66 = arith.constant dense<0.000000e+00> : vector<14x32xf32>
    %89 = tpu.matmul %87, %88, %cst_66 {dimension_numbers = #tpu.dot_dimension_numbers<[1], [0], [0], [1], [0, 0, 1, 1], [], []>} : vector<14x16xf32>, vector<16x32xf32>, vector<14x32xf32> -> vector<14x32xf32>
    %90 = arith.addf %86, %89 : vector<14x32xf32>
    %91 = vector.extract_strided_slice %83 {offsets = [2, 0], sizes = [14, 16], strides = [1, 1]} : vector<16x16xf32> to vector<14x16xf32>
    %c32_67 = arith.constant 32 : index
    %c0_68 = arith.constant 0 : index
    %92 = vector.load %arg14[%c32_67, %c0_68] : memref<48x32xf32, #tpu.memory_space<vmem>>, vector<16x32xf32>
    %cst_69 = arith.constant dense<0.000000e+00> : vector<14x32xf32>
    %93 = tpu.matmul %91, %92, %cst_69 {dimension_numbers = #tpu.dot_dimension_numbers<[1], [0], [0], [1], [0, 0, 1, 1], [], []>} : vector<14x16xf32>, vector<16x32xf32>, vector<14x32xf32> -> vector<14x32xf32>
    %94 = arith.addf %90, %93 : vector<14x32xf32>
    %c0_70 = arith.constant 0 : index
    %c0_71 = arith.constant 0 : index
    %95 = vector.load %arg15[%c0_70, %c0_71] : memref<1x32xf32, #tpu.memory_space<vmem>>, vector<1x32xf32>
    %96 = vector.broadcast %95 : vector<1x32xf32> to vector<14x32xf32>
    %97 = arith.addf %94, %96 : vector<14x32xf32>
    %cst_72 = arith.constant 0.000000e+00 : f32
    %98 = vector.broadcast %cst_72 : f32 to vector<14x32xf32>
    %99 = arith.maximumf %97, %98 : vector<14x32xf32>
    %c0_73 = arith.constant 0 : index
    %c0_74 = arith.constant 0 : index
    %c0_75 = arith.constant 0 : index
    %100 = vector.load %arg3[%c0_73, %c0_74, %c0_75] : memref<1x1x512xf32, #tpu.memory_space<vmem>>, vector<1x1x512xf32>
    %101 = vector.shape_cast %100 : vector<1x1x512xf32> to vector<1x512xf32>
    %c0_76 = arith.constant 0 : index
    %c0_77 = arith.constant 0 : index
    %102 = vector.load %arg16[%c0_76, %c0_77] : memref<512x32xf32, #tpu.memory_space<vmem>>, vector<512x32xf32>
    %cst_78 = arith.constant dense<0.000000e+00> : vector<1x32xf32>
    %103 = tpu.matmul %101, %102, %cst_78 {dimension_numbers = #tpu.dot_dimension_numbers<[1], [0], [0], [1], [0, 0, 1, 1], [], []>} : vector<1x512xf32>, vector<512x32xf32>, vector<1x32xf32> -> vector<1x32xf32>
    %c0_79 = arith.constant 0 : index
    %c0_80 = arith.constant 0 : index
    %104 = vector.load %arg17[%c0_79, %c0_80] : memref<1x32xf32, #tpu.memory_space<vmem>>, vector<1x32xf32>
    %105 = arith.addf %103, %104 : vector<1x32xf32>
    %c0_81 = arith.constant 0 : index
    %c0_82 = arith.constant 0 : index
    %106 = vector.load %arg18[%c0_81, %c0_82] : memref<32x32xf32, #tpu.memory_space<vmem>>, vector<32x32xf32>
    %cst_83 = arith.constant dense<0.000000e+00> : vector<10x32xf32>
    %107 = tpu.matmul %49, %106, %cst_83 {dimension_numbers = #tpu.dot_dimension_numbers<[1], [0], [0], [1], [0, 0, 1, 1], [], []>} : vector<10x32xf32>, vector<32x32xf32>, vector<10x32xf32> -> vector<10x32xf32>
    %c0_84 = arith.constant 0 : index
    %c0_85 = arith.constant 0 : index
    %108 = vector.load %arg19[%c0_84, %c0_85] : memref<1x32xf32, #tpu.memory_space<vmem>>, vector<1x32xf32>
    %109 = vector.broadcast %108 : vector<1x32xf32> to vector<10x32xf32>
    %110 = arith.addf %107, %109 : vector<10x32xf32>
    %c0_86 = arith.constant 0 : index
    %c0_87 = arith.constant 0 : index
    %111 = vector.load %arg18[%c0_86, %c0_87] : memref<32x32xf32, #tpu.memory_space<vmem>>, vector<32x32xf32>
    %cst_88 = arith.constant dense<0.000000e+00> : vector<1x32xf32>
    %112 = tpu.matmul %105, %111, %cst_88 {dimension_numbers = #tpu.dot_dimension_numbers<[1], [0], [0], [1], [0, 0, 1, 1], [], []>} : vector<1x32xf32>, vector<32x32xf32>, vector<1x32xf32> -> vector<1x32xf32>
    %c0_89 = arith.constant 0 : index
    %c0_90 = arith.constant 0 : index
    %113 = vector.load %arg19[%c0_89, %c0_90] : memref<1x32xf32, #tpu.memory_space<vmem>>, vector<1x32xf32>
    %114 = arith.addf %112, %113 : vector<1x32xf32>
    %c0_91 = arith.constant 0 : index
    %c0_92 = arith.constant 0 : index
    %115 = vector.load %arg20[%c0_91, %c0_92] : memref<32x32xf32, #tpu.memory_space<vmem>>, vector<32x32xf32>
    %cst_93 = arith.constant dense<0.000000e+00> : vector<10x32xf32>
    %116 = tpu.matmul %110, %115, %cst_93 {dimension_numbers = #tpu.dot_dimension_numbers<[1], [0], [0], [1], [0, 0, 1, 1], [], []>} : vector<10x32xf32>, vector<32x32xf32>, vector<10x32xf32> -> vector<10x32xf32>
    %c0_94 = arith.constant 0 : index
    %c0_95 = arith.constant 0 : index
    %117 = vector.load %arg21[%c0_94, %c0_95] : memref<1x32xf32, #tpu.memory_space<vmem>>, vector<1x32xf32>
    %118 = vector.broadcast %117 : vector<1x32xf32> to vector<10x32xf32>
    %119 = arith.addf %116, %118 : vector<10x32xf32>
    %c0_96 = arith.constant 0 : index
    %c0_97 = arith.constant 0 : index
    %120 = vector.load %arg20[%c0_96, %c0_97] : memref<32x32xf32, #tpu.memory_space<vmem>>, vector<32x32xf32>
    %cst_98 = arith.constant dense<0.000000e+00> : vector<1x32xf32>
    %121 = tpu.matmul %114, %120, %cst_98 {dimension_numbers = #tpu.dot_dimension_numbers<[1], [0], [0], [1], [0, 0, 1, 1], [], []>} : vector<1x32xf32>, vector<32x32xf32>, vector<1x32xf32> -> vector<1x32xf32>
    %c0_99 = arith.constant 0 : index
    %c0_100 = arith.constant 0 : index
    %122 = vector.load %arg21[%c0_99, %c0_100] : memref<1x32xf32, #tpu.memory_space<vmem>>, vector<1x32xf32>
    %123 = arith.addf %121, %122 : vector<1x32xf32>
    %c0_101 = arith.constant 0 : index
    %c0_102 = arith.constant 0 : index
    %124 = vector.load %arg22[%c0_101, %c0_102] : memref<32x32xf32, #tpu.memory_space<vmem>>, vector<32x32xf32>
    %cst_103 = arith.constant dense<0.000000e+00> : vector<14x32xf32>
    %125 = tpu.matmul %99, %124, %cst_103 {dimension_numbers = #tpu.dot_dimension_numbers<[1], [0], [0], [1], [0, 0, 1, 1], [], []>} : vector<14x32xf32>, vector<32x32xf32>, vector<14x32xf32> -> vector<14x32xf32>
    %c0_104 = arith.constant 0 : index
    %c0_105 = arith.constant 0 : index
    %126 = vector.load %arg23[%c0_104, %c0_105] : memref<1x32xf32, #tpu.memory_space<vmem>>, vector<1x32xf32>
    %127 = vector.broadcast %126 : vector<1x32xf32> to vector<14x32xf32>
    %128 = arith.addf %125, %127 : vector<14x32xf32>
    %129 = vector.shape_cast %119 : vector<10x32xf32> to vector<10x1x32xf32>
    %130 = vector.shape_cast %128 : vector<14x32xf32> to vector<1x14x32xf32>
    %131 = vector.broadcast %129 : vector<10x1x32xf32> to vector<10x14x32xf32>
    %132 = vector.broadcast %130 : vector<1x14x32xf32> to vector<10x14x32xf32>
    %133 = arith.addf %131, %132 : vector<10x14x32xf32>
    %cst_106 = arith.constant 0.000000e+00 : f32
    %134 = vector.broadcast %cst_106 : f32 to vector<10x14x32xf32>
    %135 = arith.maximumf %133, %134 : vector<10x14x32xf32>
    %cst_107 = arith.constant dense<0.000000e+00> : vector<10x32xf32>
    %136 = vector.multi_reduction <add>, %135, %cst_107 [1] : vector<10x14x32xf32> to vector<10x32xf32>
    %cst_108 = arith.constant dense<0.000000e+00> : vector<14x32xf32>
    %137 = vector.multi_reduction <add>, %135, %cst_108 [0] : vector<10x14x32xf32> to vector<14x32xf32>
    %138 = vector.broadcast %123 : vector<1x32xf32> to vector<14x32xf32>
    %139 = arith.addf %138, %128 : vector<14x32xf32>
    %cst_109 = arith.constant 0.000000e+00 : f32
    %140 = vector.broadcast %cst_109 : f32 to vector<14x32xf32>
    %141 = arith.maximumf %139, %140 : vector<14x32xf32>
    %142 = arith.addf %137, %141 : vector<14x32xf32>
    %cst_110 = arith.constant 0.0714285746 : f32
    %143 = vector.broadcast %cst_110 : f32 to vector<10x32xf32>
    %144 = arith.mulf %136, %143 : vector<10x32xf32>
    %c0_111 = arith.constant 0 : index
    %c0_112 = arith.constant 0 : index
    %145 = vector.load %arg24[%c0_111, %c0_112] : memref<32x32xf32, #tpu.memory_space<vmem>>, vector<32x32xf32>
    %cst_113 = arith.constant dense<0.000000e+00> : vector<10x32xf32>
    %146 = tpu.matmul %144, %145, %cst_113 {dimension_numbers = #tpu.dot_dimension_numbers<[1], [0], [0], [1], [0, 0, 1, 1], [], []>} : vector<10x32xf32>, vector<32x32xf32>, vector<10x32xf32> -> vector<10x32xf32>
    %c0_114 = arith.constant 0 : index
    %c0_115 = arith.constant 0 : index
    %147 = vector.load %arg25[%c0_114, %c0_115] : memref<1x32xf32, #tpu.memory_space<vmem>>, vector<1x32xf32>
    %148 = vector.broadcast %147 : vector<1x32xf32> to vector<10x32xf32>
    %149 = arith.addf %146, %148 : vector<10x32xf32>
    %cst_116 = arith.constant 0.0909090936 : f32
    %150 = vector.broadcast %cst_116 : f32 to vector<14x32xf32>
    %151 = arith.mulf %142, %150 : vector<14x32xf32>
    %c0_117 = arith.constant 0 : index
    %c0_118 = arith.constant 0 : index
    %152 = vector.load %arg24[%c0_117, %c0_118] : memref<32x32xf32, #tpu.memory_space<vmem>>, vector<32x32xf32>
    %cst_119 = arith.constant dense<0.000000e+00> : vector<14x32xf32>
    %153 = tpu.matmul %151, %152, %cst_119 {dimension_numbers = #tpu.dot_dimension_numbers<[1], [0], [0], [1], [0, 0, 1, 1], [], []>} : vector<14x32xf32>, vector<32x32xf32>, vector<14x32xf32> -> vector<14x32xf32>
    %c0_120 = arith.constant 0 : index
    %c0_121 = arith.constant 0 : index
    %154 = vector.load %arg25[%c0_120, %c0_121] : memref<1x32xf32, #tpu.memory_space<vmem>>, vector<1x32xf32>
    %155 = vector.broadcast %154 : vector<1x32xf32> to vector<14x32xf32>
    %156 = arith.addf %153, %155 : vector<14x32xf32>
    %cst_122 = arith.constant 0.000000e+00 : f32
    %157 = vector.broadcast %cst_122 : f32 to vector<10x32xf32>
    %158 = arith.subf %157, %149 : vector<10x32xf32>
    %159 = math.exp %158 : vector<10x32xf32>
    %cst_123 = arith.constant 1.000000e+00 : f32
    %160 = vector.broadcast %cst_123 : f32 to vector<10x32xf32>
    %161 = arith.addf %160, %159 : vector<10x32xf32>
    %cst_124 = arith.constant 1.000000e+00 : f32
    %162 = vector.broadcast %cst_124 : f32 to vector<10x32xf32>
    %163 = arith.divf %162, %161 : vector<10x32xf32>
    %cst_125 = arith.constant 0.000000e+00 : f32
    %164 = vector.broadcast %cst_125 : f32 to vector<14x32xf32>
    %165 = arith.subf %164, %156 : vector<14x32xf32>
    %166 = math.exp %165 : vector<14x32xf32>
    %cst_126 = arith.constant 1.000000e+00 : f32
    %167 = vector.broadcast %cst_126 : f32 to vector<14x32xf32>
    %168 = arith.addf %167, %166 : vector<14x32xf32>
    %cst_127 = arith.constant 1.000000e+00 : f32
    %169 = vector.broadcast %cst_127 : f32 to vector<14x32xf32>
    %170 = arith.divf %169, %168 : vector<14x32xf32>
    %cst_128 = arith.constant 5.000000e-01 : f32
    %171 = vector.broadcast %cst_128 : f32 to vector<10x32xf32>
    %172 = arith.addf %171, %163 : vector<10x32xf32>
    %173 = arith.mulf %110, %172 : vector<10x32xf32>
    %cst_129 = arith.constant dense<0xFF800000> : vector<32xf32>
    %174 = vector.multi_reduction <maximumf>, %173, %cst_129 [0] : vector<10x32xf32> to vector<32xf32>
    %175 = vector.shape_cast %174 : vector<32xf32> to vector<1x32xf32>
    %cst_130 = arith.constant 5.000000e-01 : f32
    %176 = vector.broadcast %cst_130 : f32 to vector<14x32xf32>
    %177 = arith.addf %176, %170 : vector<14x32xf32>
    %178 = arith.mulf %99, %177 : vector<14x32xf32>
    %cst_131 = arith.constant dense<0xFF800000> : vector<32xf32>
    %179 = vector.multi_reduction <maximumf>, %178, %cst_131 [0] : vector<14x32xf32> to vector<32xf32>
    %180 = vector.shape_cast %179 : vector<32xf32> to vector<1x32xf32>
    %181 = arith.truncf %175 : vector<1x32xf32> to vector<1x32xbf16>
    %c0_132 = arith.constant 0 : index
    %c0_133 = arith.constant 0 : index
    %182 = vector.load %arg26[%c0_132, %c0_133] : memref<64x1024xbf16, #tpu.memory_space<vmem>>, vector<32x1024xbf16>
    %cst_134 = arith.constant dense<0.000000e+00> : vector<1x1024xf32>
    %183 = tpu.matmul %181, %182, %cst_134 {dimension_numbers = #tpu.dot_dimension_numbers<[1], [0], [0], [1], [0, 0, 1, 1], [], []>} : vector<1x32xbf16>, vector<32x1024xbf16>, vector<1x1024xf32> -> vector<1x1024xf32>
    %184 = arith.truncf %180 : vector<1x32xf32> to vector<1x32xbf16>
    %c32_135 = arith.constant 32 : index
    %c0_136 = arith.constant 0 : index
    %185 = vector.load %arg26[%c32_135, %c0_136] : memref<64x1024xbf16, #tpu.memory_space<vmem>>, vector<32x1024xbf16>
    %cst_137 = arith.constant dense<0.000000e+00> : vector<1x1024xf32>
    %186 = tpu.matmul %184, %185, %cst_137 {dimension_numbers = #tpu.dot_dimension_numbers<[1], [0], [0], [1], [0, 0, 1, 1], [], []>} : vector<1x32xbf16>, vector<32x1024xbf16>, vector<1x1024xf32> -> vector<1x1024xf32>
    %187 = arith.addf %183, %186 : vector<1x1024xf32>
    %c0_138 = arith.constant 0 : index
    %c0_139 = arith.constant 0 : index
    %188 = vector.load %arg27[%c0_138, %c0_139] : memref<1x1024xf32, #tpu.memory_space<vmem>>, vector<1x1024xf32>
    %189 = arith.addf %187, %188 : vector<1x1024xf32>
    %cst_140 = arith.constant 0.000000e+00 : f32
    %190 = vector.broadcast %cst_140 : f32 to vector<1x1024xf32>
    %191 = arith.cmpf oge, %189, %190 : vector<1x1024xf32>
    %cst_141 = arith.constant 0.00999999977 : f32
    %192 = vector.broadcast %cst_141 : f32 to vector<1x1024xf32>
    %193 = arith.mulf %192, %189 : vector<1x1024xf32>
    %194 = arith.select %191, %189, %193 : vector<1x1024xi1>, vector<1x1024xf32>
    %195 = arith.truncf %194 : vector<1x1024xf32> to vector<1x1024xbf16>
    %c0_142 = arith.constant 0 : index
    %c0_143 = arith.constant 0 : index
    %196 = vector.load %arg28[%c0_142, %c0_143] : memref<1024x1024xbf16, #tpu.memory_space<vmem>>, vector<1024x1024xbf16>
    %cst_144 = arith.constant dense<0.000000e+00> : vector<1x1024xf32>
    %197 = tpu.matmul %195, %196, %cst_144 {dimension_numbers = #tpu.dot_dimension_numbers<[1], [0], [0], [1], [0, 0, 1, 1], [], []>} : vector<1x1024xbf16>, vector<1024x1024xbf16>, vector<1x1024xf32> -> vector<1x1024xf32>
    %c0_145 = arith.constant 0 : index
    %c0_146 = arith.constant 0 : index
    %198 = vector.load %arg29[%c0_145, %c0_146] : memref<1x1024xf32, #tpu.memory_space<vmem>>, vector<1x1024xf32>
    %199 = arith.addf %197, %198 : vector<1x1024xf32>
    %cst_147 = arith.constant 0.000000e+00 : f32
    %200 = vector.broadcast %cst_147 : f32 to vector<1x1024xf32>
    %201 = arith.cmpf oge, %199, %200 : vector<1x1024xf32>
    %cst_148 = arith.constant 0.00999999977 : f32
    %202 = vector.broadcast %cst_148 : f32 to vector<1x1024xf32>
    %203 = arith.mulf %202, %199 : vector<1x1024xf32>
    %204 = arith.select %201, %199, %203 : vector<1x1024xi1>, vector<1x1024xf32>
    %205 = arith.truncf %204 : vector<1x1024xf32> to vector<1x1024xbf16>
    %c0_149 = arith.constant 0 : index
    %c0_150 = arith.constant 0 : index
    %206 = vector.load %arg30[%c0_149, %c0_150] : memref<1024x512xbf16, #tpu.memory_space<vmem>>, vector<1024x512xbf16>
    %cst_151 = arith.constant dense<0.000000e+00> : vector<1x512xf32>
    %207 = tpu.matmul %205, %206, %cst_151 {dimension_numbers = #tpu.dot_dimension_numbers<[1], [0], [0], [1], [0, 0, 1, 1], [], []>} : vector<1x1024xbf16>, vector<1024x512xbf16>, vector<1x512xf32> -> vector<1x512xf32>
    %c0_152 = arith.constant 0 : index
    %c0_153 = arith.constant 0 : index
    %208 = vector.load %arg31[%c0_152, %c0_153] : memref<1x512xf32, #tpu.memory_space<vmem>>, vector<1x512xf32>
    %209 = arith.addf %207, %208 : vector<1x512xf32>
    %cst_154 = arith.constant 0.000000e+00 : f32
    %210 = vector.broadcast %cst_154 : f32 to vector<1x512xf32>
    %211 = arith.cmpf oge, %209, %210 : vector<1x512xf32>
    %cst_155 = arith.constant 0.00999999977 : f32
    %212 = vector.broadcast %cst_155 : f32 to vector<1x512xf32>
    %213 = arith.mulf %212, %209 : vector<1x512xf32>
    %214 = arith.select %211, %209, %213 : vector<1x512xi1>, vector<1x512xf32>
    %215 = arith.truncf %214 : vector<1x512xf32> to vector<1x512xbf16>
    %c0_156 = arith.constant 0 : index
    %c0_157 = arith.constant 0 : index
    %216 = vector.load %arg32[%c0_156, %c0_157] : memref<512x128xbf16, #tpu.memory_space<vmem>>, vector<512x128xbf16>
    %cst_158 = arith.constant dense<0.000000e+00> : vector<1x128xf32>
    %217 = tpu.matmul %215, %216, %cst_158 {dimension_numbers = #tpu.dot_dimension_numbers<[1], [0], [0], [1], [0, 0, 1, 1], [], []>} : vector<1x512xbf16>, vector<512x128xbf16>, vector<1x128xf32> -> vector<1x128xf32>
    %c0_159 = arith.constant 0 : index
    %c0_160 = arith.constant 0 : index
    %218 = vector.load %arg33[%c0_159, %c0_160] : memref<1x128xf32, #tpu.memory_space<vmem>>, vector<1x128xf32>
    %219 = arith.addf %217, %218 : vector<1x128xf32>
    %c0_161 = arith.constant 0 : index
    %c0_162 = arith.constant 0 : index
    %c0_163 = arith.constant 0 : index
    %220 = vector.load %arg34[%c0_161, %c0_162, %c0_163] : memref<1x1x128xf32, #tpu.memory_space<vmem>>, vector<1x1x128xf32>
    %221 = vector.shape_cast %220 : vector<1x1x128xf32> to vector<1x128xf32>
    %222 = vector.shape_cast %219 : vector<1x128xf32> to vector<1x1x128xf32>
    tpu.vector_store %arg34[%c0_161, %c0_162, %c0_163], %222 {strides = array<i32>} : memref<1x1x128xf32, #tpu.memory_space<vmem>>, vector<1x1x128xf32>,
    return
  }
  func.func @transform_0(%arg0: i32) -> (i32, i32, i32) {
    %c0_i32 = arith.constant 0 : i32
    %c0_i32_0 = arith.constant 0 : i32
    %c0_i32_1 = arith.constant 0 : i32
    return %arg0, %c0_i32, %c0_i32_0 : i32, i32, i32
  }
  func.func @transform_1(%arg0: i32) -> (i32, i32, i32) {
    %c0_i32 = arith.constant 0 : i32
    %c0_i32_0 = arith.constant 0 : i32
    %c0_i32_1 = arith.constant 0 : i32
    return %arg0, %c0_i32, %c0_i32_0 : i32, i32, i32
  }
  func.func @transform_2(%arg0: i32) -> (i32, i32, i32) {
    %c0_i32 = arith.constant 0 : i32
    %c0_i32_0 = arith.constant 0 : i32
    %c0_i32_1 = arith.constant 0 : i32
    return %arg0, %c0_i32, %c0_i32_0 : i32, i32, i32
  }
  func.func @transform_3(%arg0: i32) -> (i32, i32) {
    %c0_i32 = arith.constant 0 : i32
    %c0_i32_0 = arith.constant 0 : i32
    %c0_i32_1 = arith.constant 0 : i32
    return %c0_i32, %c0_i32_0 : i32, i32
  }
  func.func @transform_4(%arg0: i32) -> (i32, i32) {
    %c0_i32 = arith.constant 0 : i32
    %c0_i32_0 = arith.constant 0 : i32
    %c0_i32_1 = arith.constant 0 : i32
    return %c0_i32, %c0_i32_0 : i32, i32
  }
  func.func @transform_5(%arg0: i32) -> (i32, i32) {
    %c0_i32 = arith.constant 0 : i32
    %c0_i32_0 = arith.constant 0 : i32
    %c0_i32_1 = arith.constant 0 : i32
    return %c0_i32, %c0_i32_0 : i32, i32
  }
  func.func @transform_6(%arg0: i32) -> (i32, i32) {
    %c0_i32 = arith.constant 0 : i32
    %c0_i32_0 = arith.constant 0 : i32
    %c0_i32_1 = arith.constant 0 : i32
    return %c0_i32, %c0_i32_0 : i32, i32
  }
  func.func @transform_7(%arg0: i32) -> (i32, i32) {
    %c0_i32 = arith.constant 0 : i32
    %c0_i32_0 = arith.constant 0 : i32
    %c0_i32_1 = arith.constant 0 : i32
    return %c0_i32, %c0_i32_0 : i32, i32
  }
  func.func @transform_8(%arg0: i32) -> (i32, i32) {
    %c0_i32 = arith.constant 0 : i32
    %c0_i32_0 = arith.constant 0 : i32
    %c0_i32_1 = arith.constant 0 : i32
    return %c0_i32, %c0_i32_0 : i32, i32
  }
  func.func @transform_9(%arg0: i32) -> (i32, i32) {
    %c0_i32 = arith.constant 0 : i32
    %c0_i32_0 = arith.constant 0 : i32
    %c0_i32_1 = arith.constant 0 : i32
    return %c0_i32, %c0_i32_0 : i32, i32
  }
  func.func @transform_10(%arg0: i32) -> (i32, i32) {
    %c0_i32 = arith.constant 0 : i32
    %c0_i32_0 = arith.constant 0 : i32
    %c0_i32_1 = arith.constant 0 : i32
    return %c0_i32, %c0_i32_0 : i32, i32
  }
  func.func @transform_11(%arg0: i32) -> (i32, i32) {
    %c0_i32 = arith.constant 0 : i32
    %c0_i32_0 = arith.constant 0 : i32
    %c0_i32_1 = arith.constant 0 : i32
    return %c0_i32, %c0_i32_0 : i32, i32
  }
  func.func @transform_12(%arg0: i32) -> (i32, i32) {
    %c0_i32 = arith.constant 0 : i32
    %c0_i32_0 = arith.constant 0 : i32
    %c0_i32_1 = arith.constant 0 : i32
    return %c0_i32, %c0_i32_0 : i32, i32
  }
  func.func @transform_13(%arg0: i32) -> (i32, i32) {
    %c0_i32 = arith.constant 0 : i32
    %c0_i32_0 = arith.constant 0 : i32
    %c0_i32_1 = arith.constant 0 : i32
    return %c0_i32, %c0_i32_0 : i32, i32
  }
  func.func @transform_14(%arg0: i32) -> (i32, i32) {
    %c0_i32 = arith.constant 0 : i32
    %c0_i32_0 = arith.constant 0 : i32
    %c0_i32_1 = arith.constant 0 : i32
    return %c0_i32, %c0_i32_0 : i32, i32
  }
  func.func @transform_15(%arg0: i32) -> (i32, i32) {
    %c0_i32 = arith.constant 0 : i32
    %c0_i32_0 = arith.constant 0 : i32
    %c0_i32_1 = arith.constant 0 : i32
    return %c0_i32, %c0_i32_0 : i32, i32
  }
  func.func @transform_16(%arg0: i32) -> (i32, i32) {
    %c0_i32 = arith.constant 0 : i32
    %c0_i32_0 = arith.constant 0 : i32
    %c0_i32_1 = arith.constant 0 : i32
    return %c0_i32, %c0_i32_0 : i32, i32
  }
  func.func @transform_17(%arg0: i32) -> (i32, i32) {
    %c0_i32 = arith.constant 0 : i32
    %c0_i32_0 = arith.constant 0 : i32
    %c0_i32_1 = arith.constant 0 : i32
    return %c0_i32, %c0_i32_0 : i32, i32
  }
  func.func @transform_18(%arg0: i32) -> (i32, i32) {
    %c0_i32 = arith.constant 0 : i32
    %c0_i32_0 = arith.constant 0 : i32
    %c0_i32_1 = arith.constant 0 : i32
    return %c0_i32, %c0_i32_0 : i32, i32
  }
  func.func @transform_19(%arg0: i32) -> (i32, i32) {
    %c0_i32 = arith.constant 0 : i32
    %c0_i32_0 = arith.constant 0 : i32
    %c0_i32_1 = arith.constant 0 : i32
    return %c0_i32, %c0_i32_0 : i32, i32
  }
  func.func @transform_20(%arg0: i32) -> (i32, i32) {
    %c0_i32 = arith.constant 0 : i32
    %c0_i32_0 = arith.constant 0 : i32
    %c0_i32_1 = arith.constant 0 : i32
    return %c0_i32, %c0_i32_0 : i32, i32
  }
  func.func @transform_21(%arg0: i32) -> (i32, i32) {
    %c0_i32 = arith.constant 0 : i32
    %c0_i32_0 = arith.constant 0 : i32
    %c0_i32_1 = arith.constant 0 : i32
    return %c0_i32, %c0_i32_0 : i32, i32
  }
  func.func @transform_22(%arg0: i32) -> (i32, i32) {
    %c0_i32 = arith.constant 0 : i32
    %c0_i32_0 = arith.constant 0 : i32
    %c0_i32_1 = arith.constant 0 : i32
    return %c0_i32, %c0_i32_0 : i32, i32
  }
  func.func @transform_23(%arg0: i32) -> (i32, i32) {
    %c0_i32 = arith.constant 0 : i32
    %c0_i32_0 = arith.constant 0 : i32
    %c0_i32_1 = arith.constant 0 : i32
    return %c0_i32, %c0_i32_0 : i32, i32
  }
  func.func @transform_24(%arg0: i32) -> (i32, i32) {
    %c0_i32 = arith.constant 0 : i32
    %c0_i32_0 = arith.constant 0 : i32
    %c0_i32_1 = arith.constant 0 : i32
    return %c0_i32, %c0_i32_0 : i32, i32
  }
  func.func @transform_25(%arg0: i32) -> (i32, i32) {
    %c0_i32 = arith.constant 0 : i32
    %c0_i32_0 = arith.constant 0 : i32
    %c0_i32_1 = arith.constant 0 : i32
    return %c0_i32, %c0_i32_0 : i32, i32
  }
  func.func @transform_26(%arg0: i32) -> (i32, i32) {
    %c0_i32 = arith.constant 0 : i32
    %c0_i32_0 = arith.constant 0 : i32
    %c0_i32_1 = arith.constant 0 : i32
    return %c0_i32, %c0_i32_0 : i32, i32
  }
  func.func @transform_27(%arg0: i32) -> (i32, i32) {
    %c0_i32 = arith.constant 0 : i32
    %c0_i32_0 = arith.constant 0 : i32
    %c0_i32_1 = arith.constant 0 : i32
    return %c0_i32, %c0_i32_0 : i32, i32
  }
  func.func @transform_28(%arg0: i32) -> (i32, i32) {
    %c0_i32 = arith.constant 0 : i32
    %c0_i32_0 = arith.constant 0 : i32
    %c0_i32_1 = arith.constant 0 : i32
    return %c0_i32, %c0_i32_0 : i32, i32
  }
  func.func @transform_29(%arg0: i32) -> (i32, i32) {
    %c0_i32 = arith.constant 0 : i32
    %c0_i32_0 = arith.constant 0 : i32
    %c0_i32_1 = arith.constant 0 : i32
    return %c0_i32, %c0_i32_0 : i32, i32
  }
  func.func @transform_30(%arg0: i32) -> (i32, i32) {
    %c0_i32 = arith.constant 0 : i32
    %c0_i32_0 = arith.constant 0 : i32
    %c0_i32_1 = arith.constant 0 : i32
    return %c0_i32, %c0_i32_0 : i32, i32
  }
  func.func @transform_31(%arg0: i32) -> (i32, i32) {
    %c0_i32 = arith.constant 0 : i32
    %c0_i32_0 = arith.constant 0 : i32
    %c0_i32_1 = arith.constant 0 : i32
    return %c0_i32, %c0_i32_0 : i32, i32
  }
  func.func @transform_32(%arg0: i32) -> (i32, i32) {
    %c0_i32 = arith.constant 0 : i32
    %c0_i32_0 = arith.constant 0 : i32
    %c0_i32_1 = arith.constant 0 : i32
    return %c0_i32, %c0_i32_0 : i32, i32
  }
  func.func @transform_33(%arg0: i32) -> (i32, i32, i32) {
    %c0_i32 = arith.constant 0 : i32
    %c0_i32_0 = arith.constant 0 : i32
    %c0_i32_1 = arith.constant 0 : i32
    return %arg0, %c0_i32, %c0_i32_0 : i32, i32, i32
  }
}

</mosaic_0001>

<llo_original>
// kernel: forward.1
$region0: #{forward.1}
  #allocation0 [shape = 'u32[]', space=smem, size = 0x4, offset = 0x4, fixed_abs, tag = 'smem constant byte address 0x4 - core index']
  #allocation1 [shape = 'u32[72,128]{1,0:T(1,128)}', space=vmem, size = 0x9000, scoped, tag = 'internal scratch']
  %s0 = inlined_call_operand.smem [shape: u32[34], index: -1, kind: input, shape index: {}]
  %s1 = sld [smem:[%s0]]
  %s2 = scalar_lea.smem %s0, 1
  %s3 = sld [smem:[%s2]]
  %s4 = scalar_lea.smem %s0, 2
  %s5 = sld [smem:[%s4]]
  %s6 = scalar_lea.smem %s0, 3
  %s7 = sld [smem:[%s6]]
  %s8 = scalar_lea.smem %s0, 4
  %s9 = sld [smem:[%s8]]
  %s10 = scalar_lea.smem %s0, 5
  %s11 = sld [smem:[%s10]]
  %s12 = scalar_lea.smem %s0, 6
  %s13 = sld [smem:[%s12]]
  %s14 = scalar_lea.smem %s0, 7
  %s15 = sld [smem:[%s14]]
  %s16 = scalar_lea.smem %s0, 8
  %s17 = sld [smem:[%s16]]
  %s18 = scalar_lea.smem %s0, 9
  %s19 = sld [smem:[%s18]]
  %s20 = scalar_lea.smem %s0, 10
  %s21 = sld [smem:[%s20]]
  %s22 = scalar_lea.smem %s0, 11
  %s23 = sld [smem:[%s22]]
  %s24 = scalar_lea.smem %s0, 12
  %s25 = sld [smem:[%s24]]
  %s26 = scalar_lea.smem %s0, 13
  %s27 = sld [smem:[%s26]]
  %s28 = scalar_lea.smem %s0, 14
  %s29 = sld [smem:[%s28]]
  %s30 = scalar_lea.smem %s0, 15
  %s31 = sld [smem:[%s30]]
  %s32 = scalar_lea.smem %s0, 16
  %s33 = sld [smem:[%s32]]
  %s34 = scalar_lea.smem %s0, 17
  %s35 = sld [smem:[%s34]]
  %s36 = scalar_lea.smem %s0, 18
  %s37 = sld [smem:[%s36]]
  %s38 = scalar_lea.smem %s0, 19
  %s39 = sld [smem:[%s38]]
  %s40 = scalar_lea.smem %s0, 20
  %s41 = sld [smem:[%s40]]
  %s42 = scalar_lea.smem %s0, 21
  %s43 = sld [smem:[%s42]]
  %s44 = scalar_lea.smem %s0, 22
  %s45 = sld [smem:[%s44]]
  %s46 = scalar_lea.smem %s0, 23
  %s47 = sld [smem:[%s46]]
  %s48 = scalar_lea.smem %s0, 24
  %s49 = sld [smem:[%s48]]
  %s50 = scalar_lea.smem %s0, 25
  %s51 = sld [smem:[%s50]]
  %s52 = scalar_lea.smem %s0, 26
  %s53 = sld [smem:[%s52]]
  %s54 = scalar_lea.smem %s0, 27
  %s55 = sld [smem:[%s54]]
  %s56 = scalar_lea.smem %s0, 28
  %s57 = sld [smem:[%s56]]
  %s58 = scalar_lea.smem %s0, 29
  %s59 = sld [smem:[%s58]]
  %s60 = scalar_lea.smem %s0, 30
  %s61 = sld [smem:[%s60]]
  %s62 = scalar_lea.smem %s0, 31
  %s63 = sld [smem:[%s62]]
  %s64 = scalar_lea.smem %s0, 32
  %s65 = sld [smem:[%s64]]
  %s66 = scalar_lea.smem %s0, 33
  %s67 = sld [smem:[%s66]]
  %s68 = sld [smem:[#allocation0]]
  $region249: #{forward.1} parent=0
    _
  %s70 = ssub.s32 1, %s68
  %s71 = scalar_select 0, %s70, %s68
  $region1: #{forward.1} parent=0
    #allocation2 [shape = 'u8[512]{0}', space=vmem, size = 0x400, scoped, tag = 'input window, operand 4, single buffered']
    #allocation3 [shape = 's32[2]{0}', space=sflag, size = 0x8, scoped, tag = 'scoped memory for forward.1']
    #allocation4 [shape = 's32[2]{0}', space=sflag, size = 0x8, scoped, tag = 'scoped memory for forward.1']
    #allocation5 [shape = 'u8[512]{0}', space=vmem, size = 0x400, scoped, tag = 'input window, operand 6, single buffered']
    #allocation6 [shape = 's32[1]{0}', space=sflag, size = 0x4, scoped, tag = 'scoped memory for forward.1']
    #allocation7 [shape = 'u8[512]{0}', space=vmem, size = 0x400, scoped, tag = 'input window, operand 8, single buffered']
    #allocation8 [shape = 'u8[512]{0}', space=vmem, size = 0x400, scoped, tag = 'input window, operand 10, single buffered']
    #allocation9 [shape = 's32[1]{0}', space=sflag, size = 0x4, scoped, tag = 'scoped memory for forward.1']
    #allocation10 [shape = 'u8[512]{0}', space=vmem, size = 0x400, scoped, tag = 'input window, operand 12, single buffered']
    #allocation11 [shape = 'u8[512]{0}', space=vmem, size = 0x400, scoped, tag = 'input window, operand 14, single buffered']
    #allocation12 [shape = 's32[1]{0}', space=sflag, size = 0x4, scoped, tag = 'scoped memory for forward.1']
    #allocation13 [shape = 'u8[512]{0}', space=vmem, size = 0x400, scoped, tag = 'input window, operand 16, single buffered']
    #allocation14 [shape = 'u8[16384]{0}', space=vmem, size = 0x4000, scoped, tag = 'input window, operand 17, single buffered']
    #allocation15 [shape = 's32[1]{0}', space=sflag, size = 0x4, scoped, tag = 'scoped memory for forward.1']
    #allocation16 [shape = 'u8[512]{0}', space=vmem, size = 0x400, scoped, tag = 'input window, operand 18, single buffered']
    #allocation17 [shape = 'u8[16384]{0}', space=vmem, size = 0x4000, scoped, tag = 'input window, operand 19, single buffered']
    #allocation18 [shape = 's32[1]{0}', space=sflag, size = 0x4, scoped, tag = 'scoped memory for forward.1']
    #allocation19 [shape = 'u8[512]{0}', space=vmem, size = 0x400, scoped, tag = 'input window, operand 20, single buffered']
    #allocation20 [shape = 'u8[16384]{0}', space=vmem, size = 0x4000, scoped, tag = 'input window, operand 21, single buffered']
    #allocation21 [shape = 's32[1]{0}', space=sflag, size = 0x4, scoped, tag = 'scoped memory for forward.1']
    #allocation22 [shape = 'u8[512]{0}', space=vmem, size = 0x400, scoped, tag = 'input window, operand 22, single buffered']
    #allocation23 [shape = 'u8[16384]{0}', space=vmem, size = 0x4000, scoped, tag = 'input window, operand 23, single buffered']
    #allocation24 [shape = 's32[1]{0}', space=sflag, size = 0x4, scoped, tag = 'scoped memory for forward.1']
    #allocation25 [shape = 'u8[512]{0}', space=vmem, size = 0x400, scoped, tag = 'input window, operand 24, single buffered']
    #allocation26 [shape = 'u8[131072]{0}', space=vmem, size = 0x20000, scoped, tag = 'input window, operand 25, single buffered']
    #allocation27 [shape = 's32[1]{0}', space=sflag, size = 0x4, scoped, tag = 'scoped memory for forward.1']
    #allocation28 [shape = 'u8[4096]{0}', space=vmem, size = 0x1000, scoped, tag = 'input window, operand 26, single buffered']
    #allocation29 [shape = 'u8[2097152]{0}', space=vmem, size = 0x200000, scoped, tag = 'input window, operand 27, single buffered']
    #allocation30 [shape = 's32[1]{0}', space=sflag, size = 0x4, scoped, tag = 'scoped memory for forward.1']
    #allocation31 [shape = 'u8[4096]{0}', space=vmem, size = 0x1000, scoped, tag = 'input window, operand 28, single buffered']
    #allocation32 [shape = 'u8[1048576]{0}', space=vmem, size = 0x100000, scoped, tag = 'input window, operand 29, single buffered']
    #allocation33 [shape = 's32[1]{0}', space=sflag, size = 0x4, scoped, tag = 'scoped memory for forward.1']
    #allocation34 [shape = 'u8[2048]{0}', space=vmem, size = 0x800, scoped, tag = 'input window, operand 30, single buffered']
    #allocation35 [shape = 'u8[1024]{0}', space=vmem, size = 0x400, scoped, tag = 'output window, operand 0']
    %72 = vsyncpa [#allocation3], 0
    %73 = vsyncpa [#allocation6], 0
    %74 = vsyncpa [#allocation9], 0
    %75 = vsyncpa [#allocation12], 0
    %76 = vsyncpa [#allocation15], 0
    %77 = vsyncpa [#allocation18], 0
    %78 = vsyncpa [#allocation21], 0
    %79 = vsyncpa [#allocation24], 0
    %80 = vsyncpa [#allocation27], 0
    %81 = vsyncpa [#allocation30], 0
    %82 = vsyncpa [#allocation33], 0
    %83 = vsyncpa [#allocation4], 0
    %s84 = scalar_lea.sflag [#allocation4], 1
    %85 = vsyncpa %s84, 0
    loop: start=0, step=1, limit=4
    $region2: #{forward.1} parent=1 // loop_pre_header
      _
    $region3: #{forward.1} parent=1 // loop_header
      %s87 = sphi 0, %s91
      %p88 = scmp.ge.s32.totalorder %s87, 4
      %s97 = sphi 0, %s99
      %s100 = sphi 0, %s97
      %s101 = sphi 0, %s100
      %s117 = sphi 0, %s101
      %s123 = sphi 0, %s125
      %s126 = sphi 0, %s123
      %s127 = sphi 0, %s126
      %s143 = sphi 0, %s127
      %s149 = sphi 0, %s151
      %s152 = sphi 0, %s149
      %s153 = sphi 0, %s152
      %s169 = sphi 0, %s153
      %s173 = sphi 0, %s173
      %s175 = sphi 0, %s173
      %s176 = sphi 0, %s175
      %s190 = sphi 0, %s176
      %s194 = sphi 0, %s194
      %s196 = sphi 0, %s194
      %s197 = sphi 0, %s196
      %s211 = sphi 0, %s197
      %s215 = sphi 0, %s215
      %s217 = sphi 0, %s215
      %s218 = sphi 0, %s217
      %s232 = sphi 0, %s218
      %s236 = sphi 0, %s236
      %s238 = sphi 0, %s236
      %s239 = sphi 0, %s238
      %s253 = sphi 0, %s239
      %s257 = sphi 0, %s257
      %s259 = sphi 0, %s257
      %s260 = sphi 0, %s259
      %s274 = sphi 0, %s260
      %s278 = sphi 0, %s278
      %s280 = sphi 0, %s278
      %s281 = sphi 0, %s280
      %s295 = sphi 0, %s281
      %s299 = sphi 0, %s299
      %s301 = sphi 0, %s299
      %s302 = sphi 0, %s301
      %s316 = sphi 0, %s302
      %s320 = sphi 0, %s320
      %s322 = sphi 0, %s320
      %s323 = sphi 0, %s322
      %s337 = sphi 0, %s323
      %s341 = sphi 0, %s341
      %s343 = sphi 0, %s341
      %s344 = sphi 0, %s343
      %s358 = sphi 0, %s344
      %s362 = sphi 0, %s362
      %s364 = sphi 0, %s362
      %s365 = sphi 0, %s364
      %s379 = sphi 0, %s365
      %s383 = sphi 0, %s383
      %s385 = sphi 0, %s383
      %s386 = sphi 0, %s385
      %s400 = sphi 0, %s386
      %s404 = sphi 0, %s404
      %s406 = sphi 0, %s404
      %s407 = sphi 0, %s406
      %s421 = sphi 0, %s407
      %s425 = sphi 0, %s425
      %s427 = sphi 0, %s425
      %s428 = sphi 0, %s427
      %s442 = sphi 0, %s428
      %s446 = sphi 0, %s446
      %s448 = sphi 0, %s446
      %s449 = sphi 0, %s448
      %s463 = sphi 0, %s449
      %s467 = sphi 0, %s467
      %s469 = sphi 0, %s467
      %s470 = sphi 0, %s469
      %s484 = sphi 0, %s470
      %s488 = sphi 0, %s488
      %s490 = sphi 0, %s488
      %s491 = sphi 0, %s490
      %s505 = sphi 0, %s491
      %s509 = sphi 0, %s509
      %s511 = sphi 0, %s509
      %s512 = sphi 0, %s511
      %s526 = sphi 0, %s512
      %s530 = sphi 0, %s530
      %s532 = sphi 0, %s530
      %s533 = sphi 0, %s532
      %s547 = sphi 0, %s533
      %s551 = sphi 0, %s551
      %s553 = sphi 0, %s551
      %s554 = sphi 0, %s553
      %s568 = sphi 0, %s554
      %s572 = sphi 0, %s572
      %s574 = sphi 0, %s572
      %s575 = sphi 0, %s574
      %s589 = sphi 0, %s575
      %s593 = sphi 0, %s593
      %s595 = sphi 0, %s593
      %s596 = sphi 0, %s595
      %s610 = sphi 0, %s596
      %s614 = sphi 0, %s614
      %s616 = sphi 0, %s614
      %s617 = sphi 0, %s616
      %s631 = sphi 0, %s617
      %s635 = sphi 0, %s635
      %s637 = sphi 0, %s635
      %s638 = sphi 0, %s637
      %s652 = sphi 0, %s638
      %s656 = sphi 0, %s656
      %s658 = sphi 0, %s656
      %s659 = sphi 0, %s658
      %s673 = sphi 0, %s659
      %s677 = sphi 0, %s677
      %s679 = sphi 0, %s677
      %s680 = sphi 0, %s679
      %s694 = sphi 0, %s680
      %s698 = sphi 0, %s698
      %s700 = sphi 0, %s698
      %s701 = sphi 0, %s700
      %s715 = sphi 0, %s701
      %s719 = sphi 0, %s719
      %s721 = sphi 0, %s719
      %s722 = sphi 0, %s721
      %s736 = sphi 0, %s722
      %s740 = sphi 0, %s740
      %s742 = sphi 0, %s740
      %s743 = sphi 0, %s742
      %s757 = sphi 0, %s743
      %s761 = sphi 0, %s761
      %s763 = sphi 0, %s761
      %s764 = sphi 0, %s763
      %s778 = sphi 0, %s764
      %s782 = sphi 0, %s782
      %s784 = sphi 0, %s782
      %s785 = sphi 0, %s784
      %s799 = sphi 0, %s785
      %s805 = sphi 0, %s807
      %s808 = sphi 0, %s805
      %s809 = sphi 0, %s808
      %s825 = sphi 0, %s809
    $region4: #{forward.1} parent=1 // loop_header_branch
      %90 = sbr.rel (%p88) target = $region8
    $region5: #{forward.1} parent=1 // loop_body
      %s92 = ssub.s32 %s87, 1
      %s93 = ssub.s32 %s87, 2
      %s94 = sadd.s32 %s87, 1
      %s95 = ssub.s32 %s87, %s94
      %p96 = scmp.eq.s32.totalorder %s95, 0
      %s98 = sadd.s32 %s97, 1
      %s99 = scalar_select %p96, %s97, %s98
      %p102 = pneg %p96
      %p103 = scmp.eq.s32.totalorder %s87, 1
      %p104 = por %p102, %p103
      %p105 = scmp.ne.s32.totalorder %s97, %s100
      %p106 = scmp.eq.s32.totalorder %s87, 0
      %p107 = por %p105, %p106
      %p108 = scmp.ne.s32.totalorder %s97, %s100
      %p109 = scmp.eq.s32.totalorder %s92, 1
      %p110 = por %p108, %p109
      %p111 = scmp.ne.s32.totalorder %s100, %s101
      %p112 = scmp.eq.s32.totalorder %s92, 0
      %p113 = por %p111, %p112
      %p114 = scmp.ne.s32.totalorder %s100, %s101
      %p115 = scmp.eq.s32.totalorder %s93, 1
      %p116 = por %p114, %p115
      %p118 = scmp.ne.s32.totalorder %s101, %s117
      %p119 = scmp.eq.s32.totalorder %s93, 0
      %p120 = por %p118, %p119
      %s121 = ssub.s32 %s87, %s94
      %p122 = scmp.eq.s32.totalorder %s121, 0
      %s124 = sadd.s32 %s123, 1
      %s125 = scalar_select %p122, %s123, %s124
      %p128 = pneg %p122
      %p129 = scmp.eq.s32.totalorder %s87, 1
      %p130 = por %p128, %p129
      %p131 = scmp.ne.s32.totalorder %s123, %s126
      %p132 = scmp.eq.s32.totalorder %s87, 0
      %p133 = por %p131, %p132
      %p134 = scmp.ne.s32.totalorder %s123, %s126
      %p135 = scmp.eq.s32.totalorder %s92, 1
      %p136 = por %p134, %p135
      %p137 = scmp.ne.s32.totalorder %s126, %s127
      %p138 = scmp.eq.s32.totalorder %s92, 0
      %p139 = por %p137, %p138
      %p140 = scmp.ne.s32.totalorder %s126, %s127
      %p141 = scmp.eq.s32.totalorder %s93, 1
      %p142 = por %p140, %p141
      %p144 = scmp.ne.s32.totalorder %s127, %s143
      %p145 = scmp.eq.s32.totalorder %s93, 0
      %p146 = por %p144, %p145
      %s147 = ssub.s32 %s87, %s94
      %p148 = scmp.eq.s32.totalorder %s147, 0
      %s150 = sadd.s32 %s149, 1
      %s151 = scalar_select %p148, %s149, %s150
      %p154 = pneg %p148
      %p155 = scmp.eq.s32.totalorder %s87, 1
      %p156 = por %p154, %p155
      %p157 = scmp.ne.s32.totalorder %s149, %s152
      %p158 = scmp.eq.s32.totalorder %s87, 0
      %p159 = por %p157, %p158
      %p160 = scmp.ne.s32.totalorder %s149, %s152
      %p161 = scmp.eq.s32.totalorder %s92, 1
      %p162 = por %p160, %p161
      %p163 = scmp.ne.s32.totalorder %s152, %s153
      %p164 = scmp.eq.s32.totalorder %s92, 0
      %p165 = por %p163, %p164
      %p166 = scmp.ne.s32.totalorder %s152, %s153
      %p167 = scmp.eq.s32.totalorder %s93, 1
      %p168 = por %p166, %p167
      %p170 = scmp.ne.s32.totalorder %s153, %s169
      %p171 = scmp.eq.s32.totalorder %s93, 0
      %p172 = por %p170, %p171
      %s174 = sadd.s32 %s173, 1
      %p177 = scmp.eq.s32.totalorder %s87, 1
      %p178 = scmp.ne.s32.totalorder %s173, %s175
      %p179 = scmp.eq.s32.totalorder %s87, 0
      %p180 = por %p178, %p179
      %p181 = scmp.ne.s32.totalorder %s173, %s175
      %p182 = scmp.eq.s32.totalorder %s92, 1
      %p183 = por %p181, %p182
      %p184 = scmp.ne.s32.totalorder %s175, %s176
      %p185 = scmp.eq.s32.totalorder %s92, 0
      %p186 = por %p184, %p185
      %p187 = scmp.ne.s32.totalorder %s175, %s176
      %p188 = scmp.eq.s32.totalorder %s93, 1
      %p189 = por %p187, %p188
      %p191 = scmp.ne.s32.totalorder %s176, %s190
      %p192 = scmp.eq.s32.totalorder %s93, 0
      %p193 = por %p191, %p192
      %s195 = sadd.s32 %s194, 1
      %p198 = scmp.eq.s32.totalorder %s87, 1
      %p199 = scmp.ne.s32.totalorder %s194, %s196
      %p200 = scmp.eq.s32.totalorder %s87, 0
      %p201 = por %p199, %p200
      %p202 = scmp.ne.s32.totalorder %s194, %s196
      %p203 = scmp.eq.s32.totalorder %s92, 1
      %p204 = por %p202, %p203
      %p205 = scmp.ne.s32.totalorder %s196, %s197
      %p206 = scmp.eq.s32.totalorder %s92, 0
      %p207 = por %p205, %p206
      %p208 = scmp.ne.s32.totalorder %s196, %s197
      %p209 = scmp.eq.s32.totalorder %s93, 1
      %p210 = por %p208, %p209
      %p212 = scmp.ne.s32.totalorder %s197, %s211
      %p213 = scmp.eq.s32.totalorder %s93, 0
      %p214 = por %p212, %p213
      %s216 = sadd.s32 %s215, 1
      %p219 = scmp.eq.s32.totalorder %s87, 1
      %p220 = scmp.ne.s32.totalorder %s215, %s217
      %p221 = scmp.eq.s32.totalorder %s87, 0
      %p222 = por %p220, %p221
      %p223 = scmp.ne.s32.totalorder %s215, %s217
      %p224 = scmp.eq.s32.totalorder %s92, 1
      %p225 = por %p223, %p224
      %p226 = scmp.ne.s32.totalorder %s217, %s218
      %p227 = scmp.eq.s32.totalorder %s92, 0
      %p228 = por %p226, %p227
      %p229 = scmp.ne.s32.totalorder %s217, %s218
      %p230 = scmp.eq.s32.totalorder %s93, 1
      %p231 = por %p229, %p230
      %p233 = scmp.ne.s32.totalorder %s218, %s232
      %p234 = scmp.eq.s32.totalorder %s93, 0
      %p235 = por %p233, %p234
      %s237 = sadd.s32 %s236, 1
      %p240 = scmp.eq.s32.totalorder %s87, 1
      %p241 = scmp.ne.s32.totalorder %s236, %s238
      %p242 = scmp.eq.s32.totalorder %s87, 0
      %p243 = por %p241, %p242
      %p244 = scmp.ne.s32.totalorder %s236, %s238
      %p245 = scmp.eq.s32.totalorder %s92, 1
      %p246 = por %p244, %p245
      %p247 = scmp.ne.s32.totalorder %s238, %s239
      %p248 = scmp.eq.s32.totalorder %s92, 0
      %p249 = por %p247, %p248
      %p250 = scmp.ne.s32.totalorder %s238, %s239
      %p251 = scmp.eq.s32.totalorder %s93, 1
      %p252 = por %p250, %p251
      %p254 = scmp.ne.s32.totalorder %s239, %s253
      %p255 = scmp.eq.s32.totalorder %s93, 0
      %p256 = por %p254, %p255
      %s258 = sadd.s32 %s257, 1
      %p261 = scmp.eq.s32.totalorder %s87, 1
      %p262 = scmp.ne.s32.totalorder %s257, %s259
      %p263 = scmp.eq.s32.totalorder %s87, 0
      %p264 = por %p262, %p263
      %p265 = scmp.ne.s32.totalorder %s257, %s259
      %p266 = scmp.eq.s32.totalorder %s92, 1
      %p267 = por %p265, %p266
      %p268 = scmp.ne.s32.totalorder %s259, %s260
      %p269 = scmp.eq.s32.totalorder %s92, 0
      %p270 = por %p268, %p269
      %p271 = scmp.ne.s32.totalorder %s259, %s260
      %p272 = scmp.eq.s32.totalorder %s93, 1
      %p273 = por %p271, %p272
      %p275 = scmp.ne.s32.totalorder %s260, %s274
      %p276 = scmp.eq.s32.totalorder %s93, 0
      %p277 = por %p275, %p276
      %s279 = sadd.s32 %s278, 1
      %p282 = scmp.eq.s32.totalorder %s87, 1
      %p283 = scmp.ne.s32.totalorder %s278, %s280
      %p284 = scmp.eq.s32.totalorder %s87, 0
      %p285 = por %p283, %p284
      %p286 = scmp.ne.s32.totalorder %s278, %s280
      %p287 = scmp.eq.s32.totalorder %s92, 1
      %p288 = por %p286, %p287
      %p289 = scmp.ne.s32.totalorder %s280, %s281
      %p290 = scmp.eq.s32.totalorder %s92, 0
      %p291 = por %p289, %p290
      %p292 = scmp.ne.s32.totalorder %s280, %s281
      %p293 = scmp.eq.s32.totalorder %s93, 1
      %p294 = por %p292, %p293
      %p296 = scmp.ne.s32.totalorder %s281, %s295
      %p297 = scmp.eq.s32.totalorder %s93, 0
      %p298 = por %p296, %p297
      %s300 = sadd.s32 %s299, 1
      %p303 = scmp.eq.s32.totalorder %s87, 1
      %p304 = scmp.ne.s32.totalorder %s299, %s301
      %p305 = scmp.eq.s32.totalorder %s87, 0
      %p306 = por %p304, %p305
      %p307 = scmp.ne.s32.totalorder %s299, %s301
      %p308 = scmp.eq.s32.totalorder %s92, 1
      %p309 = por %p307, %p308
      %p310 = scmp.ne.s32.totalorder %s301, %s302
      %p311 = scmp.eq.s32.totalorder %s92, 0
      %p312 = por %p310, %p311
      %p313 = scmp.ne.s32.totalorder %s301, %s302
      %p314 = scmp.eq.s32.totalorder %s93, 1
      %p315 = por %p313, %p314
      %p317 = scmp.ne.s32.totalorder %s302, %s316
      %p318 = scmp.eq.s32.totalorder %s93, 0
      %p319 = por %p317, %p318
      %s321 = sadd.s32 %s320, 1
      %p324 = scmp.eq.s32.totalorder %s87, 1
      %p325 = scmp.ne.s32.totalorder %s320, %s322
      %p326 = scmp.eq.s32.totalorder %s87, 0
      %p327 = por %p325, %p326
      %p328 = scmp.ne.s32.totalorder %s320, %s322
      %p329 = scmp.eq.s32.totalorder %s92, 1
      %p330 = por %p328, %p329
      %p331 = scmp.ne.s32.totalorder %s322, %s323
      %p332 = scmp.eq.s32.totalorder %s92, 0
      %p333 = por %p331, %p332
      %p334 = scmp.ne.s32.totalorder %s322, %s323
      %p335 = scmp.eq.s32.totalorder %s93, 1
      %p336 = por %p334, %p335
      %p338 = scmp.ne.s32.totalorder %s323, %s337
      %p339 = scmp.eq.s32.totalorder %s93, 0
      %p340 = por %p338, %p339
      %s342 = sadd.s32 %s341, 1
      %p345 = scmp.eq.s32.totalorder %s87, 1
      %p346 = scmp.ne.s32.totalorder %s341, %s343
      %p347 = scmp.eq.s32.totalorder %s87, 0
      %p348 = por %p346, %p347
      %p349 = scmp.ne.s32.totalorder %s341, %s343
      %p350 = scmp.eq.s32.totalorder %s92, 1
      %p351 = por %p349, %p350
      %p352 = scmp.ne.s32.totalorder %s343, %s344
      %p353 = scmp.eq.s32.totalorder %s92, 0
      %p354 = por %p352, %p353
      %p355 = scmp.ne.s32.totalorder %s343, %s344
      %p356 = scmp.eq.s32.totalorder %s93, 1
      %p357 = por %p355, %p356
      %p359 = scmp.ne.s32.totalorder %s344, %s358
      %p360 = scmp.eq.s32.totalorder %s93, 0
      %p361 = por %p359, %p360
      %s363 = sadd.s32 %s362, 1
      %p366 = scmp.eq.s32.totalorder %s87, 1
      %p367 = scmp.ne.s32.totalorder %s362, %s364
      %p368 = scmp.eq.s32.totalorder %s87, 0
      %p369 = por %p367, %p368
      %p370 = scmp.ne.s32.totalorder %s362, %s364
      %p371 = scmp.eq.s32.totalorder %s92, 1
      %p372 = por %p370, %p371
      %p373 = scmp.ne.s32.totalorder %s364, %s365
      %p374 = scmp.eq.s32.totalorder %s92, 0
      %p375 = por %p373, %p374
      %p376 = scmp.ne.s32.totalorder %s364, %s365
      %p377 = scmp.eq.s32.totalorder %s93, 1
      %p378 = por %p376, %p377
      %p380 = scmp.ne.s32.totalorder %s365, %s379
      %p381 = scmp.eq.s32.totalorder %s93, 0
      %p382 = por %p380, %p381
      %s384 = sadd.s32 %s383, 1
      %p387 = scmp.eq.s32.totalorder %s87, 1
      %p388 = scmp.ne.s32.totalorder %s383, %s385
      %p389 = scmp.eq.s32.totalorder %s87, 0
      %p390 = por %p388, %p389
      %p391 = scmp.ne.s32.totalorder %s383, %s385
      %p392 = scmp.eq.s32.totalorder %s92, 1
      %p393 = por %p391, %p392
      %p394 = scmp.ne.s32.totalorder %s385, %s386
      %p395 = scmp.eq.s32.totalorder %s92, 0
      %p396 = por %p394, %p395
      %p397 = scmp.ne.s32.totalorder %s385, %s386
      %p398 = scmp.eq.s32.totalorder %s93, 1
      %p399 = por %p397, %p398
      %p401 = scmp.ne.s32.totalorder %s386, %s400
      %p402 = scmp.eq.s32.totalorder %s93, 0
      %p403 = por %p401, %p402
      %s405 = sadd.s32 %s404, 1
      %p408 = scmp.eq.s32.totalorder %s87, 1
      %p409 = scmp.ne.s32.totalorder %s404, %s406
      %p410 = scmp.eq.s32.totalorder %s87, 0
      %p411 = por %p409, %p410
      %p412 = scmp.ne.s32.totalorder %s404, %s406
      %p413 = scmp.eq.s32.totalorder %s92, 1
      %p414 = por %p412, %p413
      %p415 = scmp.ne.s32.totalorder %s406, %s407
      %p416 = scmp.eq.s32.totalorder %s92, 0
      %p417 = por %p415, %p416
      %p418 = scmp.ne.s32.totalorder %s406, %s407
      %p419 = scmp.eq.s32.totalorder %s93, 1
      %p420 = por %p418, %p419
      %p422 = scmp.ne.s32.totalorder %s407, %s421
      %p423 = scmp.eq.s32.totalorder %s93, 0
      %p424 = por %p422, %p423
      %s426 = sadd.s32 %s425, 1
      %p429 = scmp.eq.s32.totalorder %s87, 1
      %p430 = scmp.ne.s32.totalorder %s425, %s427
      %p431 = scmp.eq.s32.totalorder %s87, 0
      %p432 = por %p430, %p431
      %p433 = scmp.ne.s32.totalorder %s425, %s427
      %p434 = scmp.eq.s32.totalorder %s92, 1
      %p435 = por %p433, %p434
      %p436 = scmp.ne.s32.totalorder %s427, %s428
      %p437 = scmp.eq.s32.totalorder %s92, 0
      %p438 = por %p436, %p437
      %p439 = scmp.ne.s32.totalorder %s427, %s428
      %p440 = scmp.eq.s32.totalorder %s93, 1
      %p441 = por %p439, %p440
      %p443 = scmp.ne.s32.totalorder %s428, %s442
      %p444 = scmp.eq.s32.totalorder %s93, 0
      %p445 = por %p443, %p444
      %s447 = sadd.s32 %s446, 1
      %p450 = scmp.eq.s32.totalorder %s87, 1
      %p451 = scmp.ne.s32.totalorder %s446, %s448
      %p452 = scmp.eq.s32.totalorder %s87, 0
      %p453 = por %p451, %p452
      %p454 = scmp.ne.s32.totalorder %s446, %s448
      %p455 = scmp.eq.s32.totalorder %s92, 1
      %p456 = por %p454, %p455
      %p457 = scmp.ne.s32.totalorder %s448, %s449
      %p458 = scmp.eq.s32.totalorder %s92, 0
      %p459 = por %p457, %p458
      %p460 = scmp.ne.s32.totalorder %s448, %s449
      %p461 = scmp.eq.s32.totalorder %s93, 1
      %p462 = por %p460, %p461
      %p464 = scmp.ne.s32.totalorder %s449, %s463
      %p465 = scmp.eq.s32.totalorder %s93, 0
      %p466 = por %p464, %p465
      %s468 = sadd.s32 %s467, 1
      %p471 = scmp.eq.s32.totalorder %s87, 1
      %p472 = scmp.ne.s32.totalorder %s467, %s469
      %p473 = scmp.eq.s32.totalorder %s87, 0
      %p474 = por %p472, %p473
      %p475 = scmp.ne.s32.totalorder %s467, %s469
      %p476 = scmp.eq.s32.totalorder %s92, 1
      %p477 = por %p475, %p476
      %p478 = scmp.ne.s32.totalorder %s469, %s470
      %p479 = scmp.eq.s32.totalorder %s92, 0
      %p480 = por %p478, %p479
      %p481 = scmp.ne.s32.totalorder %s469, %s470
      %p482 = scmp.eq.s32.totalorder %s93, 1
      %p483 = por %p481, %p482
      %p485 = scmp.ne.s32.totalorder %s470, %s484
      %p486 = scmp.eq.s32.totalorder %s93, 0
      %p487 = por %p485, %p486
      %s489 = sadd.s32 %s488, 1
      %p492 = scmp.eq.s32.totalorder %s87, 1
      %p493 = scmp.ne.s32.totalorder %s488, %s490
      %p494 = scmp.eq.s32.totalorder %s87, 0
      %p495 = por %p493, %p494
      %p496 = scmp.ne.s32.totalorder %s488, %s490
      %p497 = scmp.eq.s32.totalorder %s92, 1
      %p498 = por %p496, %p497
      %p499 = scmp.ne.s32.totalorder %s490, %s491
      %p500 = scmp.eq.s32.totalorder %s92, 0
      %p501 = por %p499, %p500
      %p502 = scmp.ne.s32.totalorder %s490, %s491
      %p503 = scmp.eq.s32.totalorder %s93, 1
      %p504 = por %p502, %p503
      %p506 = scmp.ne.s32.totalorder %s491, %s505
      %p507 = scmp.eq.s32.totalorder %s93, 0
      %p508 = por %p506, %p507
      %s510 = sadd.s32 %s509, 1
      %p513 = scmp.eq.s32.totalorder %s87, 1
      %p514 = scmp.ne.s32.totalorder %s509, %s511
      %p515 = scmp.eq.s32.totalorder %s87, 0
      %p516 = por %p514, %p515
      %p517 = scmp.ne.s32.totalorder %s509, %s511
      %p518 = scmp.eq.s32.totalorder %s92, 1
      %p519 = por %p517, %p518
      %p520 = scmp.ne.s32.totalorder %s511, %s512
      %p521 = scmp.eq.s32.totalorder %s92, 0
      %p522 = por %p520, %p521
      %p523 = scmp.ne.s32.totalorder %s511, %s512
      %p524 = scmp.eq.s32.totalorder %s93, 1
      %p525 = por %p523, %p524
      %p527 = scmp.ne.s32.totalorder %s512, %s526
      %p528 = scmp.eq.s32.totalorder %s93, 0
      %p529 = por %p527, %p528
      %s531 = sadd.s32 %s530, 1
      %p534 = scmp.eq.s32.totalorder %s87, 1
      %p535 = scmp.ne.s32.totalorder %s530, %s532
      %p536 = scmp.eq.s32.totalorder %s87, 0
      %p537 = por %p535, %p536
      %p538 = scmp.ne.s32.totalorder %s530, %s532
      %p539 = scmp.eq.s32.totalorder %s92, 1
      %p540 = por %p538, %p539
      %p541 = scmp.ne.s32.totalorder %s532, %s533
      %p542 = scmp.eq.s32.totalorder %s92, 0
      %p543 = por %p541, %p542
      %p544 = scmp.ne.s32.totalorder %s532, %s533
      %p545 = scmp.eq.s32.totalorder %s93, 1
      %p546 = por %p544, %p545
      %p548 = scmp.ne.s32.totalorder %s533, %s547
      %p549 = scmp.eq.s32.totalorder %s93, 0
      %p550 = por %p548, %p549
      %s552 = sadd.s32 %s551, 1
      %p555 = scmp.eq.s32.totalorder %s87, 1
      %p556 = scmp.ne.s32.totalorder %s551, %s553
      %p557 = scmp.eq.s32.totalorder %s87, 0
      %p558 = por %p556, %p557
      %p559 = scmp.ne.s32.totalorder %s551, %s553
      %p560 = scmp.eq.s32.totalorder %s92, 1
      %p561 = por %p559, %p560
      %p562 = scmp.ne.s32.totalorder %s553, %s554
      %p563 = scmp.eq.s32.totalorder %s92, 0
      %p564 = por %p562, %p563
      %p565 = scmp.ne.s32.totalorder %s553, %s554
      %p566 = scmp.eq.s32.totalorder %s93, 1
      %p567 = por %p565, %p566
      %p569 = scmp.ne.s32.totalorder %s554, %s568
      %p570 = scmp.eq.s32.totalorder %s93, 0
      %p571 = por %p569, %p570
      %s573 = sadd.s32 %s572, 1
      %p576 = scmp.eq.s32.totalorder %s87, 1
      %p577 = scmp.ne.s32.totalorder %s572, %s574
      %p578 = scmp.eq.s32.totalorder %s87, 0
      %p579 = por %p577, %p578
      %p580 = scmp.ne.s32.totalorder %s572, %s574
      %p581 = scmp.eq.s32.totalorder %s92, 1
      %p582 = por %p580, %p581
      %p583 = scmp.ne.s32.totalorder %s574, %s575
      %p584 = scmp.eq.s32.totalorder %s92, 0
      %p585 = por %p583, %p584
      %p586 = scmp.ne.s32.totalorder %s574, %s575
      %p587 = scmp.eq.s32.totalorder %s93, 1
      %p588 = por %p586, %p587
      %p590 = scmp.ne.s32.totalorder %s575, %s589
      %p591 = scmp.eq.s32.totalorder %s93, 0
      %p592 = por %p590, %p591
      %s594 = sadd.s32 %s593, 1
      %p597 = scmp.eq.s32.totalorder %s87, 1
      %p598 = scmp.ne.s32.totalorder %s593, %s595
      %p599 = scmp.eq.s32.totalorder %s87, 0
      %p600 = por %p598, %p599
      %p601 = scmp.ne.s32.totalorder %s593, %s595
      %p602 = scmp.eq.s32.totalorder %s92, 1
      %p603 = por %p601, %p602
      %p604 = scmp.ne.s32.totalorder %s595, %s596
      %p605 = scmp.eq.s32.totalorder %s92, 0
      %p606 = por %p604, %p605
      %p607 = scmp.ne.s32.totalorder %s595, %s596
      %p608 = scmp.eq.s32.totalorder %s93, 1
      %p609 = por %p607, %p608
      %p611 = scmp.ne.s32.totalorder %s596, %s610
      %p612 = scmp.eq.s32.totalorder %s93, 0
      %p613 = por %p611, %p612
      %s615 = sadd.s32 %s614, 1
      %p618 = scmp.eq.s32.totalorder %s87, 1
      %p619 = scmp.ne.s32.totalorder %s614, %s616
      %p620 = scmp.eq.s32.totalorder %s87, 0
      %p621 = por %p619, %p620
      %p622 = scmp.ne.s32.totalorder %s614, %s616
      %p623 = scmp.eq.s32.totalorder %s92, 1
      %p624 = por %p622, %p623
      %p625 = scmp.ne.s32.totalorder %s616, %s617
      %p626 = scmp.eq.s32.totalorder %s92, 0
      %p627 = por %p625, %p626
      %p628 = scmp.ne.s32.totalorder %s616, %s617
      %p629 = scmp.eq.s32.totalorder %s93, 1
      %p630 = por %p628, %p629
      %p632 = scmp.ne.s32.totalorder %s617, %s631
      %p633 = scmp.eq.s32.totalorder %s93, 0
      %p634 = por %p632, %p633
      %s636 = sadd.s32 %s635, 1
      %p639 = scmp.eq.s32.totalorder %s87, 1
      %p640 = scmp.ne.s32.totalorder %s635, %s637
      %p641 = scmp.eq.s32.totalorder %s87, 0
      %p642 = por %p640, %p641
      %p643 = scmp.ne.s32.totalorder %s635, %s637
      %p644 = scmp.eq.s32.totalorder %s92, 1
      %p645 = por %p643, %p644
      %p646 = scmp.ne.s32.totalorder %s637, %s638
      %p647 = scmp.eq.s32.totalorder %s92, 0
      %p648 = por %p646, %p647
      %p649 = scmp.ne.s32.totalorder %s637, %s638
      %p650 = scmp.eq.s32.totalorder %s93, 1
      %p651 = por %p649, %p650
      %p653 = scmp.ne.s32.totalorder %s638, %s652
      %p654 = scmp.eq.s32.totalorder %s93, 0
      %p655 = por %p653, %p654
      %s657 = sadd.s32 %s656, 1
      %p660 = scmp.eq.s32.totalorder %s87, 1
      %p661 = scmp.ne.s32.totalorder %s656, %s658
      %p662 = scmp.eq.s32.totalorder %s87, 0
      %p663 = por %p661, %p662
      %p664 = scmp.ne.s32.totalorder %s656, %s658
      %p665 = scmp.eq.s32.totalorder %s92, 1
      %p666 = por %p664, %p665
      %p667 = scmp.ne.s32.totalorder %s658, %s659
      %p668 = scmp.eq.s32.totalorder %s92, 0
      %p669 = por %p667, %p668
      %p670 = scmp.ne.s32.totalorder %s658, %s659
      %p671 = scmp.eq.s32.totalorder %s93, 1
      %p672 = por %p670, %p671
      %p674 = scmp.ne.s32.totalorder %s659, %s673
      %p675 = scmp.eq.s32.totalorder %s93, 0
      %p676 = por %p674, %p675
      %s678 = sadd.s32 %s677, 1
      %p681 = scmp.eq.s32.totalorder %s87, 1
      %p682 = scmp.ne.s32.totalorder %s677, %s679
      %p683 = scmp.eq.s32.totalorder %s87, 0
      %p684 = por %p682, %p683
      %p685 = scmp.ne.s32.totalorder %s677, %s679
      %p686 = scmp.eq.s32.totalorder %s92, 1
      %p687 = por %p685, %p686
      %p688 = scmp.ne.s32.totalorder %s679, %s680
      %p689 = scmp.eq.s32.totalorder %s92, 0
      %p690 = por %p688, %p689
      %p691 = scmp.ne.s32.totalorder %s679, %s680
      %p692 = scmp.eq.s32.totalorder %s93, 1
      %p693 = por %p691, %p692
      %p695 = scmp.ne.s32.totalorder %s680, %s694
      %p696 = scmp.eq.s32.totalorder %s93, 0
      %p697 = por %p695, %p696
      %s699 = sadd.s32 %s698, 1
      %p702 = scmp.eq.s32.totalorder %s87, 1
      %p703 = scmp.ne.s32.totalorder %s698, %s700
      %p704 = scmp.eq.s32.totalorder %s87, 0
      %p705 = por %p703, %p704
      %p706 = scmp.ne.s32.totalorder %s698, %s700
      %p707 = scmp.eq.s32.totalorder %s92, 1
      %p708 = por %p706, %p707
      %p709 = scmp.ne.s32.totalorder %s700, %s701
      %p710 = scmp.eq.s32.totalorder %s92, 0
      %p711 = por %p709, %p710
      %p712 = scmp.ne.s32.totalorder %s700, %s701
      %p713 = scmp.eq.s32.totalorder %s93, 1
      %p714 = por %p712, %p713
      %p716 = scmp.ne.s32.totalorder %s701, %s715
      %p717 = scmp.eq.s32.totalorder %s93, 0
      %p718 = por %p716, %p717
      %s720 = sadd.s32 %s719, 1
      %p723 = scmp.eq.s32.totalorder %s87, 1
      %p724 = scmp.ne.s32.totalorder %s719, %s721
      %p725 = scmp.eq.s32.totalorder %s87, 0
      %p726 = por %p724, %p725
      %p727 = scmp.ne.s32.totalorder %s719, %s721
      %p728 = scmp.eq.s32.totalorder %s92, 1
      %p729 = por %p727, %p728
      %p730 = scmp.ne.s32.totalorder %s721, %s722
      %p731 = scmp.eq.s32.totalorder %s92, 0
      %p732 = por %p730, %p731
      %p733 = scmp.ne.s32.totalorder %s721, %s722
      %p734 = scmp.eq.s32.totalorder %s93, 1
      %p735 = por %p733, %p734
      %p737 = scmp.ne.s32.totalorder %s722, %s736
      %p738 = scmp.eq.s32.totalorder %s93, 0
      %p739 = por %p737, %p738
      %s741 = sadd.s32 %s740, 1
      %p744 = scmp.eq.s32.totalorder %s87, 1
      %p745 = scmp.ne.s32.totalorder %s740, %s742
      %p746 = scmp.eq.s32.totalorder %s87, 0
      %p747 = por %p745, %p746
      %p748 = scmp.ne.s32.totalorder %s740, %s742
      %p749 = scmp.eq.s32.totalorder %s92, 1
      %p750 = por %p748, %p749
      %p751 = scmp.ne.s32.totalorder %s742, %s743
      %p752 = scmp.eq.s32.totalorder %s92, 0
      %p753 = por %p751, %p752
      %p754 = scmp.ne.s32.totalorder %s742, %s743
      %p755 = scmp.eq.s32.totalorder %s93, 1
      %p756 = por %p754, %p755
      %p758 = scmp.ne.s32.totalorder %s743, %s757
      %p759 = scmp.eq.s32.totalorder %s93, 0
      %p760 = por %p758, %p759
      %s762 = sadd.s32 %s761, 1
      %p765 = scmp.eq.s32.totalorder %s87, 1
      %p766 = scmp.ne.s32.totalorder %s761, %s763
      %p767 = scmp.eq.s32.totalorder %s87, 0
      %p768 = por %p766, %p767
      %p769 = scmp.ne.s32.totalorder %s761, %s763
      %p770 = scmp.eq.s32.totalorder %s92, 1
      %p771 = por %p769, %p770
      %p772 = scmp.ne.s32.totalorder %s763, %s764
      %p773 = scmp.eq.s32.totalorder %s92, 0
      %p774 = por %p772, %p773
      %p775 = scmp.ne.s32.totalorder %s763, %s764
      %p776 = scmp.eq.s32.totalorder %s93, 1
      %p777 = por %p775, %p776
      %p779 = scmp.ne.s32.totalorder %s764, %s778
      %p780 = scmp.eq.s32.totalorder %s93, 0
      %p781 = por %p779, %p780
      %s783 = sadd.s32 %s782, 1
      %p786 = scmp.eq.s32.totalorder %s87, 1
      %p787 = scmp.ne.s32.totalorder %s782, %s784
      %p788 = scmp.eq.s32.totalorder %s87, 0
      %p789 = por %p787, %p788
      %p790 = scmp.ne.s32.totalorder %s782, %s784
      %p791 = scmp.eq.s32.totalorder %s92, 1
      %p792 = por %p790, %p791
      %p793 = scmp.ne.s32.totalorder %s784, %s785
      %p794 = scmp.eq.s32.totalorder %s92, 0
      %p795 = por %p793, %p794
      %p796 = scmp.ne.s32.totalorder %s784, %s785
      %p797 = scmp.eq.s32.totalorder %s93, 1
      %p798 = por %p796, %p797
      %p800 = scmp.ne.s32.totalorder %s785, %s799
      %p801 = scmp.eq.s32.totalorder %s93, 0
      %p802 = por %p800, %p801
      %s803 = ssub.s32 %s87, %s94
      %p804 = scmp.eq.s32.totalorder %s803, 0
      %s806 = sadd.s32 %s805, 1
      %s807 = scalar_select %p804, %s805, %s806
      %p810 = pneg %p804
      %p811 = scmp.eq.s32.totalorder %s87, 1
      %p812 = por %p810, %p811
      %p813 = scmp.ne.s32.totalorder %s805, %s808
      %p814 = scmp.eq.s32.totalorder %s87, 0
      %p815 = por %p813, %p814
      %p816 = scmp.ne.s32.totalorder %s805, %s808
      %p817 = scmp.eq.s32.totalorder %s92, 1
      %p818 = por %p816, %p817
      %p819 = scmp.ne.s32.totalorder %s808, %s809
      %p820 = scmp.eq.s32.totalorder %s92, 0
      %p821 = por %p819, %p820
      %p822 = scmp.ne.s32.totalorder %s808, %s809
      %p823 = scmp.eq.s32.totalorder %s93, 1
      %p824 = por %p822, %p823
      %p826 = scmp.ne.s32.totalorder %s809, %s825
      %p827 = scmp.eq.s32.totalorder %s93, 0
      %p828 = por %p826, %p827
      %p829 = scmp.le.s32.totalorder 1, %s87
      %p830 = scmp.lt.s32.totalorder %s87, 3
      %p831 = pnand %p829, %p830
      %p832 = pneg %p831
      // Predicated region
      $region9: #{forward.1} parent=5 // pred_check
        _
      $region10: #{forward.1} parent=5 // pred_check_branch
        %834 = sbr.rel (%p831) target = $region12
      $region11: #{forward.1} parent=5 // pred_region
        %s835 = ssub.s32 %s87, 1
        // Predicated region
        $region13: #{forward.1} parent=11 // pred_check
          %p836 = pneg %p186
        $region14: #{forward.1} parent=11 // pred_check_branch
          %838 = sbr.rel (%p836) target = $region16
        $region15: #{forward.1} parent=11 // pred_region
          _
        $region16: #{forward.1} parent=11 // pred_fallthru
          _
        // Predicated region
        $region17: #{forward.1} parent=11 // pred_check
          %p839 = pneg %p207
        $region18: #{forward.1} parent=11 // pred_check_branch
          %841 = sbr.rel (%p839) target = $region20
        $region19: #{forward.1} parent=11 // pred_region
          %843 = vsyncadd [#allocation3], 0
          %s845 = sshll.u32 %s9, 4
          %s846 = int_to_ptr.hbm [resolvable:$true] %s845
          %s847 = sshll.u32 [#allocation2], 4
          %s848 = int_to_ptr.vmem [resolvable:$true] %s847
          %850 = dma.hbm_to_vmem [thread:$0]  %s846, 16, %s848, [#allocation3]
        $region20: #{forward.1} parent=11 // pred_fallthru
          _
        // Predicated region
        $region21: #{forward.1} parent=11 // pred_check
          %p851 = pneg %p228
        $region22: #{forward.1} parent=11 // pred_check_branch
          %853 = sbr.rel (%p851) target = $region24
        $region23: #{forward.1} parent=11 // pred_region
          _
        $region24: #{forward.1} parent=11 // pred_fallthru
          _
        // Predicated region
        $region25: #{forward.1} parent=11 // pred_check
          %p854 = pneg %p249
        $region26: #{forward.1} parent=11 // pred_check_branch
          %856 = sbr.rel (%p854) target = $region28
        $region27: #{forward.1} parent=11 // pred_region
          %858 = vsyncadd [#allocation6], 0
          %s860 = sshll.u32 %s13, 4
          %s861 = int_to_ptr.hbm [resolvable:$true] %s860
          %s862 = sshll.u32 [#allocation5], 4
          %s863 = int_to_ptr.vmem [resolvable:$true] %s862
          %865 = dma.hbm_to_vmem [thread:$0]  %s861, 16, %s863, [#allocation6]
        $region28: #{forward.1} parent=11 // pred_fallthru
          _
        // Predicated region
        $region29: #{forward.1} parent=11 // pred_check
          %p866 = pneg %p270
        $region30: #{forward.1} parent=11 // pred_check_branch
          %868 = sbr.rel (%p866) target = $region32
        $region31: #{forward.1} parent=11 // pred_region
          _
        $region32: #{forward.1} parent=11 // pred_fallthru
          _
        // Predicated region
        $region33: #{forward.1} parent=11 // pred_check
          %p869 = pneg %p291
        $region34: #{forward.1} parent=11 // pred_check_branch
          %871 = sbr.rel (%p869) target = $region36
        $region35: #{forward.1} parent=11 // pred_region
          %873 = vsyncadd [#allocation6], 0
          %s875 = sshll.u32 %s17, 4
          %s876 = int_to_ptr.hbm [resolvable:$true] %s875
          %s877 = sshll.u32 [#allocation7], 4
          %s878 = int_to_ptr.vmem [resolvable:$true] %s877
          %880 = dma.hbm_to_vmem [thread:$0]  %s876, 16, %s878, [#allocation6]
        $region36: #{forward.1} parent=11 // pred_fallthru
          _
        // Predicated region
        $region37: #{forward.1} parent=11 // pred_check
          %p881 = pneg %p312
        $region38: #{forward.1} parent=11 // pred_check_branch
          %883 = sbr.rel (%p881) target = $region40
        $region39: #{forward.1} parent=11 // pred_region
          _
        $region40: #{forward.1} parent=11 // pred_fallthru
          _
        // Predicated region
        $region41: #{forward.1} parent=11 // pred_check
          %p884 = pneg %p333
        $region42: #{forward.1} parent=11 // pred_check_branch
          %886 = sbr.rel (%p884) target = $region44
        $region43: #{forward.1} parent=11 // pred_region
          %888 = vsyncadd [#allocation9], 0
          %s890 = sshll.u32 %s21, 4
          %s891 = int_to_ptr.hbm [resolvable:$true] %s890
          %s892 = sshll.u32 [#allocation8], 4
          %s893 = int_to_ptr.vmem [resolvable:$true] %s892
          %895 = dma.hbm_to_vmem [thread:$0]  %s891, 16, %s893, [#allocation9]
        $region44: #{forward.1} parent=11 // pred_fallthru
          _
        // Predicated region
        $region45: #{forward.1} parent=11 // pred_check
          %p896 = pneg %p354
        $region46: #{forward.1} parent=11 // pred_check_branch
          %898 = sbr.rel (%p896) target = $region48
        $region47: #{forward.1} parent=11 // pred_region
          _
        $region48: #{forward.1} parent=11 // pred_fallthru
          _
        // Predicated region
        $region49: #{forward.1} parent=11 // pred_check
          %p899 = pneg %p375
        $region50: #{forward.1} parent=11 // pred_check_branch
          %901 = sbr.rel (%p899) target = $region52
        $region51: #{forward.1} parent=11 // pred_region
          %903 = vsyncadd [#allocation9], 0
          %s905 = sshll.u32 %s25, 4
          %s906 = int_to_ptr.hbm [resolvable:$true] %s905
          %s907 = sshll.u32 [#allocation10], 4
          %s908 = int_to_ptr.vmem [resolvable:$true] %s907
          %910 = dma.hbm_to_vmem [thread:$0]  %s906, 16, %s908, [#allocation9]
        $region52: #{forward.1} parent=11 // pred_fallthru
          _
        // Predicated region
        $region53: #{forward.1} parent=11 // pred_check
          %p911 = pneg %p396
        $region54: #{forward.1} parent=11 // pred_check_branch
          %913 = sbr.rel (%p911) target = $region56
        $region55: #{forward.1} parent=11 // pred_region
          _
        $region56: #{forward.1} parent=11 // pred_fallthru
          _
        // Predicated region
        $region57: #{forward.1} parent=11 // pred_check
          %p914 = pneg %p417
        $region58: #{forward.1} parent=11 // pred_check_branch
          %916 = sbr.rel (%p914) target = $region60
        $region59: #{forward.1} parent=11 // pred_region
          %918 = vsyncadd [#allocation12], 0
          %s920 = sshll.u32 %s29, 4
          %s921 = int_to_ptr.hbm [resolvable:$true] %s920
          %s922 = sshll.u32 [#allocation11], 4
          %s923 = int_to_ptr.vmem [resolvable:$true] %s922
          %925 = dma.hbm_to_vmem [thread:$0]  %s921, 16, %s923, [#allocation12]
        $region60: #{forward.1} parent=11 // pred_fallthru
          _
        // Predicated region
        $region61: #{forward.1} parent=11 // pred_check
          %p926 = pneg %p438
        $region62: #{forward.1} parent=11 // pred_check_branch
          %928 = sbr.rel (%p926) target = $region64
        $region63: #{forward.1} parent=11 // pred_region
          _
        $region64: #{forward.1} parent=11 // pred_fallthru
          _
        // Predicated region
        $region65: #{forward.1} parent=11 // pred_check
          %p929 = pneg %p459
        $region66: #{forward.1} parent=11 // pred_check_branch
          %931 = sbr.rel (%p929) target = $region68
        $region67: #{forward.1} parent=11 // pred_region
          %933 = vsyncadd [#allocation12], 0
          %s935 = sshll.u32 %s33, 4
          %s936 = int_to_ptr.hbm [resolvable:$true] %s935
          %s937 = sshll.u32 [#allocation13], 4
          %s938 = int_to_ptr.vmem [resolvable:$true] %s937
          %940 = dma.hbm_to_vmem [thread:$0]  %s936, 16, %s938, [#allocation12]
        $region68: #{forward.1} parent=11 // pred_fallthru
          _
        // Predicated region
        $region69: #{forward.1} parent=11 // pred_check
          %p941 = pneg %p480
        $region70: #{forward.1} parent=11 // pred_check_branch
          %943 = sbr.rel (%p941) target = $region72
        $region71: #{forward.1} parent=11 // pred_region
          %945 = vsyncadd [#allocation15], 0
          %s946 = sshll.u32 %s35, 4
          %s947 = int_to_ptr.hbm [resolvable:$true] %s946
          %s948 = sshll.u32 [#allocation14], 4
          %s949 = int_to_ptr.vmem [resolvable:$true] %s948
          %954 = dma.hbm_to_vmem [thread:$0]  %s947, 512, %s949, [#allocation15], 128, 128, 8
        $region72: #{forward.1} parent=11 // pred_fallthru
          _
        // Predicated region
        $region73: #{forward.1} parent=11 // pred_check
          %p955 = pneg %p501
        $region74: #{forward.1} parent=11 // pred_check_branch
          %957 = sbr.rel (%p955) target = $region76
        $region75: #{forward.1} parent=11 // pred_region
          %959 = vsyncadd [#allocation15], 0
          %s961 = sshll.u32 %s37, 4
          %s962 = int_to_ptr.hbm [resolvable:$true] %s961
          %s963 = sshll.u32 [#allocation16], 4
          %s964 = int_to_ptr.vmem [resolvable:$true] %s963
          %966 = dma.hbm_to_vmem [thread:$0]  %s962, 16, %s964, [#allocation15]
        $region76: #{forward.1} parent=11 // pred_fallthru
          _
        // Predicated region
        $region77: #{forward.1} parent=11 // pred_check
          %p967 = pneg %p522
        $region78: #{forward.1} parent=11 // pred_check_branch
          %969 = sbr.rel (%p967) target = $region80
        $region79: #{forward.1} parent=11 // pred_region
          %971 = vsyncadd [#allocation18], 0
          %s972 = sshll.u32 %s39, 4
          %s973 = int_to_ptr.hbm [resolvable:$true] %s972
          %s974 = sshll.u32 [#allocation17], 4
          %s975 = int_to_ptr.vmem [resolvable:$true] %s974
          %980 = dma.hbm_to_vmem [thread:$0]  %s973, 512, %s975, [#allocation18], 128, 128, 8
        $region80: #{forward.1} parent=11 // pred_fallthru
          _
        // Predicated region
        $region81: #{forward.1} parent=11 // pred_check
          %p981 = pneg %p543
        $region82: #{forward.1} parent=11 // pred_check_branch
          %983 = sbr.rel (%p981) target = $region84
        $region83: #{forward.1} parent=11 // pred_region
          %985 = vsyncadd [#allocation18], 0
          %s987 = sshll.u32 %s41, 4
          %s988 = int_to_ptr.hbm [resolvable:$true] %s987
          %s989 = sshll.u32 [#allocation19], 4
          %s990 = int_to_ptr.vmem [resolvable:$true] %s989
          %992 = dma.hbm_to_vmem [thread:$0]  %s988, 16, %s990, [#allocation18]
        $region84: #{forward.1} parent=11 // pred_fallthru
          _
        // Predicated region
        $region85: #{forward.1} parent=11 // pred_check
          %p993 = pneg %p564
        $region86: #{forward.1} parent=11 // pred_check_branch
          %995 = sbr.rel (%p993) target = $region88
        $region87: #{forward.1} parent=11 // pred_region
          %997 = vsyncadd [#allocation21], 0
          %s998 = sshll.u32 %s43, 4
          %s999 = int_to_ptr.hbm [resolvable:$true] %s998
          %s1000 = sshll.u32 [#allocation20], 4
          %s1001 = int_to_ptr.vmem [resolvable:$true] %s1000
          %1006 = dma.hbm_to_vmem [thread:$0]  %s999, 512, %s1001, [#allocation21], 128, 128, 8
        $region88: #{forward.1} parent=11 // pred_fallthru
          _
        // Predicated region
        $region89: #{forward.1} parent=11 // pred_check
          %p1007 = pneg %p585
        $region90: #{forward.1} parent=11 // pred_check_branch
          %1009 = sbr.rel (%p1007) target = $region92
        $region91: #{forward.1} parent=11 // pred_region
          %1011 = vsyncadd [#allocation21], 0
          %s1013 = sshll.u32 %s45, 4
          %s1014 = int_to_ptr.hbm [resolvable:$true] %s1013
          %s1015 = sshll.u32 [#allocation22], 4
          %s1016 = int_to_ptr.vmem [resolvable:$true] %s1015
          %1018 = dma.hbm_to_vmem [thread:$0]  %s1014, 16, %s1016, [#allocation21]
        $region92: #{forward.1} parent=11 // pred_fallthru
          _
        // Predicated region
        $region93: #{forward.1} parent=11 // pred_check
          %p1019 = pneg %p606
        $region94: #{forward.1} parent=11 // pred_check_branch
          %1021 = sbr.rel (%p1019) target = $region96
        $region95: #{forward.1} parent=11 // pred_region
          %1023 = vsyncadd [#allocation24], 0
          %s1024 = sshll.u32 %s47, 4
          %s1025 = int_to_ptr.hbm [resolvable:$true] %s1024
          %s1026 = sshll.u32 [#allocation23], 4
          %s1027 = int_to_ptr.vmem [resolvable:$true] %s1026
          %1032 = dma.hbm_to_vmem [thread:$0]  %s1025, 512, %s1027, [#allocation24], 128, 128, 8
        $region96: #{forward.1} parent=11 // pred_fallthru
          _
        // Predicated region
        $region97: #{forward.1} parent=11 // pred_check
          %p1033 = pneg %p627
        $region98: #{forward.1} parent=11 // pred_check_branch
          %1035 = sbr.rel (%p1033) target = $region100
        $region99: #{forward.1} parent=11 // pred_region
          %1037 = vsyncadd [#allocation24], 0
          %s1039 = sshll.u32 %s49, 4
          %s1040 = int_to_ptr.hbm [resolvable:$true] %s1039
          %s1041 = sshll.u32 [#allocation25], 4
          %s1042 = int_to_ptr.vmem [resolvable:$true] %s1041
          %1044 = dma.hbm_to_vmem [thread:$0]  %s1040, 16, %s1042, [#allocation24]
        $region100: #{forward.1} parent=11 // pred_fallthru
          _
        // Predicated region
        $region101: #{forward.1} parent=11 // pred_check
          %p1045 = pneg %p648
        $region102: #{forward.1} parent=11 // pred_check_branch
          %1047 = sbr.rel (%p1045) target = $region104
        $region103: #{forward.1} parent=11 // pred_region
          %1049 = vsyncadd [#allocation27], 0
          %s1050 = sshll.u32 %s51, 4
          %s1051 = int_to_ptr.hbm [resolvable:$true] %s1050
          %s1052 = sshll.u32 [#allocation26], 4
          %s1053 = int_to_ptr.vmem [resolvable:$true] %s1052
          %1058 = dma.hbm_to_vmem [thread:$0]  %s1051, 4096, %s1053, [#allocation27], 512, 512, 32
        $region104: #{forward.1} parent=11 // pred_fallthru
          _
        // Predicated region
        $region105: #{forward.1} parent=11 // pred_check
          %p1059 = pneg %p669
        $region106: #{forward.1} parent=11 // pred_check_branch
          %1061 = sbr.rel (%p1059) target = $region108
        $region107: #{forward.1} parent=11 // pred_region
          %1063 = vsyncadd [#allocation27], 0
          %s1065 = sshll.u32 %s53, 4
          %s1066 = int_to_ptr.hbm [resolvable:$true] %s1065
          %s1067 = sshll.u32 [#allocation28], 4
          %s1068 = int_to_ptr.vmem [resolvable:$true] %s1067
          %1070 = dma.hbm_to_vmem [thread:$0]  %s1066, 128, %s1068, [#allocation27]
        $region108: #{forward.1} parent=11 // pred_fallthru
          _
        // Predicated region
        $region109: #{forward.1} parent=11 // pred_check
          %p1071 = pneg %p690
        $region110: #{forward.1} parent=11 // pred_check_branch
          %1073 = sbr.rel (%p1071) target = $region112
        $region111: #{forward.1} parent=11 // pred_region
          %1075 = vsyncadd [#allocation30], 0
          %s1076 = sshll.u32 %s55, 4
          %s1077 = int_to_ptr.hbm [resolvable:$true] %s1076
          %s1078 = sshll.u32 [#allocation29], 4
          %s1079 = int_to_ptr.vmem [resolvable:$true] %s1078
          %1084 = dma.hbm_to_vmem [thread:$0]  %s1077, 65536, %s1079, [#allocation30], 512, 512, 32
        $region112: #{forward.1} parent=11 // pred_fallthru
          _
        // Predicated region
        $region113: #{forward.1} parent=11 // pred_check
          %p1085 = pneg %p711
        $region114: #{forward.1} parent=11 // pred_check_branch
          %1087 = sbr.rel (%p1085) target = $region116
        $region115: #{forward.1} parent=11 // pred_region
          %1089 = vsyncadd [#allocation30], 0
          %s1091 = sshll.u32 %s57, 4
          %s1092 = int_to_ptr.hbm [resolvable:$true] %s1091
          %s1093 = sshll.u32 [#allocation31], 4
          %s1094 = int_to_ptr.vmem [resolvable:$true] %s1093
          %1096 = dma.hbm_to_vmem [thread:$0]  %s1092, 128, %s1094, [#allocation30]
        $region116: #{forward.1} parent=11 // pred_fallthru
          _
        // Predicated region
        $region117: #{forward.1} parent=11 // pred_check
          %p1097 = pneg %p732
        $region118: #{forward.1} parent=11 // pred_check_branch
          %1099 = sbr.rel (%p1097) target = $region120
        $region119: #{forward.1} parent=11 // pred_region
          %1101 = vsyncadd [#allocation33], 0
          %s1102 = sshll.u32 %s59, 4
          %s1103 = int_to_ptr.hbm [resolvable:$true] %s1102
          %s1104 = sshll.u32 [#allocation32], 4
          %s1105 = int_to_ptr.vmem [resolvable:$true] %s1104
          %1110 = dma.hbm_to_vmem [thread:$0]  %s1103, 32768, %s1105, [#allocation33], 256, 256, 16
        $region120: #{forward.1} parent=11 // pred_fallthru
          _
        // Predicated region
        $region121: #{forward.1} parent=11 // pred_check
          %p1111 = pneg %p753
        $region122: #{forward.1} parent=11 // pred_check_branch
          %1113 = sbr.rel (%p1111) target = $region124
        $region123: #{forward.1} parent=11 // pred_region
          %1115 = vsyncadd [#allocation33], 0
          %s1117 = sshll.u32 %s61, 4
          %s1118 = int_to_ptr.hbm [resolvable:$true] %s1117
          %s1119 = sshll.u32 [#allocation34], 4
          %s1120 = int_to_ptr.vmem [resolvable:$true] %s1119
          %1122 = dma.hbm_to_vmem [thread:$0]  %s1118, 64, %s1120, [#allocation33]
        $region124: #{forward.1} parent=11 // pred_fallthru
          _
        // Predicated region
        $region125: #{forward.1} parent=11 // pred_check
          %p1123 = pneg %p774
        $region126: #{forward.1} parent=11 // pred_check_branch
          %1125 = sbr.rel (%p1123) target = $region128
        $region127: #{forward.1} parent=11 // pred_region
          _
        $region128: #{forward.1} parent=11 // pred_fallthru
          _
        // Predicated region
        $region129: #{forward.1} parent=11 // pred_check
          %p1126 = pneg %p795
        $region130: #{forward.1} parent=11 // pred_check_branch
          %1128 = sbr.rel (%p1126) target = $region132
        $region131: #{forward.1} parent=11 // pred_region
          _
        $region132: #{forward.1} parent=11 // pred_fallthru
          _
      $region12: #{forward.1} parent=5 // pred_fallthru
        _
      %p1129 = scmp.lt.s32.totalorder %s87, 2
      // Predicated region
      $region133: #{forward.1} parent=5 // pred_check
        %p1130 = pneg %p1129
      $region134: #{forward.1} parent=5 // pred_check_branch
        %1132 = sbr.rel (%p1130) target = $region136
      $region135: #{forward.1} parent=5 // pred_region
        // Predicated region
        $region137: #{forward.1} parent=135 // pred_check
          %p1133 = pneg %p107
        $region138: #{forward.1} parent=135 // pred_check_branch
          %1135 = sbr.rel (%p1133) target = $region140
        $region139: #{forward.1} parent=135 // pred_region
          %p1136 = scmp.lt.s32.totalorder %s87, 1
          %s1137 = scalar_select %p1136, %s87, 1
          %s1138 = smul.addr %s1137, 2
          %s1139 = smul.addr %s1138, 8
          %s1140 = scalar_lea.vmem %s1, %s1139
        $region140: #{forward.1} parent=135 // pred_fallthru
          _
        // Predicated region
        $region141: #{forward.1} parent=135 // pred_check
          %p1141 = pneg %p133
        $region142: #{forward.1} parent=135 // pred_check_branch
          %1143 = sbr.rel (%p1141) target = $region144
        $region143: #{forward.1} parent=135 // pred_region
          %p1144 = scmp.lt.s32.totalorder %s87, 1
          %s1145 = scalar_select %p1144, %s87, 1
          %s1146 = smul.addr %s1145, 3
          %s1147 = smul.addr %s1146, 8
          %s1148 = scalar_lea.vmem %s3, %s1147
        $region144: #{forward.1} parent=135 // pred_fallthru
          _
        // Predicated region
        $region145: #{forward.1} parent=135 // pred_check
          %p1149 = pneg %p159
        $region146: #{forward.1} parent=135 // pred_check_branch
          %1151 = sbr.rel (%p1149) target = $region148
        $region147: #{forward.1} parent=135 // pred_region
          %p1152 = scmp.lt.s32.totalorder %s87, 1
          %s1153 = scalar_select %p1152, %s87, 1
          %s1154 = smul.addr %s1153, 4
          %s1155 = scalar_lea.vmem %s5, %s1154
        $region148: #{forward.1} parent=135 // pred_fallthru
          _
      $region136: #{forward.1} parent=5 // pred_fallthru
        _
      %p1156 = scmp.le.s32.totalorder 1, %s87
      %p1157 = scmp.lt.s32.totalorder %s87, 3
      %p1158 = pnand %p1156, %p1157
      %p1159 = pneg %p1158
      // Predicated region
      $region149: #{forward.1} parent=5 // pred_check
        _
      $region150: #{forward.1} parent=5 // pred_check_branch
        %1161 = sbr.rel (%p1158) target = $region152
      $region151: #{forward.1} parent=5 // pred_region
        %s1162 = ssub.s32 %s87, 1
        // Predicated region
        $region153: #{forward.1} parent=151 // pred_check
          %p1163 = pneg %p207
        $region154: #{forward.1} parent=151 // pred_check_branch
          %1165 = sbr.rel (%p1163) target = $region156
        $region155: #{forward.1} parent=151 // pred_region
          %1167 = dma.done [#allocation3], 16
        $region156: #{forward.1} parent=151 // pred_fallthru
          _
        // Predicated region
        $region157: #{forward.1} parent=151 // pred_check
          %p1168 = pneg %p249
        $region158: #{forward.1} parent=151 // pred_check_branch
          %1170 = sbr.rel (%p1168) target = $region160
        $region159: #{forward.1} parent=151 // pred_region
          %1172 = dma.done [#allocation6], 16
        $region160: #{forward.1} parent=151 // pred_fallthru
          _
        // Predicated region
        $region161: #{forward.1} parent=151 // pred_check
          %p1173 = pneg %p291
        $region162: #{forward.1} parent=151 // pred_check_branch
          %1175 = sbr.rel (%p1173) target = $region164
        $region163: #{forward.1} parent=151 // pred_region
          %1177 = dma.done [#allocation6], 16
        $region164: #{forward.1} parent=151 // pred_fallthru
          _
        // Predicated region
        $region165: #{forward.1} parent=151 // pred_check
          %p1178 = pneg %p333
        $region166: #{forward.1} parent=151 // pred_check_branch
          %1180 = sbr.rel (%p1178) target = $region168
        $region167: #{forward.1} parent=151 // pred_region
          %1182 = dma.done [#allocation9], 16
        $region168: #{forward.1} parent=151 // pred_fallthru
          _
        // Predicated region
        $region169: #{forward.1} parent=151 // pred_check
          %p1183 = pneg %p375
        $region170: #{forward.1} parent=151 // pred_check_branch
          %1185 = sbr.rel (%p1183) target = $region172
        $region171: #{forward.1} parent=151 // pred_region
          %1187 = dma.done [#allocation9], 16
        $region172: #{forward.1} parent=151 // pred_fallthru
          _
        // Predicated region
        $region173: #{forward.1} parent=151 // pred_check
          %p1188 = pneg %p417
        $region174: #{forward.1} parent=151 // pred_check_branch
          %1190 = sbr.rel (%p1188) target = $region176
        $region175: #{forward.1} parent=151 // pred_region
          %1192 = dma.done [#allocation12], 16
        $region176: #{forward.1} parent=151 // pred_fallthru
          _
        // Predicated region
        $region177: #{forward.1} parent=151 // pred_check
          %p1193 = pneg %p459
        $region178: #{forward.1} parent=151 // pred_check_branch
          %1195 = sbr.rel (%p1193) target = $region180
        $region179: #{forward.1} parent=151 // pred_region
          %1197 = dma.done [#allocation12], 16
        $region180: #{forward.1} parent=151 // pred_fallthru
          _
        // Predicated region
        $region181: #{forward.1} parent=151 // pred_check
          %p1198 = pneg %p480
        $region182: #{forward.1} parent=151 // pred_check_branch
          %1200 = sbr.rel (%p1198) target = $region184
        $region183: #{forward.1} parent=151 // pred_region
          %1202 = dma.done [#allocation15], 512
        $region184: #{forward.1} parent=151 // pred_fallthru
          _
        // Predicated region
        $region185: #{forward.1} parent=151 // pred_check
          %p1203 = pneg %p501
        $region186: #{forward.1} parent=151 // pred_check_branch
          %1205 = sbr.rel (%p1203) target = $region188
        $region187: #{forward.1} parent=151 // pred_region
          %1207 = dma.done [#allocation15], 16
        $region188: #{forward.1} parent=151 // pred_fallthru
          _
        // Predicated region
        $region189: #{forward.1} parent=151 // pred_check
          %p1208 = pneg %p522
        $region190: #{forward.1} parent=151 // pred_check_branch
          %1210 = sbr.rel (%p1208) target = $region192
        $region191: #{forward.1} parent=151 // pred_region
          %1212 = dma.done [#allocation18], 512
        $region192: #{forward.1} parent=151 // pred_fallthru
          _
        // Predicated region
        $region193: #{forward.1} parent=151 // pred_check
          %p1213 = pneg %p543
        $region194: #{forward.1} parent=151 // pred_check_branch
          %1215 = sbr.rel (%p1213) target = $region196
        $region195: #{forward.1} parent=151 // pred_region
          %1217 = dma.done [#allocation18], 16
        $region196: #{forward.1} parent=151 // pred_fallthru
          _
        // Predicated region
        $region197: #{forward.1} parent=151 // pred_check
          %p1218 = pneg %p564
        $region198: #{forward.1} parent=151 // pred_check_branch
          %1220 = sbr.rel (%p1218) target = $region200
        $region199: #{forward.1} parent=151 // pred_region
          %1222 = dma.done [#allocation21], 512
        $region200: #{forward.1} parent=151 // pred_fallthru
          _
        // Predicated region
        $region201: #{forward.1} parent=151 // pred_check
          %p1223 = pneg %p585
        $region202: #{forward.1} parent=151 // pred_check_branch
          %1225 = sbr.rel (%p1223) target = $region204
        $region203: #{forward.1} parent=151 // pred_region
          %1227 = dma.done [#allocation21], 16
        $region204: #{forward.1} parent=151 // pred_fallthru
          _
        // Predicated region
        $region205: #{forward.1} parent=151 // pred_check
          %p1228 = pneg %p606
        $region206: #{forward.1} parent=151 // pred_check_branch
          %1230 = sbr.rel (%p1228) target = $region208
        $region207: #{forward.1} parent=151 // pred_region
          %1232 = dma.done [#allocation24], 512
        $region208: #{forward.1} parent=151 // pred_fallthru
          _
        // Predicated region
        $region209: #{forward.1} parent=151 // pred_check
          %p1233 = pneg %p627
        $region210: #{forward.1} parent=151 // pred_check_branch
          %1235 = sbr.rel (%p1233) target = $region212
        $region211: #{forward.1} parent=151 // pred_region
          %1237 = dma.done [#allocation24], 16
        $region212: #{forward.1} parent=151 // pred_fallthru
          _
        // Predicated region
        $region213: #{forward.1} parent=151 // pred_check
          %p1238 = pneg %p648
        $region214: #{forward.1} parent=151 // pred_check_branch
          %1240 = sbr.rel (%p1238) target = $region216
        $region215: #{forward.1} parent=151 // pred_region
          %1242 = dma.done [#allocation27], 4096
        $region216: #{forward.1} parent=151 // pred_fallthru
          _
        // Predicated region
        $region217: #{forward.1} parent=151 // pred_check
          %p1243 = pneg %p669
        $region218: #{forward.1} parent=151 // pred_check_branch
          %1245 = sbr.rel (%p1243) target = $region220
        $region219: #{forward.1} parent=151 // pred_region
          %1247 = dma.done [#allocation27], 128
        $region220: #{forward.1} parent=151 // pred_fallthru
          _
        // Predicated region
        $region221: #{forward.1} parent=151 // pred_check
          %p1248 = pneg %p690
        $region222: #{forward.1} parent=151 // pred_check_branch
          %1250 = sbr.rel (%p1248) target = $region224
        $region223: #{forward.1} parent=151 // pred_region
          %1252 = dma.done [#allocation30], 65536
        $region224: #{forward.1} parent=151 // pred_fallthru
          _
        // Predicated region
        $region225: #{forward.1} parent=151 // pred_check
          %p1253 = pneg %p711
        $region226: #{forward.1} parent=151 // pred_check_branch
          %1255 = sbr.rel (%p1253) target = $region228
        $region227: #{forward.1} parent=151 // pred_region
          %1257 = dma.done [#allocation30], 128
        $region228: #{forward.1} parent=151 // pred_fallthru
          _
        // Predicated region
        $region229: #{forward.1} parent=151 // pred_check
          %p1258 = pneg %p732
        $region230: #{forward.1} parent=151 // pred_check_branch
          %1260 = sbr.rel (%p1258) target = $region232
        $region231: #{forward.1} parent=151 // pred_region
          %1262 = dma.done [#allocation33], 32768
        $region232: #{forward.1} parent=151 // pred_fallthru
          _
        // Predicated region
        $region233: #{forward.1} parent=151 // pred_check
          %p1263 = pneg %p753
        $region234: #{forward.1} parent=151 // pred_check_branch
          %1265 = sbr.rel (%p1263) target = $region236
        $region235: #{forward.1} parent=151 // pred_region
          %1267 = dma.done [#allocation33], 64
        $region236: #{forward.1} parent=151 // pred_fallthru
          _
        %p1268 = scmp.lt.s32.totalorder %s92, 1
        %s1269 = scalar_select %p1268, %s92, 1
        %s1270 = smul.addr %s1269, 2
        %s1271 = smul.addr %s1270, 8
        %s1272 = scalar_lea.vmem %s1, %s1271
        %p1273 = pneg %p113
        %p1274 = pneg %p110
        %p1275 = scmp.lt.s32.totalorder %s92, 1
        %s1276 = scalar_select %p1275, %s92, 1
        %s1277 = smul.addr %s1276, 3
        %s1278 = smul.addr %s1277, 8
        %s1279 = scalar_lea.vmem %s3, %s1278
        %p1280 = pneg %p139
        %p1281 = pneg %p136
        %p1282 = scmp.lt.s32.totalorder %s92, 1
        %s1283 = scalar_select %p1282, %s92, 1
        %s1284 = smul.addr %s1283, 4
        %s1285 = scalar_lea.vmem %s5, %s1284
        %p1286 = pneg %p165
        %p1287 = pneg %p162
        %p1288 = pneg %p186
        %p1289 = pneg %p183
        %p1290 = pneg %p207
        %p1291 = pneg %p204
        %p1292 = pneg %p228
        %p1293 = pneg %p225
        %p1294 = pneg %p249
        %p1295 = pneg %p246
        %p1296 = pneg %p270
        %p1297 = pneg %p267
        %p1298 = pneg %p291
        %p1299 = pneg %p288
        %p1300 = pneg %p312
        %p1301 = pneg %p309
        %p1302 = pneg %p333
        %p1303 = pneg %p330
        %p1304 = pneg %p354
        %p1305 = pneg %p351
        %p1306 = pneg %p375
        %p1307 = pneg %p372
        %p1308 = pneg %p396
        %p1309 = pneg %p393
        %p1310 = pneg %p417
        %p1311 = pneg %p414
        %p1312 = pneg %p438
        %p1313 = pneg %p435
        %p1314 = pneg %p459
        %p1315 = pneg %p456
        %p1316 = pneg %p480
        %p1317 = pneg %p477
        %p1318 = pneg %p501
        %p1319 = pneg %p498
        %p1320 = pneg %p522
        %p1321 = pneg %p519
        %p1322 = pneg %p543
        %p1323 = pneg %p540
        %p1324 = pneg %p564
        %p1325 = pneg %p561
        %p1326 = pneg %p585
        %p1327 = pneg %p582
        %p1328 = pneg %p606
        %p1329 = pneg %p603
        %p1330 = pneg %p627
        %p1331 = pneg %p624
        %p1332 = pneg %p648
        %p1333 = pneg %p645
        %p1334 = pneg %p669
        %p1335 = pneg %p666
        %p1336 = pneg %p690
        %p1337 = pneg %p687
        %p1338 = pneg %p711
        %p1339 = pneg %p708
        %p1340 = pneg %p732
        %p1341 = pneg %p729
        %p1342 = pneg %p753
        %p1343 = pneg %p750
        %p1344 = pneg %p774
        %p1345 = pneg %p771
        %p1346 = pneg %p795
        %p1347 = pneg %p792
        %p1348 = pneg %p821
        %p1349 = pneg %p818
        %s1350 = sand.u32 %s808, 1
        %s1351 = scalar_lea.sflag [#allocation4], %s1350
        %s1352 = sand.u32 %s808, 1
        %s1353 = scalar_lea.vmem [#allocation35], %s1352
        %p1354 = scmp.lt.s32.totalorder %s92, 1
        %s1355 = scalar_select %p1354, %s92, 1
        %s1356 = smul.addr %s1355, 2
        %s1357 = smul.addr %s1356, 8
        %s1358 = scalar_lea.vmem %s1, %s1357
        %p1359 = scmp.lt.s32.totalorder %s92, 1
        %s1360 = scalar_select %p1359, %s92, 1
        %s1361 = smul.addr %s1360, 3
        %s1362 = smul.addr %s1361, 8
        %s1363 = scalar_lea.vmem %s3, %s1362
        %p1364 = scmp.lt.s32.totalorder %s92, 1
        %s1365 = scalar_select %p1364, %s92, 1
        %s1366 = smul.addr %s1365, 4
        %s1367 = scalar_lea.vmem %s5, %s1366
        %v1369 = vld [vmem:[%s1358] sm:$0xff]
        %v1370 = vld [vmem:[%s1358 + $0x8] sm:$0xff]
        %v1371 = vld [vmem:[%s7] sm:$0xff]
        %v1372 = vld [vmem:[%s7 + $0x8] sm:$0xff]
        %v1373 = vld [vmem:[%s7 + $0x10] sm:$0xff]
        %v1374 = vld [vmem:[%s7 + $0x18] sm:$0xff]
        %vm1377 = vcmask 1046528
        %v1378 = vrot.slane %v1369, 1
        %v1379 = vrot.slane %v1370, 1
        %v1380 = vsel %vm1377, %v1378, %v1379
        %vm1381 = vcmask 130048
        %v1382 = vsel %vm1381, %v1380, 0
        %v1384 = vsel %vm1381, %v1379, 0
        %1386 = vmatpush.msra.mxu0 0.0
        %1387 = vmatpush.msra.mxu0 0.0
        %1388 = vmatpush.msra.mxu0 0.0
        %1389 = vmatpush.msra.mxu0 0.0
        %1390 = vmatpush.msra.mxu0 0.0
        %1391 = vmatpush.msra.mxu0 0.0
        %1392 = vmatpush.msra.mxu0 0.0
        %1393 = vmatpush.msra.mxu0 0.0
        %1394 = vmatpush.msra.mxu0 0.0
        %1395 = vmatpush.msra.mxu0 0.0
        %1396 = vmatpush.msra.mxu0 0.0
        %1397 = vmatpush.msra.mxu0 0.0
        %1398 = vmatpush.msra.mxu0 0.0
        %1399 = vmatpush.msra.mxu0 0.0
        %1400 = vmatpush.msra.mxu0 %v1374
        %1401 = vmatpush.msra.mxu0 %v1373
        %1402 = vmatmul.f32.gmra.mxu0 %v1382
        %v1403 = vpop.f32.mrf.mxu0
        %v1404 = vadd.f32 0.0, %v1403
        %1405 = vmatmul.f32.gmra.mxu0 %v1384
        %v1406 = vpop.f32.mrf.mxu0
        %v1407 = vadd.f32 0.0, %v1406
        %1408 = vdwg.mxu0
        %v1409 = vsel %vm1381, %v1369, 0
        %v1411 = vsel %vm1381, %v1370, 0
        %1413 = vmatpush.msra.mxu0 0.0
        %1414 = vmatpush.msra.mxu0 0.0
        %1415 = vmatpush.msra.mxu0 0.0
        %1416 = vmatpush.msra.mxu0 0.0
        %1417 = vmatpush.msra.mxu0 0.0
        %1418 = vmatpush.msra.mxu0 0.0
        %1419 = vmatpush.msra.mxu0 0.0
        %1420 = vmatpush.msra.mxu0 0.0
        %1421 = vmatpush.msra.mxu0 0.0
        %1422 = vmatpush.msra.mxu0 0.0
        %1423 = vmatpush.msra.mxu0 0.0
        %1424 = vmatpush.msra.mxu0 0.0
        %1425 = vmatpush.msra.mxu0 0.0
        %1426 = vmatpush.msra.mxu0 0.0
        %1427 = vmatpush.msra.mxu0 %v1372
        %1428 = vmatpush.msra.mxu0 %v1371
        %1429 = vmatmul.f32.gmra.mxu0 %v1409
        %v1430 = vpop.f32.mrf.mxu0
        %v1431 = vadd.f32 %v1404, %v1430
        %1432 = vmatmul.f32.gmra.mxu0 %v1411
        %v1433 = vpop.f32.mrf.mxu0
        %v1434 = vadd.f32 %v1407, %v1433
        %1435 = vdwg.mxu0
        %v1436 = vld [vmem:[%s7 + $0x20] sm:$0xff]
        %v1437 = vld [vmem:[%s7 + $0x28] sm:$0xff]
        %vm1438 = vcmask 1045504
        %v1439 = vrot.slane %v1369, 2
        %v1440 = vrot.slane %v1370, 2
        %v1441 = vsel %vm1438, %v1439, %v1440
        %v1442 = vsel %vm1381, %v1441, 0
        %v1444 = vsel %vm1381, %v1440, 0
        %1446 = vmatpush.msra.mxu0 0.0
        %1447 = vmatpush.msra.mxu0 0.0
        %1448 = vmatpush.msra.mxu0 0.0
        %1449 = vmatpush.msra.mxu0 0.0
        %1450 = vmatpush.msra.mxu0 0.0
        %1451 = vmatpush.msra.mxu0 0.0
        %1452 = vmatpush.msra.mxu0 0.0
        %1453 = vmatpush.msra.mxu0 0.0
        %1454 = vmatpush.msra.mxu0 0.0
        %1455 = vmatpush.msra.mxu0 0.0
        %1456 = vmatpush.msra.mxu0 0.0
        %1457 = vmatpush.msra.mxu0 0.0
        %1458 = vmatpush.msra.mxu0 0.0
        %1459 = vmatpush.msra.mxu0 0.0
        %1460 = vmatpush.msra.mxu0 %v1437
        %1461 = vmatpush.msra.mxu0 %v1436
        %1462 = vmatmul.f32.gmra.mxu0 %v1442
        %v1463 = vpop.f32.mrf.mxu0
        %v1464 = vadd.f32 0.0, %v1463
        %1465 = vmatmul.f32.gmra.mxu0 %v1444
        %v1466 = vpop.f32.mrf.mxu0
        %v1467 = vadd.f32 0.0, %v1466
        %1468 = vdwg.mxu0
        %v1469 = vadd.f32 %v1431, %v1464
        %v1470 = vadd.f32 %v1434, %v1467
        %v1471 = vld [vmem:[#allocation2] sm:$0x1]
        %v1473 = vperm.slane %v1471, 0
        %v1475 = vadd.f32 %v1469, %v1473
        %v1476 = vadd.f32 %v1470, %v1473
        %v1477 = vmax.f32 %v1475, 0.0
        %v1478 = vmax.f32 %v1476, 0.0
        %v1479 = vld [vmem:[%s11] sm:$0xff]
        %v1480 = vld [vmem:[%s11 + $0x8] sm:$0xff]
        %v1483 = vrot.slane %v1477, 1
        %v1484 = vrot.slane %v1478, 1
        %v1485 = vsel %vm1377, %v1483, %v1484
        %vm1486 = vcmask 64512
        %v1487 = vsel %vm1486, %v1485, 0
        %v1489 = vsel %vm1486, %v1484, 0
        %1491 = vmatpush.msra.mxu0 0.0
        %1492 = vmatpush.msra.mxu0 0.0
        %1493 = vmatpush.msra.mxu0 0.0
        %1494 = vmatpush.msra.mxu0 0.0
        %1495 = vmatpush.msra.mxu0 0.0
        %1496 = vmatpush.msra.mxu0 0.0
        %1497 = vmatpush.msra.mxu0 0.0
        %1498 = vmatpush.msra.mxu0 0.0
        %1499 = vmatpush.msra.mxu0 0.0
        %1500 = vmatpush.msra.mxu0 0.0
        %1501 = vmatpush.msra.mxu0 0.0
        %1502 = vmatpush.msra.mxu0 0.0
        %1503 = vmatpush.msra.mxu0 0.0
        %1504 = vmatpush.msra.mxu0 0.0
        %1505 = vmatpush.msra.mxu0 0.0
        %1506 = vmatpush.msra.mxu0 %v1480
        %1507 = vmatmul.f32.gmra.mxu0 %v1487
        %v1508 = vpop.f32.mrf.mxu0
        %v1509 = vadd.f32 0.0, %v1508
        %1510 = vmatmul.f32.gmra.mxu0 %v1489
        %v1511 = vpop.f32.mrf.mxu0
        %v1512 = vadd.f32 0.0, %v1511
        %1513 = vdwg.mxu0
        %v1514 = vsel %vm1486, %v1477, 0
        %v1516 = vsel %vm1486, %v1478, 0
        %1518 = vmatpush.msra.mxu0 0.0
        %1519 = vmatpush.msra.mxu0 0.0
        %1520 = vmatpush.msra.mxu0 0.0
        %1521 = vmatpush.msra.mxu0 0.0
        %1522 = vmatpush.msra.mxu0 0.0
        %1523 = vmatpush.msra.mxu0 0.0
        %1524 = vmatpush.msra.mxu0 0.0
        %1525 = vmatpush.msra.mxu0 0.0
        %1526 = vmatpush.msra.mxu0 0.0
        %1527 = vmatpush.msra.mxu0 0.0
        %1528 = vmatpush.msra.mxu0 0.0
        %1529 = vmatpush.msra.mxu0 0.0
        %1530 = vmatpush.msra.mxu0 0.0
        %1531 = vmatpush.msra.mxu0 0.0
        %1532 = vmatpush.msra.mxu0 0.0
        %1533 = vmatpush.msra.mxu0 %v1479
        %1534 = vmatmul.f32.gmra.mxu0 %v1514
        %v1535 = vpop.f32.mrf.mxu0
        %v1536 = vadd.f32 %v1509, %v1535
        %1537 = vmatmul.f32.gmra.mxu0 %v1516
        %v1538 = vpop.f32.mrf.mxu0
        %v1539 = vadd.f32 %v1512, %v1538
        %1540 = vdwg.mxu0
        %v1541 = vld [vmem:[%s11 + $0x10] sm:$0xff]
        %v1542 = vrot.slane %v1477, 2
        %v1543 = vrot.slane %v1478, 2
        %v1544 = vsel %vm1438, %v1542, %v1543
        %v1545 = vsel %vm1486, %v1544, 0
        %v1547 = vsel %vm1486, %v1543, 0
        %1549 = vmatpush.msra.mxu0 0.0
        %1550 = vmatpush.msra.mxu0 0.0
        %1551 = vmatpush.msra.mxu0 0.0
        %1552 = vmatpush.msra.mxu0 0.0
        %1553 = vmatpush.msra.mxu0 0.0
        %1554 = vmatpush.msra.mxu0 0.0
        %1555 = vmatpush.msra.mxu0 0.0
        %1556 = vmatpush.msra.mxu0 0.0
        %1557 = vmatpush.msra.mxu0 0.0
        %1558 = vmatpush.msra.mxu0 0.0
        %1559 = vmatpush.msra.mxu0 0.0
        %1560 = vmatpush.msra.mxu0 0.0
        %1561 = vmatpush.msra.mxu0 0.0
        %1562 = vmatpush.msra.mxu0 0.0
        %1563 = vmatpush.msra.mxu0 0.0
        %1564 = vmatpush.msra.mxu0 %v1541
        %1565 = vmatmul.f32.gmra.mxu0 %v1545
        %v1566 = vpop.f32.mrf.mxu0
        %v1567 = vadd.f32 0.0, %v1566
        %1568 = vmatmul.f32.gmra.mxu0 %v1547
        %v1569 = vpop.f32.mrf.mxu0
        %v1570 = vadd.f32 0.0, %v1569
        %1571 = vdwg.mxu0
        %v1572 = vadd.f32 %v1536, %v1567
        %v1573 = vadd.f32 %v1539, %v1570
        %v1574 = vld [vmem:[#allocation5] sm:$0x1]
        %v1576 = vperm.slane %v1574, 0
        %v1578 = vadd.f32 %v1572, %v1576
        %v1579 = vadd.f32 %v1573, %v1576
        %v1580 = vmax.f32 %v1578, 0.0
        %v1581 = vmax.f32 %v1579, 0.0
        %v1582 = vld [vmem:[%s15] sm:$0xff]
        %v1583 = vld [vmem:[%s15 + $0x8] sm:$0xff]
        %v1584 = vld [vmem:[%s15 + $0x10] sm:$0xff]
        %v1585 = vld [vmem:[%s15 + $0x18] sm:$0xff]
        %v1588 = vrot.slane %v1580, 1
        %v1589 = vrot.slane %v1581, 1
        %v1590 = vsel %vm1377, %v1588, %v1589
        %v1591 = vsel %vm1381, %v1590, 0
        %v1593 = vsel %vm1381, %v1589, 0
        %1595 = vmatpush.msra.mxu0 0.0
        %1596 = vmatpush.msra.mxu0 0.0
        %1597 = vmatpush.msra.mxu0 0.0
        %1598 = vmatpush.msra.mxu0 0.0
        %1599 = vmatpush.msra.mxu0 0.0
        %1600 = vmatpush.msra.mxu0 0.0
        %1601 = vmatpush.msra.mxu0 0.0
        %1602 = vmatpush.msra.mxu0 0.0
        %1603 = vmatpush.msra.mxu0 0.0
        %1604 = vmatpush.msra.mxu0 0.0
        %1605 = vmatpush.msra.mxu0 0.0
        %1606 = vmatpush.msra.mxu0 0.0
        %1607 = vmatpush.msra.mxu0 0.0
        %1608 = vmatpush.msra.mxu0 0.0
        %1609 = vmatpush.msra.mxu0 %v1585
        %1610 = vmatpush.msra.mxu0 %v1584
        %1611 = vmatmul.f32.gmra.mxu0 %v1591
        %v1612 = vpop.f32.mrf.mxu0
        %v1613 = vadd.f32 0.0, %v1612
        %1614 = vmatmul.f32.gmra.mxu0 %v1593
        %v1615 = vpop.f32.mrf.mxu0
        %v1616 = vadd.f32 0.0, %v1615
        %1617 = vdwg.mxu0
        %v1618 = vsel %vm1381, %v1580, 0
        %v1620 = vsel %vm1381, %v1581, 0
        %1622 = vmatpush.msra.mxu0 0.0
        %1623 = vmatpush.msra.mxu0 0.0
        %1624 = vmatpush.msra.mxu0 0.0
        %1625 = vmatpush.msra.mxu0 0.0
        %1626 = vmatpush.msra.mxu0 0.0
        %1627 = vmatpush.msra.mxu0 0.0
        %1628 = vmatpush.msra.mxu0 0.0
        %1629 = vmatpush.msra.mxu0 0.0
        %1630 = vmatpush.msra.mxu0 0.0
        %1631 = vmatpush.msra.mxu0 0.0
        %1632 = vmatpush.msra.mxu0 0.0
        %1633 = vmatpush.msra.mxu0 0.0
        %1634 = vmatpush.msra.mxu0 0.0
        %1635 = vmatpush.msra.mxu0 0.0
        %1636 = vmatpush.msra.mxu0 %v1583
        %1637 = vmatpush.msra.mxu0 %v1582
        %1638 = vmatmul.f32.gmra.mxu0 %v1618
        %v1639 = vpop.f32.mrf.mxu0
        %v1640 = vadd.f32 %v1613, %v1639
        %1641 = vmatmul.f32.gmra.mxu0 %v1620
        %v1642 = vpop.f32.mrf.mxu0
        %v1643 = vadd.f32 %v1616, %v1642
        %1644 = vdwg.mxu0
        %v1645 = vld [vmem:[%s15 + $0x20] sm:$0xff]
        %v1646 = vld [vmem:[%s15 + $0x28] sm:$0xff]
        %v1647 = vrot.slane %v1580, 2
        %v1648 = vrot.slane %v1581, 2
        %v1649 = vsel %vm1438, %v1647, %v1648
        %v1650 = vsel %vm1381, %v1649, 0
        %v1652 = vsel %vm1381, %v1648, 0
        %1654 = vmatpush.msra.mxu0 0.0
        %1655 = vmatpush.msra.mxu0 0.0
        %1656 = vmatpush.msra.mxu0 0.0
        %1657 = vmatpush.msra.mxu0 0.0
        %1658 = vmatpush.msra.mxu0 0.0
        %1659 = vmatpush.msra.mxu0 0.0
        %1660 = vmatpush.msra.mxu0 0.0
        %1661 = vmatpush.msra.mxu0 0.0
        %1662 = vmatpush.msra.mxu0 0.0
        %1663 = vmatpush.msra.mxu0 0.0
        %1664 = vmatpush.msra.mxu0 0.0
        %1665 = vmatpush.msra.mxu0 0.0
        %1666 = vmatpush.msra.mxu0 0.0
        %1667 = vmatpush.msra.mxu0 0.0
        %1668 = vmatpush.msra.mxu0 %v1646
        %1669 = vmatpush.msra.mxu0 %v1645
        %1670 = vmatmul.f32.gmra.mxu0 %v1650
        %v1671 = vpop.f32.mrf.mxu0
        %v1672 = vadd.f32 0.0, %v1671
        %1673 = vmatmul.f32.gmra.mxu0 %v1652
        %v1674 = vpop.f32.mrf.mxu0
        %v1675 = vadd.f32 0.0, %v1674
        %1676 = vdwg.mxu0
        %v1677 = vadd.f32 %v1640, %v1672
        %v1678 = vadd.f32 %v1643, %v1675
        %v1679 = vld [vmem:[#allocation7] sm:$0x1]
        %v1681 = vperm.slane %v1679, 0
        %v1683 = vadd.f32 %v1677, %v1681
        %v1684 = vadd.f32 %v1678, %v1681
        %v1685 = vmax.f32 %v1683, 0.0
        %v1686 = vmax.f32 %v1684, 0.0
        %v1687 = vld [vmem:[%s1363] sm:$0xff]
        %v1688 = vld [vmem:[%s1363 + $0x8] sm:$0xff]
        %v1689 = vld [vmem:[%s1363 + $0x10] sm:$0xf]
        %v1690 = vld [vmem:[%s19] sm:$0xff]
        %v1691 = vld [vmem:[%s19 + $0x8] sm:$0xff]
        %v1692 = vld [vmem:[%s19 + $0x10] sm:$0xff]
        %v1693 = vld [vmem:[%s19 + $0x18] sm:$0xff]
        %v1697 = vrot.slane %v1687, 1
        %v1698 = vrot.slane %v1688, 1
        %v1699 = vsel %vm1377, %v1697, %v1698
        %v1700 = vrot.slane %v1689, 1
        %v1701 = vsel %vm1377, %v1698, %v1700
        %v1702 = vsel %vm1381, %v1699, 0
        %v1704 = vsel %vm1381, %v1701, 0
        %v1706 = vsel %vm1381, %v1700, 0
        %1708 = vmatpush.msra.mxu0 0.0
        %1709 = vmatpush.msra.mxu0 0.0
        %1710 = vmatpush.msra.mxu0 0.0
        %1711 = vmatpush.msra.mxu0 0.0
        %1712 = vmatpush.msra.mxu0 0.0
        %1713 = vmatpush.msra.mxu0 0.0
        %1714 = vmatpush.msra.mxu0 0.0
        %1715 = vmatpush.msra.mxu0 0.0
        %1716 = vmatpush.msra.mxu0 0.0
        %1717 = vmatpush.msra.mxu0 0.0
        %1718 = vmatpush.msra.mxu0 0.0
        %1719 = vmatpush.msra.mxu0 0.0
        %1720 = vmatpush.msra.mxu0 0.0
        %1721 = vmatpush.msra.mxu0 0.0
        %1722 = vmatpush.msra.mxu0 %v1693
        %1723 = vmatpush.msra.mxu0 %v1692
        %1724 = vmatmul.f32.gmra.mxu0 %v1702
        %v1725 = vpop.f32.mrf.mxu0
        %v1726 = vadd.f32 0.0, %v1725
        %1727 = vmatmul.f32.gmra.mxu0 %v1704
        %v1728 = vpop.f32.mrf.mxu0
        %v1729 = vadd.f32 0.0, %v1728
        %1730 = vmatmul.f32.gmra.mxu0 %v1706
        %v1731 = vpop.f32.mrf.mxu0
        %v1732 = vadd.f32 0.0, %v1731
        %1733 = vdwg.mxu0
        %v1734 = vsel %vm1381, %v1687, 0
        %v1736 = vsel %vm1381, %v1688, 0
        %v1738 = vsel %vm1381, %v1689, 0
        %1740 = vmatpush.msra.mxu0 0.0
        %1741 = vmatpush.msra.mxu0 0.0
        %1742 = vmatpush.msra.mxu0 0.0
        %1743 = vmatpush.msra.mxu0 0.0
        %1744 = vmatpush.msra.mxu0 0.0
        %1745 = vmatpush.msra.mxu0 0.0
        %1746 = vmatpush.msra.mxu0 0.0
        %1747 = vmatpush.msra.mxu0 0.0
        %1748 = vmatpush.msra.mxu0 0.0
        %1749 = vmatpush.msra.mxu0 0.0
        %1750 = vmatpush.msra.mxu0 0.0
        %1751 = vmatpush.msra.mxu0 0.0
        %1752 = vmatpush.msra.mxu0 0.0
        %1753 = vmatpush.msra.mxu0 0.0
        %1754 = vmatpush.msra.mxu0 %v1691
        %1755 = vmatpush.msra.mxu0 %v1690
        %1756 = vmatmul.f32.gmra.mxu0 %v1734
        %v1757 = vpop.f32.mrf.mxu0
        %v1758 = vadd.f32 %v1726, %v1757
        %1759 = vmatmul.f32.gmra.mxu0 %v1736
        %v1760 = vpop.f32.mrf.mxu0
        %v1761 = vadd.f32 %v1729, %v1760
        %1762 = vmatmul.f32.gmra.mxu0 %v1738
        %v1763 = vpop.f32.mrf.mxu0
        %v1764 = vadd.f32 %v1732, %v1763
        %1765 = vdwg.mxu0
        %v1766 = vld [vmem:[%s19 + $0x20] sm:$0xff]
        %v1767 = vld [vmem:[%s19 + $0x28] sm:$0xff]
        %v1768 = vrot.slane %v1687, 2
        %v1769 = vrot.slane %v1688, 2
        %v1770 = vsel %vm1438, %v1768, %v1769
        %v1771 = vrot.slane %v1689, 2
        %v1772 = vsel %vm1438, %v1769, %v1771
        %v1773 = vsel %vm1381, %v1770, 0
        %v1775 = vsel %vm1381, %v1772, 0
        %v1777 = vsel %vm1381, %v1771, 0
        %1779 = vmatpush.msra.mxu0 0.0
        %1780 = vmatpush.msra.mxu0 0.0
        %1781 = vmatpush.msra.mxu0 0.0
        %1782 = vmatpush.msra.mxu0 0.0
        %1783 = vmatpush.msra.mxu0 0.0
        %1784 = vmatpush.msra.mxu0 0.0
        %1785 = vmatpush.msra.mxu0 0.0
        %1786 = vmatpush.msra.mxu0 0.0
        %1787 = vmatpush.msra.mxu0 0.0
        %1788 = vmatpush.msra.mxu0 0.0
        %1789 = vmatpush.msra.mxu0 0.0
        %1790 = vmatpush.msra.mxu0 0.0
        %1791 = vmatpush.msra.mxu0 0.0
        %1792 = vmatpush.msra.mxu0 0.0
        %1793 = vmatpush.msra.mxu0 %v1767
        %1794 = vmatpush.msra.mxu0 %v1766
        %1795 = vmatmul.f32.gmra.mxu0 %v1773
        %v1796 = vpop.f32.mrf.mxu0
        %v1797 = vadd.f32 0.0, %v1796
        %1798 = vmatmul.f32.gmra.mxu0 %v1775
        %v1799 = vpop.f32.mrf.mxu0
        %v1800 = vadd.f32 0.0, %v1799
        %1801 = vmatmul.f32.gmra.mxu0 %v1777
        %v1802 = vpop.f32.mrf.mxu0
        %v1803 = vadd.f32 0.0, %v1802
        %1804 = vdwg.mxu0
        %v1805 = vadd.f32 %v1758, %v1797
        %v1806 = vadd.f32 %v1761, %v1800
        %v1807 = vadd.f32 %v1764, %v1803
        %v1808 = vld [vmem:[#allocation8] sm:$0x1]
        %v1810 = vperm.slane %v1808, 0
        %v1812 = vadd.f32 %v1805, %v1810
        %v1813 = vadd.f32 %v1806, %v1810
        %v1814 = vadd.f32 %v1807, %v1810
        %v1815 = vmax.f32 %v1812, 0.0
        %v1816 = vmax.f32 %v1813, 0.0
        %v1817 = vmax.f32 %v1814, 0.0
        %v1818 = vld [vmem:[%s23] sm:$0xff]
        %v1819 = vld [vmem:[%s23 + $0x8] sm:$0xff]
        %v1823 = vrot.slane %v1815, 1
        %v1824 = vrot.slane %v1816, 1
        %v1825 = vsel %vm1377, %v1823, %v1824
        %v1826 = vrot.slane %v1817, 1
        %v1827 = vsel %vm1377, %v1824, %v1826
        %v1828 = vsel %vm1486, %v1825, 0
        %v1830 = vsel %vm1486, %v1827, 0
        %1832 = vmatpush.msra.mxu0 0.0
        %1833 = vmatpush.msra.mxu0 0.0
        %1834 = vmatpush.msra.mxu0 0.0
        %1835 = vmatpush.msra.mxu0 0.0
        %1836 = vmatpush.msra.mxu0 0.0
        %1837 = vmatpush.msra.mxu0 0.0
        %1838 = vmatpush.msra.mxu0 0.0
        %1839 = vmatpush.msra.mxu0 0.0
        %1840 = vmatpush.msra.mxu0 0.0
        %1841 = vmatpush.msra.mxu0 0.0
        %1842 = vmatpush.msra.mxu0 0.0
        %1843 = vmatpush.msra.mxu0 0.0
        %1844 = vmatpush.msra.mxu0 0.0
        %1845 = vmatpush.msra.mxu0 0.0
        %1846 = vmatpush.msra.mxu0 0.0
        %1847 = vmatpush.msra.mxu0 %v1819
        %1848 = vmatmul.f32.gmra.mxu0 %v1828
        %v1849 = vpop.f32.mrf.mxu0
        %v1850 = vadd.f32 0.0, %v1849
        %1851 = vmatmul.f32.gmra.mxu0 %v1830
        %v1852 = vpop.f32.mrf.mxu0
        %v1853 = vadd.f32 0.0, %v1852
        %1854 = vdwg.mxu0
        %v1855 = vsel %vm1486, %v1815, 0
        %v1857 = vsel %vm1486, %v1816, 0
        %1859 = vmatpush.msra.mxu0 0.0
        %1860 = vmatpush.msra.mxu0 0.0
        %1861 = vmatpush.msra.mxu0 0.0
        %1862 = vmatpush.msra.mxu0 0.0
        %1863 = vmatpush.msra.mxu0 0.0
        %1864 = vmatpush.msra.mxu0 0.0
        %1865 = vmatpush.msra.mxu0 0.0
        %1866 = vmatpush.msra.mxu0 0.0
        %1867 = vmatpush.msra.mxu0 0.0
        %1868 = vmatpush.msra.mxu0 0.0
        %1869 = vmatpush.msra.mxu0 0.0
        %1870 = vmatpush.msra.mxu0 0.0
        %1871 = vmatpush.msra.mxu0 0.0
        %1872 = vmatpush.msra.mxu0 0.0
        %1873 = vmatpush.msra.mxu0 0.0
        %1874 = vmatpush.msra.mxu0 %v1818
        %1875 = vmatmul.f32.gmra.mxu0 %v1855
        %v1876 = vpop.f32.mrf.mxu0
        %v1877 = vadd.f32 %v1850, %v1876
        %1878 = vmatmul.f32.gmra.mxu0 %v1857
        %v1879 = vpop.f32.mrf.mxu0
        %v1880 = vadd.f32 %v1853, %v1879
        %1881 = vdwg.mxu0
        %v1882 = vld [vmem:[%s23 + $0x10] sm:$0xff]
        %v1883 = vrot.slane %v1815, 2
        %v1884 = vrot.slane %v1816, 2
        %v1885 = vsel %vm1438, %v1883, %v1884
        %v1886 = vrot.slane %v1817, 2
        %v1887 = vsel %vm1438, %v1884, %v1886
        %v1888 = vsel %vm1486, %v1885, 0
        %v1890 = vsel %vm1486, %v1887, 0
        %1892 = vmatpush.msra.mxu0 0.0
        %1893 = vmatpush.msra.mxu0 0.0
        %1894 = vmatpush.msra.mxu0 0.0
        %1895 = vmatpush.msra.mxu0 0.0
        %1896 = vmatpush.msra.mxu0 0.0
        %1897 = vmatpush.msra.mxu0 0.0
        %1898 = vmatpush.msra.mxu0 0.0
        %1899 = vmatpush.msra.mxu0 0.0
        %1900 = vmatpush.msra.mxu0 0.0
        %1901 = vmatpush.msra.mxu0 0.0
        %1902 = vmatpush.msra.mxu0 0.0
        %1903 = vmatpush.msra.mxu0 0.0
        %1904 = vmatpush.msra.mxu0 0.0
        %1905 = vmatpush.msra.mxu0 0.0
        %1906 = vmatpush.msra.mxu0 0.0
        %1907 = vmatpush.msra.mxu0 %v1882
        %1908 = vmatmul.f32.gmra.mxu0 %v1888
        %v1909 = vpop.f32.mrf.mxu0
        %v1910 = vadd.f32 0.0, %v1909
        %1911 = vmatmul.f32.gmra.mxu0 %v1890
        %v1912 = vpop.f32.mrf.mxu0
        %v1913 = vadd.f32 0.0, %v1912
        %1914 = vdwg.mxu0
        %v1915 = vadd.f32 %v1877, %v1910
        %v1916 = vadd.f32 %v1880, %v1913
        %v1917 = vld [vmem:[#allocation10] sm:$0x1]
        %v1919 = vperm.slane %v1917, 0
        %v1921 = vadd.f32 %v1915, %v1919
        %v1922 = vadd.f32 %v1916, %v1919
        %v1923 = vmax.f32 %v1921, 0.0
        %v1924 = vmax.f32 %v1922, 0.0
        %v1925 = vld [vmem:[%s27] sm:$0xff]
        %v1926 = vld [vmem:[%s27 + $0x8] sm:$0xff]
        %v1927 = vld [vmem:[%s27 + $0x10] sm:$0xff]
        %v1928 = vld [vmem:[%s27 + $0x18] sm:$0xff]
        %v1931 = vrot.slane %v1923, 1
        %v1932 = vrot.slane %v1924, 1
        %v1933 = vsel %vm1377, %v1931, %v1932
        %v1934 = vsel %vm1381, %v1933, 0
        %v1936 = vsel %vm1381, %v1932, 0
        %1938 = vmatpush.msra.mxu0 0.0
        %1939 = vmatpush.msra.mxu0 0.0
        %1940 = vmatpush.msra.mxu0 0.0
        %1941 = vmatpush.msra.mxu0 0.0
        %1942 = vmatpush.msra.mxu0 0.0
        %1943 = vmatpush.msra.mxu0 0.0
        %1944 = vmatpush.msra.mxu0 0.0
        %1945 = vmatpush.msra.mxu0 0.0
        %1946 = vmatpush.msra.mxu0 0.0
        %1947 = vmatpush.msra.mxu0 0.0
        %1948 = vmatpush.msra.mxu0 0.0
        %1949 = vmatpush.msra.mxu0 0.0
        %1950 = vmatpush.msra.mxu0 0.0
        %1951 = vmatpush.msra.mxu0 0.0
        %1952 = vmatpush.msra.mxu0 %v1928
        %1953 = vmatpush.msra.mxu0 %v1927
        %1954 = vmatmul.f32.gmra.mxu0 %v1934
        %v1955 = vpop.f32.mrf.mxu0
        %v1956 = vadd.f32 0.0, %v1955
        %1957 = vmatmul.f32.gmra.mxu0 %v1936
        %v1958 = vpop.f32.mrf.mxu0
        %v1959 = vadd.f32 0.0, %v1958
        %1960 = vdwg.mxu0
        %v1961 = vsel %vm1381, %v1923, 0
        %v1963 = vsel %vm1381, %v1924, 0
        %1965 = vmatpush.msra.mxu0 0.0
        %1966 = vmatpush.msra.mxu0 0.0
        %1967 = vmatpush.msra.mxu0 0.0
        %1968 = vmatpush.msra.mxu0 0.0
        %1969 = vmatpush.msra.mxu0 0.0
        %1970 = vmatpush.msra.mxu0 0.0
        %1971 = vmatpush.msra.mxu0 0.0
        %1972 = vmatpush.msra.mxu0 0.0
        %1973 = vmatpush.msra.mxu0 0.0
        %1974 = vmatpush.msra.mxu0 0.0
        %1975 = vmatpush.msra.mxu0 0.0
        %1976 = vmatpush.msra.mxu0 0.0
        %1977 = vmatpush.msra.mxu0 0.0
        %1978 = vmatpush.msra.mxu0 0.0
        %1979 = vmatpush.msra.mxu0 %v1926
        %1980 = vmatpush.msra.mxu0 %v1925
        %1981 = vmatmul.f32.gmra.mxu0 %v1961
        %v1982 = vpop.f32.mrf.mxu0
        %v1983 = vadd.f32 %v1956, %v1982
        %1984 = vmatmul.f32.gmra.mxu0 %v1963
        %v1985 = vpop.f32.mrf.mxu0
        %v1986 = vadd.f32 %v1959, %v1985
        %1987 = vdwg.mxu0
        %v1988 = vld [vmem:[%s27 + $0x20] sm:$0xff]
        %v1989 = vld [vmem:[%s27 + $0x28] sm:$0xff]
        %v1990 = vrot.slane %v1923, 2
        %v1991 = vrot.slane %v1924, 2
        %v1992 = vsel %vm1438, %v1990, %v1991
        %v1993 = vsel %vm1381, %v1992, 0
        %v1995 = vsel %vm1381, %v1991, 0
        %1997 = vmatpush.msra.mxu0 0.0
        %1998 = vmatpush.msra.mxu0 0.0
        %1999 = vmatpush.msra.mxu0 0.0
        %2000 = vmatpush.msra.mxu0 0.0
        %2001 = vmatpush.msra.mxu0 0.0
        %2002 = vmatpush.msra.mxu0 0.0
        %2003 = vmatpush.msra.mxu0 0.0
        %2004 = vmatpush.msra.mxu0 0.0
        %2005 = vmatpush.msra.mxu0 0.0
        %2006 = vmatpush.msra.mxu0 0.0
        %2007 = vmatpush.msra.mxu0 0.0
        %2008 = vmatpush.msra.mxu0 0.0
        %2009 = vmatpush.msra.mxu0 0.0
        %2010 = vmatpush.msra.mxu0 0.0
        %2011 = vmatpush.msra.mxu0 %v1989
        %2012 = vmatpush.msra.mxu0 %v1988
        %2013 = vmatmul.f32.gmra.mxu0 %v1993
        %v2014 = vpop.f32.mrf.mxu0
        %v2015 = vadd.f32 0.0, %v2014
        %2016 = vmatmul.f32.gmra.mxu0 %v1995
        %v2017 = vpop.f32.mrf.mxu0
        %v2018 = vadd.f32 0.0, %v2017
        %2019 = vdwg.mxu0
        %v2020 = vadd.f32 %v1983, %v2015
        %v2021 = vadd.f32 %v1986, %v2018
        %v2022 = vld [vmem:[#allocation11] sm:$0x1]
        %v2024 = vperm.slane %v2022, 0
        %v2026 = vadd.f32 %v2020, %v2024
        %v2027 = vadd.f32 %v2021, %v2024
        %v2028 = vmax.f32 %v2026, 0.0
        %v2029 = vmax.f32 %v2027, 0.0
        %v2030 = vld [vmem:[%s1367] sm:$0xf]
        %v2031 = vld [vmem:[%s31] sm:$0xff]
        %v2032 = vld [vmem:[%s31 + $0x8] sm:$0xff]
        %v2033 = vld [vmem:[%s31 + $0x10] sm:$0xff]
        %v2034 = vld [vmem:[%s31 + $0x18] sm:$0xff]
        %v2035 = vld [vmem:[%s31 + $0x20] sm:$0xff]
        %v2036 = vld [vmem:[%s31 + $0x28] sm:$0xff]
        %v2037 = vld [vmem:[%s31 + $0x30] sm:$0xff]
        %v2038 = vld [vmem:[%s31 + $0x38] sm:$0xff]
        %v2039 = vld [vmem:[%s31 + $0x40] sm:$0xff]
        %v2040 = vld [vmem:[%s31 + $0x48] sm:$0xff]
        %v2041 = vld [vmem:[%s31 + $0x50] sm:$0xff]
        %v2042 = vld [vmem:[%s31 + $0x58] sm:$0xff]
        %v2043 = vld [vmem:[%s31 + $0x60] sm:$0xff]
        %v2044 = vld [vmem:[%s31 + $0x68] sm:$0xff]
        %v2045 = vld [vmem:[%s31 + $0x70] sm:$0xff]
        %v2046 = vld [vmem:[%s31 + $0x78] sm:$0xff]
        %v2047 = vld [vmem:[%s31 + $0x80] sm:$0xff]
        %v2048 = vld [vmem:[%s31 + $0x88] sm:$0xff]
        %v2049 = vld [vmem:[%s31 + $0x90] sm:$0xff]
        %v2050 = vld [vmem:[%s31 + $0x98] sm:$0xff]
        %v2051 = vld [vmem:[%s31 + $0xa0] sm:$0xff]
        %v2052 = vld [vmem:[%s31 + $0xa8] sm:$0xff]
        %v2053 = vld [vmem:[%s31 + $0xb0] sm:$0xff]
        %v2054 = vld [vmem:[%s31 + $0xb8] sm:$0xff]
        %v2055 = vld [vmem:[%s31 + $0xc0] sm:$0xff]
        %v2056 = vld [vmem:[%s31 + $0xc8] sm:$0xff]
        %v2057 = vld [vmem:[%s31 + $0xd0] sm:$0xff]
        %v2058 = vld [vmem:[%s31 + $0xd8] sm:$0xff]
        %v2059 = vld [vmem:[%s31 + $0xe0] sm:$0xff]
        %v2060 = vld [vmem:[%s31 + $0xe8] sm:$0xff]
        %v2061 = vld [vmem:[%s31 + $0xf0] sm:$0xff]
        %v2062 = vld [vmem:[%s31 + $0xf8] sm:$0xff]
        %v2063 = vld [vmem:[%s31 + $0x100] sm:$0xff]
        %v2064 = vld [vmem:[%s31 + $0x108] sm:$0xff]
        %v2065 = vld [vmem:[%s31 + $0x110] sm:$0xff]
        %v2066 = vld [vmem:[%s31 + $0x118] sm:$0xff]
        %v2067 = vld [vmem:[%s31 + $0x120] sm:$0xff]
        %v2068 = vld [vmem:[%s31 + $0x128] sm:$0xff]
        %v2069 = vld [vmem:[%s31 + $0x130] sm:$0xff]
        %v2070 = vld [vmem:[%s31 + $0x138] sm:$0xff]
        %v2071 = vld [vmem:[%s31 + $0x140] sm:$0xff]
        %v2072 = vld [vmem:[%s31 + $0x148] sm:$0xff]
        %v2073 = vld [vmem:[%s31 + $0x150] sm:$0xff]
        %v2074 = vld [vmem:[%s31 + $0x158] sm:$0xff]
        %v2075 = vld [vmem:[%s31 + $0x160] sm:$0xff]
        %v2076 = vld [vmem:[%s31 + $0x168] sm:$0xff]
        %v2077 = vld [vmem:[%s31 + $0x170] sm:$0xff]
        %v2078 = vld [vmem:[%s31 + $0x178] sm:$0xff]
        %v2079 = vld [vmem:[%s31 + $0x180] sm:$0xff]
        %v2080 = vld [vmem:[%s31 + $0x188] sm:$0xff]
        %v2081 = vld [vmem:[%s31 + $0x190] sm:$0xff]
        %v2082 = vld [vmem:[%s31 + $0x198] sm:$0xff]
        %v2083 = vld [vmem:[%s31 + $0x1a0] sm:$0xff]
        %v2084 = vld [vmem:[%s31 + $0x1a8] sm:$0xff]
        %v2085 = vld [vmem:[%s31 + $0x1b0] sm:$0xff]
        %v2086 = vld [vmem:[%s31 + $0x1b8] sm:$0xff]
        %v2087 = vld [vmem:[%s31 + $0x1c0] sm:$0xff]
        %v2088 = vld [vmem:[%s31 + $0x1c8] sm:$0xff]
        %v2089 = vld [vmem:[%s31 + $0x1d0] sm:$0xff]
        %v2090 = vld [vmem:[%s31 + $0x1d8] sm:$0xff]
        %v2091 = vld [vmem:[%s31 + $0x1e0] sm:$0xff]
        %v2092 = vld [vmem:[%s31 + $0x1e8] sm:$0xff]
        %v2093 = vld [vmem:[%s31 + $0x1f0] sm:$0xff]
        %v2094 = vld [vmem:[%s31 + $0x1f8] sm:$0xff]
        %v2095 = vld [vmem:[#allocation13] sm:$0x1]
        %v2097 = vperm.slane %v2030, 0
        %v2098 = vperm.slane %v2030, 1
        %v2099 = vperm.slane %v2030, 2
        %v2100 = vperm.slane %v2030, 3
        %2105 = vmatpush.msra.mxu0 %v2046
        %2106 = vmatpush.msra.mxu0 %v2045
        %2107 = vmatpush.msra.mxu0 %v2044
        %2108 = vmatpush.msra.mxu0 %v2043
        %2109 = vmatpush.msra.mxu0 %v2042
        %2110 = vmatpush.msra.mxu0 %v2041
        %2111 = vmatpush.msra.mxu0 %v2040
        %2112 = vmatpush.msra.mxu0 %v2039
        %2113 = vmatpush.msra.mxu0 %v2038
        %2114 = vmatpush.msra.mxu0 %v2037
        %2115 = vmatpush.msra.mxu0 %v2036
        %2116 = vmatpush.msra.mxu0 %v2035
        %2117 = vmatpush.msra.mxu0 %v2034
        %2118 = vmatpush.msra.mxu0 %v2033
        %2119 = vmatpush.msra.mxu0 %v2032
        %2120 = vmatpush.msra.mxu0 %v2031
        %2121 = vmatmul.f32.gmra.mxu0 %v2097
        %v2122 = vpop.f32.mrf.mxu0
        %v2123 = vadd.f32 %v2095, %v2122
        %2124 = vdwg.mxu0
        %2125 = vmatpush.msra.mxu0 %v2062
        %2126 = vmatpush.msra.mxu0 %v2061
        %2127 = vmatpush.msra.mxu0 %v2060
        %2128 = vmatpush.msra.mxu0 %v2059
        %2129 = vmatpush.msra.mxu0 %v2058
        %2130 = vmatpush.msra.mxu0 %v2057
        %2131 = vmatpush.msra.mxu0 %v2056
        %2132 = vmatpush.msra.mxu0 %v2055
        %2133 = vmatpush.msra.mxu0 %v2054
        %2134 = vmatpush.msra.mxu0 %v2053
        %2135 = vmatpush.msra.mxu0 %v2052
        %2136 = vmatpush.msra.mxu0 %v2051
        %2137 = vmatpush.msra.mxu0 %v2050
        %2138 = vmatpush.msra.mxu0 %v2049
        %2139 = vmatpush.msra.mxu0 %v2048
        %2140 = vmatpush.msra.mxu0 %v2047
        %2141 = vmatmul.f32.gmra.mxu0 %v2098
        %v2142 = vpop.f32.mrf.mxu0
        %v2143 = vadd.f32 %v2123, %v2142
        %2144 = vdwg.mxu0
        %2145 = vmatpush.msra.mxu0 %v2078
        %2146 = vmatpush.msra.mxu0 %v2077
        %2147 = vmatpush.msra.mxu0 %v2076
        %2148 = vmatpush.msra.mxu0 %v2075
        %2149 = vmatpush.msra.mxu0 %v2074
        %2150 = vmatpush.msra.mxu0 %v2073
        %2151 = vmatpush.msra.mxu0 %v2072
        %2152 = vmatpush.msra.mxu0 %v2071
        %2153 = vmatpush.msra.mxu0 %v2070
        %2154 = vmatpush.msra.mxu0 %v2069
        %2155 = vmatpush.msra.mxu0 %v2068
        %2156 = vmatpush.msra.mxu0 %v2067
        %2157 = vmatpush.msra.mxu0 %v2066
        %2158 = vmatpush.msra.mxu0 %v2065
        %2159 = vmatpush.msra.mxu0 %v2064
        %2160 = vmatpush.msra.mxu0 %v2063
        %2161 = vmatmul.f32.gmra.mxu0 %v2099
        %v2162 = vpop.f32.mrf.mxu0
        %v2163 = vadd.f32 %v2143, %v2162
        %2164 = vdwg.mxu0
        %2165 = vmatpush.msra.mxu0 %v2094
        %2166 = vmatpush.msra.mxu0 %v2093
        %2167 = vmatpush.msra.mxu0 %v2092
        %2168 = vmatpush.msra.mxu0 %v2091
        %2169 = vmatpush.msra.mxu0 %v2090
        %2170 = vmatpush.msra.mxu0 %v2089
        %2171 = vmatpush.msra.mxu0 %v2088
        %2172 = vmatpush.msra.mxu0 %v2087
        %2173 = vmatpush.msra.mxu0 %v2086
        %2174 = vmatpush.msra.mxu0 %v2085
        %2175 = vmatpush.msra.mxu0 %v2084
        %2176 = vmatpush.msra.mxu0 %v2083
        %2177 = vmatpush.msra.mxu0 %v2082
        %2178 = vmatpush.msra.mxu0 %v2081
        %2179 = vmatpush.msra.mxu0 %v2080
        %2180 = vmatpush.msra.mxu0 %v2079
        %2181 = vmatmul.f32.gmra.mxu0 %v2100
        %v2182 = vpop.f32.mrf.mxu0
        %v2183 = vadd.f32 %v2163, %v2182
        %2184 = vdwg.mxu0
        %v2185 = vld [vmem:[#allocation14] sm:$0xff]
        %v2186 = vld [vmem:[#allocation14 + $0x8] sm:$0xff]
        %v2187 = vld [vmem:[#allocation14 + $0x10] sm:$0xff]
        %v2188 = vld [vmem:[#allocation14 + $0x18] sm:$0xff]
        %v2189 = vld [vmem:[#allocation16] sm:$0x1]
        %v2191 = vperm.slane %v2189, 0
        %vm2193 = vcmask 261120
        %v2195 = vsel %vm2193, %v1685, 0
        %v2198 = vsel %vm2193, %v1686, 0
        %2200 = vmatpush.msra.mxu0 0.0
        %2201 = vmatpush.msra.mxu0 0.0
        %2202 = vmatpush.msra.mxu0 0.0
        %2203 = vmatpush.msra.mxu0 0.0
        %2204 = vmatpush.msra.mxu0 0.0
        %2205 = vmatpush.msra.mxu0 0.0
        %2206 = vmatpush.msra.mxu0 0.0
        %2207 = vmatpush.msra.mxu0 0.0
        %2208 = vmatpush.msra.mxu0 0.0
        %2209 = vmatpush.msra.mxu0 0.0
        %2210 = vmatpush.msra.mxu0 0.0
        %2211 = vmatpush.msra.mxu0 0.0
        %2212 = vmatpush.msra.mxu0 %v2188
        %2213 = vmatpush.msra.mxu0 %v2187
        %2214 = vmatpush.msra.mxu0 %v2186
        %2215 = vmatpush.msra.mxu0 %v2185
        %2216 = vmatmul.f32.gmra.mxu0 %v2195
        %v2217 = vpop.f32.mrf.mxu0
        %v2218 = vadd.f32 %v2191, %v2217
        %2219 = vmatmul.f32.gmra.mxu0 %v2198
        %v2220 = vpop.f32.mrf.mxu0
        %v2221 = vadd.f32 %v2191, %v2220
        %2222 = vdwg.mxu0
        %v2224 = vsel %vm2193, %v2183, 0
        %2226 = vmatpush.msra.mxu0 0.0
        %2227 = vmatpush.msra.mxu0 0.0
        %2228 = vmatpush.msra.mxu0 0.0
        %2229 = vmatpush.msra.mxu0 0.0
        %2230 = vmatpush.msra.mxu0 0.0
        %2231 = vmatpush.msra.mxu0 0.0
        %2232 = vmatpush.msra.mxu0 0.0
        %2233 = vmatpush.msra.mxu0 0.0
        %2234 = vmatpush.msra.mxu0 0.0
        %2235 = vmatpush.msra.mxu0 0.0
        %2236 = vmatpush.msra.mxu0 0.0
        %2237 = vmatpush.msra.mxu0 0.0
        %2238 = vmatpush.msra.mxu0 %v2188
        %2239 = vmatpush.msra.mxu0 %v2187
        %2240 = vmatpush.msra.mxu0 %v2186
        %2241 = vmatpush.msra.mxu0 %v2185
        %2242 = vmatmul.f32.gmra.mxu0 %v2224
        %v2243 = vpop.f32.mrf.mxu0
        %v2244 = vadd.f32 %v2189, %v2243
        %2245 = vdwg.mxu0
        %v2246 = vld [vmem:[#allocation17] sm:$0xff]
        %v2247 = vld [vmem:[#allocation17 + $0x8] sm:$0xff]
        %v2248 = vld [vmem:[#allocation17 + $0x10] sm:$0xff]
        %v2249 = vld [vmem:[#allocation17 + $0x18] sm:$0xff]
        %v2250 = vld [vmem:[#allocation19] sm:$0x1]
        %v2252 = vperm.slane %v2250, 0
        %v2255 = vsel %vm2193, %v2218, 0
        %v2258 = vsel %vm2193, %v2221, 0
        %2260 = vmatpush.msra.mxu0 0.0
        %2261 = vmatpush.msra.mxu0 0.0
        %2262 = vmatpush.msra.mxu0 0.0
        %2263 = vmatpush.msra.mxu0 0.0
        %2264 = vmatpush.msra.mxu0 0.0
        %2265 = vmatpush.msra.mxu0 0.0
        %2266 = vmatpush.msra.mxu0 0.0
        %2267 = vmatpush.msra.mxu0 0.0
        %2268 = vmatpush.msra.mxu0 0.0
        %2269 = vmatpush.msra.mxu0 0.0
        %2270 = vmatpush.msra.mxu0 0.0
        %2271 = vmatpush.msra.mxu0 0.0
        %2272 = vmatpush.msra.mxu0 %v2249
        %2273 = vmatpush.msra.mxu0 %v2248
        %2274 = vmatpush.msra.mxu0 %v2247
        %2275 = vmatpush.msra.mxu0 %v2246
        %2276 = vmatmul.f32.gmra.mxu0 %v2255
        %v2277 = vpop.f32.mrf.mxu0
        %v2278 = vadd.f32 %v2252, %v2277
        %2279 = vmatmul.f32.gmra.mxu0 %v2258
        %v2280 = vpop.f32.mrf.mxu0
        %v2281 = vadd.f32 %v2252, %v2280
        %2282 = vdwg.mxu0
        %v2284 = vsel %vm2193, %v2244, 0
        %2286 = vmatpush.msra.mxu0 0.0
        %2287 = vmatpush.msra.mxu0 0.0
        %2288 = vmatpush.msra.mxu0 0.0
        %2289 = vmatpush.msra.mxu0 0.0
        %2290 = vmatpush.msra.mxu0 0.0
        %2291 = vmatpush.msra.mxu0 0.0
        %2292 = vmatpush.msra.mxu0 0.0
        %2293 = vmatpush.msra.mxu0 0.0
        %2294 = vmatpush.msra.mxu0 0.0
        %2295 = vmatpush.msra.mxu0 0.0
        %2296 = vmatpush.msra.mxu0 0.0
        %2297 = vmatpush.msra.mxu0 0.0
        %2298 = vmatpush.msra.mxu0 %v2249
        %2299 = vmatpush.msra.mxu0 %v2248
        %2300 = vmatpush.msra.mxu0 %v2247
        %2301 = vmatpush.msra.mxu0 %v2246
        %2302 = vmatmul.f32.gmra.mxu0 %v2284
        %v2303 = vpop.f32.mrf.mxu0
        %v2304 = vadd.f32 %v2250, %v2303
        %2305 = vdwg.mxu0
        %v2306 = vld [vmem:[#allocation20] sm:$0xff]
        %v2307 = vld [vmem:[#allocation20 + $0x8] sm:$0xff]
        %v2308 = vld [vmem:[#allocation20 + $0x10] sm:$0xff]
        %v2309 = vld [vmem:[#allocation20 + $0x18] sm:$0xff]
        %v2310 = vld [vmem:[#allocation22] sm:$0x1]
        %v2312 = vperm.slane %v2310, 0
        %v2315 = vsel %vm2193, %v2028, 0
        %v2318 = vsel %vm2193, %v2029, 0
        %2320 = vmatpush.msra.mxu0 0.0
        %2321 = vmatpush.msra.mxu0 0.0
        %2322 = vmatpush.msra.mxu0 0.0
        %2323 = vmatpush.msra.mxu0 0.0
        %2324 = vmatpush.msra.mxu0 0.0
        %2325 = vmatpush.msra.mxu0 0.0
        %2326 = vmatpush.msra.mxu0 0.0
        %2327 = vmatpush.msra.mxu0 0.0
        %2328 = vmatpush.msra.mxu0 0.0
        %2329 = vmatpush.msra.mxu0 0.0
        %2330 = vmatpush.msra.mxu0 0.0
        %2331 = vmatpush.msra.mxu0 0.0
        %2332 = vmatpush.msra.mxu0 %v2309
        %2333 = vmatpush.msra.mxu0 %v2308
        %2334 = vmatpush.msra.mxu0 %v2307
        %2335 = vmatpush.msra.mxu0 %v2306
        %2336 = vmatmul.f32.gmra.mxu0 %v2315
        %v2337 = vpop.f32.mrf.mxu0
        %v2338 = vadd.f32 %v2312, %v2337
        %2339 = vmatmul.f32.gmra.mxu0 %v2318
        %v2340 = vpop.f32.mrf.mxu0
        %v2341 = vadd.f32 %v2312, %v2340
        %2342 = vdwg.mxu0
        %v2345 = vrot.slane %v2278, 1
        %v2346 = vrot.slane %v2278, 2
        %v2347 = vrot.slane %v2278, 3
        %v2348 = vrot.slane %v2278, 4
        %v2349 = vrot.slane %v2278, 5
        %v2350 = vrot.slane %v2278, 6
        %v2351 = vrot.slane %v2278, 7
        %v2352 = vrot.slane %v2281, 1
        %v2353 = vperm.slane %v2278, 0
        %v2354 = vperm.slane %v2345, 0
        %v2355 = vperm.slane %v2346, 0
        %v2356 = vperm.slane %v2347, 0
        %v2357 = vperm.slane %v2348, 0
        %v2358 = vperm.slane %v2349, 0
        %v2359 = vperm.slane %v2350, 0
        %v2360 = vperm.slane %v2351, 0
        %v2361 = vperm.slane %v2281, 0
        %v2362 = vperm.slane %v2352, 0
        %v2373 = vadd.f32 %v2353, %v2338
        %v2374 = vadd.f32 %v2353, %v2341
        %v2375 = vadd.f32 %v2354, %v2338
        %v2376 = vadd.f32 %v2354, %v2341
        %v2377 = vadd.f32 %v2355, %v2338
        %v2378 = vadd.f32 %v2355, %v2341
        %v2379 = vadd.f32 %v2356, %v2338
        %v2380 = vadd.f32 %v2356, %v2341
        %v2381 = vadd.f32 %v2357, %v2338
        %v2382 = vadd.f32 %v2357, %v2341
        %v2383 = vadd.f32 %v2358, %v2338
        %v2384 = vadd.f32 %v2358, %v2341
        %v2385 = vadd.f32 %v2359, %v2338
        %v2386 = vadd.f32 %v2359, %v2341
        %v2387 = vadd.f32 %v2360, %v2338
        %v2388 = vadd.f32 %v2360, %v2341
        %v2389 = vadd.f32 %v2361, %v2338
        %v2390 = vadd.f32 %v2361, %v2341
        %v2391 = vadd.f32 %v2362, %v2338
        %v2392 = vadd.f32 %v2362, %v2341
        %v2393 = vmax.f32 %v2373, 0.0
        %v2394 = vmax.f32 %v2374, 0.0
        %v2395 = vmax.f32 %v2375, 0.0
        %v2396 = vmax.f32 %v2376, 0.0
        %v2397 = vmax.f32 %v2377, 0.0
        %v2398 = vmax.f32 %v2378, 0.0
        %v2399 = vmax.f32 %v2379, 0.0
        %v2400 = vmax.f32 %v2380, 0.0
        %v2401 = vmax.f32 %v2381, 0.0
        %v2402 = vmax.f32 %v2382, 0.0
        %v2403 = vmax.f32 %v2383, 0.0
        %v2404 = vmax.f32 %v2384, 0.0
        %v2405 = vmax.f32 %v2385, 0.0
        %v2406 = vmax.f32 %v2386, 0.0
        %v2407 = vmax.f32 %v2387, 0.0
        %v2408 = vmax.f32 %v2388, 0.0
        %v2409 = vmax.f32 %v2389, 0.0
        %v2410 = vmax.f32 %v2390, 0.0
        %v2411 = vmax.f32 %v2391, 0.0
        %v2412 = vmax.f32 %v2392, 0.0
        %v2413 = vsel %vm2193, %v2393, 0.0
        %vm2414 = vcmask 259072
        %v2415 = vsel %vm2414, %v2394, 0.0
        %v2416 = vadd.f32 %v2413, %v2415
        %v2417 = vrot.slane %v2416, 4
        %v2418 = vadd.f32 %v2416, %v2417
        %v2419 = vrot.slane %v2418, 2
        %v2420 = vadd.f32 %v2418, %v2419
        %v2421 = vrot.slane %v2420, 1
        %v2422 = vadd.f32 %v2420, %v2421
        %v2423 = vsel %vm2193, %v2395, 0.0
        %v2424 = vsel %vm2414, %v2396, 0.0
        %v2425 = vadd.f32 %v2423, %v2424
        %v2426 = vrot.slane %v2425, 4
        %v2427 = vadd.f32 %v2425, %v2426
        %v2428 = vrot.slane %v2427, 2
        %v2429 = vadd.f32 %v2427, %v2428
        %v2430 = vrot.slane %v2429, 1
        %v2431 = vadd.f32 %v2429, %v2430
        %v2432 = vsel %vm2193, %v2397, 0.0
        %v2433 = vsel %vm2414, %v2398, 0.0
        %v2434 = vadd.f32 %v2432, %v2433
        %v2435 = vrot.slane %v2434, 4
        %v2436 = vadd.f32 %v2434, %v2435
        %v2437 = vrot.slane %v2436, 2
        %v2438 = vadd.f32 %v2436, %v2437
        %v2439 = vrot.slane %v2438, 1
        %v2440 = vadd.f32 %v2438, %v2439
        %v2441 = vsel %vm2193, %v2399, 0.0
        %v2442 = vsel %vm2414, %v2400, 0.0
        %v2443 = vadd.f32 %v2441, %v2442
        %v2444 = vrot.slane %v2443, 4
        %v2445 = vadd.f32 %v2443, %v2444
        %v2446 = vrot.slane %v2445, 2
        %v2447 = vadd.f32 %v2445, %v2446
        %v2448 = vrot.slane %v2447, 1
        %v2449 = vadd.f32 %v2447, %v2448
        %v2450 = vsel %vm2193, %v2401, 0.0
        %v2451 = vsel %vm2414, %v2402, 0.0
        %v2452 = vadd.f32 %v2450, %v2451
        %v2453 = vrot.slane %v2452, 4
        %v2454 = vadd.f32 %v2452, %v2453
        %v2455 = vrot.slane %v2454, 2
        %v2456 = vadd.f32 %v2454, %v2455
        %v2457 = vrot.slane %v2456, 1
        %v2458 = vadd.f32 %v2456, %v2457
        %v2459 = vsel %vm2193, %v2403, 0.0
        %v2460 = vsel %vm2414, %v2404, 0.0
        %v2461 = vadd.f32 %v2459, %v2460
        %v2462 = vrot.slane %v2461, 4
        %v2463 = vadd.f32 %v2461, %v2462
        %v2464 = vrot.slane %v2463, 2
        %v2465 = vadd.f32 %v2463, %v2464
        %v2466 = vrot.slane %v2465, 1
        %v2467 = vadd.f32 %v2465, %v2466
        %v2468 = vsel %vm2193, %v2405, 0.0
        %v2469 = vsel %vm2414, %v2406, 0.0
        %v2470 = vadd.f32 %v2468, %v2469
        %v2471 = vrot.slane %v2470, 4
        %v2472 = vadd.f32 %v2470, %v2471
        %v2473 = vrot.slane %v2472, 2
        %v2474 = vadd.f32 %v2472, %v2473
        %v2475 = vrot.slane %v2474, 1
        %v2476 = vadd.f32 %v2474, %v2475
        %v2477 = vsel %vm2193, %v2407, 0.0
        %v2478 = vsel %vm2414, %v2408, 0.0
        %v2479 = vadd.f32 %v2477, %v2478
        %v2480 = vrot.slane %v2479, 4
        %v2481 = vadd.f32 %v2479, %v2480
        %v2482 = vrot.slane %v2481, 2
        %v2483 = vadd.f32 %v2481, %v2482
        %v2484 = vrot.slane %v2483, 1
        %v2485 = vadd.f32 %v2483, %v2484
        %v2486 = vsel %vm2193, %v2409, 0.0
        %v2487 = vsel %vm2414, %v2410, 0.0
        %v2488 = vadd.f32 %v2486, %v2487
        %v2489 = vrot.slane %v2488, 4
        %v2490 = vadd.f32 %v2488, %v2489
        %v2491 = vrot.slane %v2490, 2
        %v2492 = vadd.f32 %v2490, %v2491
        %v2493 = vrot.slane %v2492, 1
        %v2494 = vadd.f32 %v2492, %v2493
        %v2495 = vsel %vm2193, %v2411, 0.0
        %v2496 = vsel %vm2414, %v2412, 0.0
        %v2497 = vadd.f32 %v2495, %v2496
        %v2498 = vrot.slane %v2497, 4
        %v2499 = vadd.f32 %v2497, %v2498
        %v2500 = vrot.slane %v2499, 2
        %v2501 = vadd.f32 %v2499, %v2500
        %v2502 = vrot.slane %v2501, 1
        %v2503 = vadd.f32 %v2501, %v2502
        %v2504 = vadd.f32 %v2413, %v2423
        %v2505 = vadd.f32 %v2504, %v2432
        %v2506 = vadd.f32 %v2505, %v2441
        %v2507 = vadd.f32 %v2506, %v2450
        %v2508 = vadd.f32 %v2507, %v2459
        %v2509 = vadd.f32 %v2508, %v2468
        %v2510 = vadd.f32 %v2509, %v2477
        %v2511 = vadd.f32 %v2510, %v2486
        %v2512 = vadd.f32 %v2511, %v2495
        %v2513 = vadd.f32 %v2415, %v2424
        %v2514 = vadd.f32 %v2513, %v2433
        %v2515 = vadd.f32 %v2514, %v2442
        %v2516 = vadd.f32 %v2515, %v2451
        %v2517 = vadd.f32 %v2516, %v2460
        %v2518 = vadd.f32 %v2517, %v2469
        %v2519 = vadd.f32 %v2518, %v2478
        %v2520 = vadd.f32 %v2519, %v2487
        %v2521 = vadd.f32 %v2520, %v2496
        %v2522 = vperm.slane %v2304, 0
        %v2523 = vadd.f32 %v2522, %v2338
        %v2524 = vadd.f32 %v2522, %v2341
        %v2525 = vmax.f32 %v2523, 0.0
        %v2526 = vmax.f32 %v2524, 0.0
        %v2527 = vadd.f32 %v2512, %v2525
        %v2528 = vadd.f32 %v2521, %v2526
        %v2529 = vmul.f32 %v2422, 0.071428575
        %v2530 = vmul.f32 %v2431, 0.071428575
        %v2531 = vmul.f32 %v2440, 0.071428575
        %v2532 = vmul.f32 %v2449, 0.071428575
        %v2533 = vmul.f32 %v2458, 0.071428575
        %v2534 = vmul.f32 %v2467, 0.071428575
        %v2535 = vmul.f32 %v2476, 0.071428575
        %v2536 = vmul.f32 %v2485, 0.071428575
        %v2537 = vmul.f32 %v2494, 0.071428575
        %v2538 = vmul.f32 %v2503, 0.071428575
        %v2539 = vld [vmem:[#allocation23] sm:$0xff]
        %v2540 = vld [vmem:[#allocation23 + $0x8] sm:$0xff]
        %v2541 = vld [vmem:[#allocation23 + $0x10] sm:$0xff]
        %v2542 = vld [vmem:[#allocation23 + $0x18] sm:$0xff]
        %v2543 = vld [vmem:[#allocation25] sm:$0x1]
        %v2545 = vperm.slane %v2543, 0
        %vm2557 = vcmask 1041409
        %v2558 = vsel %vm2557, %v2530, %v2529
        %vm2559 = vcmask 1042434
        %v2560 = vsel %vm2559, %v2531, %v2558
        %vm2561 = vcmask 1043459
        %v2562 = vsel %vm2561, %v2532, %v2560
        %vm2563 = vcmask 1044484
        %v2564 = vsel %vm2563, %v2533, %v2562
        %vm2565 = vcmask 1045509
        %v2566 = vsel %vm2565, %v2534, %v2564
        %vm2567 = vcmask 1046534
        %v2568 = vsel %vm2567, %v2535, %v2566
        %vm2569 = vcmask 1047559
        %v2570 = vsel %vm2569, %v2536, %v2568
        %v2571 = vsel %vm2557, %v2538, %v2537
        %v2572 = vsel %vm2193, %v2570, 0
        %v2574 = vsel %vm2193, %v2571, 0
        %2576 = vmatpush.msra.mxu0 0.0
        %2577 = vmatpush.msra.mxu0 0.0
        %2578 = vmatpush.msra.mxu0 0.0
        %2579 = vmatpush.msra.mxu0 0.0
        %2580 = vmatpush.msra.mxu0 0.0
        %2581 = vmatpush.msra.mxu0 0.0
        %2582 = vmatpush.msra.mxu0 0.0
        %2583 = vmatpush.msra.mxu0 0.0
        %2584 = vmatpush.msra.mxu0 0.0
        %2585 = vmatpush.msra.mxu0 0.0
        %2586 = vmatpush.msra.mxu0 0.0
        %2587 = vmatpush.msra.mxu0 0.0
        %2588 = vmatpush.msra.mxu0 %v2542
        %2589 = vmatpush.msra.mxu0 %v2541
        %2590 = vmatpush.msra.mxu0 %v2540
        %2591 = vmatpush.msra.mxu0 %v2539
        %2592 = vmatmul.f32.gmra.mxu0 %v2572
        %v2593 = vpop.f32.mrf.mxu0
        %v2594 = vadd.f32 %v2545, %v2593
        %2595 = vmatmul.f32.gmra.mxu0 %v2574
        %v2596 = vpop.f32.mrf.mxu0
        %v2597 = vadd.f32 %v2545, %v2596
        %2598 = vdwg.mxu0
        %v2599 = vmul.f32 %v2527, 0.09090909
        %v2600 = vmul.f32 %v2528, 0.09090909
        %v2602 = vsel %vm2193, %v2599, 0
        %v2605 = vsel %vm2193, %v2600, 0
        %2607 = vmatpush.msra.mxu0 0.0
        %2608 = vmatpush.msra.mxu0 0.0
        %2609 = vmatpush.msra.mxu0 0.0
        %2610 = vmatpush.msra.mxu0 0.0
        %2611 = vmatpush.msra.mxu0 0.0
        %2612 = vmatpush.msra.mxu0 0.0
        %2613 = vmatpush.msra.mxu0 0.0
        %2614 = vmatpush.msra.mxu0 0.0
        %2615 = vmatpush.msra.mxu0 0.0
        %2616 = vmatpush.msra.mxu0 0.0
        %2617 = vmatpush.msra.mxu0 0.0
        %2618 = vmatpush.msra.mxu0 0.0
        %2619 = vmatpush.msra.mxu0 %v2542
        %2620 = vmatpush.msra.mxu0 %v2541
        %2621 = vmatpush.msra.mxu0 %v2540
        %2622 = vmatpush.msra.mxu0 %v2539
        %2623 = vmatmul.f32.gmra.mxu0 %v2602
        %v2624 = vpop.f32.mrf.mxu0
        %v2625 = vadd.f32 %v2545, %v2624
        %2626 = vmatmul.f32.gmra.mxu0 %v2605
        %v2627 = vpop.f32.mrf.mxu0
        %v2628 = vadd.f32 %v2545, %v2627
        %2629 = vdwg.mxu0
        %v2630 = vsub.f32 0.0, %v2594
        %v2631 = vsub.f32 0.0, %v2597
        %v2632 = vmul.f32 %v2630, 1.442695
        %v2633 = vpow.pop %v2632
        %v2634 = vmul.f32 %v2631, 1.442695
        %v2635 = vpow.pop %v2634
        %v2636 = vadd.f32 %v2633, 1.0
        %v2637 = vadd.f32 %v2635, 1.0
        %v2638 = vrcp.pop %v2636
        %v2639 = vmul.f32 %v2636, %v2638
        %v2640 = vsub.f32 1.0, %v2639
        %v2641 = vmul.f32 %v2638, %v2640
        %v2642 = vadd.f32 %v2638, %v2641
        %vm2643 = vweird.f32 %v2636
        %vm2644 = vweird.f32 %v2638
        %vm2645 = vmor %vm2643, %vm2644
        %v2646 = vsel %vm2645, %v2638, %v2642
        %v2647 = vand.u32 2147483647, %v2636
        %vm2648 = vcmp.eq.f32.partialorder %v2647, 8.507059e+37
        %v2649 = vand.u32 %v2636, 2147483648
        %v2650 = vor.u32 1.1754944e-38, %v2649
        %v2651 = vsel %vm2648, %v2650, %v2646
        %v2652 = vmul.f32 1.0, %v2651
        %v2653 = vrcp.pop %v2637
        %v2654 = vmul.f32 %v2637, %v2653
        %v2655 = vsub.f32 1.0, %v2654
        %v2656 = vmul.f32 %v2653, %v2655
        %v2657 = vadd.f32 %v2653, %v2656
        %vm2658 = vweird.f32 %v2637
        %vm2659 = vweird.f32 %v2653
        %vm2660 = vmor %vm2658, %vm2659
        %v2661 = vsel %vm2660, %v2653, %v2657
        %v2662 = vand.u32 2147483647, %v2637
        %vm2663 = vcmp.eq.f32.partialorder %v2662, 8.507059e+37
        %v2664 = vand.u32 %v2637, 2147483648
        %v2665 = vor.u32 1.1754944e-38, %v2664
        %v2666 = vsel %vm2663, %v2665, %v2661
        %v2667 = vmul.f32 1.0, %v2666
        %v2668 = vsub.f32 0.0, %v2625
        %v2669 = vsub.f32 0.0, %v2628
        %v2670 = vmul.f32 %v2668, 1.442695
        %v2671 = vpow.pop %v2670
        %v2672 = vmul.f32 %v2669, 1.442695
        %v2673 = vpow.pop %v2672
        %v2674 = vadd.f32 %v2671, 1.0
        %v2675 = vadd.f32 %v2673, 1.0
        %v2676 = vrcp.pop %v2674
        %v2677 = vmul.f32 %v2674, %v2676
        %v2678 = vsub.f32 1.0, %v2677
        %v2679 = vmul.f32 %v2676, %v2678
        %v2680 = vadd.f32 %v2676, %v2679
        %vm2681 = vweird.f32 %v2674
        %vm2682 = vweird.f32 %v2676
        %vm2683 = vmor %vm2681, %vm2682
        %v2684 = vsel %vm2683, %v2676, %v2680
        %v2685 = vand.u32 2147483647, %v2674
        %vm2686 = vcmp.eq.f32.partialorder %v2685, 8.507059e+37
        %v2687 = vand.u32 %v2674, 2147483648
        %v2688 = vor.u32 1.1754944e-38, %v2687
        %v2689 = vsel %vm2686, %v2688, %v2684
        %v2690 = vmul.f32 1.0, %v2689
        %v2691 = vrcp.pop %v2675
        %v2692 = vmul.f32 %v2675, %v2691
        %v2693 = vsub.f32 1.0, %v2692
        %v2694 = vmul.f32 %v2691, %v2693
        %v2695 = vadd.f32 %v2691, %v2694
        %vm2696 = vweird.f32 %v2675
        %vm2697 = vweird.f32 %v2691
        %vm2698 = vmor %vm2696, %vm2697
        %v2699 = vsel %vm2698, %v2691, %v2695
        %v2700 = vand.u32 2147483647, %v2675
        %vm2701 = vcmp.eq.f32.partialorder %v2700, 8.507059e+37
        %v2702 = vand.u32 %v2675, 2147483648
        %v2703 = vor.u32 1.1754944e-38, %v2702
        %v2704 = vsel %vm2701, %v2703, %v2699
        %v2705 = vmul.f32 1.0, %v2704
        %v2706 = vadd.f32 %v2652, 0.5
        %v2707 = vadd.f32 %v2667, 0.5
        %v2708 = vmul.f32 %v2218, %v2706
        %v2709 = vmul.f32 %v2221, %v2707
        %v2710 = vsel %vm2193, %v2708, -inf
        %vm2711 = vcmask 254976
        %v2712 = vsel %vm2711, %v2709, -inf
        %v2713 = vmax.f32 %v2710, %v2712
        %v2714 = vrot.slane %v2713, 4
        %v2715 = vmax.f32 %v2713, %v2714
        %v2716 = vrot.slane %v2715, 2
        %v2717 = vmax.f32 %v2715, %v2716
        %v2718 = vrot.slane %v2717, 1
        %v2719 = vmax.f32 %v2717, %v2718
        %v2720 = vadd.f32 %v2690, 0.5
        %v2721 = vadd.f32 %v2705, 0.5
        %v2722 = vmul.f32 %v2028, %v2720
        %v2723 = vmul.f32 %v2029, %v2721
        %v2724 = vsel %vm2193, %v2722, -inf
        %v2725 = vsel %vm2414, %v2723, -inf
        %v2726 = vmax.f32 %v2724, %v2725
        %v2727 = vrot.slane %v2726, 4
        %v2728 = vmax.f32 %v2726, %v2727
        %v2729 = vrot.slane %v2728, 2
        %v2730 = vmax.f32 %v2728, %v2729
        %v2731 = vrot.slane %v2730, 1
        %v2732 = vmax.f32 %v2730, %v2731
        %v2733 = vpack.c.bf16 %v2719, %v2719
        %v2734 = vld [vmem:[#allocation26] sm:$0xff]
        %v2735 = vld [vmem:[#allocation26 + $0x8] sm:$0xff]
        %v2736 = vld [vmem:[#allocation26 + $0x10] sm:$0xff]
        %v2737 = vld [vmem:[#allocation26 + $0x18] sm:$0xff]
        %v2738 = vld [vmem:[#allocation26 + $0x20] sm:$0xff]
        %v2739 = vld [vmem:[#allocation26 + $0x28] sm:$0xff]
        %v2740 = vld [vmem:[#allocation26 + $0x30] sm:$0xff]
        %v2741 = vld [vmem:[#allocation26 + $0x38] sm:$0xff]
        %v2742 = vld [vmem:[#allocation26 + $0x40] sm:$0xff]
        %v2743 = vld [vmem:[#allocation26 + $0x48] sm:$0xff]
        %v2744 = vld [vmem:[#allocation26 + $0x50] sm:$0xff]
        %v2745 = vld [vmem:[#allocation26 + $0x58] sm:$0xff]
        %v2746 = vld [vmem:[#allocation26 + $0x60] sm:$0xff]
        %v2747 = vld [vmem:[#allocation26 + $0x68] sm:$0xff]
        %v2748 = vld [vmem:[#allocation26 + $0x70] sm:$0xff]
        %v2749 = vld [vmem:[#allocation26 + $0x78] sm:$0xff]
        %v2750 = vpack.c.bf16 %v2732, %v2732
        %v2751 = vld [vmem:[#allocation26 + $0x80] sm:$0xff]
        %v2752 = vld [vmem:[#allocation26 + $0x88] sm:$0xff]
        %v2753 = vld [vmem:[#allocation26 + $0x90] sm:$0xff]
        %v2754 = vld [vmem:[#allocation26 + $0x98] sm:$0xff]
        %v2755 = vld [vmem:[#allocation26 + $0xa0] sm:$0xff]
        %v2756 = vld [vmem:[#allocation26 + $0xa8] sm:$0xff]
        %v2757 = vld [vmem:[#allocation26 + $0xb0] sm:$0xff]
        %v2758 = vld [vmem:[#allocation26 + $0xb8] sm:$0xff]
        %v2759 = vld [vmem:[#allocation26 + $0xc0] sm:$0xff]
        %v2760 = vld [vmem:[#allocation26 + $0xc8] sm:$0xff]
        %v2761 = vld [vmem:[#allocation26 + $0xd0] sm:$0xff]
        %v2762 = vld [vmem:[#allocation26 + $0xd8] sm:$0xff]
        %v2763 = vld [vmem:[#allocation26 + $0xe0] sm:$0xff]
        %v2764 = vld [vmem:[#allocation26 + $0xe8] sm:$0xff]
        %v2765 = vld [vmem:[#allocation26 + $0xf0] sm:$0xff]
        %v2766 = vld [vmem:[#allocation26 + $0xf8] sm:$0xff]
        %v2783 = vunpack.c.l.b16 %v2751
        %v2784 = vunpack.c.h.b16 %v2751
        %v2785 = vunpack.c.l.b16 %v2752
        %v2786 = vunpack.c.h.b16 %v2752
        %v2787 = vunpack.c.l.b16 %v2753
        %v2788 = vunpack.c.h.b16 %v2753
        %v2789 = vunpack.c.l.b16 %v2754
        %v2790 = vunpack.c.h.b16 %v2754
        %v2791 = vunpack.c.l.b16 %v2755
        %v2792 = vunpack.c.h.b16 %v2755
        %v2793 = vunpack.c.l.b16 %v2756
        %v2794 = vunpack.c.h.b16 %v2756
        %v2795 = vunpack.c.l.b16 %v2757
        %v2796 = vunpack.c.h.b16 %v2757
        %v2797 = vunpack.c.l.b16 %v2758
        %v2798 = vunpack.c.h.b16 %v2758
        %v2799 = vunpack.c.l.b16 %v2759
        %v2800 = vunpack.c.h.b16 %v2759
        %v2801 = vunpack.c.l.b16 %v2760
        %v2802 = vunpack.c.h.b16 %v2760
        %v2803 = vunpack.c.l.b16 %v2761
        %v2804 = vunpack.c.h.b16 %v2761
        %v2805 = vunpack.c.l.b16 %v2762
        %v2806 = vunpack.c.h.b16 %v2762
        %v2807 = vunpack.c.l.b16 %v2763
        %v2808 = vunpack.c.h.b16 %v2763
        %v2809 = vunpack.c.l.b16 %v2764
        %v2810 = vunpack.c.h.b16 %v2764
        %v2811 = vunpack.c.l.b16 %v2765
        %v2812 = vunpack.c.h.b16 %v2765
        %v2813 = vunpack.c.l.b16 %v2766
        %v2814 = vunpack.c.h.b16 %v2766
        %v2815 = vpack.c.b16 %v2791, %v2783
        %v2816 = vpack.c.b16 %v2792, %v2784
        %v2817 = vpack.c.b16 %v2793, %v2785
        %v2818 = vpack.c.b16 %v2794, %v2786
        %v2819 = vpack.c.b16 %v2795, %v2787
        %v2820 = vpack.c.b16 %v2796, %v2788
        %v2821 = vpack.c.b16 %v2797, %v2789
        %v2822 = vpack.c.b16 %v2798, %v2790
        %v2823 = vpack.c.b16 %v2807, %v2799
        %v2824 = vpack.c.b16 %v2808, %v2800
        %v2825 = vpack.c.b16 %v2809, %v2801
        %v2826 = vpack.c.b16 %v2810, %v2802
        %v2827 = vpack.c.b16 %v2811, %v2803
        %v2828 = vpack.c.b16 %v2812, %v2804
        %v2829 = vpack.c.b16 %v2813, %v2805
        %v2830 = vpack.c.b16 %v2814, %v2806
        %v2848 = vsel %vm2193, %v2750, 0
        %2850 = vmatpush.bf16.msra.mxu0 0
        %2851 = vmatpush.bf16.msra.mxu0 0
        %2852 = vmatpush.bf16.msra.mxu0 0
        %2853 = vmatpush.bf16.msra.mxu0 0
        %2854 = vmatpush.bf16.msra.mxu0 0
        %2855 = vmatpush.bf16.msra.mxu0 0
        %2856 = vmatpush.bf16.msra.mxu0 %v2823
        %2857 = vmatpush.bf16.msra.mxu0 %v2815
        %2858 = vmatmul.bf16.gmra.mxu0 %v2848
        %v2859 = vpop.f32.mrf.mxu0
        %v2860 = vadd.f32 0.0, %v2859
        %v2861 = vpop.f32.mrf.mxu0
        %2862 = vdwg.mxu0
        %2863 = vmatpush.bf16.msra.mxu0 0
        %2864 = vmatpush.bf16.msra.mxu0 0
        %2865 = vmatpush.bf16.msra.mxu0 0
        %2866 = vmatpush.bf16.msra.mxu0 0
        %2867 = vmatpush.bf16.msra.mxu0 0
        %2868 = vmatpush.bf16.msra.mxu0 0
        %2869 = vmatpush.bf16.msra.mxu0 %v2824
        %2870 = vmatpush.bf16.msra.mxu0 %v2816
        %2871 = vmatmul.bf16.gmra.mxu0 %v2848
        %v2872 = vpop.f32.mrf.mxu0
        %v2873 = vadd.f32 0.0, %v2872
        %v2874 = vpop.f32.mrf.mxu0
        %2875 = vdwg.mxu0
        %2876 = vmatpush.bf16.msra.mxu0 0
        %2877 = vmatpush.bf16.msra.mxu0 0
        %2878 = vmatpush.bf16.msra.mxu0 0
        %2879 = vmatpush.bf16.msra.mxu0 0
        %2880 = vmatpush.bf16.msra.mxu0 0
        %2881 = vmatpush.bf16.msra.mxu0 0
        %2882 = vmatpush.bf16.msra.mxu0 %v2825
        %2883 = vmatpush.bf16.msra.mxu0 %v2817
        %2884 = vmatmul.bf16.gmra.mxu0 %v2848
        %v2885 = vpop.f32.mrf.mxu0
        %v2886 = vadd.f32 0.0, %v2885
        %v2887 = vpop.f32.mrf.mxu0
        %2888 = vdwg.mxu0
        %2889 = vmatpush.bf16.msra.mxu0 0
        %2890 = vmatpush.bf16.msra.mxu0 0
        %2891 = vmatpush.bf16.msra.mxu0 0
        %2892 = vmatpush.bf16.msra.mxu0 0
        %2893 = vmatpush.bf16.msra.mxu0 0
        %2894 = vmatpush.bf16.msra.mxu0 0
        %2895 = vmatpush.bf16.msra.mxu0 %v2826
        %2896 = vmatpush.bf16.msra.mxu0 %v2818
        %2897 = vmatmul.bf16.gmra.mxu0 %v2848
        %v2898 = vpop.f32.mrf.mxu0
        %v2899 = vadd.f32 0.0, %v2898
        %v2900 = vpop.f32.mrf.mxu0
        %2901 = vdwg.mxu0
        %2902 = vmatpush.bf16.msra.mxu0 0
        %2903 = vmatpush.bf16.msra.mxu0 0
        %2904 = vmatpush.bf16.msra.mxu0 0
        %2905 = vmatpush.bf16.msra.mxu0 0
        %2906 = vmatpush.bf16.msra.mxu0 0
        %2907 = vmatpush.bf16.msra.mxu0 0
        %2908 = vmatpush.bf16.msra.mxu0 %v2827
        %2909 = vmatpush.bf16.msra.mxu0 %v2819
        %2910 = vmatmul.bf16.gmra.mxu0 %v2848
        %v2911 = vpop.f32.mrf.mxu0
        %v2912 = vadd.f32 0.0, %v2911
        %v2913 = vpop.f32.mrf.mxu0
        %2914 = vdwg.mxu0
        %2915 = vmatpush.bf16.msra.mxu0 0
        %2916 = vmatpush.bf16.msra.mxu0 0
        %2917 = vmatpush.bf16.msra.mxu0 0
        %2918 = vmatpush.bf16.msra.mxu0 0
        %2919 = vmatpush.bf16.msra.mxu0 0
        %2920 = vmatpush.bf16.msra.mxu0 0
        %2921 = vmatpush.bf16.msra.mxu0 %v2828
        %2922 = vmatpush.bf16.msra.mxu0 %v2820
        %2923 = vmatmul.bf16.gmra.mxu0 %v2848
        %v2924 = vpop.f32.mrf.mxu0
        %v2925 = vadd.f32 0.0, %v2924
        %v2926 = vpop.f32.mrf.mxu0
        %2927 = vdwg.mxu0
        %2928 = vmatpush.bf16.msra.mxu0 0
        %2929 = vmatpush.bf16.msra.mxu0 0
        %2930 = vmatpush.bf16.msra.mxu0 0
        %2931 = vmatpush.bf16.msra.mxu0 0
        %2932 = vmatpush.bf16.msra.mxu0 0
        %2933 = vmatpush.bf16.msra.mxu0 0
        %2934 = vmatpush.bf16.msra.mxu0 %v2829
        %2935 = vmatpush.bf16.msra.mxu0 %v2821
        %2936 = vmatmul.bf16.gmra.mxu0 %v2848
        %v2937 = vpop.f32.mrf.mxu0
        %v2938 = vadd.f32 0.0, %v2937
        %v2939 = vpop.f32.mrf.mxu0
        %2940 = vdwg.mxu0
        %2941 = vmatpush.bf16.msra.mxu0 0
        %2942 = vmatpush.bf16.msra.mxu0 0
        %2943 = vmatpush.bf16.msra.mxu0 0
        %2944 = vmatpush.bf16.msra.mxu0 0
        %2945 = vmatpush.bf16.msra.mxu0 0
        %2946 = vmatpush.bf16.msra.mxu0 0
        %2947 = vmatpush.bf16.msra.mxu0 %v2830
        %2948 = vmatpush.bf16.msra.mxu0 %v2822
        %2949 = vmatmul.bf16.gmra.mxu0 %v2848
        %v2950 = vpop.f32.mrf.mxu0
        %v2951 = vadd.f32 0.0, %v2950
        %v2952 = vpop.f32.mrf.mxu0
        %2953 = vdwg.mxu0
        %v2970 = vunpack.c.l.b16 %v2734
        %v2971 = vunpack.c.h.b16 %v2734
        %v2972 = vunpack.c.l.b16 %v2735
        %v2973 = vunpack.c.h.b16 %v2735
        %v2974 = vunpack.c.l.b16 %v2736
        %v2975 = vunpack.c.h.b16 %v2736
        %v2976 = vunpack.c.l.b16 %v2737
        %v2977 = vunpack.c.h.b16 %v2737
        %v2978 = vunpack.c.l.b16 %v2738
        %v2979 = vunpack.c.h.b16 %v2738
        %v2980 = vunpack.c.l.b16 %v2739
        %v2981 = vunpack.c.h.b16 %v2739
        %v2982 = vunpack.c.l.b16 %v2740
        %v2983 = vunpack.c.h.b16 %v2740
        %v2984 = vunpack.c.l.b16 %v2741
        %v2985 = vunpack.c.h.b16 %v2741
        %v2986 = vunpack.c.l.b16 %v2742
        %v2987 = vunpack.c.h.b16 %v2742
        %v2988 = vunpack.c.l.b16 %v2743
        %v2989 = vunpack.c.h.b16 %v2743
        %v2990 = vunpack.c.l.b16 %v2744
        %v2991 = vunpack.c.h.b16 %v2744
        %v2992 = vunpack.c.l.b16 %v2745
        %v2993 = vunpack.c.h.b16 %v2745
        %v2994 = vunpack.c.l.b16 %v2746
        %v2995 = vunpack.c.h.b16 %v2746
        %v2996 = vunpack.c.l.b16 %v2747
        %v2997 = vunpack.c.h.b16 %v2747
        %v2998 = vunpack.c.l.b16 %v2748
        %v2999 = vunpack.c.h.b16 %v2748
        %v3000 = vunpack.c.l.b16 %v2749
        %v3001 = vunpack.c.h.b16 %v2749
        %v3002 = vpack.c.b16 %v2978, %v2970
        %v3003 = vpack.c.b16 %v2979, %v2971
        %v3004 = vpack.c.b16 %v2980, %v2972
        %v3005 = vpack.c.b16 %v2981, %v2973
        %v3006 = vpack.c.b16 %v2982, %v2974
        %v3007 = vpack.c.b16 %v2983, %v2975
        %v3008 = vpack.c.b16 %v2984, %v2976
        %v3009 = vpack.c.b16 %v2985, %v2977
        %v3010 = vpack.c.b16 %v2994, %v2986
        %v3011 = vpack.c.b16 %v2995, %v2987
        %v3012 = vpack.c.b16 %v2996, %v2988
        %v3013 = vpack.c.b16 %v2997, %v2989
        %v3014 = vpack.c.b16 %v2998, %v2990
        %v3015 = vpack.c.b16 %v2999, %v2991
        %v3016 = vpack.c.b16 %v3000, %v2992
        %v3017 = vpack.c.b16 %v3001, %v2993
        %v3035 = vsel %vm2193, %v2733, 0
        %3037 = vmatpush.bf16.msra.mxu0 0
        %3038 = vmatpush.bf16.msra.mxu0 0
        %3039 = vmatpush.bf16.msra.mxu0 0
        %3040 = vmatpush.bf16.msra.mxu0 0
        %3041 = vmatpush.bf16.msra.mxu0 0
        %3042 = vmatpush.bf16.msra.mxu0 0
        %3043 = vmatpush.bf16.msra.mxu0 %v3010
        %3044 = vmatpush.bf16.msra.mxu0 %v3002
        %3045 = vmatmul.bf16.gmra.mxu0 %v3035
        %v3046 = vpop.f32.mrf.mxu0
        %v3047 = vadd.f32 %v2860, %v3046
        %v3048 = vpop.f32.mrf.mxu0
        %3049 = vdwg.mxu0
        %3050 = vmatpush.bf16.msra.mxu0 0
        %3051 = vmatpush.bf16.msra.mxu0 0
        %3052 = vmatpush.bf16.msra.mxu0 0
        %3053 = vmatpush.bf16.msra.mxu0 0
        %3054 = vmatpush.bf16.msra.mxu0 0
        %3055 = vmatpush.bf16.msra.mxu0 0
        %3056 = vmatpush.bf16.msra.mxu0 %v3011
        %3057 = vmatpush.bf16.msra.mxu0 %v3003
        %3058 = vmatmul.bf16.gmra.mxu0 %v3035
        %v3059 = vpop.f32.mrf.mxu0
        %v3060 = vadd.f32 %v2873, %v3059
        %v3061 = vpop.f32.mrf.mxu0
        %3062 = vdwg.mxu0
        %3063 = vmatpush.bf16.msra.mxu0 0
        %3064 = vmatpush.bf16.msra.mxu0 0
        %3065 = vmatpush.bf16.msra.mxu0 0
        %3066 = vmatpush.bf16.msra.mxu0 0
        %3067 = vmatpush.bf16.msra.mxu0 0
        %3068 = vmatpush.bf16.msra.mxu0 0
        %3069 = vmatpush.bf16.msra.mxu0 %v3012
        %3070 = vmatpush.bf16.msra.mxu0 %v3004
        %3071 = vmatmul.bf16.gmra.mxu0 %v3035
        %v3072 = vpop.f32.mrf.mxu0
        %v3073 = vadd.f32 %v2886, %v3072
        %v3074 = vpop.f32.mrf.mxu0
        %3075 = vdwg.mxu0
        %3076 = vmatpush.bf16.msra.mxu0 0
        %3077 = vmatpush.bf16.msra.mxu0 0
        %3078 = vmatpush.bf16.msra.mxu0 0
        %3079 = vmatpush.bf16.msra.mxu0 0
        %3080 = vmatpush.bf16.msra.mxu0 0
        %3081 = vmatpush.bf16.msra.mxu0 0
        %3082 = vmatpush.bf16.msra.mxu0 %v3013
        %3083 = vmatpush.bf16.msra.mxu0 %v3005
        %3084 = vmatmul.bf16.gmra.mxu0 %v3035
        %v3085 = vpop.f32.mrf.mxu0
        %v3086 = vadd.f32 %v2899, %v3085
        %v3087 = vpop.f32.mrf.mxu0
        %3088 = vdwg.mxu0
        %3089 = vmatpush.bf16.msra.mxu0 0
        %3090 = vmatpush.bf16.msra.mxu0 0
        %3091 = vmatpush.bf16.msra.mxu0 0
        %3092 = vmatpush.bf16.msra.mxu0 0
        %3093 = vmatpush.bf16.msra.mxu0 0
        %3094 = vmatpush.bf16.msra.mxu0 0
        %3095 = vmatpush.bf16.msra.mxu0 %v3014
        %3096 = vmatpush.bf16.msra.mxu0 %v3006
        %3097 = vmatmul.bf16.gmra.mxu0 %v3035
        %v3098 = vpop.f32.mrf.mxu0
        %v3099 = vadd.f32 %v2912, %v3098
        %v3100 = vpop.f32.mrf.mxu0
        %3101 = vdwg.mxu0
        %3102 = vmatpush.bf16.msra.mxu0 0
        %3103 = vmatpush.bf16.msra.mxu0 0
        %3104 = vmatpush.bf16.msra.mxu0 0
        %3105 = vmatpush.bf16.msra.mxu0 0
        %3106 = vmatpush.bf16.msra.mxu0 0
        %3107 = vmatpush.bf16.msra.mxu0 0
        %3108 = vmatpush.bf16.msra.mxu0 %v3015
        %3109 = vmatpush.bf16.msra.mxu0 %v3007
        %3110 = vmatmul.bf16.gmra.mxu0 %v3035
        %v3111 = vpop.f32.mrf.mxu0
        %v3112 = vadd.f32 %v2925, %v3111
        %v3113 = vpop.f32.mrf.mxu0
        %3114 = vdwg.mxu0
        %3115 = vmatpush.bf16.msra.mxu0 0
        %3116 = vmatpush.bf16.msra.mxu0 0
        %3117 = vmatpush.bf16.msra.mxu0 0
        %3118 = vmatpush.bf16.msra.mxu0 0
        %3119 = vmatpush.bf16.msra.mxu0 0
        %3120 = vmatpush.bf16.msra.mxu0 0
        %3121 = vmatpush.bf16.msra.mxu0 %v3016
        %3122 = vmatpush.bf16.msra.mxu0 %v3008
        %3123 = vmatmul.bf16.gmra.mxu0 %v3035
        %v3124 = vpop.f32.mrf.mxu0
        %v3125 = vadd.f32 %v2938, %v3124
        %v3126 = vpop.f32.mrf.mxu0
        %3127 = vdwg.mxu0
        %3128 = vmatpush.bf16.msra.mxu0 0
        %3129 = vmatpush.bf16.msra.mxu0 0
        %3130 = vmatpush.bf16.msra.mxu0 0
        %3131 = vmatpush.bf16.msra.mxu0 0
        %3132 = vmatpush.bf16.msra.mxu0 0
        %3133 = vmatpush.bf16.msra.mxu0 0
        %3134 = vmatpush.bf16.msra.mxu0 %v3017
        %3135 = vmatpush.bf16.msra.mxu0 %v3009
        %3136 = vmatmul.bf16.gmra.mxu0 %v3035
        %v3137 = vpop.f32.mrf.mxu0
        %v3138 = vadd.f32 %v2951, %v3137
        %v3139 = vpop.f32.mrf.mxu0
        %3140 = vdwg.mxu0
        %v3141 = vld [vmem:[#allocation28] sm:$0xff]
        %v3143 = vperm.slane %v3141, 0
        %v3144 = vperm.slane %v3141, 1
        %v3145 = vperm.slane %v3141, 2
        %v3146 = vperm.slane %v3141, 3
        %v3147 = vperm.slane %v3141, 4
        %v3148 = vperm.slane %v3141, 5
        %v3149 = vperm.slane %v3141, 6
        %v3150 = vperm.slane %v3141, 7
        %v3159 = vadd.f32 %v3047, %v3143
        %v3160 = vadd.f32 %v3060, %v3144
        %v3161 = vadd.f32 %v3073, %v3145
        %v3162 = vadd.f32 %v3086, %v3146
        %v3163 = vadd.f32 %v3099, %v3147
        %v3164 = vadd.f32 %v3112, %v3148
        %v3165 = vadd.f32 %v3125, %v3149
        %v3166 = vadd.f32 %v3138, %v3150
        %vm3167 = vcmp.ge.f32.partialorder %v3159, 0.0
        %vm3168 = vcmp.ge.f32.partialorder %v3160, 0.0
        %vm3169 = vcmp.ge.f32.partialorder %v3161, 0.0
        %vm3170 = vcmp.ge.f32.partialorder %v3162, 0.0
        %vm3171 = vcmp.ge.f32.partialorder %v3163, 0.0
        %vm3172 = vcmp.ge.f32.partialorder %v3164, 0.0
        %vm3173 = vcmp.ge.f32.partialorder %v3165, 0.0
        %vm3174 = vcmp.ge.f32.partialorder %v3166, 0.0
        %v3175 = vmul.f32 %v3159, 0.01
        %v3176 = vmul.f32 %v3160, 0.01
        %v3177 = vmul.f32 %v3161, 0.01
        %v3178 = vmul.f32 %v3162, 0.01
        %v3179 = vmul.f32 %v3163, 0.01
        %v3180 = vmul.f32 %v3164, 0.01
        %v3181 = vmul.f32 %v3165, 0.01
        %v3182 = vmul.f32 %v3166, 0.01
        %v3183 = vsel %vm3167, %v3159, %v3175
        %v3184 = vsel %vm3168, %v3160, %v3176
        %v3185 = vsel %vm3169, %v3161, %v3177
        %v3186 = vsel %vm3170, %v3162, %v3178
        %v3187 = vsel %vm3171, %v3163, %v3179
        %v3188 = vsel %vm3172, %v3164, %v3180
        %v3189 = vsel %vm3173, %v3165, %v3181
        %v3190 = vsel %vm3174, %v3166, %v3182
        %v3191 = vpack.c.bf16 %v3183, %v3183
        %v3192 = vpack.c.bf16 %v3184, %v3184
        %v3193 = vpack.c.bf16 %v3185, %v3185
        %v3194 = vpack.c.bf16 %v3186, %v3186
        %v3195 = vpack.c.bf16 %v3187, %v3187
        %v3196 = vpack.c.bf16 %v3188, %v3188
        %v3197 = vpack.c.bf16 %v3189, %v3189
        %v3198 = vpack.c.bf16 %v3190, %v3190
        %v3199 = vld [vmem:[#allocation29] sm:$0xff]
        %v3200 = vld [vmem:[#allocation29 + $0x8] sm:$0xff]
        %v3201 = vld [vmem:[#allocation29 + $0x10] sm:$0xff]
        %v3202 = vld [vmem:[#allocation29 + $0x18] sm:$0xff]
        %v3203 = vld [vmem:[#allocation29 + $0x20] sm:$0xff]
        %v3204 = vld [vmem:[#allocation29 + $0x28] sm:$0xff]
        %v3205 = vld [vmem:[#allocation29 + $0x30] sm:$0xff]
        %v3206 = vld [vmem:[#allocation29 + $0x38] sm:$0xff]
        %v3207 = vld [vmem:[#allocation29 + $0x40] sm:$0xff]
        %v3208 = vld [vmem:[#allocation29 + $0x48] sm:$0xff]
        %v3209 = vld [vmem:[#allocation29 + $0x50] sm:$0xff]
        %v3210 = vld [vmem:[#allocation29 + $0x58] sm:$0xff]
        %v3211 = vld [vmem:[#allocation29 + $0x60] sm:$0xff]
        %v3212 = vld [vmem:[#allocation29 + $0x68] sm:$0xff]
        %v3213 = vld [vmem:[#allocation29 + $0x70] sm:$0xff]
        %v3214 = vld [vmem:[#allocation29 + $0x78] sm:$0xff]
        %v3215 = vld [vmem:[#allocation29 + $0x80] sm:$0xff]
        %v3216 = vld [vmem:[#allocation29 + $0x88] sm:$0xff]
        %v3217 = vld [vmem:[#allocation29 + $0x90] sm:$0xff]
        %v3218 = vld [vmem:[#allocation29 + $0x98] sm:$0xff]
        %v3219 = vld [vmem:[#allocation29 + $0xa0] sm:$0xff]
        %v3220 = vld [vmem:[#allocation29 + $0xa8] sm:$0xff]
        %v3221 = vld [vmem:[#allocation29 + $0xb0] sm:$0xff]
        %v3222 = vld [vmem:[#allocation29 + $0xb8] sm:$0xff]
        %v3223 = vld [vmem:[#allocation29 + $0xc0] sm:$0xff]
        %v3224 = vld [vmem:[#allocation29 + $0xc8] sm:$0xff]
        %v3225 = vld [vmem:[#allocation29 + $0xd0] sm:$0xff]
        %v3226 = vld [vmem:[#allocation29 + $0xd8] sm:$0xff]
        %v3227 = vld [vmem:[#allocation29 + $0xe0] sm:$0xff]
        %v3228 = vld [vmem:[#allocation29 + $0xe8] sm:$0xff]
        %v3229 = vld [vmem:[#allocation29 + $0xf0] sm:$0xff]
        %v3230 = vld [vmem:[#allocation29 + $0xf8] sm:$0xff]
        %v3231 = vld [vmem:[#allocation29 + $0x100] sm:$0xff]
        %v3232 = vld [vmem:[#allocation29 + $0x108] sm:$0xff]
        %v3233 = vld [vmem:[#allocation29 + $0x110] sm:$0xff]
        %v3234 = vld [vmem:[#allocation29 + $0x118] sm:$0xff]
        %v3235 = vld [vmem:[#allocation29 + $0x120] sm:$0xff]
        %v3236 = vld [vmem:[#allocation29 + $0x128] sm:$0xff]
        %v3237 = vld [vmem:[#allocation29 + $0x130] sm:$0xff]
        %v3238 = vld [vmem:[#allocation29 + $0x138] sm:$0xff]
        %v3239 = vld [vmem:[#allocation29 + $0x140] sm:$0xff]
        %v3240 = vld [vmem:[#allocation29 + $0x148] sm:$0xff]
        %v3241 = vld [vmem:[#allocation29 + $0x150] sm:$0xff]
        %v3242 = vld [vmem:[#allocation29 + $0x158] sm:$0xff]
        %v3243 = vld [vmem:[#allocation29 + $0x160] sm:$0xff]
        %v3244 = vld [vmem:[#allocation29 + $0x168] sm:$0xff]
        %v3245 = vld [vmem:[#allocation29 + $0x170] sm:$0xff]
        %v3246 = vld [vmem:[#allocation29 + $0x178] sm:$0xff]
        %v3247 = vld [vmem:[#allocation29 + $0x180] sm:$0xff]
        %v3248 = vld [vmem:[#allocation29 + $0x188] sm:$0xff]
        %v3249 = vld [vmem:[#allocation29 + $0x190] sm:$0xff]
        %v3250 = vld [vmem:[#allocation29 + $0x198] sm:$0xff]
        %v3251 = vld [vmem:[#allocation29 + $0x1a0] sm:$0xff]
        %v3252 = vld [vmem:[#allocation29 + $0x1a8] sm:$0xff]
        %v3253 = vld [vmem:[#allocation29 + $0x1b0] sm:$0xff]
        %v3254 = vld [vmem:[#allocation29 + $0x1b8] sm:$0xff]
        %v3255 = vld [vmem:[#allocation29 + $0x1c0] sm:$0xff]
        %v3256 = vld [vmem:[#allocation29 + $0x1c8] sm:$0xff]
        %v3257 = vld [vmem:[#allocation29 + $0x1d0] sm:$0xff]
        %v3258 = vld [vmem:[#allocation29 + $0x1d8] sm:$0xff]
        %v3259 = vld [vmem:[#allocation29 + $0x1e0] sm:$0xff]
        %v3260 = vld [vmem:[#allocation29 + $0x1e8] sm:$0xff]
        %v3261 = vld [vmem:[#allocation29 + $0x1f0] sm:$0xff]
        %v3262 = vld [vmem:[#allocation29 + $0x1f8] sm:$0xff]
        %v3263 = vld [vmem:[#allocation29 + $0x200] sm:$0xff]
        %v3264 = vld [vmem:[#allocation29 + $0x208] sm:$0xff]
        %v3265 = vld [vmem:[#allocation29 + $0x210] sm:$0xff]
        %v3266 = vld [vmem:[#allocation29 + $0x218] sm:$0xff]
        %v3267 = vld [vmem:[#allocation29 + $0x220] sm:$0xff]
        %v3268 = vld [vmem:[#allocation29 + $0x228] sm:$0xff]
        %v3269 = vld [vmem:[#allocation29 + $0x230] sm:$0xff]
        %v3270 = vld [vmem:[#allocation29 + $0x238] sm:$0xff]
        %v3271 = vld [vmem:[#allocation29 + $0x240] sm:$0xff]
        %v3272 = vld [vmem:[#allocation29 + $0x248] sm:$0xff]
        %v3273 = vld [vmem:[#allocation29 + $0x250] sm:$0xff]
        %v3274 = vld [vmem:[#allocation29 + $0x258] sm:$0xff]
        %v3275 = vld [vmem:[#allocation29 + $0x260] sm:$0xff]
        %v3276 = vld [vmem:[#allocation29 + $0x268] sm:$0xff]
        %v3277 = vld [vmem:[#allocation29 + $0x270] sm:$0xff]
        %v3278 = vld [vmem:[#allocation29 + $0x278] sm:$0xff]
        %v3279 = vld [vmem:[#allocation29 + $0x280] sm:$0xff]
        %v3280 = vld [vmem:[#allocation29 + $0x288] sm:$0xff]
        %v3281 = vld [vmem:[#allocation29 + $0x290] sm:$0xff]
        %v3282 = vld [vmem:[#allocation29 + $0x298] sm:$0xff]
        %v3283 = vld [vmem:[#allocation29 + $0x2a0] sm:$0xff]
        %v3284 = vld [vmem:[#allocation29 + $0x2a8] sm:$0xff]
        %v3285 = vld [vmem:[#allocation29 + $0x2b0] sm:$0xff]
        %v3286 = vld [vmem:[#allocation29 + $0x2b8] sm:$0xff]
        %v3287 = vld [vmem:[#allocation29 + $0x2c0] sm:$0xff]
        %v3288 = vld [vmem:[#allocation29 + $0x2c8] sm:$0xff]
        %v3289 = vld [vmem:[#allocation29 + $0x2d0] sm:$0xff]
        %v3290 = vld [vmem:[#allocation29 + $0x2d8] sm:$0xff]
        %v3291 = vld [vmem:[#allocation29 + $0x2e0] sm:$0xff]
        %v3292 = vld [vmem:[#allocation29 + $0x2e8] sm:$0xff]
        %v3293 = vld [vmem:[#allocation29 + $0x2f0] sm:$0xff]
        %v3294 = vld [vmem:[#allocation29 + $0x2f8] sm:$0xff]
        %v3295 = vld [vmem:[#allocation29 + $0x300] sm:$0xff]
        %v3296 = vld [vmem:[#allocation29 + $0x308] sm:$0xff]
        %v3297 = vld [vmem:[#allocation29 + $0x310] sm:$0xff]
        %v3298 = vld [vmem:[#allocation29 + $0x318] sm:$0xff]
        %v3299 = vld [vmem:[#allocation29 + $0x320] sm:$0xff]
        %v3300 = vld [vmem:[#allocation29 + $0x328] sm:$0xff]
        %v3301 = vld [vmem:[#allocation29 + $0x330] sm:$0xff]
        %v3302 = vld [vmem:[#allocation29 + $0x338] sm:$0xff]
        %v3303 = vld [vmem:[#allocation29 + $0x340] sm:$0xff]
        %v3304 = vld [vmem:[#allocation29 + $0x348] sm:$0xff]
        %v3305 = vld [vmem:[#allocation29 + $0x350] sm:$0xff]
        %v3306 = vld [vmem:[#allocation29 + $0x358] sm:$0xff]
        %v3307 = vld [vmem:[#allocation29 + $0x360] sm:$0xff]
        %v3308 = vld [vmem:[#allocation29 + $0x368] sm:$0xff]
        %v3309 = vld [vmem:[#allocation29 + $0x370] sm:$0xff]
        %v3310 = vld [vmem:[#allocation29 + $0x378] sm:$0xff]
        %v3311 = vld [vmem:[#allocation29 + $0x380] sm:$0xff]
        %v3312 = vld [vmem:[#allocation29 + $0x388] sm:$0xff]
        %v3313 = vld [vmem:[#allocation29 + $0x390] sm:$0xff]
        %v3314 = vld [vmem:[#allocation29 + $0x398] sm:$0xff]
        %v3315 = vld [vmem:[#allocation29 + $0x3a0] sm:$0xff]
        %v3316 = vld [vmem:[#allocation29 + $0x3a8] sm:$0xff]
        %v3317 = vld [vmem:[#allocation29 + $0x3b0] sm:$0xff]
        %v3318 = vld [vmem:[#allocation29 + $0x3b8] sm:$0xff]
        %v3319 = vld [vmem:[#allocation29 + $0x3c0] sm:$0xff]
        %v3320 = vld [vmem:[#allocation29 + $0x3c8] sm:$0xff]
        %v3321 = vld [vmem:[#allocation29 + $0x3d0] sm:$0xff]
        %v3322 = vld [vmem:[#allocation29 + $0x3d8] sm:$0xff]
        %v3323 = vld [vmem:[#allocation29 + $0x3e0] sm:$0xff]
        %v3324 = vld [vmem:[#allocation29 + $0x3e8] sm:$0xff]
        %v3325 = vld [vmem:[#allocation29 + $0x3f0] sm:$0xff]
        %v3326 = vld [vmem:[#allocation29 + $0x3f8] sm:$0xff]
        %v3327 = vld [vmem:[#allocation29 + $0x400] sm:$0xff]
        %v3328 = vld [vmem:[#allocation29 + $0x408] sm:$0xff]
        %v3329 = vld [vmem:[#allocation29 + $0x410] sm:$0xff]
        %v3330 = vld [vmem:[#allocation29 + $0x418] sm:$0xff]
        %v3331 = vld [vmem:[#allocation29 + $0x420] sm:$0xff]
        %v3332 = vld [vmem:[#allocation29 + $0x428] sm:$0xff]
        %v3333 = vld [vmem:[#allocation29 + $0x430] sm:$0xff]
        %v3334 = vld [vmem:[#allocation29 + $0x438] sm:$0xff]
        %v3335 = vld [vmem:[#allocation29 + $0x440] sm:$0xff]
        %v3336 = vld [vmem:[#allocation29 + $0x448] sm:$0xff]
        %v3337 = vld [vmem:[#allocation29 + $0x450] sm:$0xff]
        %v3338 = vld [vmem:[#allocation29 + $0x458] sm:$0xff]
        %v3339 = vld [vmem:[#allocation29 + $0x460] sm:$0xff]
        %v3340 = vld [vmem:[#allocation29 + $0x468] sm:$0xff]
        %v3341 = vld [vmem:[#allocation29 + $0x470] sm:$0xff]
        %v3342 = vld [vmem:[#allocation29 + $0x478] sm:$0xff]
        %v3343 = vld [vmem:[#allocation29 + $0x480] sm:$0xff]
        %v3344 = vld [vmem:[#allocation29 + $0x488] sm:$0xff]
        %v3345 = vld [vmem:[#allocation29 + $0x490] sm:$0xff]
        %v3346 = vld [vmem:[#allocation29 + $0x498] sm:$0xff]
        %v3347 = vld [vmem:[#allocation29 + $0x4a0] sm:$0xff]
        %v3348 = vld [vmem:[#allocation29 + $0x4a8] sm:$0xff]
        %v3349 = vld [vmem:[#allocation29 + $0x4b0] sm:$0xff]
        %v3350 = vld [vmem:[#allocation29 + $0x4b8] sm:$0xff]
        %v3351 = vld [vmem:[#allocation29 + $0x4c0] sm:$0xff]
        %v3352 = vld [vmem:[#allocation29 + $0x4c8] sm:$0xff]
        %v3353 = vld [vmem:[#allocation29 + $0x4d0] sm:$0xff]
        %v3354 = vld [vmem:[#allocation29 + $0x4d8] sm:$0xff]
        %v3355 = vld [vmem:[#allocation29 + $0x4e0] sm:$0xff]
        %v3356 = vld [vmem:[#allocation29 + $0x4e8] sm:$0xff]
        %v3357 = vld [vmem:[#allocation29 + $0x4f0] sm:$0xff]
        %v3358 = vld [vmem:[#allocation29 + $0x4f8] sm:$0xff]
        %v3359 = vld [vmem:[#allocation29 + $0x500] sm:$0xff]
        %v3360 = vld [vmem:[#allocation29 + $0x508] sm:$0xff]
        %v3361 = vld [vmem:[#allocation29 + $0x510] sm:$0xff]
        %v3362 = vld [vmem:[#allocation29 + $0x518] sm:$0xff]
        %v3363 = vld [vmem:[#allocation29 + $0x520] sm:$0xff]
        %v3364 = vld [vmem:[#allocation29 + $0x528] sm:$0xff]
        %v3365 = vld [vmem:[#allocation29 + $0x530] sm:$0xff]
        %v3366 = vld [vmem:[#allocation29 + $0x538] sm:$0xff]
        %v3367 = vld [vmem:[#allocation29 + $0x540] sm:$0xff]
        %v3368 = vld [vmem:[#allocation29 + $0x548] sm:$0xff]
        %v3369 = vld [vmem:[#allocation29 + $0x550] sm:$0xff]
        %v3370 = vld [vmem:[#allocation29 + $0x558] sm:$0xff]
        %v3371 = vld [vmem:[#allocation29 + $0x560] sm:$0xff]
        %v3372 = vld [vmem:[#allocation29 + $0x568] sm:$0xff]
        %v3373 = vld [vmem:[#allocation29 + $0x570] sm:$0xff]
        %v3374 = vld [vmem:[#allocation29 + $0x578] sm:$0xff]
        %v3375 = vld [vmem:[#allocation29 + $0x580] sm:$0xff]
        %v3376 = vld [vmem:[#allocation29 + $0x588] sm:$0xff]
        %v3377 = vld [vmem:[#allocation29 + $0x590] sm:$0xff]
        %v3378 = vld [vmem:[#allocation29 + $0x598] sm:$0xff]
        %v3379 = vld [vmem:[#allocation29 + $0x5a0] sm:$0xff]
        %v3380 = vld [vmem:[#allocation29 + $0x5a8] sm:$0xff]
        %v3381 = vld [vmem:[#allocation29 + $0x5b0] sm:$0xff]
        %v3382 = vld [vmem:[#allocation29 + $0x5b8] sm:$0xff]
        %v3383 = vld [vmem:[#allocation29 + $0x5c0] sm:$0xff]
        %v3384 = vld [vmem:[#allocation29 + $0x5c8] sm:$0xff]
        %v3385 = vld [vmem:[#allocation29 + $0x5d0] sm:$0xff]
        %v3386 = vld [vmem:[#allocation29 + $0x5d8] sm:$0xff]
        %v3387 = vld [vmem:[#allocation29 + $0x5e0] sm:$0xff]
        %v3388 = vld [vmem:[#allocation29 + $0x5e8] sm:$0xff]
        %v3389 = vld [vmem:[#allocation29 + $0x5f0] sm:$0xff]
        %v3390 = vld [vmem:[#allocation29 + $0x5f8] sm:$0xff]
        %v3391 = vld [vmem:[#allocation29 + $0x600] sm:$0xff]
        %v3392 = vld [vmem:[#allocation29 + $0x608] sm:$0xff]
        %v3393 = vld [vmem:[#allocation29 + $0x610] sm:$0xff]
        %v3394 = vld [vmem:[#allocation29 + $0x618] sm:$0xff]
        %v3395 = vld [vmem:[#allocation29 + $0x620] sm:$0xff]
        %v3396 = vld [vmem:[#allocation29 + $0x628] sm:$0xff]
        %v3397 = vld [vmem:[#allocation29 + $0x630] sm:$0xff]
        %v3398 = vld [vmem:[#allocation29 + $0x638] sm:$0xff]
        %v3399 = vld [vmem:[#allocation29 + $0x640] sm:$0xff]
        %v3400 = vld [vmem:[#allocation29 + $0x648] sm:$0xff]
        %v3401 = vld [vmem:[#allocation29 + $0x650] sm:$0xff]
        %v3402 = vld [vmem:[#allocation29 + $0x658] sm:$0xff]
        %v3403 = vld [vmem:[#allocation29 + $0x660] sm:$0xff]
        %v3404 = vld [vmem:[#allocation29 + $0x668] sm:$0xff]
        %v3405 = vld [vmem:[#allocation29 + $0x670] sm:$0xff]
        %v3406 = vld [vmem:[#allocation29 + $0x678] sm:$0xff]
        %v3407 = vld [vmem:[#allocation29 + $0x680] sm:$0xff]
        %v3408 = vld [vmem:[#allocation29 + $0x688] sm:$0xff]
        %v3409 = vld [vmem:[#allocation29 + $0x690] sm:$0xff]
        %v3410 = vld [vmem:[#allocation29 + $0x698] sm:$0xff]
        %v3411 = vld [vmem:[#allocation29 + $0x6a0] sm:$0xff]
        %v3412 = vld [vmem:[#allocation29 + $0x6a8] sm:$0xff]
        %v3413 = vld [vmem:[#allocation29 + $0x6b0] sm:$0xff]
        %v3414 = vld [vmem:[#allocation29 + $0x6b8] sm:$0xff]
        %v3415 = vld [vmem:[#allocation29 + $0x6c0] sm:$0xff]
        %v3416 = vld [vmem:[#allocation29 + $0x6c8] sm:$0xff]
        %v3417 = vld [vmem:[#allocation29 + $0x6d0] sm:$0xff]
        %v3418 = vld [vmem:[#allocation29 + $0x6d8] sm:$0xff]
        %v3419 = vld [vmem:[#allocation29 + $0x6e0] sm:$0xff]
        %v3420 = vld [vmem:[#allocation29 + $0x6e8] sm:$0xff]
        %v3421 = vld [vmem:[#allocation29 + $0x6f0] sm:$0xff]
        %v3422 = vld [vmem:[#allocation29 + $0x6f8] sm:$0xff]
        %v3423 = vld [vmem:[#allocation29 + $0x700] sm:$0xff]
        %v3424 = vld [vmem:[#allocation29 + $0x708] sm:$0xff]
        %v3425 = vld [vmem:[#allocation29 + $0x710] sm:$0xff]
        %v3426 = vld [vmem:[#allocation29 + $0x718] sm:$0xff]
        %v3427 = vld [vmem:[#allocation29 + $0x720] sm:$0xff]
        %v3428 = vld [vmem:[#allocation29 + $0x728] sm:$0xff]
        %v3429 = vld [vmem:[#allocation29 + $0x730] sm:$0xff]
        %v3430 = vld [vmem:[#allocation29 + $0x738] sm:$0xff]
        %v3431 = vld [vmem:[#allocation29 + $0x740] sm:$0xff]
        %v3432 = vld [vmem:[#allocation29 + $0x748] sm:$0xff]
        %v3433 = vld [vmem:[#allocation29 + $0x750] sm:$0xff]
        %v3434 = vld [vmem:[#allocation29 + $0x758] sm:$0xff]
        %v3435 = vld [vmem:[#allocation29 + $0x760] sm:$0xff]
        %v3436 = vld [vmem:[#allocation29 + $0x768] sm:$0xff]
        %v3437 = vld [vmem:[#allocation29 + $0x770] sm:$0xff]
        %v3438 = vld [vmem:[#allocation29 + $0x778] sm:$0xff]
        %v3439 = vld [vmem:[#allocation29 + $0x780] sm:$0xff]
        %v3440 = vld [vmem:[#allocation29 + $0x788] sm:$0xff]
        %v3441 = vld [vmem:[#allocation29 + $0x790] sm:$0xff]
        %v3442 = vld [vmem:[#allocation29 + $0x798] sm:$0xff]
        %v3443 = vld [vmem:[#allocation29 + $0x7a0] sm:$0xff]
        %v3444 = vld [vmem:[#allocation29 + $0x7a8] sm:$0xff]
        %v3445 = vld [vmem:[#allocation29 + $0x7b0] sm:$0xff]
        %v3446 = vld [vmem:[#allocation29 + $0x7b8] sm:$0xff]
        %v3447 = vld [vmem:[#allocation29 + $0x7c0] sm:$0xff]
        %v3448 = vld [vmem:[#allocation29 + $0x7c8] sm:$0xff]
        %v3449 = vld [vmem:[#allocation29 + $0x7d0] sm:$0xff]
        %v3450 = vld [vmem:[#allocation29 + $0x7d8] sm:$0xff]
        %v3451 = vld [vmem:[#allocation29 + $0x7e0] sm:$0xff]
        %v3452 = vld [vmem:[#allocation29 + $0x7e8] sm:$0xff]
        %v3453 = vld [vmem:[#allocation29 + $0x7f0] sm:$0xff]
        %v3454 = vld [vmem:[#allocation29 + $0x7f8] sm:$0xff]
        %v3455 = vld [vmem:[#allocation29 + $0x800] sm:$0xff]
        %v3456 = vld [vmem:[#allocation29 + $0x808] sm:$0xff]
        %v3457 = vld [vmem:[#allocation29 + $0x810] sm:$0xff]
        %v3458 = vld [vmem:[#allocation29 + $0x818] sm:$0xff]
        %v3459 = vld [vmem:[#allocation29 + $0x820] sm:$0xff]
        %v3460 = vld [vmem:[#allocation29 + $0x828] sm:$0xff]
        %v3461 = vld [vmem:[#allocation29 + $0x830] sm:$0xff]
        %v3462 = vld [vmem:[#allocation29 + $0x838] sm:$0xff]
        %v3463 = vld [vmem:[#allocation29 + $0x840] sm:$0xff]
        %v3464 = vld [vmem:[#allocation29 + $0x848] sm:$0xff]
        %v3465 = vld [vmem:[#allocation29 + $0x850] sm:$0xff]
        %v3466 = vld [vmem:[#allocation29 + $0x858] sm:$0xff]
        %v3467 = vld [vmem:[#allocation29 + $0x860] sm:$0xff]
        %v3468 = vld [vmem:[#allocation29 + $0x868] sm:$0xff]
        %v3469 = vld [vmem:[#allocation29 + $0x870] sm:$0xff]
        %v3470 = vld [vmem:[#allocation29 + $0x878] sm:$0xff]
        %v3471 = vld [vmem:[#allocation29 + $0x880] sm:$0xff]
        %v3472 = vld [vmem:[#allocation29 + $0x888] sm:$0xff]
        %v3473 = vld [vmem:[#allocation29 + $0x890] sm:$0xff]
        %v3474 = vld [vmem:[#allocation29 + $0x898] sm:$0xff]
        %v3475 = vld [vmem:[#allocation29 + $0x8a0] sm:$0xff]
        %v3476 = vld [vmem:[#allocation29 + $0x8a8] sm:$0xff]
        %v3477 = vld [vmem:[#allocation29 + $0x8b0] sm:$0xff]
        %v3478 = vld [vmem:[#allocation29 + $0x8b8] sm:$0xff]
        %v3479 = vld [vmem:[#allocation29 + $0x8c0] sm:$0xff]
        %v3480 = vld [vmem:[#allocation29 + $0x8c8] sm:$0xff]
        %v3481 = vld [vmem:[#allocation29 + $0x8d0] sm:$0xff]
        %v3482 = vld [vmem:[#allocation29 + $0x8d8] sm:$0xff]
        %v3483 = vld [vmem:[#allocation29 + $0x8e0] sm:$0xff]
        %v3484 = vld [vmem:[#allocation29 + $0x8e8] sm:$0xff]
        %v3485 = vld [vmem:[#allocation29 + $0x8f0] sm:$0xff]
        %v3486 = vld [vmem:[#allocation29 + $0x8f8] sm:$0xff]
        %v3487 = vld [vmem:[#allocation29 + $0x900] sm:$0xff]
        %v3488 = vld [vmem:[#allocation29 + $0x908] sm:$0xff]
        %v3489 = vld [vmem:[#allocation29 + $0x910] sm:$0xff]
        %v3490 = vld [vmem:[#allocation29 + $0x918] sm:$0xff]
        %v3491 = vld [vmem:[#allocation29 + $0x920] sm:$0xff]
        %v3492 = vld [vmem:[#allocation29 + $0x928] sm:$0xff]
        %v3493 = vld [vmem:[#allocation29 + $0x930] sm:$0xff]
        %v3494 = vld [vmem:[#allocation29 + $0x938] sm:$0xff]
        %v3495 = vld [vmem:[#allocation29 + $0x940] sm:$0xff]
        %v3496 = vld [vmem:[#allocation29 + $0x948] sm:$0xff]
        %v3497 = vld [vmem:[#allocation29 + $0x950] sm:$0xff]
        %v3498 = vld [vmem:[#allocation29 + $0x958] sm:$0xff]
        %v3499 = vld [vmem:[#allocation29 + $0x960] sm:$0xff]
        %v3500 = vld [vmem:[#allocation29 + $0x968] sm:$0xff]
        %v3501 = vld [vmem:[#allocation29 + $0x970] sm:$0xff]
        %v3502 = vld [vmem:[#allocation29 + $0x978] sm:$0xff]
        %v3503 = vld [vmem:[#allocation29 + $0x980] sm:$0xff]
        %v3504 = vld [vmem:[#allocation29 + $0x988] sm:$0xff]
        %v3505 = vld [vmem:[#allocation29 + $0x990] sm:$0xff]
        %v3506 = vld [vmem:[#allocation29 + $0x998] sm:$0xff]
        %v3507 = vld [vmem:[#allocation29 + $0x9a0] sm:$0xff]
        %v3508 = vld [vmem:[#allocation29 + $0x9a8] sm:$0xff]
        %v3509 = vld [vmem:[#allocation29 + $0x9b0] sm:$0xff]
        %v3510 = vld [vmem:[#allocation29 + $0x9b8] sm:$0xff]
        %v3511 = vld [vmem:[#allocation29 + $0x9c0] sm:$0xff]
        %v3512 = vld [vmem:[#allocation29 + $0x9c8] sm:$0xff]
        %v3513 = vld [vmem:[#allocation29 + $0x9d0] sm:$0xff]
        %v3514 = vld [vmem:[#allocation29 + $0x9d8] sm:$0xff]
        %v3515 = vld [vmem:[#allocation29 + $0x9e0] sm:$0xff]
        %v3516 = vld [vmem:[#allocation29 + $0x9e8] sm:$0xff]
        %v3517 = vld [vmem:[#allocation29 + $0x9f0] sm:$0xff]
        %v3518 = vld [vmem:[#allocation29 + $0x9f8] sm:$0xff]
        %v3519 = vld [vmem:[#allocation29 + $0xa00] sm:$0xff]
        %v3520 = vld [vmem:[#allocation29 + $0xa08] sm:$0xff]
        %v3521 = vld [vmem:[#allocation29 + $0xa10] sm:$0xff]
        %v3522 = vld [vmem:[#allocation29 + $0xa18] sm:$0xff]
        %v3523 = vld [vmem:[#allocation29 + $0xa20] sm:$0xff]
        %v3524 = vld [vmem:[#allocation29 + $0xa28] sm:$0xff]
        %v3525 = vld [vmem:[#allocation29 + $0xa30] sm:$0xff]
        %v3526 = vld [vmem:[#allocation29 + $0xa38] sm:$0xff]
        %v3527 = vld [vmem:[#allocation29 + $0xa40] sm:$0xff]
        %v3528 = vld [vmem:[#allocation29 + $0xa48] sm:$0xff]
        %v3529 = vld [vmem:[#allocation29 + $0xa50] sm:$0xff]
        %v3530 = vld [vmem:[#allocation29 + $0xa58] sm:$0xff]
        %v3531 = vld [vmem:[#allocation29 + $0xa60] sm:$0xff]
        %v3532 = vld [vmem:[#allocation29 + $0xa68] sm:$0xff]
        %v3533 = vld [vmem:[#allocation29 + $0xa70] sm:$0xff]
        %v3534 = vld [vmem:[#allocation29 + $0xa78] sm:$0xff]
        %v3535 = vld [vmem:[#allocation29 + $0xa80] sm:$0xff]
        %v3536 = vld [vmem:[#allocation29 + $0xa88] sm:$0xff]
        %v3537 = vld [vmem:[#allocation29 + $0xa90] sm:$0xff]
        %v3538 = vld [vmem:[#allocation29 + $0xa98] sm:$0xff]
        %v3539 = vld [vmem:[#allocation29 + $0xaa0] sm:$0xff]
        %v3540 = vld [vmem:[#allocation29 + $0xaa8] sm:$0xff]
        %v3541 = vld [vmem:[#allocation29 + $0xab0] sm:$0xff]
        %v3542 = vld [vmem:[#allocation29 + $0xab8] sm:$0xff]
        %v3543 = vld [vmem:[#allocation29 + $0xac0] sm:$0xff]
        %v3544 = vld [vmem:[#allocation29 + $0xac8] sm:$0xff]
        %v3545 = vld [vmem:[#allocation29 + $0xad0] sm:$0xff]
        %v3546 = vld [vmem:[#allocation29 + $0xad8] sm:$0xff]
        %v3547 = vld [vmem:[#allocation29 + $0xae0] sm:$0xff]
        %v3548 = vld [vmem:[#allocation29 + $0xae8] sm:$0xff]
        %v3549 = vld [vmem:[#allocation29 + $0xaf0] sm:$0xff]
        %v3550 = vld [vmem:[#allocation29 + $0xaf8] sm:$0xff]
        %v3551 = vld [vmem:[#allocation29 + $0xb00] sm:$0xff]
        %v3552 = vld [vmem:[#allocation29 + $0xb08] sm:$0xff]
        %v3553 = vld [vmem:[#allocation29 + $0xb10] sm:$0xff]
        %v3554 = vld [vmem:[#allocation29 + $0xb18] sm:$0xff]
        %v3555 = vld [vmem:[#allocation29 + $0xb20] sm:$0xff]
        %v3556 = vld [vmem:[#allocation29 + $0xb28] sm:$0xff]
        %v3557 = vld [vmem:[#allocation29 + $0xb30] sm:$0xff]
        %v3558 = vld [vmem:[#allocation29 + $0xb38] sm:$0xff]
        %v3559 = vld [vmem:[#allocation29 + $0xb40] sm:$0xff]
        %v3560 = vld [vmem:[#allocation29 + $0xb48] sm:$0xff]
        %v3561 = vld [vmem:[#allocation29 + $0xb50] sm:$0xff]
        %v3562 = vld [vmem:[#allocation29 + $0xb58] sm:$0xff]
        %v3563 = vld [vmem:[#allocation29 + $0xb60] sm:$0xff]
        %v3564 = vld [vmem:[#allocation29 + $0xb68] sm:$0xff]
        %v3565 = vld [vmem:[#allocation29 + $0xb70] sm:$0xff]
        %v3566 = vld [vmem:[#allocation29 + $0xb78] sm:$0xff]
        %v3567 = vld [vmem:[#allocation29 + $0xb80] sm:$0xff]
        %v3568 = vld [vmem:[#allocation29 + $0xb88] sm:$0xff]
        %v3569 = vld [vmem:[#allocation29 + $0xb90] sm:$0xff]
        %v3570 = vld [vmem:[#allocation29 + $0xb98] sm:$0xff]
        %v3571 = vld [vmem:[#allocation29 + $0xba0] sm:$0xff]
        %v3572 = vld [vmem:[#allocation29 + $0xba8] sm:$0xff]
        %v3573 = vld [vmem:[#allocation29 + $0xbb0] sm:$0xff]
        %v3574 = vld [vmem:[#allocation29 + $0xbb8] sm:$0xff]
        %v3575 = vld [vmem:[#allocation29 + $0xbc0] sm:$0xff]
        %v3576 = vld [vmem:[#allocation29 + $0xbc8] sm:$0xff]
        %v3577 = vld [vmem:[#allocation29 + $0xbd0] sm:$0xff]
        %v3578 = vld [vmem:[#allocation29 + $0xbd8] sm:$0xff]
        %v3579 = vld [vmem:[#allocation29 + $0xbe0] sm:$0xff]
        %v3580 = vld [vmem:[#allocation29 + $0xbe8] sm:$0xff]
        %v3581 = vld [vmem:[#allocation29 + $0xbf0] sm:$0xff]
        %v3582 = vld [vmem:[#allocation29 + $0xbf8] sm:$0xff]
        %v3583 = vld [vmem:[#allocation29 + $0xc00] sm:$0xff]
        %v3584 = vld [vmem:[#allocation29 + $0xc08] sm:$0xff]
        %v3585 = vld [vmem:[#allocation29 + $0xc10] sm:$0xff]
        %v3586 = vld [vmem:[#allocation29 + $0xc18] sm:$0xff]
        %v3587 = vld [vmem:[#allocation29 + $0xc20] sm:$0xff]
        %v3588 = vld [vmem:[#allocation29 + $0xc28] sm:$0xff]
        %v3589 = vld [vmem:[#allocation29 + $0xc30] sm:$0xff]
        %v3590 = vld [vmem:[#allocation29 + $0xc38] sm:$0xff]
        %v3591 = vld [vmem:[#allocation29 + $0xc40] sm:$0xff]
        %v3592 = vld [vmem:[#allocation29 + $0xc48] sm:$0xff]
        %v3593 = vld [vmem:[#allocation29 + $0xc50] sm:$0xff]
        %v3594 = vld [vmem:[#allocation29 + $0xc58] sm:$0xff]
        %v3595 = vld [vmem:[#allocation29 + $0xc60] sm:$0xff]
        %v3596 = vld [vmem:[#allocation29 + $0xc68] sm:$0xff]
        %v3597 = vld [vmem:[#allocation29 + $0xc70] sm:$0xff]
        %v3598 = vld [vmem:[#allocation29 + $0xc78] sm:$0xff]
        %v3599 = vld [vmem:[#allocation29 + $0xc80] sm:$0xff]
        %v3600 = vld [vmem:[#allocation29 + $0xc88] sm:$0xff]
        %v3601 = vld [vmem:[#allocation29 + $0xc90] sm:$0xff]
        %v3602 = vld [vmem:[#allocation29 + $0xc98] sm:$0xff]
        %v3603 = vld [vmem:[#allocation29 + $0xca0] sm:$0xff]
        %v3604 = vld [vmem:[#allocation29 + $0xca8] sm:$0xff]
        %v3605 = vld [vmem:[#allocation29 + $0xcb0] sm:$0xff]
        %v3606 = vld [vmem:[#allocation29 + $0xcb8] sm:$0xff]
        %v3607 = vld [vmem:[#allocation29 + $0xcc0] sm:$0xff]
        %v3608 = vld [vmem:[#allocation29 + $0xcc8] sm:$0xff]
        %v3609 = vld [vmem:[#allocation29 + $0xcd0] sm:$0xff]
        %v3610 = vld [vmem:[#allocation29 + $0xcd8] sm:$0xff]
        %v3611 = vld [vmem:[#allocation29 + $0xce0] sm:$0xff]
        %v3612 = vld [vmem:[#allocation29 + $0xce8] sm:$0xff]
        %v3613 = vld [vmem:[#allocation29 + $0xcf0] sm:$0xff]
        %v3614 = vld [vmem:[#allocation29 + $0xcf8] sm:$0xff]
        %v3615 = vld [vmem:[#allocation29 + $0xd00] sm:$0xff]
        %v3616 = vld [vmem:[#allocation29 + $0xd08] sm:$0xff]
        %v3617 = vld [vmem:[#allocation29 + $0xd10] sm:$0xff]
        %v3618 = vld [vmem:[#allocation29 + $0xd18] sm:$0xff]
        %v3619 = vld [vmem:[#allocation29 + $0xd20] sm:$0xff]
        %v3620 = vld [vmem:[#allocation29 + $0xd28] sm:$0xff]
        %v3621 = vld [vmem:[#allocation29 + $0xd30] sm:$0xff]
        %v3622 = vld [vmem:[#allocation29 + $0xd38] sm:$0xff]
        %v3623 = vld [vmem:[#allocation29 + $0xd40] sm:$0xff]
        %v3624 = vld [vmem:[#allocation29 + $0xd48] sm:$0xff]
        %v3625 = vld [vmem:[#allocation29 + $0xd50] sm:$0xff]
        %v3626 = vld [vmem:[#allocation29 + $0xd58] sm:$0xff]
        %v3627 = vld [vmem:[#allocation29 + $0xd60] sm:$0xff]
        %v3628 = vld [vmem:[#allocation29 + $0xd68] sm:$0xff]
        %v3629 = vld [vmem:[#allocation29 + $0xd70] sm:$0xff]
        %v3630 = vld [vmem:[#allocation29 + $0xd78] sm:$0xff]
        %v3631 = vld [vmem:[#allocation29 + $0xd80] sm:$0xff]
        %v3632 = vld [vmem:[#allocation29 + $0xd88] sm:$0xff]
        %v3633 = vld [vmem:[#allocation29 + $0xd90] sm:$0xff]
        %v3634 = vld [vmem:[#allocation29 + $0xd98] sm:$0xff]
        %v3635 = vld [vmem:[#allocation29 + $0xda0] sm:$0xff]
        %v3636 = vld [vmem:[#allocation29 + $0xda8] sm:$0xff]
        %v3637 = vld [vmem:[#allocation29 + $0xdb0] sm:$0xff]
        %v3638 = vld [vmem:[#allocation29 + $0xdb8] sm:$0xff]
        %v3639 = vld [vmem:[#allocation29 + $0xdc0] sm:$0xff]
        %v3640 = vld [vmem:[#allocation29 + $0xdc8] sm:$0xff]
        %v3641 = vld [vmem:[#allocation29 + $0xdd0] sm:$0xff]
        %v3642 = vld [vmem:[#allocation29 + $0xdd8] sm:$0xff]
        %v3643 = vld [vmem:[#allocation29 + $0xde0] sm:$0xff]
        %v3644 = vld [vmem:[#allocation29 + $0xde8] sm:$0xff]
        %v3645 = vld [vmem:[#allocation29 + $0xdf0] sm:$0xff]
        %v3646 = vld [vmem:[#allocation29 + $0xdf8] sm:$0xff]
        %v3647 = vld [vmem:[#allocation29 + $0xe00] sm:$0xff]
        %v3648 = vld [vmem:[#allocation29 + $0xe08] sm:$0xff]
        %v3649 = vld [vmem:[#allocation29 + $0xe10] sm:$0xff]
        %v3650 = vld [vmem:[#allocation29 + $0xe18] sm:$0xff]
        %v3651 = vld [vmem:[#allocation29 + $0xe20] sm:$0xff]
        %v3652 = vld [vmem:[#allocation29 + $0xe28] sm:$0xff]
        %v3653 = vld [vmem:[#allocation29 + $0xe30] sm:$0xff]
        %v3654 = vld [vmem:[#allocation29 + $0xe38] sm:$0xff]
        %v3655 = vld [vmem:[#allocation29 + $0xe40] sm:$0xff]
        %v3656 = vld [vmem:[#allocation29 + $0xe48] sm:$0xff]
        %v3657 = vld [vmem:[#allocation29 + $0xe50] sm:$0xff]
        %v3658 = vld [vmem:[#allocation29 + $0xe58] sm:$0xff]
        %v3659 = vld [vmem:[#allocation29 + $0xe60] sm:$0xff]
        %v3660 = vld [vmem:[#allocation29 + $0xe68] sm:$0xff]
        %v3661 = vld [vmem:[#allocation29 + $0xe70] sm:$0xff]
        %v3662 = vld [vmem:[#allocation29 + $0xe78] sm:$0xff]
        %v3663 = vld [vmem:[#allocation29 + $0xe80] sm:$0xff]
        %v3664 = vld [vmem:[#allocation29 + $0xe88] sm:$0xff]
        %v3665 = vld [vmem:[#allocation29 + $0xe90] sm:$0xff]
        %v3666 = vld [vmem:[#allocation29 + $0xe98] sm:$0xff]
        %v3667 = vld [vmem:[#allocation29 + $0xea0] sm:$0xff]
        %v3668 = vld [vmem:[#allocation29 + $0xea8] sm:$0xff]
        %v3669 = vld [vmem:[#allocation29 + $0xeb0] sm:$0xff]
        %v3670 = vld [vmem:[#allocation29 + $0xeb8] sm:$0xff]
        %v3671 = vld [vmem:[#allocation29 + $0xec0] sm:$0xff]
        %v3672 = vld [vmem:[#allocation29 + $0xec8] sm:$0xff]
        %v3673 = vld [vmem:[#allocation29 + $0xed0] sm:$0xff]
        %v3674 = vld [vmem:[#allocation29 + $0xed8] sm:$0xff]
        %v3675 = vld [vmem:[#allocation29 + $0xee0] sm:$0xff]
        %v3676 = vld [vmem:[#allocation29 + $0xee8] sm:$0xff]
        %v3677 = vld [vmem:[#allocation29 + $0xef0] sm:$0xff]
        %v3678 = vld [vmem:[#allocation29 + $0xef8] sm:$0xff]
        %v3679 = vld [vmem:[#allocation29 + $0xf00] sm:$0xff]
        %v3680 = vld [vmem:[#allocation29 + $0xf08] sm:$0xff]
        %v3681 = vld [vmem:[#allocation29 + $0xf10] sm:$0xff]
        %v3682 = vld [vmem:[#allocation29 + $0xf18] sm:$0xff]
        %v3683 = vld [vmem:[#allocation29 + $0xf20] sm:$0xff]
        %v3684 = vld [vmem:[#allocation29 + $0xf28] sm:$0xff]
        %v3685 = vld [vmem:[#allocation29 + $0xf30] sm:$0xff]
        %v3686 = vld [vmem:[#allocation29 + $0xf38] sm:$0xff]
        %v3687 = vld [vmem:[#allocation29 + $0xf40] sm:$0xff]
        %v3688 = vld [vmem:[#allocation29 + $0xf48] sm:$0xff]
        %v3689 = vld [vmem:[#allocation29 + $0xf50] sm:$0xff]
        %v3690 = vld [vmem:[#allocation29 + $0xf58] sm:$0xff]
        %v3691 = vld [vmem:[#allocation29 + $0xf60] sm:$0xff]
        %v3692 = vld [vmem:[#allocation29 + $0xf68] sm:$0xff]
        %v3693 = vld [vmem:[#allocation29 + $0xf70] sm:$0xff]
        %v3694 = vld [vmem:[#allocation29 + $0xf78] sm:$0xff]
        %v3695 = vld [vmem:[#allocation29 + $0xf80] sm:$0xff]
        %v3696 = vld [vmem:[#allocation29 + $0xf88] sm:$0xff]
        %v3697 = vld [vmem:[#allocation29 + $0xf90] sm:$0xff]
        %v3698 = vld [vmem:[#allocation29 + $0xf98] sm:$0xff]
        %v3699 = vld [vmem:[#allocation29 + $0xfa0] sm:$0xff]
        %v3700 = vld [vmem:[#allocation29 + $0xfa8] sm:$0xff]
        %v3701 = vld [vmem:[#allocation29 + $0xfb0] sm:$0xff]
        %v3702 = vld [vmem:[#allocation29 + $0xfb8] sm:$0xff]
        %v3703 = vld [vmem:[#allocation29 + $0xfc0] sm:$0xff]
        %v3704 = vld [vmem:[#allocation29 + $0xfc8] sm:$0xff]
        %v3705 = vld [vmem:[#allocation29 + $0xfd0] sm:$0xff]
        %v3706 = vld [vmem:[#allocation29 + $0xfd8] sm:$0xff]
        %v3707 = vld [vmem:[#allocation29 + $0xfe0] sm:$0xff]
        %v3708 = vld [vmem:[#allocation29 + $0xfe8] sm:$0xff]
        %v3709 = vld [vmem:[#allocation29 + $0xff0] sm:$0xff]
        %v3710 = vld [vmem:[#allocation29 + $0xff8] sm:$0xff]
        %v3711 = vld [vmem:[#allocation31] sm:$0xff]
        %v4224 = vunpack.c.l.b16 %v3199
        %v4225 = vunpack.c.h.b16 %v3199
        %v4226 = vunpack.c.l.b16 %v3200
        %v4227 = vunpack.c.h.b16 %v3200
        %v4228 = vunpack.c.l.b16 %v3201
        %v4229 = vunpack.c.h.b16 %v3201
        %v4230 = vunpack.c.l.b16 %v3202
        %v4231 = vunpack.c.h.b16 %v3202
        %v4232 = vunpack.c.l.b16 %v3203
        %v4233 = vunpack.c.h.b16 %v3203
        %v4234 = vunpack.c.l.b16 %v3204
        %v4235 = vunpack.c.h.b16 %v3204
        %v4236 = vunpack.c.l.b16 %v3205
        %v4237 = vunpack.c.h.b16 %v3205
        %v4238 = vunpack.c.l.b16 %v3206
        %v4239 = vunpack.c.h.b16 %v3206
        %v4240 = vunpack.c.l.b16 %v3207
        %v4241 = vunpack.c.h.b16 %v3207
        %v4242 = vunpack.c.l.b16 %v3208
        %v4243 = vunpack.c.h.b16 %v3208
        %v4244 = vunpack.c.l.b16 %v3209
        %v4245 = vunpack.c.h.b16 %v3209
        %v4246 = vunpack.c.l.b16 %v3210
        %v4247 = vunpack.c.h.b16 %v3210
        %v4248 = vunpack.c.l.b16 %v3211
        %v4249 = vunpack.c.h.b16 %v3211
        %v4250 = vunpack.c.l.b16 %v3212
        %v4251 = vunpack.c.h.b16 %v3212
        %v4252 = vunpack.c.l.b16 %v3213
        %v4253 = vunpack.c.h.b16 %v3213
        %v4254 = vunpack.c.l.b16 %v3214
        %v4255 = vunpack.c.h.b16 %v3214
        %v4256 = vunpack.c.l.b16 %v3215
        %v4257 = vunpack.c.h.b16 %v3215
        %v4258 = vunpack.c.l.b16 %v3216
        %v4259 = vunpack.c.h.b16 %v3216
        %v4260 = vunpack.c.l.b16 %v3217
        %v4261 = vunpack.c.h.b16 %v3217
        %v4262 = vunpack.c.l.b16 %v3218
        %v4263 = vunpack.c.h.b16 %v3218
        %v4264 = vunpack.c.l.b16 %v3219
        %v4265 = vunpack.c.h.b16 %v3219
        %v4266 = vunpack.c.l.b16 %v3220
        %v4267 = vunpack.c.h.b16 %v3220
        %v4268 = vunpack.c.l.b16 %v3221
        %v4269 = vunpack.c.h.b16 %v3221
        %v4270 = vunpack.c.l.b16 %v3222
        %v4271 = vunpack.c.h.b16 %v3222
        %v4272 = vunpack.c.l.b16 %v3223
        %v4273 = vunpack.c.h.b16 %v3223
        %v4274 = vunpack.c.l.b16 %v3224
        %v4275 = vunpack.c.h.b16 %v3224
        %v4276 = vunpack.c.l.b16 %v3225
        %v4277 = vunpack.c.h.b16 %v3225
        %v4278 = vunpack.c.l.b16 %v3226
        %v4279 = vunpack.c.h.b16 %v3226
        %v4280 = vunpack.c.l.b16 %v3227
        %v4281 = vunpack.c.h.b16 %v3227
        %v4282 = vunpack.c.l.b16 %v3228
        %v4283 = vunpack.c.h.b16 %v3228
        %v4284 = vunpack.c.l.b16 %v3229
        %v4285 = vunpack.c.h.b16 %v3229
        %v4286 = vunpack.c.l.b16 %v3230
        %v4287 = vunpack.c.h.b16 %v3230
        %v4288 = vunpack.c.l.b16 %v3231
        %v4289 = vunpack.c.h.b16 %v3231
        %v4290 = vunpack.c.l.b16 %v3232
        %v4291 = vunpack.c.h.b16 %v3232
        %v4292 = vunpack.c.l.b16 %v3233
        %v4293 = vunpack.c.h.b16 %v3233
        %v4294 = vunpack.c.l.b16 %v3234
        %v4295 = vunpack.c.h.b16 %v3234
        %v4296 = vunpack.c.l.b16 %v3235
        %v4297 = vunpack.c.h.b16 %v3235
        %v4298 = vunpack.c.l.b16 %v3236
        %v4299 = vunpack.c.h.b16 %v3236
        %v4300 = vunpack.c.l.b16 %v3237
        %v4301 = vunpack.c.h.b16 %v3237
        %v4302 = vunpack.c.l.b16 %v3238
        %v4303 = vunpack.c.h.b16 %v3238
        %v4304 = vunpack.c.l.b16 %v3239
        %v4305 = vunpack.c.h.b16 %v3239
        %v4306 = vunpack.c.l.b16 %v3240
        %v4307 = vunpack.c.h.b16 %v3240
        %v4308 = vunpack.c.l.b16 %v3241
        %v4309 = vunpack.c.h.b16 %v3241
        %v4310 = vunpack.c.l.b16 %v3242
        %v4311 = vunpack.c.h.b16 %v3242
        %v4312 = vunpack.c.l.b16 %v3243
        %v4313 = vunpack.c.h.b16 %v3243
        %v4314 = vunpack.c.l.b16 %v3244
        %v4315 = vunpack.c.h.b16 %v3244
        %v4316 = vunpack.c.l.b16 %v3245
        %v4317 = vunpack.c.h.b16 %v3245
        %v4318 = vunpack.c.l.b16 %v3246
        %v4319 = vunpack.c.h.b16 %v3246
        %v4320 = vunpack.c.l.b16 %v3247
        %v4321 = vunpack.c.h.b16 %v3247
        %v4322 = vunpack.c.l.b16 %v3248
        %v4323 = vunpack.c.h.b16 %v3248
        %v4324 = vunpack.c.l.b16 %v3249
        %v4325 = vunpack.c.h.b16 %v3249
        %v4326 = vunpack.c.l.b16 %v3250
        %v4327 = vunpack.c.h.b16 %v3250
        %v4328 = vunpack.c.l.b16 %v3251
        %v4329 = vunpack.c.h.b16 %v3251
        %v4330 = vunpack.c.l.b16 %v3252
        %v4331 = vunpack.c.h.b16 %v3252
        %v4332 = vunpack.c.l.b16 %v3253
        %v4333 = vunpack.c.h.b16 %v3253
        %v4334 = vunpack.c.l.b16 %v3254
        %v4335 = vunpack.c.h.b16 %v3254
        %v4336 = vunpack.c.l.b16 %v3255
        %v4337 = vunpack.c.h.b16 %v3255
        %v4338 = vunpack.c.l.b16 %v3256
        %v4339 = vunpack.c.h.b16 %v3256
        %v4340 = vunpack.c.l.b16 %v3257
        %v4341 = vunpack.c.h.b16 %v3257
        %v4342 = vunpack.c.l.b16 %v3258
        %v4343 = vunpack.c.h.b16 %v3258
        %v4344 = vunpack.c.l.b16 %v3259
        %v4345 = vunpack.c.h.b16 %v3259
        %v4346 = vunpack.c.l.b16 %v3260
        %v4347 = vunpack.c.h.b16 %v3260
        %v4348 = vunpack.c.l.b16 %v3261
        %v4349 = vunpack.c.h.b16 %v3261
        %v4350 = vunpack.c.l.b16 %v3262
        %v4351 = vunpack.c.h.b16 %v3262
        %v4352 = vunpack.c.l.b16 %v3263
        %v4353 = vunpack.c.h.b16 %v3263
        %v4354 = vunpack.c.l.b16 %v3264
        %v4355 = vunpack.c.h.b16 %v3264
        %v4356 = vunpack.c.l.b16 %v3265
        %v4357 = vunpack.c.h.b16 %v3265
        %v4358 = vunpack.c.l.b16 %v3266
        %v4359 = vunpack.c.h.b16 %v3266
        %v4360 = vunpack.c.l.b16 %v3267
        %v4361 = vunpack.c.h.b16 %v3267
        %v4362 = vunpack.c.l.b16 %v3268
        %v4363 = vunpack.c.h.b16 %v3268
        %v4364 = vunpack.c.l.b16 %v3269
        %v4365 = vunpack.c.h.b16 %v3269
        %v4366 = vunpack.c.l.b16 %v3270
        %v4367 = vunpack.c.h.b16 %v3270
        %v4368 = vunpack.c.l.b16 %v3271
        %v4369 = vunpack.c.h.b16 %v3271
        %v4370 = vunpack.c.l.b16 %v3272
        %v4371 = vunpack.c.h.b16 %v3272
        %v4372 = vunpack.c.l.b16 %v3273
        %v4373 = vunpack.c.h.b16 %v3273
        %v4374 = vunpack.c.l.b16 %v3274
        %v4375 = vunpack.c.h.b16 %v3274
        %v4376 = vunpack.c.l.b16 %v3275
        %v4377 = vunpack.c.h.b16 %v3275
        %v4378 = vunpack.c.l.b16 %v3276
        %v4379 = vunpack.c.h.b16 %v3276
        %v4380 = vunpack.c.l.b16 %v3277
        %v4381 = vunpack.c.h.b16 %v3277
        %v4382 = vunpack.c.l.b16 %v3278
        %v4383 = vunpack.c.h.b16 %v3278
        %v4384 = vunpack.c.l.b16 %v3279
        %v4385 = vunpack.c.h.b16 %v3279
        %v4386 = vunpack.c.l.b16 %v3280
        %v4387 = vunpack.c.h.b16 %v3280
        %v4388 = vunpack.c.l.b16 %v3281
        %v4389 = vunpack.c.h.b16 %v3281
        %v4390 = vunpack.c.l.b16 %v3282
        %v4391 = vunpack.c.h.b16 %v3282
        %v4392 = vunpack.c.l.b16 %v3283
        %v4393 = vunpack.c.h.b16 %v3283
        %v4394 = vunpack.c.l.b16 %v3284
        %v4395 = vunpack.c.h.b16 %v3284
        %v4396 = vunpack.c.l.b16 %v3285
        %v4397 = vunpack.c.h.b16 %v3285
        %v4398 = vunpack.c.l.b16 %v3286
        %v4399 = vunpack.c.h.b16 %v3286
        %v4400 = vunpack.c.l.b16 %v3287
        %v4401 = vunpack.c.h.b16 %v3287
        %v4402 = vunpack.c.l.b16 %v3288
        %v4403 = vunpack.c.h.b16 %v3288
        %v4404 = vunpack.c.l.b16 %v3289
        %v4405 = vunpack.c.h.b16 %v3289
        %v4406 = vunpack.c.l.b16 %v3290
        %v4407 = vunpack.c.h.b16 %v3290
        %v4408 = vunpack.c.l.b16 %v3291
        %v4409 = vunpack.c.h.b16 %v3291
        %v4410 = vunpack.c.l.b16 %v3292
        %v4411 = vunpack.c.h.b16 %v3292
        %v4412 = vunpack.c.l.b16 %v3293
        %v4413 = vunpack.c.h.b16 %v3293
        %v4414 = vunpack.c.l.b16 %v3294
        %v4415 = vunpack.c.h.b16 %v3294
        %v4416 = vunpack.c.l.b16 %v3295
        %v4417 = vunpack.c.h.b16 %v3295
        %v4418 = vunpack.c.l.b16 %v3296
        %v4419 = vunpack.c.h.b16 %v3296
        %v4420 = vunpack.c.l.b16 %v3297
        %v4421 = vunpack.c.h.b16 %v3297
        %v4422 = vunpack.c.l.b16 %v3298
        %v4423 = vunpack.c.h.b16 %v3298
        %v4424 = vunpack.c.l.b16 %v3299
        %v4425 = vunpack.c.h.b16 %v3299
        %v4426 = vunpack.c.l.b16 %v3300
        %v4427 = vunpack.c.h.b16 %v3300
        %v4428 = vunpack.c.l.b16 %v3301
        %v4429 = vunpack.c.h.b16 %v3301
        %v4430 = vunpack.c.l.b16 %v3302
        %v4431 = vunpack.c.h.b16 %v3302
        %v4432 = vunpack.c.l.b16 %v3303
        %v4433 = vunpack.c.h.b16 %v3303
        %v4434 = vunpack.c.l.b16 %v3304
        %v4435 = vunpack.c.h.b16 %v3304
        %v4436 = vunpack.c.l.b16 %v3305
        %v4437 = vunpack.c.h.b16 %v3305
        %v4438 = vunpack.c.l.b16 %v3306
        %v4439 = vunpack.c.h.b16 %v3306
        %v4440 = vunpack.c.l.b16 %v3307
        %v4441 = vunpack.c.h.b16 %v3307
        %v4442 = vunpack.c.l.b16 %v3308
        %v4443 = vunpack.c.h.b16 %v3308
        %v4444 = vunpack.c.l.b16 %v3309
        %v4445 = vunpack.c.h.b16 %v3309
        %v4446 = vunpack.c.l.b16 %v3310
        %v4447 = vunpack.c.h.b16 %v3310
        %v4448 = vunpack.c.l.b16 %v3311
        %v4449 = vunpack.c.h.b16 %v3311
        %v4450 = vunpack.c.l.b16 %v3312
        %v4451 = vunpack.c.h.b16 %v3312
        %v4452 = vunpack.c.l.b16 %v3313
        %v4453 = vunpack.c.h.b16 %v3313
        %v4454 = vunpack.c.l.b16 %v3314
        %v4455 = vunpack.c.h.b16 %v3314
        %v4456 = vunpack.c.l.b16 %v3315
        %v4457 = vunpack.c.h.b16 %v3315
        %v4458 = vunpack.c.l.b16 %v3316
        %v4459 = vunpack.c.h.b16 %v3316
        %v4460 = vunpack.c.l.b16 %v3317
        %v4461 = vunpack.c.h.b16 %v3317
        %v4462 = vunpack.c.l.b16 %v3318
        %v4463 = vunpack.c.h.b16 %v3318
        %v4464 = vunpack.c.l.b16 %v3319
        %v4465 = vunpack.c.h.b16 %v3319
        %v4466 = vunpack.c.l.b16 %v3320
        %v4467 = vunpack.c.h.b16 %v3320
        %v4468 = vunpack.c.l.b16 %v3321
        %v4469 = vunpack.c.h.b16 %v3321
        %v4470 = vunpack.c.l.b16 %v3322
        %v4471 = vunpack.c.h.b16 %v3322
        %v4472 = vunpack.c.l.b16 %v3323
        %v4473 = vunpack.c.h.b16 %v3323
        %v4474 = vunpack.c.l.b16 %v3324
        %v4475 = vunpack.c.h.b16 %v3324
        %v4476 = vunpack.c.l.b16 %v3325
        %v4477 = vunpack.c.h.b16 %v3325
        %v4478 = vunpack.c.l.b16 %v3326
        %v4479 = vunpack.c.h.b16 %v3326
        %v4480 = vunpack.c.l.b16 %v3327
        %v4481 = vunpack.c.h.b16 %v3327
        %v4482 = vunpack.c.l.b16 %v3328
        %v4483 = vunpack.c.h.b16 %v3328
        %v4484 = vunpack.c.l.b16 %v3329
        %v4485 = vunpack.c.h.b16 %v3329
        %v4486 = vunpack.c.l.b16 %v3330
        %v4487 = vunpack.c.h.b16 %v3330
        %v4488 = vunpack.c.l.b16 %v3331
        %v4489 = vunpack.c.h.b16 %v3331
        %v4490 = vunpack.c.l.b16 %v3332
        %v4491 = vunpack.c.h.b16 %v3332
        %v4492 = vunpack.c.l.b16 %v3333
        %v4493 = vunpack.c.h.b16 %v3333
        %v4494 = vunpack.c.l.b16 %v3334
        %v4495 = vunpack.c.h.b16 %v3334
        %v4496 = vunpack.c.l.b16 %v3335
        %v4497 = vunpack.c.h.b16 %v3335
        %v4498 = vunpack.c.l.b16 %v3336
        %v4499 = vunpack.c.h.b16 %v3336
        %v4500 = vunpack.c.l.b16 %v3337
        %v4501 = vunpack.c.h.b16 %v3337
        %v4502 = vunpack.c.l.b16 %v3338
        %v4503 = vunpack.c.h.b16 %v3338
        %v4504 = vunpack.c.l.b16 %v3339
        %v4505 = vunpack.c.h.b16 %v3339
        %v4506 = vunpack.c.l.b16 %v3340
        %v4507 = vunpack.c.h.b16 %v3340
        %v4508 = vunpack.c.l.b16 %v3341
        %v4509 = vunpack.c.h.b16 %v3341
        %v4510 = vunpack.c.l.b16 %v3342
        %v4511 = vunpack.c.h.b16 %v3342
        %v4512 = vunpack.c.l.b16 %v3343
        %v4513 = vunpack.c.h.b16 %v3343
        %v4514 = vunpack.c.l.b16 %v3344
        %v4515 = vunpack.c.h.b16 %v3344
        %v4516 = vunpack.c.l.b16 %v3345
        %v4517 = vunpack.c.h.b16 %v3345
        %v4518 = vunpack.c.l.b16 %v3346
        %v4519 = vunpack.c.h.b16 %v3346
        %v4520 = vunpack.c.l.b16 %v3347
        %v4521 = vunpack.c.h.b16 %v3347
        %v4522 = vunpack.c.l.b16 %v3348
        %v4523 = vunpack.c.h.b16 %v3348
        %v4524 = vunpack.c.l.b16 %v3349
        %v4525 = vunpack.c.h.b16 %v3349
        %v4526 = vunpack.c.l.b16 %v3350
        %v4527 = vunpack.c.h.b16 %v3350
        %v4528 = vunpack.c.l.b16 %v3351
        %v4529 = vunpack.c.h.b16 %v3351
        %v4530 = vunpack.c.l.b16 %v3352
        %v4531 = vunpack.c.h.b16 %v3352
        %v4532 = vunpack.c.l.b16 %v3353
        %v4533 = vunpack.c.h.b16 %v3353
        %v4534 = vunpack.c.l.b16 %v3354
        %v4535 = vunpack.c.h.b16 %v3354
        %v4536 = vunpack.c.l.b16 %v3355
        %v4537 = vunpack.c.h.b16 %v3355
        %v4538 = vunpack.c.l.b16 %v3356
        %v4539 = vunpack.c.h.b16 %v3356
        %v4540 = vunpack.c.l.b16 %v3357
        %v4541 = vunpack.c.h.b16 %v3357
        %v4542 = vunpack.c.l.b16 %v3358
        %v4543 = vunpack.c.h.b16 %v3358
        %v4544 = vunpack.c.l.b16 %v3359
        %v4545 = vunpack.c.h.b16 %v3359
        %v4546 = vunpack.c.l.b16 %v3360
        %v4547 = vunpack.c.h.b16 %v3360
        %v4548 = vunpack.c.l.b16 %v3361
        %v4549 = vunpack.c.h.b16 %v3361
        %v4550 = vunpack.c.l.b16 %v3362
        %v4551 = vunpack.c.h.b16 %v3362
        %v4552 = vunpack.c.l.b16 %v3363
        %v4553 = vunpack.c.h.b16 %v3363
        %v4554 = vunpack.c.l.b16 %v3364
        %v4555 = vunpack.c.h.b16 %v3364
        %v4556 = vunpack.c.l.b16 %v3365
        %v4557 = vunpack.c.h.b16 %v3365
        %v4558 = vunpack.c.l.b16 %v3366
        %v4559 = vunpack.c.h.b16 %v3366
        %v4560 = vunpack.c.l.b16 %v3367
        %v4561 = vunpack.c.h.b16 %v3367
        %v4562 = vunpack.c.l.b16 %v3368
        %v4563 = vunpack.c.h.b16 %v3368
        %v4564 = vunpack.c.l.b16 %v3369
        %v4565 = vunpack.c.h.b16 %v3369
        %v4566 = vunpack.c.l.b16 %v3370
        %v4567 = vunpack.c.h.b16 %v3370
        %v4568 = vunpack.c.l.b16 %v3371
        %v4569 = vunpack.c.h.b16 %v3371
        %v4570 = vunpack.c.l.b16 %v3372
        %v4571 = vunpack.c.h.b16 %v3372
        %v4572 = vunpack.c.l.b16 %v3373
        %v4573 = vunpack.c.h.b16 %v3373
        %v4574 = vunpack.c.l.b16 %v3374
        %v4575 = vunpack.c.h.b16 %v3374
        %v4576 = vunpack.c.l.b16 %v3375
        %v4577 = vunpack.c.h.b16 %v3375
        %v4578 = vunpack.c.l.b16 %v3376
        %v4579 = vunpack.c.h.b16 %v3376
        %v4580 = vunpack.c.l.b16 %v3377
        %v4581 = vunpack.c.h.b16 %v3377
        %v4582 = vunpack.c.l.b16 %v3378
        %v4583 = vunpack.c.h.b16 %v3378
        %v4584 = vunpack.c.l.b16 %v3379
        %v4585 = vunpack.c.h.b16 %v3379
        %v4586 = vunpack.c.l.b16 %v3380
        %v4587 = vunpack.c.h.b16 %v3380
        %v4588 = vunpack.c.l.b16 %v3381
        %v4589 = vunpack.c.h.b16 %v3381
        %v4590 = vunpack.c.l.b16 %v3382
        %v4591 = vunpack.c.h.b16 %v3382
        %v4592 = vunpack.c.l.b16 %v3383
        %v4593 = vunpack.c.h.b16 %v3383
        %v4594 = vunpack.c.l.b16 %v3384
        %v4595 = vunpack.c.h.b16 %v3384
        %v4596 = vunpack.c.l.b16 %v3385
        %v4597 = vunpack.c.h.b16 %v3385
        %v4598 = vunpack.c.l.b16 %v3386
        %v4599 = vunpack.c.h.b16 %v3386
        %v4600 = vunpack.c.l.b16 %v3387
        %v4601 = vunpack.c.h.b16 %v3387
        %v4602 = vunpack.c.l.b16 %v3388
        %v4603 = vunpack.c.h.b16 %v3388
        %v4604 = vunpack.c.l.b16 %v3389
        %v4605 = vunpack.c.h.b16 %v3389
        %v4606 = vunpack.c.l.b16 %v3390
        %v4607 = vunpack.c.h.b16 %v3390
        %v4608 = vunpack.c.l.b16 %v3391
        %v4609 = vunpack.c.h.b16 %v3391
        %v4610 = vunpack.c.l.b16 %v3392
        %v4611 = vunpack.c.h.b16 %v3392
        %v4612 = vunpack.c.l.b16 %v3393
        %v4613 = vunpack.c.h.b16 %v3393
        %v4614 = vunpack.c.l.b16 %v3394
        %v4615 = vunpack.c.h.b16 %v3394
        %v4616 = vunpack.c.l.b16 %v3395
        %v4617 = vunpack.c.h.b16 %v3395
        %v4618 = vunpack.c.l.b16 %v3396
        %v4619 = vunpack.c.h.b16 %v3396
        %v4620 = vunpack.c.l.b16 %v3397
        %v4621 = vunpack.c.h.b16 %v3397
        %v4622 = vunpack.c.l.b16 %v3398
        %v4623 = vunpack.c.h.b16 %v3398
        %v4624 = vunpack.c.l.b16 %v3399
        %v4625 = vunpack.c.h.b16 %v3399
        %v4626 = vunpack.c.l.b16 %v3400
        %v4627 = vunpack.c.h.b16 %v3400
        %v4628 = vunpack.c.l.b16 %v3401
        %v4629 = vunpack.c.h.b16 %v3401
        %v4630 = vunpack.c.l.b16 %v3402
        %v4631 = vunpack.c.h.b16 %v3402
        %v4632 = vunpack.c.l.b16 %v3403
        %v4633 = vunpack.c.h.b16 %v3403
        %v4634 = vunpack.c.l.b16 %v3404
        %v4635 = vunpack.c.h.b16 %v3404
        %v4636 = vunpack.c.l.b16 %v3405
        %v4637 = vunpack.c.h.b16 %v3405
        %v4638 = vunpack.c.l.b16 %v3406
        %v4639 = vunpack.c.h.b16 %v3406
        %v4640 = vunpack.c.l.b16 %v3407
        %v4641 = vunpack.c.h.b16 %v3407
        %v4642 = vunpack.c.l.b16 %v3408
        %v4643 = vunpack.c.h.b16 %v3408
        %v4644 = vunpack.c.l.b16 %v3409
        %v4645 = vunpack.c.h.b16 %v3409
        %v4646 = vunpack.c.l.b16 %v3410
        %v4647 = vunpack.c.h.b16 %v3410
        %v4648 = vunpack.c.l.b16 %v3411
        %v4649 = vunpack.c.h.b16 %v3411
        %v4650 = vunpack.c.l.b16 %v3412
        %v4651 = vunpack.c.h.b16 %v3412
        %v4652 = vunpack.c.l.b16 %v3413
        %v4653 = vunpack.c.h.b16 %v3413
        %v4654 = vunpack.c.l.b16 %v3414
        %v4655 = vunpack.c.h.b16 %v3414
        %v4656 = vunpack.c.l.b16 %v3415
        %v4657 = vunpack.c.h.b16 %v3415
        %v4658 = vunpack.c.l.b16 %v3416
        %v4659 = vunpack.c.h.b16 %v3416
        %v4660 = vunpack.c.l.b16 %v3417
        %v4661 = vunpack.c.h.b16 %v3417
        %v4662 = vunpack.c.l.b16 %v3418
        %v4663 = vunpack.c.h.b16 %v3418
        %v4664 = vunpack.c.l.b16 %v3419
        %v4665 = vunpack.c.h.b16 %v3419
        %v4666 = vunpack.c.l.b16 %v3420
        %v4667 = vunpack.c.h.b16 %v3420
        %v4668 = vunpack.c.l.b16 %v3421
        %v4669 = vunpack.c.h.b16 %v3421
        %v4670 = vunpack.c.l.b16 %v3422
        %v4671 = vunpack.c.h.b16 %v3422
        %v4672 = vunpack.c.l.b16 %v3423
        %v4673 = vunpack.c.h.b16 %v3423
        %v4674 = vunpack.c.l.b16 %v3424
        %v4675 = vunpack.c.h.b16 %v3424
        %v4676 = vunpack.c.l.b16 %v3425
        %v4677 = vunpack.c.h.b16 %v3425
        %v4678 = vunpack.c.l.b16 %v3426
        %v4679 = vunpack.c.h.b16 %v3426
        %v4680 = vunpack.c.l.b16 %v3427
        %v4681 = vunpack.c.h.b16 %v3427
        %v4682 = vunpack.c.l.b16 %v3428
        %v4683 = vunpack.c.h.b16 %v3428
        %v4684 = vunpack.c.l.b16 %v3429
        %v4685 = vunpack.c.h.b16 %v3429
        %v4686 = vunpack.c.l.b16 %v3430
        %v4687 = vunpack.c.h.b16 %v3430
        %v4688 = vunpack.c.l.b16 %v3431
        %v4689 = vunpack.c.h.b16 %v3431
        %v4690 = vunpack.c.l.b16 %v3432
        %v4691 = vunpack.c.h.b16 %v3432
        %v4692 = vunpack.c.l.b16 %v3433
        %v4693 = vunpack.c.h.b16 %v3433
        %v4694 = vunpack.c.l.b16 %v3434
        %v4695 = vunpack.c.h.b16 %v3434
        %v4696 = vunpack.c.l.b16 %v3435
        %v4697 = vunpack.c.h.b16 %v3435
        %v4698 = vunpack.c.l.b16 %v3436
        %v4699 = vunpack.c.h.b16 %v3436
        %v4700 = vunpack.c.l.b16 %v3437
        %v4701 = vunpack.c.h.b16 %v3437
        %v4702 = vunpack.c.l.b16 %v3438
        %v4703 = vunpack.c.h.b16 %v3438
        %v4704 = vunpack.c.l.b16 %v3439
        %v4705 = vunpack.c.h.b16 %v3439
        %v4706 = vunpack.c.l.b16 %v3440
        %v4707 = vunpack.c.h.b16 %v3440
        %v4708 = vunpack.c.l.b16 %v3441
        %v4709 = vunpack.c.h.b16 %v3441
        %v4710 = vunpack.c.l.b16 %v3442
        %v4711 = vunpack.c.h.b16 %v3442
        %v4712 = vunpack.c.l.b16 %v3443
        %v4713 = vunpack.c.h.b16 %v3443
        %v4714 = vunpack.c.l.b16 %v3444
        %v4715 = vunpack.c.h.b16 %v3444
        %v4716 = vunpack.c.l.b16 %v3445
        %v4717 = vunpack.c.h.b16 %v3445
        %v4718 = vunpack.c.l.b16 %v3446
        %v4719 = vunpack.c.h.b16 %v3446
        %v4720 = vunpack.c.l.b16 %v3447
        %v4721 = vunpack.c.h.b16 %v3447
        %v4722 = vunpack.c.l.b16 %v3448
        %v4723 = vunpack.c.h.b16 %v3448
        %v4724 = vunpack.c.l.b16 %v3449
        %v4725 = vunpack.c.h.b16 %v3449
        %v4726 = vunpack.c.l.b16 %v3450
        %v4727 = vunpack.c.h.b16 %v3450
        %v4728 = vunpack.c.l.b16 %v3451
        %v4729 = vunpack.c.h.b16 %v3451
        %v4730 = vunpack.c.l.b16 %v3452
        %v4731 = vunpack.c.h.b16 %v3452
        %v4732 = vunpack.c.l.b16 %v3453
        %v4733 = vunpack.c.h.b16 %v3453
        %v4734 = vunpack.c.l.b16 %v3454
        %v4735 = vunpack.c.h.b16 %v3454
        %v4736 = vunpack.c.l.b16 %v3455
        %v4737 = vunpack.c.h.b16 %v3455
        %v4738 = vunpack.c.l.b16 %v3456
        %v4739 = vunpack.c.h.b16 %v3456
        %v4740 = vunpack.c.l.b16 %v3457
        %v4741 = vunpack.c.h.b16 %v3457
        %v4742 = vunpack.c.l.b16 %v3458
        %v4743 = vunpack.c.h.b16 %v3458
        %v4744 = vunpack.c.l.b16 %v3459
        %v4745 = vunpack.c.h.b16 %v3459
        %v4746 = vunpack.c.l.b16 %v3460
        %v4747 = vunpack.c.h.b16 %v3460
        %v4748 = vunpack.c.l.b16 %v3461
        %v4749 = vunpack.c.h.b16 %v3461
        %v4750 = vunpack.c.l.b16 %v3462
        %v4751 = vunpack.c.h.b16 %v3462
        %v4752 = vunpack.c.l.b16 %v3463
        %v4753 = vunpack.c.h.b16 %v3463
        %v4754 = vunpack.c.l.b16 %v3464
        %v4755 = vunpack.c.h.b16 %v3464
        %v4756 = vunpack.c.l.b16 %v3465
        %v4757 = vunpack.c.h.b16 %v3465
        %v4758 = vunpack.c.l.b16 %v3466
        %v4759 = vunpack.c.h.b16 %v3466
        %v4760 = vunpack.c.l.b16 %v3467
        %v4761 = vunpack.c.h.b16 %v3467
        %v4762 = vunpack.c.l.b16 %v3468
        %v4763 = vunpack.c.h.b16 %v3468
        %v4764 = vunpack.c.l.b16 %v3469
        %v4765 = vunpack.c.h.b16 %v3469
        %v4766 = vunpack.c.l.b16 %v3470
        %v4767 = vunpack.c.h.b16 %v3470
        %v4768 = vunpack.c.l.b16 %v3471
        %v4769 = vunpack.c.h.b16 %v3471
        %v4770 = vunpack.c.l.b16 %v3472
        %v4771 = vunpack.c.h.b16 %v3472
        %v4772 = vunpack.c.l.b16 %v3473
        %v4773 = vunpack.c.h.b16 %v3473
        %v4774 = vunpack.c.l.b16 %v3474
        %v4775 = vunpack.c.h.b16 %v3474
        %v4776 = vunpack.c.l.b16 %v3475
        %v4777 = vunpack.c.h.b16 %v3475
        %v4778 = vunpack.c.l.b16 %v3476
        %v4779 = vunpack.c.h.b16 %v3476
        %v4780 = vunpack.c.l.b16 %v3477
        %v4781 = vunpack.c.h.b16 %v3477
        %v4782 = vunpack.c.l.b16 %v3478
        %v4783 = vunpack.c.h.b16 %v3478
        %v4784 = vunpack.c.l.b16 %v3479
        %v4785 = vunpack.c.h.b16 %v3479
        %v4786 = vunpack.c.l.b16 %v3480
        %v4787 = vunpack.c.h.b16 %v3480
        %v4788 = vunpack.c.l.b16 %v3481
        %v4789 = vunpack.c.h.b16 %v3481
        %v4790 = vunpack.c.l.b16 %v3482
        %v4791 = vunpack.c.h.b16 %v3482
        %v4792 = vunpack.c.l.b16 %v3483
        %v4793 = vunpack.c.h.b16 %v3483
        %v4794 = vunpack.c.l.b16 %v3484
        %v4795 = vunpack.c.h.b16 %v3484
        %v4796 = vunpack.c.l.b16 %v3485
        %v4797 = vunpack.c.h.b16 %v3485
        %v4798 = vunpack.c.l.b16 %v3486
        %v4799 = vunpack.c.h.b16 %v3486
        %v4800 = vunpack.c.l.b16 %v3487
        %v4801 = vunpack.c.h.b16 %v3487
        %v4802 = vunpack.c.l.b16 %v3488
        %v4803 = vunpack.c.h.b16 %v3488
        %v4804 = vunpack.c.l.b16 %v3489
        %v4805 = vunpack.c.h.b16 %v3489
        %v4806 = vunpack.c.l.b16 %v3490
        %v4807 = vunpack.c.h.b16 %v3490
        %v4808 = vunpack.c.l.b16 %v3491
        %v4809 = vunpack.c.h.b16 %v3491
        %v4810 = vunpack.c.l.b16 %v3492
        %v4811 = vunpack.c.h.b16 %v3492
        %v4812 = vunpack.c.l.b16 %v3493
        %v4813 = vunpack.c.h.b16 %v3493
        %v4814 = vunpack.c.l.b16 %v3494
        %v4815 = vunpack.c.h.b16 %v3494
        %v4816 = vunpack.c.l.b16 %v3495
        %v4817 = vunpack.c.h.b16 %v3495
        %v4818 = vunpack.c.l.b16 %v3496
        %v4819 = vunpack.c.h.b16 %v3496
        %v4820 = vunpack.c.l.b16 %v3497
        %v4821 = vunpack.c.h.b16 %v3497
        %v4822 = vunpack.c.l.b16 %v3498
        %v4823 = vunpack.c.h.b16 %v3498
        %v4824 = vunpack.c.l.b16 %v3499
        %v4825 = vunpack.c.h.b16 %v3499
        %v4826 = vunpack.c.l.b16 %v3500
        %v4827 = vunpack.c.h.b16 %v3500
        %v4828 = vunpack.c.l.b16 %v3501
        %v4829 = vunpack.c.h.b16 %v3501
        %v4830 = vunpack.c.l.b16 %v3502
        %v4831 = vunpack.c.h.b16 %v3502
        %v4832 = vunpack.c.l.b16 %v3503
        %v4833 = vunpack.c.h.b16 %v3503
        %v4834 = vunpack.c.l.b16 %v3504
        %v4835 = vunpack.c.h.b16 %v3504
        %v4836 = vunpack.c.l.b16 %v3505
        %v4837 = vunpack.c.h.b16 %v3505
        %v4838 = vunpack.c.l.b16 %v3506
        %v4839 = vunpack.c.h.b16 %v3506
        %v4840 = vunpack.c.l.b16 %v3507
        %v4841 = vunpack.c.h.b16 %v3507
        %v4842 = vunpack.c.l.b16 %v3508
        %v4843 = vunpack.c.h.b16 %v3508
        %v4844 = vunpack.c.l.b16 %v3509
        %v4845 = vunpack.c.h.b16 %v3509
        %v4846 = vunpack.c.l.b16 %v3510
        %v4847 = vunpack.c.h.b16 %v3510
        %v4848 = vunpack.c.l.b16 %v3511
        %v4849 = vunpack.c.h.b16 %v3511
        %v4850 = vunpack.c.l.b16 %v3512
        %v4851 = vunpack.c.h.b16 %v3512
        %v4852 = vunpack.c.l.b16 %v3513
        %v4853 = vunpack.c.h.b16 %v3513
        %v4854 = vunpack.c.l.b16 %v3514
        %v4855 = vunpack.c.h.b16 %v3514
        %v4856 = vunpack.c.l.b16 %v3515
        %v4857 = vunpack.c.h.b16 %v3515
        %v4858 = vunpack.c.l.b16 %v3516
        %v4859 = vunpack.c.h.b16 %v3516
        %v4860 = vunpack.c.l.b16 %v3517
        %v4861 = vunpack.c.h.b16 %v3517
        %v4862 = vunpack.c.l.b16 %v3518
        %v4863 = vunpack.c.h.b16 %v3518
        %v4864 = vunpack.c.l.b16 %v3519
        %v4865 = vunpack.c.h.b16 %v3519
        %v4866 = vunpack.c.l.b16 %v3520
        %v4867 = vunpack.c.h.b16 %v3520
        %v4868 = vunpack.c.l.b16 %v3521
        %v4869 = vunpack.c.h.b16 %v3521
        %v4870 = vunpack.c.l.b16 %v3522
        %v4871 = vunpack.c.h.b16 %v3522
        %v4872 = vunpack.c.l.b16 %v3523
        %v4873 = vunpack.c.h.b16 %v3523
        %v4874 = vunpack.c.l.b16 %v3524
        %v4875 = vunpack.c.h.b16 %v3524
        %v4876 = vunpack.c.l.b16 %v3525
        %v4877 = vunpack.c.h.b16 %v3525
        %v4878 = vunpack.c.l.b16 %v3526
        %v4879 = vunpack.c.h.b16 %v3526
        %v4880 = vunpack.c.l.b16 %v3527
        %v4881 = vunpack.c.h.b16 %v3527
        %v4882 = vunpack.c.l.b16 %v3528
        %v4883 = vunpack.c.h.b16 %v3528
        %v4884 = vunpack.c.l.b16 %v3529
        %v4885 = vunpack.c.h.b16 %v3529
        %v4886 = vunpack.c.l.b16 %v3530
        %v4887 = vunpack.c.h.b16 %v3530
        %v4888 = vunpack.c.l.b16 %v3531
        %v4889 = vunpack.c.h.b16 %v3531
        %v4890 = vunpack.c.l.b16 %v3532
        %v4891 = vunpack.c.h.b16 %v3532
        %v4892 = vunpack.c.l.b16 %v3533
        %v4893 = vunpack.c.h.b16 %v3533
        %v4894 = vunpack.c.l.b16 %v3534
        %v4895 = vunpack.c.h.b16 %v3534
        %v4896 = vunpack.c.l.b16 %v3535
        %v4897 = vunpack.c.h.b16 %v3535
        %v4898 = vunpack.c.l.b16 %v3536
        %v4899 = vunpack.c.h.b16 %v3536
        %v4900 = vunpack.c.l.b16 %v3537
        %v4901 = vunpack.c.h.b16 %v3537
        %v4902 = vunpack.c.l.b16 %v3538
        %v4903 = vunpack.c.h.b16 %v3538
        %v4904 = vunpack.c.l.b16 %v3539
        %v4905 = vunpack.c.h.b16 %v3539
        %v4906 = vunpack.c.l.b16 %v3540
        %v4907 = vunpack.c.h.b16 %v3540
        %v4908 = vunpack.c.l.b16 %v3541
        %v4909 = vunpack.c.h.b16 %v3541
        %v4910 = vunpack.c.l.b16 %v3542
        %v4911 = vunpack.c.h.b16 %v3542
        %v4912 = vunpack.c.l.b16 %v3543
        %v4913 = vunpack.c.h.b16 %v3543
        %v4914 = vunpack.c.l.b16 %v3544
        %v4915 = vunpack.c.h.b16 %v3544
        %v4916 = vunpack.c.l.b16 %v3545
        %v4917 = vunpack.c.h.b16 %v3545
        %v4918 = vunpack.c.l.b16 %v3546
        %v4919 = vunpack.c.h.b16 %v3546
        %v4920 = vunpack.c.l.b16 %v3547
        %v4921 = vunpack.c.h.b16 %v3547
        %v4922 = vunpack.c.l.b16 %v3548
        %v4923 = vunpack.c.h.b16 %v3548
        %v4924 = vunpack.c.l.b16 %v3549
        %v4925 = vunpack.c.h.b16 %v3549
        %v4926 = vunpack.c.l.b16 %v3550
        %v4927 = vunpack.c.h.b16 %v3550
        %v4928 = vunpack.c.l.b16 %v3551
        %v4929 = vunpack.c.h.b16 %v3551
        %v4930 = vunpack.c.l.b16 %v3552
        %v4931 = vunpack.c.h.b16 %v3552
        %v4932 = vunpack.c.l.b16 %v3553
        %v4933 = vunpack.c.h.b16 %v3553
        %v4934 = vunpack.c.l.b16 %v3554
        %v4935 = vunpack.c.h.b16 %v3554
        %v4936 = vunpack.c.l.b16 %v3555
        %v4937 = vunpack.c.h.b16 %v3555
        %v4938 = vunpack.c.l.b16 %v3556
        %v4939 = vunpack.c.h.b16 %v3556
        %v4940 = vunpack.c.l.b16 %v3557
        %v4941 = vunpack.c.h.b16 %v3557
        %v4942 = vunpack.c.l.b16 %v3558
        %v4943 = vunpack.c.h.b16 %v3558
        %v4944 = vunpack.c.l.b16 %v3559
        %v4945 = vunpack.c.h.b16 %v3559
        %v4946 = vunpack.c.l.b16 %v3560
        %v4947 = vunpack.c.h.b16 %v3560
        %v4948 = vunpack.c.l.b16 %v3561
        %v4949 = vunpack.c.h.b16 %v3561
        %v4950 = vunpack.c.l.b16 %v3562
        %v4951 = vunpack.c.h.b16 %v3562
        %v4952 = vunpack.c.l.b16 %v3563
        %v4953 = vunpack.c.h.b16 %v3563
        %v4954 = vunpack.c.l.b16 %v3564
        %v4955 = vunpack.c.h.b16 %v3564
        %v4956 = vunpack.c.l.b16 %v3565
        %v4957 = vunpack.c.h.b16 %v3565
        %v4958 = vunpack.c.l.b16 %v3566
        %v4959 = vunpack.c.h.b16 %v3566
        %v4960 = vunpack.c.l.b16 %v3567
        %v4961 = vunpack.c.h.b16 %v3567
        %v4962 = vunpack.c.l.b16 %v3568
        %v4963 = vunpack.c.h.b16 %v3568
        %v4964 = vunpack.c.l.b16 %v3569
        %v4965 = vunpack.c.h.b16 %v3569
        %v4966 = vunpack.c.l.b16 %v3570
        %v4967 = vunpack.c.h.b16 %v3570
        %v4968 = vunpack.c.l.b16 %v3571
        %v4969 = vunpack.c.h.b16 %v3571
        %v4970 = vunpack.c.l.b16 %v3572
        %v4971 = vunpack.c.h.b16 %v3572
        %v4972 = vunpack.c.l.b16 %v3573
        %v4973 = vunpack.c.h.b16 %v3573
        %v4974 = vunpack.c.l.b16 %v3574
        %v4975 = vunpack.c.h.b16 %v3574
        %v4976 = vunpack.c.l.b16 %v3575
        %v4977 = vunpack.c.h.b16 %v3575
        %v4978 = vunpack.c.l.b16 %v3576
        %v4979 = vunpack.c.h.b16 %v3576
        %v4980 = vunpack.c.l.b16 %v3577
        %v4981 = vunpack.c.h.b16 %v3577
        %v4982 = vunpack.c.l.b16 %v3578
        %v4983 = vunpack.c.h.b16 %v3578
        %v4984 = vunpack.c.l.b16 %v3579
        %v4985 = vunpack.c.h.b16 %v3579
        %v4986 = vunpack.c.l.b16 %v3580
        %v4987 = vunpack.c.h.b16 %v3580
        %v4988 = vunpack.c.l.b16 %v3581
        %v4989 = vunpack.c.h.b16 %v3581
        %v4990 = vunpack.c.l.b16 %v3582
        %v4991 = vunpack.c.h.b16 %v3582
        %v4992 = vunpack.c.l.b16 %v3583
        %v4993 = vunpack.c.h.b16 %v3583
        %v4994 = vunpack.c.l.b16 %v3584
        %v4995 = vunpack.c.h.b16 %v3584
        %v4996 = vunpack.c.l.b16 %v3585
        %v4997 = vunpack.c.h.b16 %v3585
        %v4998 = vunpack.c.l.b16 %v3586
        %v4999 = vunpack.c.h.b16 %v3586
        %v5000 = vunpack.c.l.b16 %v3587
        %v5001 = vunpack.c.h.b16 %v3587
        %v5002 = vunpack.c.l.b16 %v3588
        %v5003 = vunpack.c.h.b16 %v3588
        %v5004 = vunpack.c.l.b16 %v3589
        %v5005 = vunpack.c.h.b16 %v3589
        %v5006 = vunpack.c.l.b16 %v3590
        %v5007 = vunpack.c.h.b16 %v3590
        %v5008 = vunpack.c.l.b16 %v3591
        %v5009 = vunpack.c.h.b16 %v3591
        %v5010 = vunpack.c.l.b16 %v3592
        %v5011 = vunpack.c.h.b16 %v3592
        %v5012 = vunpack.c.l.b16 %v3593
        %v5013 = vunpack.c.h.b16 %v3593
        %v5014 = vunpack.c.l.b16 %v3594
        %v5015 = vunpack.c.h.b16 %v3594
        %v5016 = vunpack.c.l.b16 %v3595
        %v5017 = vunpack.c.h.b16 %v3595
        %v5018 = vunpack.c.l.b16 %v3596
        %v5019 = vunpack.c.h.b16 %v3596
        %v5020 = vunpack.c.l.b16 %v3597
        %v5021 = vunpack.c.h.b16 %v3597
        %v5022 = vunpack.c.l.b16 %v3598
        %v5023 = vunpack.c.h.b16 %v3598
        %v5024 = vunpack.c.l.b16 %v3599
        %v5025 = vunpack.c.h.b16 %v3599
        %v5026 = vunpack.c.l.b16 %v3600
        %v5027 = vunpack.c.h.b16 %v3600
        %v5028 = vunpack.c.l.b16 %v3601
        %v5029 = vunpack.c.h.b16 %v3601
        %v5030 = vunpack.c.l.b16 %v3602
        %v5031 = vunpack.c.h.b16 %v3602
        %v5032 = vunpack.c.l.b16 %v3603
        %v5033 = vunpack.c.h.b16 %v3603
        %v5034 = vunpack.c.l.b16 %v3604
        %v5035 = vunpack.c.h.b16 %v3604
        %v5036 = vunpack.c.l.b16 %v3605
        %v5037 = vunpack.c.h.b16 %v3605
        %v5038 = vunpack.c.l.b16 %v3606
        %v5039 = vunpack.c.h.b16 %v3606
        %v5040 = vunpack.c.l.b16 %v3607
        %v5041 = vunpack.c.h.b16 %v3607
        %v5042 = vunpack.c.l.b16 %v3608
        %v5043 = vunpack.c.h.b16 %v3608
        %v5044 = vunpack.c.l.b16 %v3609
        %v5045 = vunpack.c.h.b16 %v3609
        %v5046 = vunpack.c.l.b16 %v3610
        %v5047 = vunpack.c.h.b16 %v3610
        %v5048 = vunpack.c.l.b16 %v3611
        %v5049 = vunpack.c.h.b16 %v3611
        %v5050 = vunpack.c.l.b16 %v3612
        %v5051 = vunpack.c.h.b16 %v3612
        %v5052 = vunpack.c.l.b16 %v3613
        %v5053 = vunpack.c.h.b16 %v3613
        %v5054 = vunpack.c.l.b16 %v3614
        %v5055 = vunpack.c.h.b16 %v3614
        %v5056 = vunpack.c.l.b16 %v3615
        %v5057 = vunpack.c.h.b16 %v3615
        %v5058 = vunpack.c.l.b16 %v3616
        %v5059 = vunpack.c.h.b16 %v3616
        %v5060 = vunpack.c.l.b16 %v3617
        %v5061 = vunpack.c.h.b16 %v3617
        %v5062 = vunpack.c.l.b16 %v3618
        %v5063 = vunpack.c.h.b16 %v3618
        %v5064 = vunpack.c.l.b16 %v3619
        %v5065 = vunpack.c.h.b16 %v3619
        %v5066 = vunpack.c.l.b16 %v3620
        %v5067 = vunpack.c.h.b16 %v3620
        %v5068 = vunpack.c.l.b16 %v3621
        %v5069 = vunpack.c.h.b16 %v3621
        %v5070 = vunpack.c.l.b16 %v3622
        %v5071 = vunpack.c.h.b16 %v3622
        %v5072 = vunpack.c.l.b16 %v3623
        %v5073 = vunpack.c.h.b16 %v3623
        %v5074 = vunpack.c.l.b16 %v3624
        %v5075 = vunpack.c.h.b16 %v3624
        %v5076 = vunpack.c.l.b16 %v3625
        %v5077 = vunpack.c.h.b16 %v3625
        %v5078 = vunpack.c.l.b16 %v3626
        %v5079 = vunpack.c.h.b16 %v3626
        %v5080 = vunpack.c.l.b16 %v3627
        %v5081 = vunpack.c.h.b16 %v3627
        %v5082 = vunpack.c.l.b16 %v3628
        %v5083 = vunpack.c.h.b16 %v3628
        %v5084 = vunpack.c.l.b16 %v3629
        %v5085 = vunpack.c.h.b16 %v3629
        %v5086 = vunpack.c.l.b16 %v3630
        %v5087 = vunpack.c.h.b16 %v3630
        %v5088 = vunpack.c.l.b16 %v3631
        %v5089 = vunpack.c.h.b16 %v3631
        %v5090 = vunpack.c.l.b16 %v3632
        %v5091 = vunpack.c.h.b16 %v3632
        %v5092 = vunpack.c.l.b16 %v3633
        %v5093 = vunpack.c.h.b16 %v3633
        %v5094 = vunpack.c.l.b16 %v3634
        %v5095 = vunpack.c.h.b16 %v3634
        %v5096 = vunpack.c.l.b16 %v3635
        %v5097 = vunpack.c.h.b16 %v3635
        %v5098 = vunpack.c.l.b16 %v3636
        %v5099 = vunpack.c.h.b16 %v3636
        %v5100 = vunpack.c.l.b16 %v3637
        %v5101 = vunpack.c.h.b16 %v3637
        %v5102 = vunpack.c.l.b16 %v3638
        %v5103 = vunpack.c.h.b16 %v3638
        %v5104 = vunpack.c.l.b16 %v3639
        %v5105 = vunpack.c.h.b16 %v3639
        %v5106 = vunpack.c.l.b16 %v3640
        %v5107 = vunpack.c.h.b16 %v3640
        %v5108 = vunpack.c.l.b16 %v3641
        %v5109 = vunpack.c.h.b16 %v3641
        %v5110 = vunpack.c.l.b16 %v3642
        %v5111 = vunpack.c.h.b16 %v3642
        %v5112 = vunpack.c.l.b16 %v3643
        %v5113 = vunpack.c.h.b16 %v3643
        %v5114 = vunpack.c.l.b16 %v3644
        %v5115 = vunpack.c.h.b16 %v3644
        %v5116 = vunpack.c.l.b16 %v3645
        %v5117 = vunpack.c.h.b16 %v3645
        %v5118 = vunpack.c.l.b16 %v3646
        %v5119 = vunpack.c.h.b16 %v3646
        %v5120 = vunpack.c.l.b16 %v3647
        %v5121 = vunpack.c.h.b16 %v3647
        %v5122 = vunpack.c.l.b16 %v3648
        %v5123 = vunpack.c.h.b16 %v3648
        %v5124 = vunpack.c.l.b16 %v3649
        %v5125 = vunpack.c.h.b16 %v3649
        %v5126 = vunpack.c.l.b16 %v3650
        %v5127 = vunpack.c.h.b16 %v3650
        %v5128 = vunpack.c.l.b16 %v3651
        %v5129 = vunpack.c.h.b16 %v3651
        %v5130 = vunpack.c.l.b16 %v3652
        %v5131 = vunpack.c.h.b16 %v3652
        %v5132 = vunpack.c.l.b16 %v3653
        %v5133 = vunpack.c.h.b16 %v3653
        %v5134 = vunpack.c.l.b16 %v3654
        %v5135 = vunpack.c.h.b16 %v3654
        %v5136 = vunpack.c.l.b16 %v3655
        %v5137 = vunpack.c.h.b16 %v3655
        %v5138 = vunpack.c.l.b16 %v3656
        %v5139 = vunpack.c.h.b16 %v3656
        %v5140 = vunpack.c.l.b16 %v3657
        %v5141 = vunpack.c.h.b16 %v3657
        %v5142 = vunpack.c.l.b16 %v3658
        %v5143 = vunpack.c.h.b16 %v3658
        %v5144 = vunpack.c.l.b16 %v3659
        %v5145 = vunpack.c.h.b16 %v3659
        %v5146 = vunpack.c.l.b16 %v3660
        %v5147 = vunpack.c.h.b16 %v3660
        %v5148 = vunpack.c.l.b16 %v3661
        %v5149 = vunpack.c.h.b16 %v3661
        %v5150 = vunpack.c.l.b16 %v3662
        %v5151 = vunpack.c.h.b16 %v3662
        %v5152 = vunpack.c.l.b16 %v3663
        %v5153 = vunpack.c.h.b16 %v3663
        %v5154 = vunpack.c.l.b16 %v3664
        %v5155 = vunpack.c.h.b16 %v3664
        %v5156 = vunpack.c.l.b16 %v3665
        %v5157 = vunpack.c.h.b16 %v3665
        %v5158 = vunpack.c.l.b16 %v3666
        %v5159 = vunpack.c.h.b16 %v3666
        %v5160 = vunpack.c.l.b16 %v3667
        %v5161 = vunpack.c.h.b16 %v3667
        %v5162 = vunpack.c.l.b16 %v3668
        %v5163 = vunpack.c.h.b16 %v3668
        %v5164 = vunpack.c.l.b16 %v3669
        %v5165 = vunpack.c.h.b16 %v3669
        %v5166 = vunpack.c.l.b16 %v3670
        %v5167 = vunpack.c.h.b16 %v3670
        %v5168 = vunpack.c.l.b16 %v3671
        %v5169 = vunpack.c.h.b16 %v3671
        %v5170 = vunpack.c.l.b16 %v3672
        %v5171 = vunpack.c.h.b16 %v3672
        %v5172 = vunpack.c.l.b16 %v3673
        %v5173 = vunpack.c.h.b16 %v3673
        %v5174 = vunpack.c.l.b16 %v3674
        %v5175 = vunpack.c.h.b16 %v3674
        %v5176 = vunpack.c.l.b16 %v3675
        %v5177 = vunpack.c.h.b16 %v3675
        %v5178 = vunpack.c.l.b16 %v3676
        %v5179 = vunpack.c.h.b16 %v3676
        %v5180 = vunpack.c.l.b16 %v3677
        %v5181 = vunpack.c.h.b16 %v3677
        %v5182 = vunpack.c.l.b16 %v3678
        %v5183 = vunpack.c.h.b16 %v3678
        %v5184 = vunpack.c.l.b16 %v3679
        %v5185 = vunpack.c.h.b16 %v3679
        %v5186 = vunpack.c.l.b16 %v3680
        %v5187 = vunpack.c.h.b16 %v3680
        %v5188 = vunpack.c.l.b16 %v3681
        %v5189 = vunpack.c.h.b16 %v3681
        %v5190 = vunpack.c.l.b16 %v3682
        %v5191 = vunpack.c.h.b16 %v3682
        %v5192 = vunpack.c.l.b16 %v3683
        %v5193 = vunpack.c.h.b16 %v3683
        %v5194 = vunpack.c.l.b16 %v3684
        %v5195 = vunpack.c.h.b16 %v3684
        %v5196 = vunpack.c.l.b16 %v3685
        %v5197 = vunpack.c.h.b16 %v3685
        %v5198 = vunpack.c.l.b16 %v3686
        %v5199 = vunpack.c.h.b16 %v3686
        %v5200 = vunpack.c.l.b16 %v3687
        %v5201 = vunpack.c.h.b16 %v3687
        %v5202 = vunpack.c.l.b16 %v3688
        %v5203 = vunpack.c.h.b16 %v3688
        %v5204 = vunpack.c.l.b16 %v3689
        %v5205 = vunpack.c.h.b16 %v3689
        %v5206 = vunpack.c.l.b16 %v3690
        %v5207 = vunpack.c.h.b16 %v3690
        %v5208 = vunpack.c.l.b16 %v3691
        %v5209 = vunpack.c.h.b16 %v3691
        %v5210 = vunpack.c.l.b16 %v3692
        %v5211 = vunpack.c.h.b16 %v3692
        %v5212 = vunpack.c.l.b16 %v3693
        %v5213 = vunpack.c.h.b16 %v3693
        %v5214 = vunpack.c.l.b16 %v3694
        %v5215 = vunpack.c.h.b16 %v3694
        %v5216 = vunpack.c.l.b16 %v3695
        %v5217 = vunpack.c.h.b16 %v3695
        %v5218 = vunpack.c.l.b16 %v3696
        %v5219 = vunpack.c.h.b16 %v3696
        %v5220 = vunpack.c.l.b16 %v3697
        %v5221 = vunpack.c.h.b16 %v3697
        %v5222 = vunpack.c.l.b16 %v3698
        %v5223 = vunpack.c.h.b16 %v3698
        %v5224 = vunpack.c.l.b16 %v3699
        %v5225 = vunpack.c.h.b16 %v3699
        %v5226 = vunpack.c.l.b16 %v3700
        %v5227 = vunpack.c.h.b16 %v3700
        %v5228 = vunpack.c.l.b16 %v3701
        %v5229 = vunpack.c.h.b16 %v3701
        %v5230 = vunpack.c.l.b16 %v3702
        %v5231 = vunpack.c.h.b16 %v3702
        %v5232 = vunpack.c.l.b16 %v3703
        %v5233 = vunpack.c.h.b16 %v3703
        %v5234 = vunpack.c.l.b16 %v3704
        %v5235 = vunpack.c.h.b16 %v3704
        %v5236 = vunpack.c.l.b16 %v3705
        %v5237 = vunpack.c.h.b16 %v3705
        %v5238 = vunpack.c.l.b16 %v3706
        %v5239 = vunpack.c.h.b16 %v3706
        %v5240 = vunpack.c.l.b16 %v3707
        %v5241 = vunpack.c.h.b16 %v3707
        %v5242 = vunpack.c.l.b16 %v3708
        %v5243 = vunpack.c.h.b16 %v3708
        %v5244 = vunpack.c.l.b16 %v3709
        %v5245 = vunpack.c.h.b16 %v3709
        %v5246 = vunpack.c.l.b16 %v3710
        %v5247 = vunpack.c.h.b16 %v3710
        %v5248 = vpack.c.b16 %v4232, %v4224
        %v5249 = vpack.c.b16 %v4233, %v4225
        %v5250 = vpack.c.b16 %v4234, %v4226
        %v5251 = vpack.c.b16 %v4235, %v4227
        %v5252 = vpack.c.b16 %v4236, %v4228
        %v5253 = vpack.c.b16 %v4237, %v4229
        %v5254 = vpack.c.b16 %v4238, %v4230
        %v5255 = vpack.c.b16 %v4239, %v4231
        %v5256 = vpack.c.b16 %v4248, %v4240
        %v5257 = vpack.c.b16 %v4249, %v4241
        %v5258 = vpack.c.b16 %v4250, %v4242
        %v5259 = vpack.c.b16 %v4251, %v4243
        %v5260 = vpack.c.b16 %v4252, %v4244
        %v5261 = vpack.c.b16 %v4253, %v4245
        %v5262 = vpack.c.b16 %v4254, %v4246
        %v5263 = vpack.c.b16 %v4255, %v4247
        %v5264 = vpack.c.b16 %v4264, %v4256
        %v5265 = vpack.c.b16 %v4265, %v4257
        %v5266 = vpack.c.b16 %v4266, %v4258
        %v5267 = vpack.c.b16 %v4267, %v4259
        %v5268 = vpack.c.b16 %v4268, %v4260
        %v5269 = vpack.c.b16 %v4269, %v4261
        %v5270 = vpack.c.b16 %v4270, %v4262
        %v5271 = vpack.c.b16 %v4271, %v4263
        %v5272 = vpack.c.b16 %v4280, %v4272
        %v5273 = vpack.c.b16 %v4281, %v4273
        %v5274 = vpack.c.b16 %v4282, %v4274
        %v5275 = vpack.c.b16 %v4283, %v4275
        %v5276 = vpack.c.b16 %v4284, %v4276
        %v5277 = vpack.c.b16 %v4285, %v4277
        %v5278 = vpack.c.b16 %v4286, %v4278
        %v5279 = vpack.c.b16 %v4287, %v4279
        %v5280 = vpack.c.b16 %v4296, %v4288
        %v5281 = vpack.c.b16 %v4297, %v4289
        %v5282 = vpack.c.b16 %v4298, %v4290
        %v5283 = vpack.c.b16 %v4299, %v4291
        %v5284 = vpack.c.b16 %v4300, %v4292
        %v5285 = vpack.c.b16 %v4301, %v4293
        %v5286 = vpack.c.b16 %v4302, %v4294
        %v5287 = vpack.c.b16 %v4303, %v4295
        %v5288 = vpack.c.b16 %v4312, %v4304
        %v5289 = vpack.c.b16 %v4313, %v4305
        %v5290 = vpack.c.b16 %v4314, %v4306
        %v5291 = vpack.c.b16 %v4315, %v4307
        %v5292 = vpack.c.b16 %v4316, %v4308
        %v5293 = vpack.c.b16 %v4317, %v4309
        %v5294 = vpack.c.b16 %v4318, %v4310
        %v5295 = vpack.c.b16 %v4319, %v4311
        %v5296 = vpack.c.b16 %v4328, %v4320
        %v5297 = vpack.c.b16 %v4329, %v4321
        %v5298 = vpack.c.b16 %v4330, %v4322
        %v5299 = vpack.c.b16 %v4331, %v4323
        %v5300 = vpack.c.b16 %v4332, %v4324
        %v5301 = vpack.c.b16 %v4333, %v4325
        %v5302 = vpack.c.b16 %v4334, %v4326
        %v5303 = vpack.c.b16 %v4335, %v4327
        %v5304 = vpack.c.b16 %v4344, %v4336
        %v5305 = vpack.c.b16 %v4345, %v4337
        %v5306 = vpack.c.b16 %v4346, %v4338
        %v5307 = vpack.c.b16 %v4347, %v4339
        %v5308 = vpack.c.b16 %v4348, %v4340
        %v5309 = vpack.c.b16 %v4349, %v4341
        %v5310 = vpack.c.b16 %v4350, %v4342
        %v5311 = vpack.c.b16 %v4351, %v4343
        %v5312 = vpack.c.b16 %v4360, %v4352
        %v5313 = vpack.c.b16 %v4361, %v4353
        %v5314 = vpack.c.b16 %v4362, %v4354
        %v5315 = vpack.c.b16 %v4363, %v4355
        %v5316 = vpack.c.b16 %v4364, %v4356
        %v5317 = vpack.c.b16 %v4365, %v4357
        %v5318 = vpack.c.b16 %v4366, %v4358
        %v5319 = vpack.c.b16 %v4367, %v4359
        %v5320 = vpack.c.b16 %v4376, %v4368
        %v5321 = vpack.c.b16 %v4377, %v4369
        %v5322 = vpack.c.b16 %v4378, %v4370
        %v5323 = vpack.c.b16 %v4379, %v4371
        %v5324 = vpack.c.b16 %v4380, %v4372
        %v5325 = vpack.c.b16 %v4381, %v4373
        %v5326 = vpack.c.b16 %v4382, %v4374
        %v5327 = vpack.c.b16 %v4383, %v4375
        %v5328 = vpack.c.b16 %v4392, %v4384
        %v5329 = vpack.c.b16 %v4393, %v4385
        %v5330 = vpack.c.b16 %v4394, %v4386
        %v5331 = vpack.c.b16 %v4395, %v4387
        %v5332 = vpack.c.b16 %v4396, %v4388
        %v5333 = vpack.c.b16 %v4397, %v4389
        %v5334 = vpack.c.b16 %v4398, %v4390
        %v5335 = vpack.c.b16 %v4399, %v4391
        %v5336 = vpack.c.b16 %v4408, %v4400
        %v5337 = vpack.c.b16 %v4409, %v4401
        %v5338 = vpack.c.b16 %v4410, %v4402
        %v5339 = vpack.c.b16 %v4411, %v4403
        %v5340 = vpack.c.b16 %v4412, %v4404
        %v5341 = vpack.c.b16 %v4413, %v4405
        %v5342 = vpack.c.b16 %v4414, %v4406
        %v5343 = vpack.c.b16 %v4415, %v4407
        %v5344 = vpack.c.b16 %v4424, %v4416
        %v5345 = vpack.c.b16 %v4425, %v4417
        %v5346 = vpack.c.b16 %v4426, %v4418
        %v5347 = vpack.c.b16 %v4427, %v4419
        %v5348 = vpack.c.b16 %v4428, %v4420
        %v5349 = vpack.c.b16 %v4429, %v4421
        %v5350 = vpack.c.b16 %v4430, %v4422
        %v5351 = vpack.c.b16 %v4431, %v4423
        %v5352 = vpack.c.b16 %v4440, %v4432
        %v5353 = vpack.c.b16 %v4441, %v4433
        %v5354 = vpack.c.b16 %v4442, %v4434
        %v5355 = vpack.c.b16 %v4443, %v4435
        %v5356 = vpack.c.b16 %v4444, %v4436
        %v5357 = vpack.c.b16 %v4445, %v4437
        %v5358 = vpack.c.b16 %v4446, %v4438
        %v5359 = vpack.c.b16 %v4447, %v4439
        %v5360 = vpack.c.b16 %v4456, %v4448
        %v5361 = vpack.c.b16 %v4457, %v4449
        %v5362 = vpack.c.b16 %v4458, %v4450
        %v5363 = vpack.c.b16 %v4459, %v4451
        %v5364 = vpack.c.b16 %v4460, %v4452
        %v5365 = vpack.c.b16 %v4461, %v4453
        %v5366 = vpack.c.b16 %v4462, %v4454
        %v5367 = vpack.c.b16 %v4463, %v4455
        %v5368 = vpack.c.b16 %v4472, %v4464
        %v5369 = vpack.c.b16 %v4473, %v4465
        %v5370 = vpack.c.b16 %v4474, %v4466
        %v5371 = vpack.c.b16 %v4475, %v4467
        %v5372 = vpack.c.b16 %v4476, %v4468
        %v5373 = vpack.c.b16 %v4477, %v4469
        %v5374 = vpack.c.b16 %v4478, %v4470
        %v5375 = vpack.c.b16 %v4479, %v4471
        %v5376 = vpack.c.b16 %v4488, %v4480
        %v5377 = vpack.c.b16 %v4489, %v4481
        %v5378 = vpack.c.b16 %v4490, %v4482
        %v5379 = vpack.c.b16 %v4491, %v4483
        %v5380 = vpack.c.b16 %v4492, %v4484
        %v5381 = vpack.c.b16 %v4493, %v4485
        %v5382 = vpack.c.b16 %v4494, %v4486
        %v5383 = vpack.c.b16 %v4495, %v4487
        %v5384 = vpack.c.b16 %v4504, %v4496
        %v5385 = vpack.c.b16 %v4505, %v4497
        %v5386 = vpack.c.b16 %v4506, %v4498
        %v5387 = vpack.c.b16 %v4507, %v4499
        %v5388 = vpack.c.b16 %v4508, %v4500
        %v5389 = vpack.c.b16 %v4509, %v4501
        %v5390 = vpack.c.b16 %v4510, %v4502
        %v5391 = vpack.c.b16 %v4511, %v4503
        %v5392 = vpack.c.b16 %v4520, %v4512
        %v5393 = vpack.c.b16 %v4521, %v4513
        %v5394 = vpack.c.b16 %v4522, %v4514
        %v5395 = vpack.c.b16 %v4523, %v4515
        %v5396 = vpack.c.b16 %v4524, %v4516
        %v5397 = vpack.c.b16 %v4525, %v4517
        %v5398 = vpack.c.b16 %v4526, %v4518
        %v5399 = vpack.c.b16 %v4527, %v4519
        %v5400 = vpack.c.b16 %v4536, %v4528
        %v5401 = vpack.c.b16 %v4537, %v4529
        %v5402 = vpack.c.b16 %v4538, %v4530
        %v5403 = vpack.c.b16 %v4539, %v4531
        %v5404 = vpack.c.b16 %v4540, %v4532
        %v5405 = vpack.c.b16 %v4541, %v4533
        %v5406 = vpack.c.b16 %v4542, %v4534
        %v5407 = vpack.c.b16 %v4543, %v4535
        %v5408 = vpack.c.b16 %v4552, %v4544
        %v5409 = vpack.c.b16 %v4553, %v4545
        %v5410 = vpack.c.b16 %v4554, %v4546
        %v5411 = vpack.c.b16 %v4555, %v4547
        %v5412 = vpack.c.b16 %v4556, %v4548
        %v5413 = vpack.c.b16 %v4557, %v4549
        %v5414 = vpack.c.b16 %v4558, %v4550
        %v5415 = vpack.c.b16 %v4559, %v4551
        %v5416 = vpack.c.b16 %v4568, %v4560
        %v5417 = vpack.c.b16 %v4569, %v4561
        %v5418 = vpack.c.b16 %v4570, %v4562
        %v5419 = vpack.c.b16 %v4571, %v4563
        %v5420 = vpack.c.b16 %v4572, %v4564
        %v5421 = vpack.c.b16 %v4573, %v4565
        %v5422 = vpack.c.b16 %v4574, %v4566
        %v5423 = vpack.c.b16 %v4575, %v4567
        %v5424 = vpack.c.b16 %v4584, %v4576
        %v5425 = vpack.c.b16 %v4585, %v4577
        %v5426 = vpack.c.b16 %v4586, %v4578
        %v5427 = vpack.c.b16 %v4587, %v4579
        %v5428 = vpack.c.b16 %v4588, %v4580
        %v5429 = vpack.c.b16 %v4589, %v4581
        %v5430 = vpack.c.b16 %v4590, %v4582
        %v5431 = vpack.c.b16 %v4591, %v4583
        %v5432 = vpack.c.b16 %v4600, %v4592
        %v5433 = vpack.c.b16 %v4601, %v4593
        %v5434 = vpack.c.b16 %v4602, %v4594
        %v5435 = vpack.c.b16 %v4603, %v4595
        %v5436 = vpack.c.b16 %v4604, %v4596
        %v5437 = vpack.c.b16 %v4605, %v4597
        %v5438 = vpack.c.b16 %v4606, %v4598
        %v5439 = vpack.c.b16 %v4607, %v4599
        %v5440 = vpack.c.b16 %v4616, %v4608
        %v5441 = vpack.c.b16 %v4617, %v4609
        %v5442 = vpack.c.b16 %v4618, %v4610
        %v5443 = vpack.c.b16 %v4619, %v4611
        %v5444 = vpack.c.b16 %v4620, %v4612
        %v5445 = vpack.c.b16 %v4621, %v4613
        %v5446 = vpack.c.b16 %v4622, %v4614
        %v5447 = vpack.c.b16 %v4623, %v4615
        %v5448 = vpack.c.b16 %v4632, %v4624
        %v5449 = vpack.c.b16 %v4633, %v4625
        %v5450 = vpack.c.b16 %v4634, %v4626
        %v5451 = vpack.c.b16 %v4635, %v4627
        %v5452 = vpack.c.b16 %v4636, %v4628
        %v5453 = vpack.c.b16 %v4637, %v4629
        %v5454 = vpack.c.b16 %v4638, %v4630
        %v5455 = vpack.c.b16 %v4639, %v4631
        %v5456 = vpack.c.b16 %v4648, %v4640
        %v5457 = vpack.c.b16 %v4649, %v4641
        %v5458 = vpack.c.b16 %v4650, %v4642
        %v5459 = vpack.c.b16 %v4651, %v4643
        %v5460 = vpack.c.b16 %v4652, %v4644
        %v5461 = vpack.c.b16 %v4653, %v4645
        %v5462 = vpack.c.b16 %v4654, %v4646
        %v5463 = vpack.c.b16 %v4655, %v4647
        %v5464 = vpack.c.b16 %v4664, %v4656
        %v5465 = vpack.c.b16 %v4665, %v4657
        %v5466 = vpack.c.b16 %v4666, %v4658
        %v5467 = vpack.c.b16 %v4667, %v4659
        %v5468 = vpack.c.b16 %v4668, %v4660
        %v5469 = vpack.c.b16 %v4669, %v4661
        %v5470 = vpack.c.b16 %v4670, %v4662
        %v5471 = vpack.c.b16 %v4671, %v4663
        %v5472 = vpack.c.b16 %v4680, %v4672
        %v5473 = vpack.c.b16 %v4681, %v4673
        %v5474 = vpack.c.b16 %v4682, %v4674
        %v5475 = vpack.c.b16 %v4683, %v4675
        %v5476 = vpack.c.b16 %v4684, %v4676
        %v5477 = vpack.c.b16 %v4685, %v4677
        %v5478 = vpack.c.b16 %v4686, %v4678
        %v5479 = vpack.c.b16 %v4687, %v4679
        %v5480 = vpack.c.b16 %v4696, %v4688
        %v5481 = vpack.c.b16 %v4697, %v4689
        %v5482 = vpack.c.b16 %v4698, %v4690
        %v5483 = vpack.c.b16 %v4699, %v4691
        %v5484 = vpack.c.b16 %v4700, %v4692
        %v5485 = vpack.c.b16 %v4701, %v4693
        %v5486 = vpack.c.b16 %v4702, %v4694
        %v5487 = vpack.c.b16 %v4703, %v4695
        %v5488 = vpack.c.b16 %v4712, %v4704
        %v5489 = vpack.c.b16 %v4713, %v4705
        %v5490 = vpack.c.b16 %v4714, %v4706
        %v5491 = vpack.c.b16 %v4715, %v4707
        %v5492 = vpack.c.b16 %v4716, %v4708
        %v5493 = vpack.c.b16 %v4717, %v4709
        %v5494 = vpack.c.b16 %v4718, %v4710
        %v5495 = vpack.c.b16 %v4719, %v4711
        %v5496 = vpack.c.b16 %v4728, %v4720
        %v5497 = vpack.c.b16 %v4729, %v4721
        %v5498 = vpack.c.b16 %v4730, %v4722
        %v5499 = vpack.c.b16 %v4731, %v4723
        %v5500 = vpack.c.b16 %v4732, %v4724
        %v5501 = vpack.c.b16 %v4733, %v4725
        %v5502 = vpack.c.b16 %v4734, %v4726
        %v5503 = vpack.c.b16 %v4735, %v4727
        %v5504 = vpack.c.b16 %v4744, %v4736
        %v5505 = vpack.c.b16 %v4745, %v4737
        %v5506 = vpack.c.b16 %v4746, %v4738
        %v5507 = vpack.c.b16 %v4747, %v4739
        %v5508 = vpack.c.b16 %v4748, %v4740
        %v5509 = vpack.c.b16 %v4749, %v4741
        %v5510 = vpack.c.b16 %v4750, %v4742
        %v5511 = vpack.c.b16 %v4751, %v4743
        %v5512 = vpack.c.b16 %v4760, %v4752
        %v5513 = vpack.c.b16 %v4761, %v4753
        %v5514 = vpack.c.b16 %v4762, %v4754
        %v5515 = vpack.c.b16 %v4763, %v4755
        %v5516 = vpack.c.b16 %v4764, %v4756
        %v5517 = vpack.c.b16 %v4765, %v4757
        %v5518 = vpack.c.b16 %v4766, %v4758
        %v5519 = vpack.c.b16 %v4767, %v4759
        %v5520 = vpack.c.b16 %v4776, %v4768
        %v5521 = vpack.c.b16 %v4777, %v4769
        %v5522 = vpack.c.b16 %v4778, %v4770
        %v5523 = vpack.c.b16 %v4779, %v4771
        %v5524 = vpack.c.b16 %v4780, %v4772
        %v5525 = vpack.c.b16 %v4781, %v4773
        %v5526 = vpack.c.b16 %v4782, %v4774
        %v5527 = vpack.c.b16 %v4783, %v4775
        %v5528 = vpack.c.b16 %v4792, %v4784
        %v5529 = vpack.c.b16 %v4793, %v4785
        %v5530 = vpack.c.b16 %v4794, %v4786
        %v5531 = vpack.c.b16 %v4795, %v4787
        %v5532 = vpack.c.b16 %v4796, %v4788
        %v5533 = vpack.c.b16 %v4797, %v4789
        %v5534 = vpack.c.b16 %v4798, %v4790
        %v5535 = vpack.c.b16 %v4799, %v4791
        %v5536 = vpack.c.b16 %v4808, %v4800
        %v5537 = vpack.c.b16 %v4809, %v4801
        %v5538 = vpack.c.b16 %v4810, %v4802
        %v5539 = vpack.c.b16 %v4811, %v4803
        %v5540 = vpack.c.b16 %v4812, %v4804
        %v5541 = vpack.c.b16 %v4813, %v4805
        %v5542 = vpack.c.b16 %v4814, %v4806
        %v5543 = vpack.c.b16 %v4815, %v4807
        %v5544 = vpack.c.b16 %v4824, %v4816
        %v5545 = vpack.c.b16 %v4825, %v4817
        %v5546 = vpack.c.b16 %v4826, %v4818
        %v5547 = vpack.c.b16 %v4827, %v4819
        %v5548 = vpack.c.b16 %v4828, %v4820
        %v5549 = vpack.c.b16 %v4829, %v4821
        %v5550 = vpack.c.b16 %v4830, %v4822
        %v5551 = vpack.c.b16 %v4831, %v4823
        %v5552 = vpack.c.b16 %v4840, %v4832
        %v5553 = vpack.c.b16 %v4841, %v4833
        %v5554 = vpack.c.b16 %v4842, %v4834
        %v5555 = vpack.c.b16 %v4843, %v4835
        %v5556 = vpack.c.b16 %v4844, %v4836
        %v5557 = vpack.c.b16 %v4845, %v4837
        %v5558 = vpack.c.b16 %v4846, %v4838
        %v5559 = vpack.c.b16 %v4847, %v4839
        %v5560 = vpack.c.b16 %v4856, %v4848
        %v5561 = vpack.c.b16 %v4857, %v4849
        %v5562 = vpack.c.b16 %v4858, %v4850
        %v5563 = vpack.c.b16 %v4859, %v4851
        %v5564 = vpack.c.b16 %v4860, %v4852
        %v5565 = vpack.c.b16 %v4861, %v4853
        %v5566 = vpack.c.b16 %v4862, %v4854
        %v5567 = vpack.c.b16 %v4863, %v4855
        %v5568 = vpack.c.b16 %v4872, %v4864
        %v5569 = vpack.c.b16 %v4873, %v4865
        %v5570 = vpack.c.b16 %v4874, %v4866
        %v5571 = vpack.c.b16 %v4875, %v4867
        %v5572 = vpack.c.b16 %v4876, %v4868
        %v5573 = vpack.c.b16 %v4877, %v4869
        %v5574 = vpack.c.b16 %v4878, %v4870
        %v5575 = vpack.c.b16 %v4879, %v4871
        %v5576 = vpack.c.b16 %v4888, %v4880
        %v5577 = vpack.c.b16 %v4889, %v4881
        %v5578 = vpack.c.b16 %v4890, %v4882
        %v5579 = vpack.c.b16 %v4891, %v4883
        %v5580 = vpack.c.b16 %v4892, %v4884
        %v5581 = vpack.c.b16 %v4893, %v4885
        %v5582 = vpack.c.b16 %v4894, %v4886
        %v5583 = vpack.c.b16 %v4895, %v4887
        %v5584 = vpack.c.b16 %v4904, %v4896
        %v5585 = vpack.c.b16 %v4905, %v4897
        %v5586 = vpack.c.b16 %v4906, %v4898
        %v5587 = vpack.c.b16 %v4907, %v4899
        %v5588 = vpack.c.b16 %v4908, %v4900
        %v5589 = vpack.c.b16 %v4909, %v4901
        %v5590 = vpack.c.b16 %v4910, %v4902
        %v5591 = vpack.c.b16 %v4911, %v4903
        %v5592 = vpack.c.b16 %v4920, %v4912
        %v5593 = vpack.c.b16 %v4921, %v4913
        %v5594 = vpack.c.b16 %v4922, %v4914
        %v5595 = vpack.c.b16 %v4923, %v4915
        %v5596 = vpack.c.b16 %v4924, %v4916
        %v5597 = vpack.c.b16 %v4925, %v4917
        %v5598 = vpack.c.b16 %v4926, %v4918
        %v5599 = vpack.c.b16 %v4927, %v4919
        %v5600 = vpack.c.b16 %v4936, %v4928
        %v5601 = vpack.c.b16 %v4937, %v4929
        %v5602 = vpack.c.b16 %v4938, %v4930
        %v5603 = vpack.c.b16 %v4939, %v4931
        %v5604 = vpack.c.b16 %v4940, %v4932
        %v5605 = vpack.c.b16 %v4941, %v4933
        %v5606 = vpack.c.b16 %v4942, %v4934
        %v5607 = vpack.c.b16 %v4943, %v4935
        %v5608 = vpack.c.b16 %v4952, %v4944
        %v5609 = vpack.c.b16 %v4953, %v4945
        %v5610 = vpack.c.b16 %v4954, %v4946
        %v5611 = vpack.c.b16 %v4955, %v4947
        %v5612 = vpack.c.b16 %v4956, %v4948
        %v5613 = vpack.c.b16 %v4957, %v4949
        %v5614 = vpack.c.b16 %v4958, %v4950
        %v5615 = vpack.c.b16 %v4959, %v4951
        %v5616 = vpack.c.b16 %v4968, %v4960
        %v5617 = vpack.c.b16 %v4969, %v4961
        %v5618 = vpack.c.b16 %v4970, %v4962
        %v5619 = vpack.c.b16 %v4971, %v4963
        %v5620 = vpack.c.b16 %v4972, %v4964
        %v5621 = vpack.c.b16 %v4973, %v4965
        %v5622 = vpack.c.b16 %v4974, %v4966
        %v5623 = vpack.c.b16 %v4975, %v4967
        %v5624 = vpack.c.b16 %v4984, %v4976
        %v5625 = vpack.c.b16 %v4985, %v4977
        %v5626 = vpack.c.b16 %v4986, %v4978
        %v5627 = vpack.c.b16 %v4987, %v4979
        %v5628 = vpack.c.b16 %v4988, %v4980
        %v5629 = vpack.c.b16 %v4989, %v4981
        %v5630 = vpack.c.b16 %v4990, %v4982
        %v5631 = vpack.c.b16 %v4991, %v4983
        %v5632 = vpack.c.b16 %v5000, %v4992
        %v5633 = vpack.c.b16 %v5001, %v4993
        %v5634 = vpack.c.b16 %v5002, %v4994
        %v5635 = vpack.c.b16 %v5003, %v4995
        %v5636 = vpack.c.b16 %v5004, %v4996
        %v5637 = vpack.c.b16 %v5005, %v4997
        %v5638 = vpack.c.b16 %v5006, %v4998
        %v5639 = vpack.c.b16 %v5007, %v4999
        %v5640 = vpack.c.b16 %v5016, %v5008
        %v5641 = vpack.c.b16 %v5017, %v5009
        %v5642 = vpack.c.b16 %v5018, %v5010
        %v5643 = vpack.c.b16 %v5019, %v5011
        %v5644 = vpack.c.b16 %v5020, %v5012
        %v5645 = vpack.c.b16 %v5021, %v5013
        %v5646 = vpack.c.b16 %v5022, %v5014
        %v5647 = vpack.c.b16 %v5023, %v5015
        %v5648 = vpack.c.b16 %v5032, %v5024
        %v5649 = vpack.c.b16 %v5033, %v5025
        %v5650 = vpack.c.b16 %v5034, %v5026
        %v5651 = vpack.c.b16 %v5035, %v5027
        %v5652 = vpack.c.b16 %v5036, %v5028
        %v5653 = vpack.c.b16 %v5037, %v5029
        %v5654 = vpack.c.b16 %v5038, %v5030
        %v5655 = vpack.c.b16 %v5039, %v5031
        %v5656 = vpack.c.b16 %v5048, %v5040
        %v5657 = vpack.c.b16 %v5049, %v5041
        %v5658 = vpack.c.b16 %v5050, %v5042
        %v5659 = vpack.c.b16 %v5051, %v5043
        %v5660 = vpack.c.b16 %v5052, %v5044
        %v5661 = vpack.c.b16 %v5053, %v5045
        %v5662 = vpack.c.b16 %v5054, %v5046
        %v5663 = vpack.c.b16 %v5055, %v5047
        %v5664 = vpack.c.b16 %v5064, %v5056
        %v5665 = vpack.c.b16 %v5065, %v5057
        %v5666 = vpack.c.b16 %v5066, %v5058
        %v5667 = vpack.c.b16 %v5067, %v5059
        %v5668 = vpack.c.b16 %v5068, %v5060
        %v5669 = vpack.c.b16 %v5069, %v5061
        %v5670 = vpack.c.b16 %v5070, %v5062
        %v5671 = vpack.c.b16 %v5071, %v5063
        %v5672 = vpack.c.b16 %v5080, %v5072
        %v5673 = vpack.c.b16 %v5081, %v5073
        %v5674 = vpack.c.b16 %v5082, %v5074
        %v5675 = vpack.c.b16 %v5083, %v5075
        %v5676 = vpack.c.b16 %v5084, %v5076
        %v5677 = vpack.c.b16 %v5085, %v5077
        %v5678 = vpack.c.b16 %v5086, %v5078
        %v5679 = vpack.c.b16 %v5087, %v5079
        %v5680 = vpack.c.b16 %v5096, %v5088
        %v5681 = vpack.c.b16 %v5097, %v5089
        %v5682 = vpack.c.b16 %v5098, %v5090
        %v5683 = vpack.c.b16 %v5099, %v5091
        %v5684 = vpack.c.b16 %v5100, %v5092
        %v5685 = vpack.c.b16 %v5101, %v5093
        %v5686 = vpack.c.b16 %v5102, %v5094
        %v5687 = vpack.c.b16 %v5103, %v5095
        %v5688 = vpack.c.b16 %v5112, %v5104
        %v5689 = vpack.c.b16 %v5113, %v5105
        %v5690 = vpack.c.b16 %v5114, %v5106
        %v5691 = vpack.c.b16 %v5115, %v5107
        %v5692 = vpack.c.b16 %v5116, %v5108
        %v5693 = vpack.c.b16 %v5117, %v5109
        %v5694 = vpack.c.b16 %v5118, %v5110
        %v5695 = vpack.c.b16 %v5119, %v5111
        %v5696 = vpack.c.b16 %v5128, %v5120
        %v5697 = vpack.c.b16 %v5129, %v5121
        %v5698 = vpack.c.b16 %v5130, %v5122
        %v5699 = vpack.c.b16 %v5131, %v5123
        %v5700 = vpack.c.b16 %v5132, %v5124
        %v5701 = vpack.c.b16 %v5133, %v5125
        %v5702 = vpack.c.b16 %v5134, %v5126
        %v5703 = vpack.c.b16 %v5135, %v5127
        %v5704 = vpack.c.b16 %v5144, %v5136
        %v5705 = vpack.c.b16 %v5145, %v5137
        %v5706 = vpack.c.b16 %v5146, %v5138
        %v5707 = vpack.c.b16 %v5147, %v5139
        %v5708 = vpack.c.b16 %v5148, %v5140
        %v5709 = vpack.c.b16 %v5149, %v5141
        %v5710 = vpack.c.b16 %v5150, %v5142
        %v5711 = vpack.c.b16 %v5151, %v5143
        %v5712 = vpack.c.b16 %v5160, %v5152
        %v5713 = vpack.c.b16 %v5161, %v5153
        %v5714 = vpack.c.b16 %v5162, %v5154
        %v5715 = vpack.c.b16 %v5163, %v5155
        %v5716 = vpack.c.b16 %v5164, %v5156
        %v5717 = vpack.c.b16 %v5165, %v5157
        %v5718 = vpack.c.b16 %v5166, %v5158
        %v5719 = vpack.c.b16 %v5167, %v5159
        %v5720 = vpack.c.b16 %v5176, %v5168
        %v5721 = vpack.c.b16 %v5177, %v5169
        %v5722 = vpack.c.b16 %v5178, %v5170
        %v5723 = vpack.c.b16 %v5179, %v5171
        %v5724 = vpack.c.b16 %v5180, %v5172
        %v5725 = vpack.c.b16 %v5181, %v5173
        %v5726 = vpack.c.b16 %v5182, %v5174
        %v5727 = vpack.c.b16 %v5183, %v5175
        %v5728 = vpack.c.b16 %v5192, %v5184
        %v5729 = vpack.c.b16 %v5193, %v5185
        %v5730 = vpack.c.b16 %v5194, %v5186
        %v5731 = vpack.c.b16 %v5195, %v5187
        %v5732 = vpack.c.b16 %v5196, %v5188
        %v5733 = vpack.c.b16 %v5197, %v5189
        %v5734 = vpack.c.b16 %v5198, %v5190
        %v5735 = vpack.c.b16 %v5199, %v5191
        %v5736 = vpack.c.b16 %v5208, %v5200
        %v5737 = vpack.c.b16 %v5209, %v5201
        %v5738 = vpack.c.b16 %v5210, %v5202
        %v5739 = vpack.c.b16 %v5211, %v5203
        %v5740 = vpack.c.b16 %v5212, %v5204
        %v5741 = vpack.c.b16 %v5213, %v5205
        %v5742 = vpack.c.b16 %v5214, %v5206
        %v5743 = vpack.c.b16 %v5215, %v5207
        %v5744 = vpack.c.b16 %v5224, %v5216
        %v5745 = vpack.c.b16 %v5225, %v5217
        %v5746 = vpack.c.b16 %v5226, %v5218
        %v5747 = vpack.c.b16 %v5227, %v5219
        %v5748 = vpack.c.b16 %v5228, %v5220
        %v5749 = vpack.c.b16 %v5229, %v5221
        %v5750 = vpack.c.b16 %v5230, %v5222
        %v5751 = vpack.c.b16 %v5231, %v5223
        %v5752 = vpack.c.b16 %v5240, %v5232
        %v5753 = vpack.c.b16 %v5241, %v5233
        %v5754 = vpack.c.b16 %v5242, %v5234
        %v5755 = vpack.c.b16 %v5243, %v5235
        %v5756 = vpack.c.b16 %v5244, %v5236
        %v5757 = vpack.c.b16 %v5245, %v5237
        %v5758 = vpack.c.b16 %v5246, %v5238
        %v5759 = vpack.c.b16 %v5247, %v5239
        %v6273 = vperm.slane %v3711, 0
        %v6274 = vperm.slane %v3711, 1
        %v6275 = vperm.slane %v3711, 2
        %v6276 = vperm.slane %v3711, 3
        %v6277 = vperm.slane %v3711, 4
        %v6278 = vperm.slane %v3711, 5
        %v6279 = vperm.slane %v3711, 6
        %v6280 = vperm.slane %v3711, 7
        %6289 = vmatpush.bf16.msra.mxu0 %v5304
        %6290 = vmatpush.bf16.msra.mxu0 %v5296
        %6291 = vmatpush.bf16.msra.mxu0 %v5288
        %6292 = vmatpush.bf16.msra.mxu0 %v5280
        %6293 = vmatpush.bf16.msra.mxu0 %v5272
        %6294 = vmatpush.bf16.msra.mxu0 %v5264
        %6295 = vmatpush.bf16.msra.mxu0 %v5256
        %6296 = vmatpush.bf16.msra.mxu0 %v5248
        %6297 = vmatmul.bf16.gmra.mxu0 %v3191
        %v6298 = vpop.f32.mrf.mxu0
        %v6299 = vadd.f32 %v6273, %v6298
        %v6300 = vpop.f32.mrf.mxu0
        %6301 = vdwg.mxu0
        %6302 = vmatpush.bf16.msra.mxu0 %v5368
        %6303 = vmatpush.bf16.msra.mxu0 %v5360
        %6304 = vmatpush.bf16.msra.mxu0 %v5352
        %6305 = vmatpush.bf16.msra.mxu0 %v5344
        %6306 = vmatpush.bf16.msra.mxu0 %v5336
        %6307 = vmatpush.bf16.msra.mxu0 %v5328
        %6308 = vmatpush.bf16.msra.mxu0 %v5320
        %6309 = vmatpush.bf16.msra.mxu0 %v5312
        %6310 = vmatmul.bf16.gmra.mxu0 %v3192
        %v6311 = vpop.f32.mrf.mxu0
        %v6312 = vadd.f32 %v6299, %v6311
        %v6313 = vpop.f32.mrf.mxu0
        %6314 = vdwg.mxu0
        %6315 = vmatpush.bf16.msra.mxu0 %v5432
        %6316 = vmatpush.bf16.msra.mxu0 %v5424
        %6317 = vmatpush.bf16.msra.mxu0 %v5416
        %6318 = vmatpush.bf16.msra.mxu0 %v5408
        %6319 = vmatpush.bf16.msra.mxu0 %v5400
        %6320 = vmatpush.bf16.msra.mxu0 %v5392
        %6321 = vmatpush.bf16.msra.mxu0 %v5384
        %6322 = vmatpush.bf16.msra.mxu0 %v5376
        %6323 = vmatmul.bf16.gmra.mxu0 %v3193
        %v6324 = vpop.f32.mrf.mxu0
        %v6325 = vadd.f32 %v6312, %v6324
        %v6326 = vpop.f32.mrf.mxu0
        %6327 = vdwg.mxu0
        %6328 = vmatpush.bf16.msra.mxu0 %v5496
        %6329 = vmatpush.bf16.msra.mxu0 %v5488
        %6330 = vmatpush.bf16.msra.mxu0 %v5480
        %6331 = vmatpush.bf16.msra.mxu0 %v5472
        %6332 = vmatpush.bf16.msra.mxu0 %v5464
        %6333 = vmatpush.bf16.msra.mxu0 %v5456
        %6334 = vmatpush.bf16.msra.mxu0 %v5448
        %6335 = vmatpush.bf16.msra.mxu0 %v5440
        %6336 = vmatmul.bf16.gmra.mxu0 %v3194
        %v6337 = vpop.f32.mrf.mxu0
        %v6338 = vadd.f32 %v6325, %v6337
        %v6339 = vpop.f32.mrf.mxu0
        %6340 = vdwg.mxu0
        %6341 = vmatpush.bf16.msra.mxu0 %v5560
        %6342 = vmatpush.bf16.msra.mxu0 %v5552
        %6343 = vmatpush.bf16.msra.mxu0 %v5544
        %6344 = vmatpush.bf16.msra.mxu0 %v5536
        %6345 = vmatpush.bf16.msra.mxu0 %v5528
        %6346 = vmatpush.bf16.msra.mxu0 %v5520
        %6347 = vmatpush.bf16.msra.mxu0 %v5512
        %6348 = vmatpush.bf16.msra.mxu0 %v5504
        %6349 = vmatmul.bf16.gmra.mxu0 %v3195
        %v6350 = vpop.f32.mrf.mxu0
        %v6351 = vadd.f32 %v6338, %v6350
        %v6352 = vpop.f32.mrf.mxu0
        %6353 = vdwg.mxu0
        %6354 = vmatpush.bf16.msra.mxu0 %v5624
        %6355 = vmatpush.bf16.msra.mxu0 %v5616
        %6356 = vmatpush.bf16.msra.mxu0 %v5608
        %6357 = vmatpush.bf16.msra.mxu0 %v5600
        %6358 = vmatpush.bf16.msra.mxu0 %v5592
        %6359 = vmatpush.bf16.msra.mxu0 %v5584
        %6360 = vmatpush.bf16.msra.mxu0 %v5576
        %6361 = vmatpush.bf16.msra.mxu0 %v5568
        %6362 = vmatmul.bf16.gmra.mxu0 %v3196
        %v6363 = vpop.f32.mrf.mxu0
        %v6364 = vadd.f32 %v6351, %v6363
        %v6365 = vpop.f32.mrf.mxu0
        %6366 = vdwg.mxu0
        %6367 = vmatpush.bf16.msra.mxu0 %v5688
        %6368 = vmatpush.bf16.msra.mxu0 %v5680
        %6369 = vmatpush.bf16.msra.mxu0 %v5672
        %6370 = vmatpush.bf16.msra.mxu0 %v5664
        %6371 = vmatpush.bf16.msra.mxu0 %v5656
        %6372 = vmatpush.bf16.msra.mxu0 %v5648
        %6373 = vmatpush.bf16.msra.mxu0 %v5640
        %6374 = vmatpush.bf16.msra.mxu0 %v5632
        %6375 = vmatmul.bf16.gmra.mxu0 %v3197
        %v6376 = vpop.f32.mrf.mxu0
        %v6377 = vadd.f32 %v6364, %v6376
        %v6378 = vpop.f32.mrf.mxu0
        %6379 = vdwg.mxu0
        %6380 = vmatpush.bf16.msra.mxu0 %v5752
        %6381 = vmatpush.bf16.msra.mxu0 %v5744
        %6382 = vmatpush.bf16.msra.mxu0 %v5736
        %6383 = vmatpush.bf16.msra.mxu0 %v5728
        %6384 = vmatpush.bf16.msra.mxu0 %v5720
        %6385 = vmatpush.bf16.msra.mxu0 %v5712
        %6386 = vmatpush.bf16.msra.mxu0 %v5704
        %6387 = vmatpush.bf16.msra.mxu0 %v5696
        %6388 = vmatmul.bf16.gmra.mxu0 %v3198
        %v6389 = vpop.f32.mrf.mxu0
        %v6390 = vadd.f32 %v6377, %v6389
        %v6391 = vpop.f32.mrf.mxu0
        %6392 = vdwg.mxu0
        %6393 = vmatpush.bf16.msra.mxu0 %v5305
        %6394 = vmatpush.bf16.msra.mxu0 %v5297
        %6395 = vmatpush.bf16.msra.mxu0 %v5289
        %6396 = vmatpush.bf16.msra.mxu0 %v5281
        %6397 = vmatpush.bf16.msra.mxu0 %v5273
        %6398 = vmatpush.bf16.msra.mxu0 %v5265
        %6399 = vmatpush.bf16.msra.mxu0 %v5257
        %6400 = vmatpush.bf16.msra.mxu0 %v5249
        %6401 = vmatmul.bf16.gmra.mxu0 %v3191
        %v6402 = vpop.f32.mrf.mxu0
        %v6403 = vadd.f32 %v6274, %v6402
        %v6404 = vpop.f32.mrf.mxu0
        %6405 = vdwg.mxu0
        %6406 = vmatpush.bf16.msra.mxu0 %v5369
        %6407 = vmatpush.bf16.msra.mxu0 %v5361
        %6408 = vmatpush.bf16.msra.mxu0 %v5353
        %6409 = vmatpush.bf16.msra.mxu0 %v5345
        %6410 = vmatpush.bf16.msra.mxu0 %v5337
        %6411 = vmatpush.bf16.msra.mxu0 %v5329
        %6412 = vmatpush.bf16.msra.mxu0 %v5321
        %6413 = vmatpush.bf16.msra.mxu0 %v5313
        %6414 = vmatmul.bf16.gmra.mxu0 %v3192
        %v6415 = vpop.f32.mrf.mxu0
        %v6416 = vadd.f32 %v6403, %v6415
        %v6417 = vpop.f32.mrf.mxu0
        %6418 = vdwg.mxu0
        %6419 = vmatpush.bf16.msra.mxu0 %v5433
        %6420 = vmatpush.bf16.msra.mxu0 %v5425
        %6421 = vmatpush.bf16.msra.mxu0 %v5417
        %6422 = vmatpush.bf16.msra.mxu0 %v5409
        %6423 = vmatpush.bf16.msra.mxu0 %v5401
        %6424 = vmatpush.bf16.msra.mxu0 %v5393
        %6425 = vmatpush.bf16.msra.mxu0 %v5385
        %6426 = vmatpush.bf16.msra.mxu0 %v5377
        %6427 = vmatmul.bf16.gmra.mxu0 %v3193
        %v6428 = vpop.f32.mrf.mxu0
        %v6429 = vadd.f32 %v6416, %v6428
        %v6430 = vpop.f32.mrf.mxu0
        %6431 = vdwg.mxu0
        %6432 = vmatpush.bf16.msra.mxu0 %v5497
        %6433 = vmatpush.bf16.msra.mxu0 %v5489
        %6434 = vmatpush.bf16.msra.mxu0 %v5481
        %6435 = vmatpush.bf16.msra.mxu0 %v5473
        %6436 = vmatpush.bf16.msra.mxu0 %v5465
        %6437 = vmatpush.bf16.msra.mxu0 %v5457
        %6438 = vmatpush.bf16.msra.mxu0 %v5449
        %6439 = vmatpush.bf16.msra.mxu0 %v5441
        %6440 = vmatmul.bf16.gmra.mxu0 %v3194
        %v6441 = vpop.f32.mrf.mxu0
        %v6442 = vadd.f32 %v6429, %v6441
        %v6443 = vpop.f32.mrf.mxu0
        %6444 = vdwg.mxu0
        %6445 = vmatpush.bf16.msra.mxu0 %v5561
        %6446 = vmatpush.bf16.msra.mxu0 %v5553
        %6447 = vmatpush.bf16.msra.mxu0 %v5545
        %6448 = vmatpush.bf16.msra.mxu0 %v5537
        %6449 = vmatpush.bf16.msra.mxu0 %v5529
        %6450 = vmatpush.bf16.msra.mxu0 %v5521
        %6451 = vmatpush.bf16.msra.mxu0 %v5513
        %6452 = vmatpush.bf16.msra.mxu0 %v5505
        %6453 = vmatmul.bf16.gmra.mxu0 %v3195
        %v6454 = vpop.f32.mrf.mxu0
        %v6455 = vadd.f32 %v6442, %v6454
        %v6456 = vpop.f32.mrf.mxu0
        %6457 = vdwg.mxu0
        %6458 = vmatpush.bf16.msra.mxu0 %v5625
        %6459 = vmatpush.bf16.msra.mxu0 %v5617
        %6460 = vmatpush.bf16.msra.mxu0 %v5609
        %6461 = vmatpush.bf16.msra.mxu0 %v5601
        %6462 = vmatpush.bf16.msra.mxu0 %v5593
        %6463 = vmatpush.bf16.msra.mxu0 %v5585
        %6464 = vmatpush.bf16.msra.mxu0 %v5577
        %6465 = vmatpush.bf16.msra.mxu0 %v5569
        %6466 = vmatmul.bf16.gmra.mxu0 %v3196
        %v6467 = vpop.f32.mrf.mxu0
        %v6468 = vadd.f32 %v6455, %v6467
        %v6469 = vpop.f32.mrf.mxu0
        %6470 = vdwg.mxu0
        %6471 = vmatpush.bf16.msra.mxu0 %v5689
        %6472 = vmatpush.bf16.msra.mxu0 %v5681
        %6473 = vmatpush.bf16.msra.mxu0 %v5673
        %6474 = vmatpush.bf16.msra.mxu0 %v5665
        %6475 = vmatpush.bf16.msra.mxu0 %v5657
        %6476 = vmatpush.bf16.msra.mxu0 %v5649
        %6477 = vmatpush.bf16.msra.mxu0 %v5641
        %6478 = vmatpush.bf16.msra.mxu0 %v5633
        %6479 = vmatmul.bf16.gmra.mxu0 %v3197
        %v6480 = vpop.f32.mrf.mxu0
        %v6481 = vadd.f32 %v6468, %v6480
        %v6482 = vpop.f32.mrf.mxu0
        %6483 = vdwg.mxu0
        %6484 = vmatpush.bf16.msra.mxu0 %v5753
        %6485 = vmatpush.bf16.msra.mxu0 %v5745
        %6486 = vmatpush.bf16.msra.mxu0 %v5737
        %6487 = vmatpush.bf16.msra.mxu0 %v5729
        %6488 = vmatpush.bf16.msra.mxu0 %v5721
        %6489 = vmatpush.bf16.msra.mxu0 %v5713
        %6490 = vmatpush.bf16.msra.mxu0 %v5705
        %6491 = vmatpush.bf16.msra.mxu0 %v5697
        %6492 = vmatmul.bf16.gmra.mxu0 %v3198
        %v6493 = vpop.f32.mrf.mxu0
        %v6494 = vadd.f32 %v6481, %v6493
        %v6495 = vpop.f32.mrf.mxu0
        %6496 = vdwg.mxu0
        %6497 = vmatpush.bf16.msra.mxu0 %v5306
        %6498 = vmatpush.bf16.msra.mxu0 %v5298
        %6499 = vmatpush.bf16.msra.mxu0 %v5290
        %6500 = vmatpush.bf16.msra.mxu0 %v5282
        %6501 = vmatpush.bf16.msra.mxu0 %v5274
        %6502 = vmatpush.bf16.msra.mxu0 %v5266
        %6503 = vmatpush.bf16.msra.mxu0 %v5258
        %6504 = vmatpush.bf16.msra.mxu0 %v5250
        %6505 = vmatmul.bf16.gmra.mxu0 %v3191
        %v6506 = vpop.f32.mrf.mxu0
        %v6507 = vadd.f32 %v6275, %v6506
        %v6508 = vpop.f32.mrf.mxu0
        %6509 = vdwg.mxu0
        %6510 = vmatpush.bf16.msra.mxu0 %v5370
        %6511 = vmatpush.bf16.msra.mxu0 %v5362
        %6512 = vmatpush.bf16.msra.mxu0 %v5354
        %6513 = vmatpush.bf16.msra.mxu0 %v5346
        %6514 = vmatpush.bf16.msra.mxu0 %v5338
        %6515 = vmatpush.bf16.msra.mxu0 %v5330
        %6516 = vmatpush.bf16.msra.mxu0 %v5322
        %6517 = vmatpush.bf16.msra.mxu0 %v5314
        %6518 = vmatmul.bf16.gmra.mxu0 %v3192
        %v6519 = vpop.f32.mrf.mxu0
        %v6520 = vadd.f32 %v6507, %v6519
        %v6521 = vpop.f32.mrf.mxu0
        %6522 = vdwg.mxu0
        %6523 = vmatpush.bf16.msra.mxu0 %v5434
        %6524 = vmatpush.bf16.msra.mxu0 %v5426
        %6525 = vmatpush.bf16.msra.mxu0 %v5418
        %6526 = vmatpush.bf16.msra.mxu0 %v5410
        %6527 = vmatpush.bf16.msra.mxu0 %v5402
        %6528 = vmatpush.bf16.msra.mxu0 %v5394
        %6529 = vmatpush.bf16.msra.mxu0 %v5386
        %6530 = vmatpush.bf16.msra.mxu0 %v5378
        %6531 = vmatmul.bf16.gmra.mxu0 %v3193
        %v6532 = vpop.f32.mrf.mxu0
        %v6533 = vadd.f32 %v6520, %v6532
        %v6534 = vpop.f32.mrf.mxu0
        %6535 = vdwg.mxu0
        %6536 = vmatpush.bf16.msra.mxu0 %v5498
        %6537 = vmatpush.bf16.msra.mxu0 %v5490
        %6538 = vmatpush.bf16.msra.mxu0 %v5482
        %6539 = vmatpush.bf16.msra.mxu0 %v5474
        %6540 = vmatpush.bf16.msra.mxu0 %v5466
        %6541 = vmatpush.bf16.msra.mxu0 %v5458
        %6542 = vmatpush.bf16.msra.mxu0 %v5450
        %6543 = vmatpush.bf16.msra.mxu0 %v5442
        %6544 = vmatmul.bf16.gmra.mxu0 %v3194
        %v6545 = vpop.f32.mrf.mxu0
        %v6546 = vadd.f32 %v6533, %v6545
        %v6547 = vpop.f32.mrf.mxu0
        %6548 = vdwg.mxu0
        %6549 = vmatpush.bf16.msra.mxu0 %v5562
        %6550 = vmatpush.bf16.msra.mxu0 %v5554
        %6551 = vmatpush.bf16.msra.mxu0 %v5546
        %6552 = vmatpush.bf16.msra.mxu0 %v5538
        %6553 = vmatpush.bf16.msra.mxu0 %v5530
        %6554 = vmatpush.bf16.msra.mxu0 %v5522
        %6555 = vmatpush.bf16.msra.mxu0 %v5514
        %6556 = vmatpush.bf16.msra.mxu0 %v5506
        %6557 = vmatmul.bf16.gmra.mxu0 %v3195
        %v6558 = vpop.f32.mrf.mxu0
        %v6559 = vadd.f32 %v6546, %v6558
        %v6560 = vpop.f32.mrf.mxu0
        %6561 = vdwg.mxu0
        %6562 = vmatpush.bf16.msra.mxu0 %v5626
        %6563 = vmatpush.bf16.msra.mxu0 %v5618
        %6564 = vmatpush.bf16.msra.mxu0 %v5610
        %6565 = vmatpush.bf16.msra.mxu0 %v5602
        %6566 = vmatpush.bf16.msra.mxu0 %v5594
        %6567 = vmatpush.bf16.msra.mxu0 %v5586
        %6568 = vmatpush.bf16.msra.mxu0 %v5578
        %6569 = vmatpush.bf16.msra.mxu0 %v5570
        %6570 = vmatmul.bf16.gmra.mxu0 %v3196
        %v6571 = vpop.f32.mrf.mxu0
        %v6572 = vadd.f32 %v6559, %v6571
        %v6573 = vpop.f32.mrf.mxu0
        %6574 = vdwg.mxu0
        %6575 = vmatpush.bf16.msra.mxu0 %v5690
        %6576 = vmatpush.bf16.msra.mxu0 %v5682
        %6577 = vmatpush.bf16.msra.mxu0 %v5674
        %6578 = vmatpush.bf16.msra.mxu0 %v5666
        %6579 = vmatpush.bf16.msra.mxu0 %v5658
        %6580 = vmatpush.bf16.msra.mxu0 %v5650
        %6581 = vmatpush.bf16.msra.mxu0 %v5642
        %6582 = vmatpush.bf16.msra.mxu0 %v5634
        %6583 = vmatmul.bf16.gmra.mxu0 %v3197
        %v6584 = vpop.f32.mrf.mxu0
        %v6585 = vadd.f32 %v6572, %v6584
        %v6586 = vpop.f32.mrf.mxu0
        %6587 = vdwg.mxu0
        %6588 = vmatpush.bf16.msra.mxu0 %v5754
        %6589 = vmatpush.bf16.msra.mxu0 %v5746
        %6590 = vmatpush.bf16.msra.mxu0 %v5738
        %6591 = vmatpush.bf16.msra.mxu0 %v5730
        %6592 = vmatpush.bf16.msra.mxu0 %v5722
        %6593 = vmatpush.bf16.msra.mxu0 %v5714
        %6594 = vmatpush.bf16.msra.mxu0 %v5706
        %6595 = vmatpush.bf16.msra.mxu0 %v5698
        %6596 = vmatmul.bf16.gmra.mxu0 %v3198
        %v6597 = vpop.f32.mrf.mxu0
        %v6598 = vadd.f32 %v6585, %v6597
        %v6599 = vpop.f32.mrf.mxu0
        %6600 = vdwg.mxu0
        %6601 = vmatpush.bf16.msra.mxu0 %v5307
        %6602 = vmatpush.bf16.msra.mxu0 %v5299
        %6603 = vmatpush.bf16.msra.mxu0 %v5291
        %6604 = vmatpush.bf16.msra.mxu0 %v5283
        %6605 = vmatpush.bf16.msra.mxu0 %v5275
        %6606 = vmatpush.bf16.msra.mxu0 %v5267
        %6607 = vmatpush.bf16.msra.mxu0 %v5259
        %6608 = vmatpush.bf16.msra.mxu0 %v5251
        %6609 = vmatmul.bf16.gmra.mxu0 %v3191
        %v6610 = vpop.f32.mrf.mxu0
        %v6611 = vadd.f32 %v6276, %v6610
        %v6612 = vpop.f32.mrf.mxu0
        %6613 = vdwg.mxu0
        %6614 = vmatpush.bf16.msra.mxu0 %v5371
        %6615 = vmatpush.bf16.msra.mxu0 %v5363
        %6616 = vmatpush.bf16.msra.mxu0 %v5355
        %6617 = vmatpush.bf16.msra.mxu0 %v5347
        %6618 = vmatpush.bf16.msra.mxu0 %v5339
        %6619 = vmatpush.bf16.msra.mxu0 %v5331
        %6620 = vmatpush.bf16.msra.mxu0 %v5323
        %6621 = vmatpush.bf16.msra.mxu0 %v5315
        %6622 = vmatmul.bf16.gmra.mxu0 %v3192
        %v6623 = vpop.f32.mrf.mxu0
        %v6624 = vadd.f32 %v6611, %v6623
        %v6625 = vpop.f32.mrf.mxu0
        %6626 = vdwg.mxu0
        %6627 = vmatpush.bf16.msra.mxu0 %v5435
        %6628 = vmatpush.bf16.msra.mxu0 %v5427
        %6629 = vmatpush.bf16.msra.mxu0 %v5419
        %6630 = vmatpush.bf16.msra.mxu0 %v5411
        %6631 = vmatpush.bf16.msra.mxu0 %v5403
        %6632 = vmatpush.bf16.msra.mxu0 %v5395
        %6633 = vmatpush.bf16.msra.mxu0 %v5387
        %6634 = vmatpush.bf16.msra.mxu0 %v5379
        %6635 = vmatmul.bf16.gmra.mxu0 %v3193
        %v6636 = vpop.f32.mrf.mxu0
        %v6637 = vadd.f32 %v6624, %v6636
        %v6638 = vpop.f32.mrf.mxu0
        %6639 = vdwg.mxu0
        %6640 = vmatpush.bf16.msra.mxu0 %v5499
        %6641 = vmatpush.bf16.msra.mxu0 %v5491
        %6642 = vmatpush.bf16.msra.mxu0 %v5483
        %6643 = vmatpush.bf16.msra.mxu0 %v5475
        %6644 = vmatpush.bf16.msra.mxu0 %v5467
        %6645 = vmatpush.bf16.msra.mxu0 %v5459
        %6646 = vmatpush.bf16.msra.mxu0 %v5451
        %6647 = vmatpush.bf16.msra.mxu0 %v5443
        %6648 = vmatmul.bf16.gmra.mxu0 %v3194
        %v6649 = vpop.f32.mrf.mxu0
        %v6650 = vadd.f32 %v6637, %v6649
        %v6651 = vpop.f32.mrf.mxu0
        %6652 = vdwg.mxu0
        %6653 = vmatpush.bf16.msra.mxu0 %v5563
        %6654 = vmatpush.bf16.msra.mxu0 %v5555
        %6655 = vmatpush.bf16.msra.mxu0 %v5547
        %6656 = vmatpush.bf16.msra.mxu0 %v5539
        %6657 = vmatpush.bf16.msra.mxu0 %v5531
        %6658 = vmatpush.bf16.msra.mxu0 %v5523
        %6659 = vmatpush.bf16.msra.mxu0 %v5515
        %6660 = vmatpush.bf16.msra.mxu0 %v5507
        %6661 = vmatmul.bf16.gmra.mxu0 %v3195
        %v6662 = vpop.f32.mrf.mxu0
        %v6663 = vadd.f32 %v6650, %v6662
        %v6664 = vpop.f32.mrf.mxu0
        %6665 = vdwg.mxu0
        %6666 = vmatpush.bf16.msra.mxu0 %v5627
        %6667 = vmatpush.bf16.msra.mxu0 %v5619
        %6668 = vmatpush.bf16.msra.mxu0 %v5611
        %6669 = vmatpush.bf16.msra.mxu0 %v5603
        %6670 = vmatpush.bf16.msra.mxu0 %v5595
        %6671 = vmatpush.bf16.msra.mxu0 %v5587
        %6672 = vmatpush.bf16.msra.mxu0 %v5579
        %6673 = vmatpush.bf16.msra.mxu0 %v5571
        %6674 = vmatmul.bf16.gmra.mxu0 %v3196
        %v6675 = vpop.f32.mrf.mxu0
        %v6676 = vadd.f32 %v6663, %v6675
        %v6677 = vpop.f32.mrf.mxu0
        %6678 = vdwg.mxu0
        %6679 = vmatpush.bf16.msra.mxu0 %v5691
        %6680 = vmatpush.bf16.msra.mxu0 %v5683
        %6681 = vmatpush.bf16.msra.mxu0 %v5675
        %6682 = vmatpush.bf16.msra.mxu0 %v5667
        %6683 = vmatpush.bf16.msra.mxu0 %v5659
        %6684 = vmatpush.bf16.msra.mxu0 %v5651
        %6685 = vmatpush.bf16.msra.mxu0 %v5643
        %6686 = vmatpush.bf16.msra.mxu0 %v5635
        %6687 = vmatmul.bf16.gmra.mxu0 %v3197
        %v6688 = vpop.f32.mrf.mxu0
        %v6689 = vadd.f32 %v6676, %v6688
        %v6690 = vpop.f32.mrf.mxu0
        %6691 = vdwg.mxu0
        %6692 = vmatpush.bf16.msra.mxu0 %v5755
        %6693 = vmatpush.bf16.msra.mxu0 %v5747
        %6694 = vmatpush.bf16.msra.mxu0 %v5739
        %6695 = vmatpush.bf16.msra.mxu0 %v5731
        %6696 = vmatpush.bf16.msra.mxu0 %v5723
        %6697 = vmatpush.bf16.msra.mxu0 %v5715
        %6698 = vmatpush.bf16.msra.mxu0 %v5707
        %6699 = vmatpush.bf16.msra.mxu0 %v5699
        %6700 = vmatmul.bf16.gmra.mxu0 %v3198
        %v6701 = vpop.f32.mrf.mxu0
        %v6702 = vadd.f32 %v6689, %v6701
        %v6703 = vpop.f32.mrf.mxu0
        %6704 = vdwg.mxu0
        %6705 = vmatpush.bf16.msra.mxu0 %v5308
        %6706 = vmatpush.bf16.msra.mxu0 %v5300
        %6707 = vmatpush.bf16.msra.mxu0 %v5292
        %6708 = vmatpush.bf16.msra.mxu0 %v5284
        %6709 = vmatpush.bf16.msra.mxu0 %v5276
        %6710 = vmatpush.bf16.msra.mxu0 %v5268
        %6711 = vmatpush.bf16.msra.mxu0 %v5260
        %6712 = vmatpush.bf16.msra.mxu0 %v5252
        %6713 = vmatmul.bf16.gmra.mxu0 %v3191
        %v6714 = vpop.f32.mrf.mxu0
        %v6715 = vadd.f32 %v6277, %v6714
        %v6716 = vpop.f32.mrf.mxu0
        %6717 = vdwg.mxu0
        %6718 = vmatpush.bf16.msra.mxu0 %v5372
        %6719 = vmatpush.bf16.msra.mxu0 %v5364
        %6720 = vmatpush.bf16.msra.mxu0 %v5356
        %6721 = vmatpush.bf16.msra.mxu0 %v5348
        %6722 = vmatpush.bf16.msra.mxu0 %v5340
        %6723 = vmatpush.bf16.msra.mxu0 %v5332
        %6724 = vmatpush.bf16.msra.mxu0 %v5324
        %6725 = vmatpush.bf16.msra.mxu0 %v5316
        %6726 = vmatmul.bf16.gmra.mxu0 %v3192
        %v6727 = vpop.f32.mrf.mxu0
        %v6728 = vadd.f32 %v6715, %v6727
        %v6729 = vpop.f32.mrf.mxu0
        %6730 = vdwg.mxu0
        %6731 = vmatpush.bf16.msra.mxu0 %v5436
        %6732 = vmatpush.bf16.msra.mxu0 %v5428
        %6733 = vmatpush.bf16.msra.mxu0 %v5420
        %6734 = vmatpush.bf16.msra.mxu0 %v5412
        %6735 = vmatpush.bf16.msra.mxu0 %v5404
        %6736 = vmatpush.bf16.msra.mxu0 %v5396
        %6737 = vmatpush.bf16.msra.mxu0 %v5388
        %6738 = vmatpush.bf16.msra.mxu0 %v5380
        %6739 = vmatmul.bf16.gmra.mxu0 %v3193
        %v6740 = vpop.f32.mrf.mxu0
        %v6741 = vadd.f32 %v6728, %v6740
        %v6742 = vpop.f32.mrf.mxu0
        %6743 = vdwg.mxu0
        %6744 = vmatpush.bf16.msra.mxu0 %v5500
        %6745 = vmatpush.bf16.msra.mxu0 %v5492
        %6746 = vmatpush.bf16.msra.mxu0 %v5484
        %6747 = vmatpush.bf16.msra.mxu0 %v5476
        %6748 = vmatpush.bf16.msra.mxu0 %v5468
        %6749 = vmatpush.bf16.msra.mxu0 %v5460
        %6750 = vmatpush.bf16.msra.mxu0 %v5452
        %6751 = vmatpush.bf16.msra.mxu0 %v5444
        %6752 = vmatmul.bf16.gmra.mxu0 %v3194
        %v6753 = vpop.f32.mrf.mxu0
        %v6754 = vadd.f32 %v6741, %v6753
        %v6755 = vpop.f32.mrf.mxu0
        %6756 = vdwg.mxu0
        %6757 = vmatpush.bf16.msra.mxu0 %v5564
        %6758 = vmatpush.bf16.msra.mxu0 %v5556
        %6759 = vmatpush.bf16.msra.mxu0 %v5548
        %6760 = vmatpush.bf16.msra.mxu0 %v5540
        %6761 = vmatpush.bf16.msra.mxu0 %v5532
        %6762 = vmatpush.bf16.msra.mxu0 %v5524
        %6763 = vmatpush.bf16.msra.mxu0 %v5516
        %6764 = vmatpush.bf16.msra.mxu0 %v5508
        %6765 = vmatmul.bf16.gmra.mxu0 %v3195
        %v6766 = vpop.f32.mrf.mxu0
        %v6767 = vadd.f32 %v6754, %v6766
        %v6768 = vpop.f32.mrf.mxu0
        %6769 = vdwg.mxu0
        %6770 = vmatpush.bf16.msra.mxu0 %v5628
        %6771 = vmatpush.bf16.msra.mxu0 %v5620
        %6772 = vmatpush.bf16.msra.mxu0 %v5612
        %6773 = vmatpush.bf16.msra.mxu0 %v5604
        %6774 = vmatpush.bf16.msra.mxu0 %v5596
        %6775 = vmatpush.bf16.msra.mxu0 %v5588
        %6776 = vmatpush.bf16.msra.mxu0 %v5580
        %6777 = vmatpush.bf16.msra.mxu0 %v5572
        %6778 = vmatmul.bf16.gmra.mxu0 %v3196
        %v6779 = vpop.f32.mrf.mxu0
        %v6780 = vadd.f32 %v6767, %v6779
        %v6781 = vpop.f32.mrf.mxu0
        %6782 = vdwg.mxu0
        %6783 = vmatpush.bf16.msra.mxu0 %v5692
        %6784 = vmatpush.bf16.msra.mxu0 %v5684
        %6785 = vmatpush.bf16.msra.mxu0 %v5676
        %6786 = vmatpush.bf16.msra.mxu0 %v5668
        %6787 = vmatpush.bf16.msra.mxu0 %v5660
        %6788 = vmatpush.bf16.msra.mxu0 %v5652
        %6789 = vmatpush.bf16.msra.mxu0 %v5644
        %6790 = vmatpush.bf16.msra.mxu0 %v5636
        %6791 = vmatmul.bf16.gmra.mxu0 %v3197
        %v6792 = vpop.f32.mrf.mxu0
        %v6793 = vadd.f32 %v6780, %v6792
        %v6794 = vpop.f32.mrf.mxu0
        %6795 = vdwg.mxu0
        %6796 = vmatpush.bf16.msra.mxu0 %v5756
        %6797 = vmatpush.bf16.msra.mxu0 %v5748
        %6798 = vmatpush.bf16.msra.mxu0 %v5740
        %6799 = vmatpush.bf16.msra.mxu0 %v5732
        %6800 = vmatpush.bf16.msra.mxu0 %v5724
        %6801 = vmatpush.bf16.msra.mxu0 %v5716
        %6802 = vmatpush.bf16.msra.mxu0 %v5708
        %6803 = vmatpush.bf16.msra.mxu0 %v5700
        %6804 = vmatmul.bf16.gmra.mxu0 %v3198
        %v6805 = vpop.f32.mrf.mxu0
        %v6806 = vadd.f32 %v6793, %v6805
        %v6807 = vpop.f32.mrf.mxu0
        %6808 = vdwg.mxu0
        %6809 = vmatpush.bf16.msra.mxu0 %v5309
        %6810 = vmatpush.bf16.msra.mxu0 %v5301
        %6811 = vmatpush.bf16.msra.mxu0 %v5293
        %6812 = vmatpush.bf16.msra.mxu0 %v5285
        %6813 = vmatpush.bf16.msra.mxu0 %v5277
        %6814 = vmatpush.bf16.msra.mxu0 %v5269
        %6815 = vmatpush.bf16.msra.mxu0 %v5261
        %6816 = vmatpush.bf16.msra.mxu0 %v5253
        %6817 = vmatmul.bf16.gmra.mxu0 %v3191
        %v6818 = vpop.f32.mrf.mxu0
        %v6819 = vadd.f32 %v6278, %v6818
        %v6820 = vpop.f32.mrf.mxu0
        %6821 = vdwg.mxu0
        %6822 = vmatpush.bf16.msra.mxu0 %v5373
        %6823 = vmatpush.bf16.msra.mxu0 %v5365
        %6824 = vmatpush.bf16.msra.mxu0 %v5357
        %6825 = vmatpush.bf16.msra.mxu0 %v5349
        %6826 = vmatpush.bf16.msra.mxu0 %v5341
        %6827 = vmatpush.bf16.msra.mxu0 %v5333
        %6828 = vmatpush.bf16.msra.mxu0 %v5325
        %6829 = vmatpush.bf16.msra.mxu0 %v5317
        %6830 = vmatmul.bf16.gmra.mxu0 %v3192
        %v6831 = vpop.f32.mrf.mxu0
        %v6832 = vadd.f32 %v6819, %v6831
        %v6833 = vpop.f32.mrf.mxu0
        %6834 = vdwg.mxu0
        %6835 = vmatpush.bf16.msra.mxu0 %v5437
        %6836 = vmatpush.bf16.msra.mxu0 %v5429
        %6837 = vmatpush.bf16.msra.mxu0 %v5421
        %6838 = vmatpush.bf16.msra.mxu0 %v5413
        %6839 = vmatpush.bf16.msra.mxu0 %v5405
        %6840 = vmatpush.bf16.msra.mxu0 %v5397
        %6841 = vmatpush.bf16.msra.mxu0 %v5389
        %6842 = vmatpush.bf16.msra.mxu0 %v5381
        %6843 = vmatmul.bf16.gmra.mxu0 %v3193
        %v6844 = vpop.f32.mrf.mxu0
        %v6845 = vadd.f32 %v6832, %v6844
        %v6846 = vpop.f32.mrf.mxu0
        %6847 = vdwg.mxu0
        %6848 = vmatpush.bf16.msra.mxu0 %v5501
        %6849 = vmatpush.bf16.msra.mxu0 %v5493
        %6850 = vmatpush.bf16.msra.mxu0 %v5485
        %6851 = vmatpush.bf16.msra.mxu0 %v5477
        %6852 = vmatpush.bf16.msra.mxu0 %v5469
        %6853 = vmatpush.bf16.msra.mxu0 %v5461
        %6854 = vmatpush.bf16.msra.mxu0 %v5453
        %6855 = vmatpush.bf16.msra.mxu0 %v5445
        %6856 = vmatmul.bf16.gmra.mxu0 %v3194
        %v6857 = vpop.f32.mrf.mxu0
        %v6858 = vadd.f32 %v6845, %v6857
        %v6859 = vpop.f32.mrf.mxu0
        %6860 = vdwg.mxu0
        %6861 = vmatpush.bf16.msra.mxu0 %v5565
        %6862 = vmatpush.bf16.msra.mxu0 %v5557
        %6863 = vmatpush.bf16.msra.mxu0 %v5549
        %6864 = vmatpush.bf16.msra.mxu0 %v5541
        %6865 = vmatpush.bf16.msra.mxu0 %v5533
        %6866 = vmatpush.bf16.msra.mxu0 %v5525
        %6867 = vmatpush.bf16.msra.mxu0 %v5517
        %6868 = vmatpush.bf16.msra.mxu0 %v5509
        %6869 = vmatmul.bf16.gmra.mxu0 %v3195
        %v6870 = vpop.f32.mrf.mxu0
        %v6871 = vadd.f32 %v6858, %v6870
        %v6872 = vpop.f32.mrf.mxu0
        %6873 = vdwg.mxu0
        %6874 = vmatpush.bf16.msra.mxu0 %v5629
        %6875 = vmatpush.bf16.msra.mxu0 %v5621
        %6876 = vmatpush.bf16.msra.mxu0 %v5613
        %6877 = vmatpush.bf16.msra.mxu0 %v5605
        %6878 = vmatpush.bf16.msra.mxu0 %v5597
        %6879 = vmatpush.bf16.msra.mxu0 %v5589
        %6880 = vmatpush.bf16.msra.mxu0 %v5581
        %6881 = vmatpush.bf16.msra.mxu0 %v5573
        %6882 = vmatmul.bf16.gmra.mxu0 %v3196
        %v6883 = vpop.f32.mrf.mxu0
        %v6884 = vadd.f32 %v6871, %v6883
        %v6885 = vpop.f32.mrf.mxu0
        %6886 = vdwg.mxu0
        %6887 = vmatpush.bf16.msra.mxu0 %v5693
        %6888 = vmatpush.bf16.msra.mxu0 %v5685
        %6889 = vmatpush.bf16.msra.mxu0 %v5677
        %6890 = vmatpush.bf16.msra.mxu0 %v5669
        %6891 = vmatpush.bf16.msra.mxu0 %v5661
        %6892 = vmatpush.bf16.msra.mxu0 %v5653
        %6893 = vmatpush.bf16.msra.mxu0 %v5645
        %6894 = vmatpush.bf16.msra.mxu0 %v5637
        %6895 = vmatmul.bf16.gmra.mxu0 %v3197
        %v6896 = vpop.f32.mrf.mxu0
        %v6897 = vadd.f32 %v6884, %v6896
        %v6898 = vpop.f32.mrf.mxu0
        %6899 = vdwg.mxu0
        %6900 = vmatpush.bf16.msra.mxu0 %v5757
        %6901 = vmatpush.bf16.msra.mxu0 %v5749
        %6902 = vmatpush.bf16.msra.mxu0 %v5741
        %6903 = vmatpush.bf16.msra.mxu0 %v5733
        %6904 = vmatpush.bf16.msra.mxu0 %v5725
        %6905 = vmatpush.bf16.msra.mxu0 %v5717
        %6906 = vmatpush.bf16.msra.mxu0 %v5709
        %6907 = vmatpush.bf16.msra.mxu0 %v5701
        %6908 = vmatmul.bf16.gmra.mxu0 %v3198
        %v6909 = vpop.f32.mrf.mxu0
        %v6910 = vadd.f32 %v6897, %v6909
        %v6911 = vpop.f32.mrf.mxu0
        %6912 = vdwg.mxu0
        %6913 = vmatpush.bf16.msra.mxu0 %v5310
        %6914 = vmatpush.bf16.msra.mxu0 %v5302
        %6915 = vmatpush.bf16.msra.mxu0 %v5294
        %6916 = vmatpush.bf16.msra.mxu0 %v5286
        %6917 = vmatpush.bf16.msra.mxu0 %v5278
        %6918 = vmatpush.bf16.msra.mxu0 %v5270
        %6919 = vmatpush.bf16.msra.mxu0 %v5262
        %6920 = vmatpush.bf16.msra.mxu0 %v5254
        %6921 = vmatmul.bf16.gmra.mxu0 %v3191
        %v6922 = vpop.f32.mrf.mxu0
        %v6923 = vadd.f32 %v6279, %v6922
        %v6924 = vpop.f32.mrf.mxu0
        %6925 = vdwg.mxu0
        %6926 = vmatpush.bf16.msra.mxu0 %v5374
        %6927 = vmatpush.bf16.msra.mxu0 %v5366
        %6928 = vmatpush.bf16.msra.mxu0 %v5358
        %6929 = vmatpush.bf16.msra.mxu0 %v5350
        %6930 = vmatpush.bf16.msra.mxu0 %v5342
        %6931 = vmatpush.bf16.msra.mxu0 %v5334
        %6932 = vmatpush.bf16.msra.mxu0 %v5326
        %6933 = vmatpush.bf16.msra.mxu0 %v5318
        %6934 = vmatmul.bf16.gmra.mxu0 %v3192
        %v6935 = vpop.f32.mrf.mxu0
        %v6936 = vadd.f32 %v6923, %v6935
        %v6937 = vpop.f32.mrf.mxu0
        %6938 = vdwg.mxu0
        %6939 = vmatpush.bf16.msra.mxu0 %v5438
        %6940 = vmatpush.bf16.msra.mxu0 %v5430
        %6941 = vmatpush.bf16.msra.mxu0 %v5422
        %6942 = vmatpush.bf16.msra.mxu0 %v5414
        %6943 = vmatpush.bf16.msra.mxu0 %v5406
        %6944 = vmatpush.bf16.msra.mxu0 %v5398
        %6945 = vmatpush.bf16.msra.mxu0 %v5390
        %6946 = vmatpush.bf16.msra.mxu0 %v5382
        %6947 = vmatmul.bf16.gmra.mxu0 %v3193
        %v6948 = vpop.f32.mrf.mxu0
        %v6949 = vadd.f32 %v6936, %v6948
        %v6950 = vpop.f32.mrf.mxu0
        %6951 = vdwg.mxu0
        %6952 = vmatpush.bf16.msra.mxu0 %v5502
        %6953 = vmatpush.bf16.msra.mxu0 %v5494
        %6954 = vmatpush.bf16.msra.mxu0 %v5486
        %6955 = vmatpush.bf16.msra.mxu0 %v5478
        %6956 = vmatpush.bf16.msra.mxu0 %v5470
        %6957 = vmatpush.bf16.msra.mxu0 %v5462
        %6958 = vmatpush.bf16.msra.mxu0 %v5454
        %6959 = vmatpush.bf16.msra.mxu0 %v5446
        %6960 = vmatmul.bf16.gmra.mxu0 %v3194
        %v6961 = vpop.f32.mrf.mxu0
        %v6962 = vadd.f32 %v6949, %v6961
        %v6963 = vpop.f32.mrf.mxu0
        %6964 = vdwg.mxu0
        %6965 = vmatpush.bf16.msra.mxu0 %v5566
        %6966 = vmatpush.bf16.msra.mxu0 %v5558
        %6967 = vmatpush.bf16.msra.mxu0 %v5550
        %6968 = vmatpush.bf16.msra.mxu0 %v5542
        %6969 = vmatpush.bf16.msra.mxu0 %v5534
        %6970 = vmatpush.bf16.msra.mxu0 %v5526
        %6971 = vmatpush.bf16.msra.mxu0 %v5518
        %6972 = vmatpush.bf16.msra.mxu0 %v5510
        %6973 = vmatmul.bf16.gmra.mxu0 %v3195
        %v6974 = vpop.f32.mrf.mxu0
        %v6975 = vadd.f32 %v6962, %v6974
        %v6976 = vpop.f32.mrf.mxu0
        %6977 = vdwg.mxu0
        %6978 = vmatpush.bf16.msra.mxu0 %v5630
        %6979 = vmatpush.bf16.msra.mxu0 %v5622
        %6980 = vmatpush.bf16.msra.mxu0 %v5614
        %6981 = vmatpush.bf16.msra.mxu0 %v5606
        %6982 = vmatpush.bf16.msra.mxu0 %v5598
        %6983 = vmatpush.bf16.msra.mxu0 %v5590
        %6984 = vmatpush.bf16.msra.mxu0 %v5582
        %6985 = vmatpush.bf16.msra.mxu0 %v5574
        %6986 = vmatmul.bf16.gmra.mxu0 %v3196
        %v6987 = vpop.f32.mrf.mxu0
        %v6988 = vadd.f32 %v6975, %v6987
        %v6989 = vpop.f32.mrf.mxu0
        %6990 = vdwg.mxu0
        %6991 = vmatpush.bf16.msra.mxu0 %v5694
        %6992 = vmatpush.bf16.msra.mxu0 %v5686
        %6993 = vmatpush.bf16.msra.mxu0 %v5678
        %6994 = vmatpush.bf16.msra.mxu0 %v5670
        %6995 = vmatpush.bf16.msra.mxu0 %v5662
        %6996 = vmatpush.bf16.msra.mxu0 %v5654
        %6997 = vmatpush.bf16.msra.mxu0 %v5646
        %6998 = vmatpush.bf16.msra.mxu0 %v5638
        %6999 = vmatmul.bf16.gmra.mxu0 %v3197
        %v7000 = vpop.f32.mrf.mxu0
        %v7001 = vadd.f32 %v6988, %v7000
        %v7002 = vpop.f32.mrf.mxu0
        %7003 = vdwg.mxu0
        %7004 = vmatpush.bf16.msra.mxu0 %v5758
        %7005 = vmatpush.bf16.msra.mxu0 %v5750
        %7006 = vmatpush.bf16.msra.mxu0 %v5742
        %7007 = vmatpush.bf16.msra.mxu0 %v5734
        %7008 = vmatpush.bf16.msra.mxu0 %v5726
        %7009 = vmatpush.bf16.msra.mxu0 %v5718
        %7010 = vmatpush.bf16.msra.mxu0 %v5710
        %7011 = vmatpush.bf16.msra.mxu0 %v5702
        %7012 = vmatmul.bf16.gmra.mxu0 %v3198
        %v7013 = vpop.f32.mrf.mxu0
        %v7014 = vadd.f32 %v7001, %v7013
        %v7015 = vpop.f32.mrf.mxu0
        %7016 = vdwg.mxu0
        %7017 = vmatpush.bf16.msra.mxu0 %v5311
        %7018 = vmatpush.bf16.msra.mxu0 %v5303
        %7019 = vmatpush.bf16.msra.mxu0 %v5295
        %7020 = vmatpush.bf16.msra.mxu0 %v5287
        %7021 = vmatpush.bf16.msra.mxu0 %v5279
        %7022 = vmatpush.bf16.msra.mxu0 %v5271
        %7023 = vmatpush.bf16.msra.mxu0 %v5263
        %7024 = vmatpush.bf16.msra.mxu0 %v5255
        %7025 = vmatmul.bf16.gmra.mxu0 %v3191
        %v7026 = vpop.f32.mrf.mxu0
        %v7027 = vadd.f32 %v6280, %v7026
        %v7028 = vpop.f32.mrf.mxu0
        %7029 = vdwg.mxu0
        %7030 = vmatpush.bf16.msra.mxu0 %v5375
        %7031 = vmatpush.bf16.msra.mxu0 %v5367
        %7032 = vmatpush.bf16.msra.mxu0 %v5359
        %7033 = vmatpush.bf16.msra.mxu0 %v5351
        %7034 = vmatpush.bf16.msra.mxu0 %v5343
        %7035 = vmatpush.bf16.msra.mxu0 %v5335
        %7036 = vmatpush.bf16.msra.mxu0 %v5327
        %7037 = vmatpush.bf16.msra.mxu0 %v5319
        %7038 = vmatmul.bf16.gmra.mxu0 %v3192
        %v7039 = vpop.f32.mrf.mxu0
        %v7040 = vadd.f32 %v7027, %v7039
        %v7041 = vpop.f32.mrf.mxu0
        %7042 = vdwg.mxu0
        %7043 = vmatpush.bf16.msra.mxu0 %v5439
        %7044 = vmatpush.bf16.msra.mxu0 %v5431
        %7045 = vmatpush.bf16.msra.mxu0 %v5423
        %7046 = vmatpush.bf16.msra.mxu0 %v5415
        %7047 = vmatpush.bf16.msra.mxu0 %v5407
        %7048 = vmatpush.bf16.msra.mxu0 %v5399
        %7049 = vmatpush.bf16.msra.mxu0 %v5391
        %7050 = vmatpush.bf16.msra.mxu0 %v5383
        %7051 = vmatmul.bf16.gmra.mxu0 %v3193
        %v7052 = vpop.f32.mrf.mxu0
        %v7053 = vadd.f32 %v7040, %v7052
        %v7054 = vpop.f32.mrf.mxu0
        %7055 = vdwg.mxu0
        %7056 = vmatpush.bf16.msra.mxu0 %v5503
        %7057 = vmatpush.bf16.msra.mxu0 %v5495
        %7058 = vmatpush.bf16.msra.mxu0 %v5487
        %7059 = vmatpush.bf16.msra.mxu0 %v5479
        %7060 = vmatpush.bf16.msra.mxu0 %v5471
        %7061 = vmatpush.bf16.msra.mxu0 %v5463
        %7062 = vmatpush.bf16.msra.mxu0 %v5455
        %7063 = vmatpush.bf16.msra.mxu0 %v5447
        %7064 = vmatmul.bf16.gmra.mxu0 %v3194
        %v7065 = vpop.f32.mrf.mxu0
        %v7066 = vadd.f32 %v7053, %v7065
        %v7067 = vpop.f32.mrf.mxu0
        %7068 = vdwg.mxu0
        %7069 = vmatpush.bf16.msra.mxu0 %v5567
        %7070 = vmatpush.bf16.msra.mxu0 %v5559
        %7071 = vmatpush.bf16.msra.mxu0 %v5551
        %7072 = vmatpush.bf16.msra.mxu0 %v5543
        %7073 = vmatpush.bf16.msra.mxu0 %v5535
        %7074 = vmatpush.bf16.msra.mxu0 %v5527
        %7075 = vmatpush.bf16.msra.mxu0 %v5519
        %7076 = vmatpush.bf16.msra.mxu0 %v5511
        %7077 = vmatmul.bf16.gmra.mxu0 %v3195
        %v7078 = vpop.f32.mrf.mxu0
        %v7079 = vadd.f32 %v7066, %v7078
        %v7080 = vpop.f32.mrf.mxu0
        %7081 = vdwg.mxu0
        %7082 = vmatpush.bf16.msra.mxu0 %v5631
        %7083 = vmatpush.bf16.msra.mxu0 %v5623
        %7084 = vmatpush.bf16.msra.mxu0 %v5615
        %7085 = vmatpush.bf16.msra.mxu0 %v5607
        %7086 = vmatpush.bf16.msra.mxu0 %v5599
        %7087 = vmatpush.bf16.msra.mxu0 %v5591
        %7088 = vmatpush.bf16.msra.mxu0 %v5583
        %7089 = vmatpush.bf16.msra.mxu0 %v5575
        %7090 = vmatmul.bf16.gmra.mxu0 %v3196
        %v7091 = vpop.f32.mrf.mxu0
        %v7092 = vadd.f32 %v7079, %v7091
        %v7093 = vpop.f32.mrf.mxu0
        %7094 = vdwg.mxu0
        %7095 = vmatpush.bf16.msra.mxu0 %v5695
        %7096 = vmatpush.bf16.msra.mxu0 %v5687
        %7097 = vmatpush.bf16.msra.mxu0 %v5679
        %7098 = vmatpush.bf16.msra.mxu0 %v5671
        %7099 = vmatpush.bf16.msra.mxu0 %v5663
        %7100 = vmatpush.bf16.msra.mxu0 %v5655
        %7101 = vmatpush.bf16.msra.mxu0 %v5647
        %7102 = vmatpush.bf16.msra.mxu0 %v5639
        %7103 = vmatmul.bf16.gmra.mxu0 %v3197
        %v7104 = vpop.f32.mrf.mxu0
        %v7105 = vadd.f32 %v7092, %v7104
        %v7106 = vpop.f32.mrf.mxu0
        %7107 = vdwg.mxu0
        %7108 = vmatpush.bf16.msra.mxu0 %v5759
        %7109 = vmatpush.bf16.msra.mxu0 %v5751
        %7110 = vmatpush.bf16.msra.mxu0 %v5743
        %7111 = vmatpush.bf16.msra.mxu0 %v5735
        %7112 = vmatpush.bf16.msra.mxu0 %v5727
        %7113 = vmatpush.bf16.msra.mxu0 %v5719
        %7114 = vmatpush.bf16.msra.mxu0 %v5711
        %7115 = vmatpush.bf16.msra.mxu0 %v5703
        %7116 = vmatmul.bf16.gmra.mxu0 %v3198
        %v7117 = vpop.f32.mrf.mxu0
        %v7118 = vadd.f32 %v7105, %v7117
        %v7119 = vpop.f32.mrf.mxu0
        %7120 = vdwg.mxu0
        %vm7121 = vcmp.ge.f32.partialorder %v6390, 0.0
        %vm7122 = vcmp.ge.f32.partialorder %v6494, 0.0
        %vm7123 = vcmp.ge.f32.partialorder %v6598, 0.0
        %vm7124 = vcmp.ge.f32.partialorder %v6702, 0.0
        %vm7125 = vcmp.ge.f32.partialorder %v6806, 0.0
        %vm7126 = vcmp.ge.f32.partialorder %v6910, 0.0
        %vm7127 = vcmp.ge.f32.partialorder %v7014, 0.0
        %vm7128 = vcmp.ge.f32.partialorder %v7118, 0.0
        %v7129 = vmul.f32 %v6390, 0.01
        %v7130 = vmul.f32 %v6494, 0.01
        %v7131 = vmul.f32 %v6598, 0.01
        %v7132 = vmul.f32 %v6702, 0.01
        %v7133 = vmul.f32 %v6806, 0.01
        %v7134 = vmul.f32 %v6910, 0.01
        %v7135 = vmul.f32 %v7014, 0.01
        %v7136 = vmul.f32 %v7118, 0.01
        %v7137 = vsel %vm7121, %v6390, %v7129
        %v7138 = vsel %vm7122, %v6494, %v7130
        %v7139 = vsel %vm7123, %v6598, %v7131
        %v7140 = vsel %vm7124, %v6702, %v7132
        %v7141 = vsel %vm7125, %v6806, %v7133
        %v7142 = vsel %vm7126, %v6910, %v7134
        %v7143 = vsel %vm7127, %v7014, %v7135
        %v7144 = vsel %vm7128, %v7118, %v7136
        %v7145 = vpack.c.bf16 %v7137, %v7137
        %v7146 = vpack.c.bf16 %v7138, %v7138
        %v7147 = vpack.c.bf16 %v7139, %v7139
        %v7148 = vpack.c.bf16 %v7140, %v7140
        %v7149 = vpack.c.bf16 %v7141, %v7141
        %v7150 = vpack.c.bf16 %v7142, %v7142
        %v7151 = vpack.c.bf16 %v7143, %v7143
        %v7152 = vpack.c.bf16 %v7144, %v7144
        %v7153 = vld [vmem:[#allocation32] sm:$0xff]
        %v7154 = vld [vmem:[#allocation32 + $0x8] sm:$0xff]
        %v7155 = vld [vmem:[#allocation32 + $0x10] sm:$0xff]
        %v7156 = vld [vmem:[#allocation32 + $0x18] sm:$0xff]
        %v7157 = vld [vmem:[#allocation32 + $0x20] sm:$0xff]
        %v7158 = vld [vmem:[#allocation32 + $0x28] sm:$0xff]
        %v7159 = vld [vmem:[#allocation32 + $0x30] sm:$0xff]
        %v7160 = vld [vmem:[#allocation32 + $0x38] sm:$0xff]
        %v7161 = vld [vmem:[#allocation32 + $0x40] sm:$0xff]
        %v7162 = vld [vmem:[#allocation32 + $0x48] sm:$0xff]
        %v7163 = vld [vmem:[#allocation32 + $0x50] sm:$0xff]
        %v7164 = vld [vmem:[#allocation32 + $0x58] sm:$0xff]
        %v7165 = vld [vmem:[#allocation32 + $0x60] sm:$0xff]
        %v7166 = vld [vmem:[#allocation32 + $0x68] sm:$0xff]
        %v7167 = vld [vmem:[#allocation32 + $0x70] sm:$0xff]
        %v7168 = vld [vmem:[#allocation32 + $0x78] sm:$0xff]
        %v7169 = vld [vmem:[#allocation32 + $0x80] sm:$0xff]
        %v7170 = vld [vmem:[#allocation32 + $0x88] sm:$0xff]
        %v7171 = vld [vmem:[#allocation32 + $0x90] sm:$0xff]
        %v7172 = vld [vmem:[#allocation32 + $0x98] sm:$0xff]
        %v7173 = vld [vmem:[#allocation32 + $0xa0] sm:$0xff]
        %v7174 = vld [vmem:[#allocation32 + $0xa8] sm:$0xff]
        %v7175 = vld [vmem:[#allocation32 + $0xb0] sm:$0xff]
        %v7176 = vld [vmem:[#allocation32 + $0xb8] sm:$0xff]
        %v7177 = vld [vmem:[#allocation32 + $0xc0] sm:$0xff]
        %v7178 = vld [vmem:[#allocation32 + $0xc8] sm:$0xff]
        %v7179 = vld [vmem:[#allocation32 + $0xd0] sm:$0xff]
        %v7180 = vld [vmem:[#allocation32 + $0xd8] sm:$0xff]
        %v7181 = vld [vmem:[#allocation32 + $0xe0] sm:$0xff]
        %v7182 = vld [vmem:[#allocation32 + $0xe8] sm:$0xff]
        %v7183 = vld [vmem:[#allocation32 + $0xf0] sm:$0xff]
        %v7184 = vld [vmem:[#allocation32 + $0xf8] sm:$0xff]
        %v7185 = vld [vmem:[#allocation32 + $0x100] sm:$0xff]
        %v7186 = vld [vmem:[#allocation32 + $0x108] sm:$0xff]
        %v7187 = vld [vmem:[#allocation32 + $0x110] sm:$0xff]
        %v7188 = vld [vmem:[#allocation32 + $0x118] sm:$0xff]
        %v7189 = vld [vmem:[#allocation32 + $0x120] sm:$0xff]
        %v7190 = vld [vmem:[#allocation32 + $0x128] sm:$0xff]
        %v7191 = vld [vmem:[#allocation32 + $0x130] sm:$0xff]
        %v7192 = vld [vmem:[#allocation32 + $0x138] sm:$0xff]
        %v7193 = vld [vmem:[#allocation32 + $0x140] sm:$0xff]
        %v7194 = vld [vmem:[#allocation32 + $0x148] sm:$0xff]
        %v7195 = vld [vmem:[#allocation32 + $0x150] sm:$0xff]
        %v7196 = vld [vmem:[#allocation32 + $0x158] sm:$0xff]
        %v7197 = vld [vmem:[#allocation32 + $0x160] sm:$0xff]
        %v7198 = vld [vmem:[#allocation32 + $0x168] sm:$0xff]
        %v7199 = vld [vmem:[#allocation32 + $0x170] sm:$0xff]
        %v7200 = vld [vmem:[#allocation32 + $0x178] sm:$0xff]
        %v7201 = vld [vmem:[#allocation32 + $0x180] sm:$0xff]
        %v7202 = vld [vmem:[#allocation32 + $0x188] sm:$0xff]
        %v7203 = vld [vmem:[#allocation32 + $0x190] sm:$0xff]
        %v7204 = vld [vmem:[#allocation32 + $0x198] sm:$0xff]
        %v7205 = vld [vmem:[#allocation32 + $0x1a0] sm:$0xff]
        %v7206 = vld [vmem:[#allocation32 + $0x1a8] sm:$0xff]
        %v7207 = vld [vmem:[#allocation32 + $0x1b0] sm:$0xff]
        %v7208 = vld [vmem:[#allocation32 + $0x1b8] sm:$0xff]
        %v7209 = vld [vmem:[#allocation32 + $0x1c0] sm:$0xff]
        %v7210 = vld [vmem:[#allocation32 + $0x1c8] sm:$0xff]
        %v7211 = vld [vmem:[#allocation32 + $0x1d0] sm:$0xff]
        %v7212 = vld [vmem:[#allocation32 + $0x1d8] sm:$0xff]
        %v7213 = vld [vmem:[#allocation32 + $0x1e0] sm:$0xff]
        %v7214 = vld [vmem:[#allocation32 + $0x1e8] sm:$0xff]
        %v7215 = vld [vmem:[#allocation32 + $0x1f0] sm:$0xff]
        %v7216 = vld [vmem:[#allocation32 + $0x1f8] sm:$0xff]
        %v7217 = vld [vmem:[#allocation32 + $0x200] sm:$0xff]
        %v7218 = vld [vmem:[#allocation32 + $0x208] sm:$0xff]
        %v7219 = vld [vmem:[#allocation32 + $0x210] sm:$0xff]
        %v7220 = vld [vmem:[#allocation32 + $0x218] sm:$0xff]
        %v7221 = vld [vmem:[#allocation32 + $0x220] sm:$0xff]
        %v7222 = vld [vmem:[#allocation32 + $0x228] sm:$0xff]
        %v7223 = vld [vmem:[#allocation32 + $0x230] sm:$0xff]
        %v7224 = vld [vmem:[#allocation32 + $0x238] sm:$0xff]
        %v7225 = vld [vmem:[#allocation32 + $0x240] sm:$0xff]
        %v7226 = vld [vmem:[#allocation32 + $0x248] sm:$0xff]
        %v7227 = vld [vmem:[#allocation32 + $0x250] sm:$0xff]
        %v7228 = vld [vmem:[#allocation32 + $0x258] sm:$0xff]
        %v7229 = vld [vmem:[#allocation32 + $0x260] sm:$0xff]
        %v7230 = vld [vmem:[#allocation32 + $0x268] sm:$0xff]
        %v7231 = vld [vmem:[#allocation32 + $0x270] sm:$0xff]
        %v7232 = vld [vmem:[#allocation32 + $0x278] sm:$0xff]
        %v7233 = vld [vmem:[#allocation32 + $0x280] sm:$0xff]
        %v7234 = vld [vmem:[#allocation32 + $0x288] sm:$0xff]
        %v7235 = vld [vmem:[#allocation32 + $0x290] sm:$0xff]
        %v7236 = vld [vmem:[#allocation32 + $0x298] sm:$0xff]
        %v7237 = vld [vmem:[#allocation32 + $0x2a0] sm:$0xff]
        %v7238 = vld [vmem:[#allocation32 + $0x2a8] sm:$0xff]
        %v7239 = vld [vmem:[#allocation32 + $0x2b0] sm:$0xff]
        %v7240 = vld [vmem:[#allocation32 + $0x2b8] sm:$0xff]
        %v7241 = vld [vmem:[#allocation32 + $0x2c0] sm:$0xff]
        %v7242 = vld [vmem:[#allocation32 + $0x2c8] sm:$0xff]
        %v7243 = vld [vmem:[#allocation32 + $0x2d0] sm:$0xff]
        %v7244 = vld [vmem:[#allocation32 + $0x2d8] sm:$0xff]
        %v7245 = vld [vmem:[#allocation32 + $0x2e0] sm:$0xff]
        %v7246 = vld [vmem:[#allocation32 + $0x2e8] sm:$0xff]
        %v7247 = vld [vmem:[#allocation32 + $0x2f0] sm:$0xff]
        %v7248 = vld [vmem:[#allocation32 + $0x2f8] sm:$0xff]
        %v7249 = vld [vmem:[#allocation32 + $0x300] sm:$0xff]
        %v7250 = vld [vmem:[#allocation32 + $0x308] sm:$0xff]
        %v7251 = vld [vmem:[#allocation32 + $0x310] sm:$0xff]
        %v7252 = vld [vmem:[#allocation32 + $0x318] sm:$0xff]
        %v7253 = vld [vmem:[#allocation32 + $0x320] sm:$0xff]
        %v7254 = vld [vmem:[#allocation32 + $0x328] sm:$0xff]
        %v7255 = vld [vmem:[#allocation32 + $0x330] sm:$0xff]
        %v7256 = vld [vmem:[#allocation32 + $0x338] sm:$0xff]
        %v7257 = vld [vmem:[#allocation32 + $0x340] sm:$0xff]
        %v7258 = vld [vmem:[#allocation32 + $0x348] sm:$0xff]
        %v7259 = vld [vmem:[#allocation32 + $0x350] sm:$0xff]
        %v7260 = vld [vmem:[#allocation32 + $0x358] sm:$0xff]
        %v7261 = vld [vmem:[#allocation32 + $0x360] sm:$0xff]
        %v7262 = vld [vmem:[#allocation32 + $0x368] sm:$0xff]
        %v7263 = vld [vmem:[#allocation32 + $0x370] sm:$0xff]
        %v7264 = vld [vmem:[#allocation32 + $0x378] sm:$0xff]
        %v7265 = vld [vmem:[#allocation32 + $0x380] sm:$0xff]
        %v7266 = vld [vmem:[#allocation32 + $0x388] sm:$0xff]
        %v7267 = vld [vmem:[#allocation32 + $0x390] sm:$0xff]
        %v7268 = vld [vmem:[#allocation32 + $0x398] sm:$0xff]
        %v7269 = vld [vmem:[#allocation32 + $0x3a0] sm:$0xff]
        %v7270 = vld [vmem:[#allocation32 + $0x3a8] sm:$0xff]
        %v7271 = vld [vmem:[#allocation32 + $0x3b0] sm:$0xff]
        %v7272 = vld [vmem:[#allocation32 + $0x3b8] sm:$0xff]
        %v7273 = vld [vmem:[#allocation32 + $0x3c0] sm:$0xff]
        %v7274 = vld [vmem:[#allocation32 + $0x3c8] sm:$0xff]
        %v7275 = vld [vmem:[#allocation32 + $0x3d0] sm:$0xff]
        %v7276 = vld [vmem:[#allocation32 + $0x3d8] sm:$0xff]
        %v7277 = vld [vmem:[#allocation32 + $0x3e0] sm:$0xff]
        %v7278 = vld [vmem:[#allocation32 + $0x3e8] sm:$0xff]
        %v7279 = vld [vmem:[#allocation32 + $0x3f0] sm:$0xff]
        %v7280 = vld [vmem:[#allocation32 + $0x3f8] sm:$0xff]
        %v7281 = vld [vmem:[#allocation32 + $0x400] sm:$0xff]
        %v7282 = vld [vmem:[#allocation32 + $0x408] sm:$0xff]
        %v7283 = vld [vmem:[#allocation32 + $0x410] sm:$0xff]
        %v7284 = vld [vmem:[#allocation32 + $0x418] sm:$0xff]
        %v7285 = vld [vmem:[#allocation32 + $0x420] sm:$0xff]
        %v7286 = vld [vmem:[#allocation32 + $0x428] sm:$0xff]
        %v7287 = vld [vmem:[#allocation32 + $0x430] sm:$0xff]
        %v7288 = vld [vmem:[#allocation32 + $0x438] sm:$0xff]
        %v7289 = vld [vmem:[#allocation32 + $0x440] sm:$0xff]
        %v7290 = vld [vmem:[#allocation32 + $0x448] sm:$0xff]
        %v7291 = vld [vmem:[#allocation32 + $0x450] sm:$0xff]
        %v7292 = vld [vmem:[#allocation32 + $0x458] sm:$0xff]
        %v7293 = vld [vmem:[#allocation32 + $0x460] sm:$0xff]
        %v7294 = vld [vmem:[#allocation32 + $0x468] sm:$0xff]
        %v7295 = vld [vmem:[#allocation32 + $0x470] sm:$0xff]
        %v7296 = vld [vmem:[#allocation32 + $0x478] sm:$0xff]
        %v7297 = vld [vmem:[#allocation32 + $0x480] sm:$0xff]
        %v7298 = vld [vmem:[#allocation32 + $0x488] sm:$0xff]
        %v7299 = vld [vmem:[#allocation32 + $0x490] sm:$0xff]
        %v7300 = vld [vmem:[#allocation32 + $0x498] sm:$0xff]
        %v7301 = vld [vmem:[#allocation32 + $0x4a0] sm:$0xff]
        %v7302 = vld [vmem:[#allocation32 + $0x4a8] sm:$0xff]
        %v7303 = vld [vmem:[#allocation32 + $0x4b0] sm:$0xff]
        %v7304 = vld [vmem:[#allocation32 + $0x4b8] sm:$0xff]
        %v7305 = vld [vmem:[#allocation32 + $0x4c0] sm:$0xff]
        %v7306 = vld [vmem:[#allocation32 + $0x4c8] sm:$0xff]
        %v7307 = vld [vmem:[#allocation32 + $0x4d0] sm:$0xff]
        %v7308 = vld [vmem:[#allocation32 + $0x4d8] sm:$0xff]
        %v7309 = vld [vmem:[#allocation32 + $0x4e0] sm:$0xff]
        %v7310 = vld [vmem:[#allocation32 + $0x4e8] sm:$0xff]
        %v7311 = vld [vmem:[#allocation32 + $0x4f0] sm:$0xff]
        %v7312 = vld [vmem:[#allocation32 + $0x4f8] sm:$0xff]
        %v7313 = vld [vmem:[#allocation32 + $0x500] sm:$0xff]
        %v7314 = vld [vmem:[#allocation32 + $0x508] sm:$0xff]
        %v7315 = vld [vmem:[#allocation32 + $0x510] sm:$0xff]
        %v7316 = vld [vmem:[#allocation32 + $0x518] sm:$0xff]
        %v7317 = vld [vmem:[#allocation32 + $0x520] sm:$0xff]
        %v7318 = vld [vmem:[#allocation32 + $0x528] sm:$0xff]
        %v7319 = vld [vmem:[#allocation32 + $0x530] sm:$0xff]
        %v7320 = vld [vmem:[#allocation32 + $0x538] sm:$0xff]
        %v7321 = vld [vmem:[#allocation32 + $0x540] sm:$0xff]
        %v7322 = vld [vmem:[#allocation32 + $0x548] sm:$0xff]
        %v7323 = vld [vmem:[#allocation32 + $0x550] sm:$0xff]
        %v7324 = vld [vmem:[#allocation32 + $0x558] sm:$0xff]
        %v7325 = vld [vmem:[#allocation32 + $0x560] sm:$0xff]
        %v7326 = vld [vmem:[#allocation32 + $0x568] sm:$0xff]
        %v7327 = vld [vmem:[#allocation32 + $0x570] sm:$0xff]
        %v7328 = vld [vmem:[#allocation32 + $0x578] sm:$0xff]
        %v7329 = vld [vmem:[#allocation32 + $0x580] sm:$0xff]
        %v7330 = vld [vmem:[#allocation32 + $0x588] sm:$0xff]
        %v7331 = vld [vmem:[#allocation32 + $0x590] sm:$0xff]
        %v7332 = vld [vmem:[#allocation32 + $0x598] sm:$0xff]
        %v7333 = vld [vmem:[#allocation32 + $0x5a0] sm:$0xff]
        %v7334 = vld [vmem:[#allocation32 + $0x5a8] sm:$0xff]
        %v7335 = vld [vmem:[#allocation32 + $0x5b0] sm:$0xff]
        %v7336 = vld [vmem:[#allocation32 + $0x5b8] sm:$0xff]
        %v7337 = vld [vmem:[#allocation32 + $0x5c0] sm:$0xff]
        %v7338 = vld [vmem:[#allocation32 + $0x5c8] sm:$0xff]
        %v7339 = vld [vmem:[#allocation32 + $0x5d0] sm:$0xff]
        %v7340 = vld [vmem:[#allocation32 + $0x5d8] sm:$0xff]
        %v7341 = vld [vmem:[#allocation32 + $0x5e0] sm:$0xff]
        %v7342 = vld [vmem:[#allocation32 + $0x5e8] sm:$0xff]
        %v7343 = vld [vmem:[#allocation32 + $0x5f0] sm:$0xff]
        %v7344 = vld [vmem:[#allocation32 + $0x5f8] sm:$0xff]
        %v7345 = vld [vmem:[#allocation32 + $0x600] sm:$0xff]
        %v7346 = vld [vmem:[#allocation32 + $0x608] sm:$0xff]
        %v7347 = vld [vmem:[#allocation32 + $0x610] sm:$0xff]
        %v7348 = vld [vmem:[#allocation32 + $0x618] sm:$0xff]
        %v7349 = vld [vmem:[#allocation32 + $0x620] sm:$0xff]
        %v7350 = vld [vmem:[#allocation32 + $0x628] sm:$0xff]
        %v7351 = vld [vmem:[#allocation32 + $0x630] sm:$0xff]
        %v7352 = vld [vmem:[#allocation32 + $0x638] sm:$0xff]
        %v7353 = vld [vmem:[#allocation32 + $0x640] sm:$0xff]
        %v7354 = vld [vmem:[#allocation32 + $0x648] sm:$0xff]
        %v7355 = vld [vmem:[#allocation32 + $0x650] sm:$0xff]
        %v7356 = vld [vmem:[#allocation32 + $0x658] sm:$0xff]
        %v7357 = vld [vmem:[#allocation32 + $0x660] sm:$0xff]
        %v7358 = vld [vmem:[#allocation32 + $0x668] sm:$0xff]
        %v7359 = vld [vmem:[#allocation32 + $0x670] sm:$0xff]
        %v7360 = vld [vmem:[#allocation32 + $0x678] sm:$0xff]
        %v7361 = vld [vmem:[#allocation32 + $0x680] sm:$0xff]
        %v7362 = vld [vmem:[#allocation32 + $0x688] sm:$0xff]
        %v7363 = vld [vmem:[#allocation32 + $0x690] sm:$0xff]
        %v7364 = vld [vmem:[#allocation32 + $0x698] sm:$0xff]
        %v7365 = vld [vmem:[#allocation32 + $0x6a0] sm:$0xff]
        %v7366 = vld [vmem:[#allocation32 + $0x6a8] sm:$0xff]
        %v7367 = vld [vmem:[#allocation32 + $0x6b0] sm:$0xff]
        %v7368 = vld [vmem:[#allocation32 + $0x6b8] sm:$0xff]
        %v7369 = vld [vmem:[#allocation32 + $0x6c0] sm:$0xff]
        %v7370 = vld [vmem:[#allocation32 + $0x6c8] sm:$0xff]
        %v7371 = vld [vmem:[#allocation32 + $0x6d0] sm:$0xff]
        %v7372 = vld [vmem:[#allocation32 + $0x6d8] sm:$0xff]
        %v7373 = vld [vmem:[#allocation32 + $0x6e0] sm:$0xff]
        %v7374 = vld [vmem:[#allocation32 + $0x6e8] sm:$0xff]
        %v7375 = vld [vmem:[#allocation32 + $0x6f0] sm:$0xff]
        %v7376 = vld [vmem:[#allocation32 + $0x6f8] sm:$0xff]
        %v7377 = vld [vmem:[#allocation32 + $0x700] sm:$0xff]
        %v7378 = vld [vmem:[#allocation32 + $0x708] sm:$0xff]
        %v7379 = vld [vmem:[#allocation32 + $0x710] sm:$0xff]
        %v7380 = vld [vmem:[#allocation32 + $0x718] sm:$0xff]
        %v7381 = vld [vmem:[#allocation32 + $0x720] sm:$0xff]
        %v7382 = vld [vmem:[#allocation32 + $0x728] sm:$0xff]
        %v7383 = vld [vmem:[#allocation32 + $0x730] sm:$0xff]
        %v7384 = vld [vmem:[#allocation32 + $0x738] sm:$0xff]
        %v7385 = vld [vmem:[#allocation32 + $0x740] sm:$0xff]
        %v7386 = vld [vmem:[#allocation32 + $0x748] sm:$0xff]
        %v7387 = vld [vmem:[#allocation32 + $0x750] sm:$0xff]
        %v7388 = vld [vmem:[#allocation32 + $0x758] sm:$0xff]
        %v7389 = vld [vmem:[#allocation32 + $0x760] sm:$0xff]
        %v7390 = vld [vmem:[#allocation32 + $0x768] sm:$0xff]
        %v7391 = vld [vmem:[#allocation32 + $0x770] sm:$0xff]
        %v7392 = vld [vmem:[#allocation32 + $0x778] sm:$0xff]
        %v7393 = vld [vmem:[#allocation32 + $0x780] sm:$0xff]
        %v7394 = vld [vmem:[#allocation32 + $0x788] sm:$0xff]
        %v7395 = vld [vmem:[#allocation32 + $0x790] sm:$0xff]
        %v7396 = vld [vmem:[#allocation32 + $0x798] sm:$0xff]
        %v7397 = vld [vmem:[#allocation32 + $0x7a0] sm:$0xff]
        %v7398 = vld [vmem:[#allocation32 + $0x7a8] sm:$0xff]
        %v7399 = vld [vmem:[#allocation32 + $0x7b0] sm:$0xff]
        %v7400 = vld [vmem:[#allocation32 + $0x7b8] sm:$0xff]
        %v7401 = vld [vmem:[#allocation32 + $0x7c0] sm:$0xff]
        %v7402 = vld [vmem:[#allocation32 + $0x7c8] sm:$0xff]
        %v7403 = vld [vmem:[#allocation32 + $0x7d0] sm:$0xff]
        %v7404 = vld [vmem:[#allocation32 + $0x7d8] sm:$0xff]
        %v7405 = vld [vmem:[#allocation32 + $0x7e0] sm:$0xff]
        %v7406 = vld [vmem:[#allocation32 + $0x7e8] sm:$0xff]
        %v7407 = vld [vmem:[#allocation32 + $0x7f0] sm:$0xff]
        %v7408 = vld [vmem:[#allocation32 + $0x7f8] sm:$0xff]
        %v7409 = vld [vmem:[#allocation34] sm:$0xf]
        %v7666 = vunpack.c.l.b16 %v7153
        %v7667 = vunpack.c.h.b16 %v7153
        %v7668 = vunpack.c.l.b16 %v7154
        %v7669 = vunpack.c.h.b16 %v7154
        %v7670 = vunpack.c.l.b16 %v7155
        %v7671 = vunpack.c.h.b16 %v7155
        %v7672 = vunpack.c.l.b16 %v7156
        %v7673 = vunpack.c.h.b16 %v7156
        %v7674 = vunpack.c.l.b16 %v7157
        %v7675 = vunpack.c.h.b16 %v7157
        %v7676 = vunpack.c.l.b16 %v7158
        %v7677 = vunpack.c.h.b16 %v7158
        %v7678 = vunpack.c.l.b16 %v7159
        %v7679 = vunpack.c.h.b16 %v7159
        %v7680 = vunpack.c.l.b16 %v7160
        %v7681 = vunpack.c.h.b16 %v7160
        %v7682 = vunpack.c.l.b16 %v7161
        %v7683 = vunpack.c.h.b16 %v7161
        %v7684 = vunpack.c.l.b16 %v7162
        %v7685 = vunpack.c.h.b16 %v7162
        %v7686 = vunpack.c.l.b16 %v7163
        %v7687 = vunpack.c.h.b16 %v7163
        %v7688 = vunpack.c.l.b16 %v7164
        %v7689 = vunpack.c.h.b16 %v7164
        %v7690 = vunpack.c.l.b16 %v7165
        %v7691 = vunpack.c.h.b16 %v7165
        %v7692 = vunpack.c.l.b16 %v7166
        %v7693 = vunpack.c.h.b16 %v7166
        %v7694 = vunpack.c.l.b16 %v7167
        %v7695 = vunpack.c.h.b16 %v7167
        %v7696 = vunpack.c.l.b16 %v7168
        %v7697 = vunpack.c.h.b16 %v7168
        %v7698 = vunpack.c.l.b16 %v7169
        %v7699 = vunpack.c.h.b16 %v7169
        %v7700 = vunpack.c.l.b16 %v7170
        %v7701 = vunpack.c.h.b16 %v7170
        %v7702 = vunpack.c.l.b16 %v7171
        %v7703 = vunpack.c.h.b16 %v7171
        %v7704 = vunpack.c.l.b16 %v7172
        %v7705 = vunpack.c.h.b16 %v7172
        %v7706 = vunpack.c.l.b16 %v7173
        %v7707 = vunpack.c.h.b16 %v7173
        %v7708 = vunpack.c.l.b16 %v7174
        %v7709 = vunpack.c.h.b16 %v7174
        %v7710 = vunpack.c.l.b16 %v7175
        %v7711 = vunpack.c.h.b16 %v7175
        %v7712 = vunpack.c.l.b16 %v7176
        %v7713 = vunpack.c.h.b16 %v7176
        %v7714 = vunpack.c.l.b16 %v7177
        %v7715 = vunpack.c.h.b16 %v7177
        %v7716 = vunpack.c.l.b16 %v7178
        %v7717 = vunpack.c.h.b16 %v7178
        %v7718 = vunpack.c.l.b16 %v7179
        %v7719 = vunpack.c.h.b16 %v7179
        %v7720 = vunpack.c.l.b16 %v7180
        %v7721 = vunpack.c.h.b16 %v7180
        %v7722 = vunpack.c.l.b16 %v7181
        %v7723 = vunpack.c.h.b16 %v7181
        %v7724 = vunpack.c.l.b16 %v7182
        %v7725 = vunpack.c.h.b16 %v7182
        %v7726 = vunpack.c.l.b16 %v7183
        %v7727 = vunpack.c.h.b16 %v7183
        %v7728 = vunpack.c.l.b16 %v7184
        %v7729 = vunpack.c.h.b16 %v7184
        %v7730 = vunpack.c.l.b16 %v7185
        %v7731 = vunpack.c.h.b16 %v7185
        %v7732 = vunpack.c.l.b16 %v7186
        %v7733 = vunpack.c.h.b16 %v7186
        %v7734 = vunpack.c.l.b16 %v7187
        %v7735 = vunpack.c.h.b16 %v7187
        %v7736 = vunpack.c.l.b16 %v7188
        %v7737 = vunpack.c.h.b16 %v7188
        %v7738 = vunpack.c.l.b16 %v7189
        %v7739 = vunpack.c.h.b16 %v7189
        %v7740 = vunpack.c.l.b16 %v7190
        %v7741 = vunpack.c.h.b16 %v7190
        %v7742 = vunpack.c.l.b16 %v7191
        %v7743 = vunpack.c.h.b16 %v7191
        %v7744 = vunpack.c.l.b16 %v7192
        %v7745 = vunpack.c.h.b16 %v7192
        %v7746 = vunpack.c.l.b16 %v7193
        %v7747 = vunpack.c.h.b16 %v7193
        %v7748 = vunpack.c.l.b16 %v7194
        %v7749 = vunpack.c.h.b16 %v7194
        %v7750 = vunpack.c.l.b16 %v7195
        %v7751 = vunpack.c.h.b16 %v7195
        %v7752 = vunpack.c.l.b16 %v7196
        %v7753 = vunpack.c.h.b16 %v7196
        %v7754 = vunpack.c.l.b16 %v7197
        %v7755 = vunpack.c.h.b16 %v7197
        %v7756 = vunpack.c.l.b16 %v7198
        %v7757 = vunpack.c.h.b16 %v7198
        %v7758 = vunpack.c.l.b16 %v7199
        %v7759 = vunpack.c.h.b16 %v7199
        %v7760 = vunpack.c.l.b16 %v7200
        %v7761 = vunpack.c.h.b16 %v7200
        %v7762 = vunpack.c.l.b16 %v7201
        %v7763 = vunpack.c.h.b16 %v7201
        %v7764 = vunpack.c.l.b16 %v7202
        %v7765 = vunpack.c.h.b16 %v7202
        %v7766 = vunpack.c.l.b16 %v7203
        %v7767 = vunpack.c.h.b16 %v7203
        %v7768 = vunpack.c.l.b16 %v7204
        %v7769 = vunpack.c.h.b16 %v7204
        %v7770 = vunpack.c.l.b16 %v7205
        %v7771 = vunpack.c.h.b16 %v7205
        %v7772 = vunpack.c.l.b16 %v7206
        %v7773 = vunpack.c.h.b16 %v7206
        %v7774 = vunpack.c.l.b16 %v7207
        %v7775 = vunpack.c.h.b16 %v7207
        %v7776 = vunpack.c.l.b16 %v7208
        %v7777 = vunpack.c.h.b16 %v7208
        %v7778 = vunpack.c.l.b16 %v7209
        %v7779 = vunpack.c.h.b16 %v7209
        %v7780 = vunpack.c.l.b16 %v7210
        %v7781 = vunpack.c.h.b16 %v7210
        %v7782 = vunpack.c.l.b16 %v7211
        %v7783 = vunpack.c.h.b16 %v7211
        %v7784 = vunpack.c.l.b16 %v7212
        %v7785 = vunpack.c.h.b16 %v7212
        %v7786 = vunpack.c.l.b16 %v7213
        %v7787 = vunpack.c.h.b16 %v7213
        %v7788 = vunpack.c.l.b16 %v7214
        %v7789 = vunpack.c.h.b16 %v7214
        %v7790 = vunpack.c.l.b16 %v7215
        %v7791 = vunpack.c.h.b16 %v7215
        %v7792 = vunpack.c.l.b16 %v7216
        %v7793 = vunpack.c.h.b16 %v7216
        %v7794 = vunpack.c.l.b16 %v7217
        %v7795 = vunpack.c.h.b16 %v7217
        %v7796 = vunpack.c.l.b16 %v7218
        %v7797 = vunpack.c.h.b16 %v7218
        %v7798 = vunpack.c.l.b16 %v7219
        %v7799 = vunpack.c.h.b16 %v7219
        %v7800 = vunpack.c.l.b16 %v7220
        %v7801 = vunpack.c.h.b16 %v7220
        %v7802 = vunpack.c.l.b16 %v7221
        %v7803 = vunpack.c.h.b16 %v7221
        %v7804 = vunpack.c.l.b16 %v7222
        %v7805 = vunpack.c.h.b16 %v7222
        %v7806 = vunpack.c.l.b16 %v7223
        %v7807 = vunpack.c.h.b16 %v7223
        %v7808 = vunpack.c.l.b16 %v7224
        %v7809 = vunpack.c.h.b16 %v7224
        %v7810 = vunpack.c.l.b16 %v7225
        %v7811 = vunpack.c.h.b16 %v7225
        %v7812 = vunpack.c.l.b16 %v7226
        %v7813 = vunpack.c.h.b16 %v7226
        %v7814 = vunpack.c.l.b16 %v7227
        %v7815 = vunpack.c.h.b16 %v7227
        %v7816 = vunpack.c.l.b16 %v7228
        %v7817 = vunpack.c.h.b16 %v7228
        %v7818 = vunpack.c.l.b16 %v7229
        %v7819 = vunpack.c.h.b16 %v7229
        %v7820 = vunpack.c.l.b16 %v7230
        %v7821 = vunpack.c.h.b16 %v7230
        %v7822 = vunpack.c.l.b16 %v7231
        %v7823 = vunpack.c.h.b16 %v7231
        %v7824 = vunpack.c.l.b16 %v7232
        %v7825 = vunpack.c.h.b16 %v7232
        %v7826 = vunpack.c.l.b16 %v7233
        %v7827 = vunpack.c.h.b16 %v7233
        %v7828 = vunpack.c.l.b16 %v7234
        %v7829 = vunpack.c.h.b16 %v7234
        %v7830 = vunpack.c.l.b16 %v7235
        %v7831 = vunpack.c.h.b16 %v7235
        %v7832 = vunpack.c.l.b16 %v7236
        %v7833 = vunpack.c.h.b16 %v7236
        %v7834 = vunpack.c.l.b16 %v7237
        %v7835 = vunpack.c.h.b16 %v7237
        %v7836 = vunpack.c.l.b16 %v7238
        %v7837 = vunpack.c.h.b16 %v7238
        %v7838 = vunpack.c.l.b16 %v7239
        %v7839 = vunpack.c.h.b16 %v7239
        %v7840 = vunpack.c.l.b16 %v7240
        %v7841 = vunpack.c.h.b16 %v7240
        %v7842 = vunpack.c.l.b16 %v7241
        %v7843 = vunpack.c.h.b16 %v7241
        %v7844 = vunpack.c.l.b16 %v7242
        %v7845 = vunpack.c.h.b16 %v7242
        %v7846 = vunpack.c.l.b16 %v7243
        %v7847 = vunpack.c.h.b16 %v7243
        %v7848 = vunpack.c.l.b16 %v7244
        %v7849 = vunpack.c.h.b16 %v7244
        %v7850 = vunpack.c.l.b16 %v7245
        %v7851 = vunpack.c.h.b16 %v7245
        %v7852 = vunpack.c.l.b16 %v7246
        %v7853 = vunpack.c.h.b16 %v7246
        %v7854 = vunpack.c.l.b16 %v7247
        %v7855 = vunpack.c.h.b16 %v7247
        %v7856 = vunpack.c.l.b16 %v7248
        %v7857 = vunpack.c.h.b16 %v7248
        %v7858 = vunpack.c.l.b16 %v7249
        %v7859 = vunpack.c.h.b16 %v7249
        %v7860 = vunpack.c.l.b16 %v7250
        %v7861 = vunpack.c.h.b16 %v7250
        %v7862 = vunpack.c.l.b16 %v7251
        %v7863 = vunpack.c.h.b16 %v7251
        %v7864 = vunpack.c.l.b16 %v7252
        %v7865 = vunpack.c.h.b16 %v7252
        %v7866 = vunpack.c.l.b16 %v7253
        %v7867 = vunpack.c.h.b16 %v7253
        %v7868 = vunpack.c.l.b16 %v7254
        %v7869 = vunpack.c.h.b16 %v7254
        %v7870 = vunpack.c.l.b16 %v7255
        %v7871 = vunpack.c.h.b16 %v7255
        %v7872 = vunpack.c.l.b16 %v7256
        %v7873 = vunpack.c.h.b16 %v7256
        %v7874 = vunpack.c.l.b16 %v7257
        %v7875 = vunpack.c.h.b16 %v7257
        %v7876 = vunpack.c.l.b16 %v7258
        %v7877 = vunpack.c.h.b16 %v7258
        %v7878 = vunpack.c.l.b16 %v7259
        %v7879 = vunpack.c.h.b16 %v7259
        %v7880 = vunpack.c.l.b16 %v7260
        %v7881 = vunpack.c.h.b16 %v7260
        %v7882 = vunpack.c.l.b16 %v7261
        %v7883 = vunpack.c.h.b16 %v7261
        %v7884 = vunpack.c.l.b16 %v7262
        %v7885 = vunpack.c.h.b16 %v7262
        %v7886 = vunpack.c.l.b16 %v7263
        %v7887 = vunpack.c.h.b16 %v7263
        %v7888 = vunpack.c.l.b16 %v7264
        %v7889 = vunpack.c.h.b16 %v7264
        %v7890 = vunpack.c.l.b16 %v7265
        %v7891 = vunpack.c.h.b16 %v7265
        %v7892 = vunpack.c.l.b16 %v7266
        %v7893 = vunpack.c.h.b16 %v7266
        %v7894 = vunpack.c.l.b16 %v7267
        %v7895 = vunpack.c.h.b16 %v7267
        %v7896 = vunpack.c.l.b16 %v7268
        %v7897 = vunpack.c.h.b16 %v7268
        %v7898 = vunpack.c.l.b16 %v7269
        %v7899 = vunpack.c.h.b16 %v7269
        %v7900 = vunpack.c.l.b16 %v7270
        %v7901 = vunpack.c.h.b16 %v7270
        %v7902 = vunpack.c.l.b16 %v7271
        %v7903 = vunpack.c.h.b16 %v7271
        %v7904 = vunpack.c.l.b16 %v7272
        %v7905 = vunpack.c.h.b16 %v7272
        %v7906 = vunpack.c.l.b16 %v7273
        %v7907 = vunpack.c.h.b16 %v7273
        %v7908 = vunpack.c.l.b16 %v7274
        %v7909 = vunpack.c.h.b16 %v7274
        %v7910 = vunpack.c.l.b16 %v7275
        %v7911 = vunpack.c.h.b16 %v7275
        %v7912 = vunpack.c.l.b16 %v7276
        %v7913 = vunpack.c.h.b16 %v7276
        %v7914 = vunpack.c.l.b16 %v7277
        %v7915 = vunpack.c.h.b16 %v7277
        %v7916 = vunpack.c.l.b16 %v7278
        %v7917 = vunpack.c.h.b16 %v7278
        %v7918 = vunpack.c.l.b16 %v7279
        %v7919 = vunpack.c.h.b16 %v7279
        %v7920 = vunpack.c.l.b16 %v7280
        %v7921 = vunpack.c.h.b16 %v7280
        %v7922 = vunpack.c.l.b16 %v7281
        %v7923 = vunpack.c.h.b16 %v7281
        %v7924 = vunpack.c.l.b16 %v7282
        %v7925 = vunpack.c.h.b16 %v7282
        %v7926 = vunpack.c.l.b16 %v7283
        %v7927 = vunpack.c.h.b16 %v7283
        %v7928 = vunpack.c.l.b16 %v7284
        %v7929 = vunpack.c.h.b16 %v7284
        %v7930 = vunpack.c.l.b16 %v7285
        %v7931 = vunpack.c.h.b16 %v7285
        %v7932 = vunpack.c.l.b16 %v7286
        %v7933 = vunpack.c.h.b16 %v7286
        %v7934 = vunpack.c.l.b16 %v7287
        %v7935 = vunpack.c.h.b16 %v7287
        %v7936 = vunpack.c.l.b16 %v7288
        %v7937 = vunpack.c.h.b16 %v7288
        %v7938 = vunpack.c.l.b16 %v7289
        %v7939 = vunpack.c.h.b16 %v7289
        %v7940 = vunpack.c.l.b16 %v7290
        %v7941 = vunpack.c.h.b16 %v7290
        %v7942 = vunpack.c.l.b16 %v7291
        %v7943 = vunpack.c.h.b16 %v7291
        %v7944 = vunpack.c.l.b16 %v7292
        %v7945 = vunpack.c.h.b16 %v7292
        %v7946 = vunpack.c.l.b16 %v7293
        %v7947 = vunpack.c.h.b16 %v7293
        %v7948 = vunpack.c.l.b16 %v7294
        %v7949 = vunpack.c.h.b16 %v7294
        %v7950 = vunpack.c.l.b16 %v7295
        %v7951 = vunpack.c.h.b16 %v7295
        %v7952 = vunpack.c.l.b16 %v7296
        %v7953 = vunpack.c.h.b16 %v7296
        %v7954 = vunpack.c.l.b16 %v7297
        %v7955 = vunpack.c.h.b16 %v7297
        %v7956 = vunpack.c.l.b16 %v7298
        %v7957 = vunpack.c.h.b16 %v7298
        %v7958 = vunpack.c.l.b16 %v7299
        %v7959 = vunpack.c.h.b16 %v7299
        %v7960 = vunpack.c.l.b16 %v7300
        %v7961 = vunpack.c.h.b16 %v7300
        %v7962 = vunpack.c.l.b16 %v7301
        %v7963 = vunpack.c.h.b16 %v7301
        %v7964 = vunpack.c.l.b16 %v7302
        %v7965 = vunpack.c.h.b16 %v7302
        %v7966 = vunpack.c.l.b16 %v7303
        %v7967 = vunpack.c.h.b16 %v7303
        %v7968 = vunpack.c.l.b16 %v7304
        %v7969 = vunpack.c.h.b16 %v7304
        %v7970 = vunpack.c.l.b16 %v7305
        %v7971 = vunpack.c.h.b16 %v7305
        %v7972 = vunpack.c.l.b16 %v7306
        %v7973 = vunpack.c.h.b16 %v7306
        %v7974 = vunpack.c.l.b16 %v7307
        %v7975 = vunpack.c.h.b16 %v7307
        %v7976 = vunpack.c.l.b16 %v7308
        %v7977 = vunpack.c.h.b16 %v7308
        %v7978 = vunpack.c.l.b16 %v7309
        %v7979 = vunpack.c.h.b16 %v7309
        %v7980 = vunpack.c.l.b16 %v7310
        %v7981 = vunpack.c.h.b16 %v7310
        %v7982 = vunpack.c.l.b16 %v7311
        %v7983 = vunpack.c.h.b16 %v7311
        %v7984 = vunpack.c.l.b16 %v7312
        %v7985 = vunpack.c.h.b16 %v7312
        %v7986 = vunpack.c.l.b16 %v7313
        %v7987 = vunpack.c.h.b16 %v7313
        %v7988 = vunpack.c.l.b16 %v7314
        %v7989 = vunpack.c.h.b16 %v7314
        %v7990 = vunpack.c.l.b16 %v7315
        %v7991 = vunpack.c.h.b16 %v7315
        %v7992 = vunpack.c.l.b16 %v7316
        %v7993 = vunpack.c.h.b16 %v7316
        %v7994 = vunpack.c.l.b16 %v7317
        %v7995 = vunpack.c.h.b16 %v7317
        %v7996 = vunpack.c.l.b16 %v7318
        %v7997 = vunpack.c.h.b16 %v7318
        %v7998 = vunpack.c.l.b16 %v7319
        %v7999 = vunpack.c.h.b16 %v7319
        %v8000 = vunpack.c.l.b16 %v7320
        %v8001 = vunpack.c.h.b16 %v7320
        %v8002 = vunpack.c.l.b16 %v7321
        %v8003 = vunpack.c.h.b16 %v7321
        %v8004 = vunpack.c.l.b16 %v7322
        %v8005 = vunpack.c.h.b16 %v7322
        %v8006 = vunpack.c.l.b16 %v7323
        %v8007 = vunpack.c.h.b16 %v7323
        %v8008 = vunpack.c.l.b16 %v7324
        %v8009 = vunpack.c.h.b16 %v7324
        %v8010 = vunpack.c.l.b16 %v7325
        %v8011 = vunpack.c.h.b16 %v7325
        %v8012 = vunpack.c.l.b16 %v7326
        %v8013 = vunpack.c.h.b16 %v7326
        %v8014 = vunpack.c.l.b16 %v7327
        %v8015 = vunpack.c.h.b16 %v7327
        %v8016 = vunpack.c.l.b16 %v7328
        %v8017 = vunpack.c.h.b16 %v7328
        %v8018 = vunpack.c.l.b16 %v7329
        %v8019 = vunpack.c.h.b16 %v7329
        %v8020 = vunpack.c.l.b16 %v7330
        %v8021 = vunpack.c.h.b16 %v7330
        %v8022 = vunpack.c.l.b16 %v7331
        %v8023 = vunpack.c.h.b16 %v7331
        %v8024 = vunpack.c.l.b16 %v7332
        %v8025 = vunpack.c.h.b16 %v7332
        %v8026 = vunpack.c.l.b16 %v7333
        %v8027 = vunpack.c.h.b16 %v7333
        %v8028 = vunpack.c.l.b16 %v7334
        %v8029 = vunpack.c.h.b16 %v7334
        %v8030 = vunpack.c.l.b16 %v7335
        %v8031 = vunpack.c.h.b16 %v7335
        %v8032 = vunpack.c.l.b16 %v7336
        %v8033 = vunpack.c.h.b16 %v7336
        %v8034 = vunpack.c.l.b16 %v7337
        %v8035 = vunpack.c.h.b16 %v7337
        %v8036 = vunpack.c.l.b16 %v7338
        %v8037 = vunpack.c.h.b16 %v7338
        %v8038 = vunpack.c.l.b16 %v7339
        %v8039 = vunpack.c.h.b16 %v7339
        %v8040 = vunpack.c.l.b16 %v7340
        %v8041 = vunpack.c.h.b16 %v7340
        %v8042 = vunpack.c.l.b16 %v7341
        %v8043 = vunpack.c.h.b16 %v7341
        %v8044 = vunpack.c.l.b16 %v7342
        %v8045 = vunpack.c.h.b16 %v7342
        %v8046 = vunpack.c.l.b16 %v7343
        %v8047 = vunpack.c.h.b16 %v7343
        %v8048 = vunpack.c.l.b16 %v7344
        %v8049 = vunpack.c.h.b16 %v7344
        %v8050 = vunpack.c.l.b16 %v7345
        %v8051 = vunpack.c.h.b16 %v7345
        %v8052 = vunpack.c.l.b16 %v7346
        %v8053 = vunpack.c.h.b16 %v7346
        %v8054 = vunpack.c.l.b16 %v7347
        %v8055 = vunpack.c.h.b16 %v7347
        %v8056 = vunpack.c.l.b16 %v7348
        %v8057 = vunpack.c.h.b16 %v7348
        %v8058 = vunpack.c.l.b16 %v7349
        %v8059 = vunpack.c.h.b16 %v7349
        %v8060 = vunpack.c.l.b16 %v7350
        %v8061 = vunpack.c.h.b16 %v7350
        %v8062 = vunpack.c.l.b16 %v7351
        %v8063 = vunpack.c.h.b16 %v7351
        %v8064 = vunpack.c.l.b16 %v7352
        %v8065 = vunpack.c.h.b16 %v7352
        %v8066 = vunpack.c.l.b16 %v7353
        %v8067 = vunpack.c.h.b16 %v7353
        %v8068 = vunpack.c.l.b16 %v7354
        %v8069 = vunpack.c.h.b16 %v7354
        %v8070 = vunpack.c.l.b16 %v7355
        %v8071 = vunpack.c.h.b16 %v7355
        %v8072 = vunpack.c.l.b16 %v7356
        %v8073 = vunpack.c.h.b16 %v7356
        %v8074 = vunpack.c.l.b16 %v7357
        %v8075 = vunpack.c.h.b16 %v7357
        %v8076 = vunpack.c.l.b16 %v7358
        %v8077 = vunpack.c.h.b16 %v7358
        %v8078 = vunpack.c.l.b16 %v7359
        %v8079 = vunpack.c.h.b16 %v7359
        %v8080 = vunpack.c.l.b16 %v7360
        %v8081 = vunpack.c.h.b16 %v7360
        %v8082 = vunpack.c.l.b16 %v7361
        %v8083 = vunpack.c.h.b16 %v7361
        %v8084 = vunpack.c.l.b16 %v7362
        %v8085 = vunpack.c.h.b16 %v7362
        %v8086 = vunpack.c.l.b16 %v7363
        %v8087 = vunpack.c.h.b16 %v7363
        %v8088 = vunpack.c.l.b16 %v7364
        %v8089 = vunpack.c.h.b16 %v7364
        %v8090 = vunpack.c.l.b16 %v7365
        %v8091 = vunpack.c.h.b16 %v7365
        %v8092 = vunpack.c.l.b16 %v7366
        %v8093 = vunpack.c.h.b16 %v7366
        %v8094 = vunpack.c.l.b16 %v7367
        %v8095 = vunpack.c.h.b16 %v7367
        %v8096 = vunpack.c.l.b16 %v7368
        %v8097 = vunpack.c.h.b16 %v7368
        %v8098 = vunpack.c.l.b16 %v7369
        %v8099 = vunpack.c.h.b16 %v7369
        %v8100 = vunpack.c.l.b16 %v7370
        %v8101 = vunpack.c.h.b16 %v7370
        %v8102 = vunpack.c.l.b16 %v7371
        %v8103 = vunpack.c.h.b16 %v7371
        %v8104 = vunpack.c.l.b16 %v7372
        %v8105 = vunpack.c.h.b16 %v7372
        %v8106 = vunpack.c.l.b16 %v7373
        %v8107 = vunpack.c.h.b16 %v7373
        %v8108 = vunpack.c.l.b16 %v7374
        %v8109 = vunpack.c.h.b16 %v7374
        %v8110 = vunpack.c.l.b16 %v7375
        %v8111 = vunpack.c.h.b16 %v7375
        %v8112 = vunpack.c.l.b16 %v7376
        %v8113 = vunpack.c.h.b16 %v7376
        %v8114 = vunpack.c.l.b16 %v7377
        %v8115 = vunpack.c.h.b16 %v7377
        %v8116 = vunpack.c.l.b16 %v7378
        %v8117 = vunpack.c.h.b16 %v7378
        %v8118 = vunpack.c.l.b16 %v7379
        %v8119 = vunpack.c.h.b16 %v7379
        %v8120 = vunpack.c.l.b16 %v7380
        %v8121 = vunpack.c.h.b16 %v7380
        %v8122 = vunpack.c.l.b16 %v7381
        %v8123 = vunpack.c.h.b16 %v7381
        %v8124 = vunpack.c.l.b16 %v7382
        %v8125 = vunpack.c.h.b16 %v7382
        %v8126 = vunpack.c.l.b16 %v7383
        %v8127 = vunpack.c.h.b16 %v7383
        %v8128 = vunpack.c.l.b16 %v7384
        %v8129 = vunpack.c.h.b16 %v7384
        %v8130 = vunpack.c.l.b16 %v7385
        %v8131 = vunpack.c.h.b16 %v7385
        %v8132 = vunpack.c.l.b16 %v7386
        %v8133 = vunpack.c.h.b16 %v7386
        %v8134 = vunpack.c.l.b16 %v7387
        %v8135 = vunpack.c.h.b16 %v7387
        %v8136 = vunpack.c.l.b16 %v7388
        %v8137 = vunpack.c.h.b16 %v7388
        %v8138 = vunpack.c.l.b16 %v7389
        %v8139 = vunpack.c.h.b16 %v7389
        %v8140 = vunpack.c.l.b16 %v7390
        %v8141 = vunpack.c.h.b16 %v7390
        %v8142 = vunpack.c.l.b16 %v7391
        %v8143 = vunpack.c.h.b16 %v7391
        %v8144 = vunpack.c.l.b16 %v7392
        %v8145 = vunpack.c.h.b16 %v7392
        %v8146 = vunpack.c.l.b16 %v7393
        %v8147 = vunpack.c.h.b16 %v7393
        %v8148 = vunpack.c.l.b16 %v7394
        %v8149 = vunpack.c.h.b16 %v7394
        %v8150 = vunpack.c.l.b16 %v7395
        %v8151 = vunpack.c.h.b16 %v7395
        %v8152 = vunpack.c.l.b16 %v7396
        %v8153 = vunpack.c.h.b16 %v7396
        %v8154 = vunpack.c.l.b16 %v7397
        %v8155 = vunpack.c.h.b16 %v7397
        %v8156 = vunpack.c.l.b16 %v7398
        %v8157 = vunpack.c.h.b16 %v7398
        %v8158 = vunpack.c.l.b16 %v7399
        %v8159 = vunpack.c.h.b16 %v7399
        %v8160 = vunpack.c.l.b16 %v7400
        %v8161 = vunpack.c.h.b16 %v7400
        %v8162 = vunpack.c.l.b16 %v7401
        %v8163 = vunpack.c.h.b16 %v7401
        %v8164 = vunpack.c.l.b16 %v7402
        %v8165 = vunpack.c.h.b16 %v7402
        %v8166 = vunpack.c.l.b16 %v7403
        %v8167 = vunpack.c.h.b16 %v7403
        %v8168 = vunpack.c.l.b16 %v7404
        %v8169 = vunpack.c.h.b16 %v7404
        %v8170 = vunpack.c.l.b16 %v7405
        %v8171 = vunpack.c.h.b16 %v7405
        %v8172 = vunpack.c.l.b16 %v7406
        %v8173 = vunpack.c.h.b16 %v7406
        %v8174 = vunpack.c.l.b16 %v7407
        %v8175 = vunpack.c.h.b16 %v7407
        %v8176 = vunpack.c.l.b16 %v7408
        %v8177 = vunpack.c.h.b16 %v7408
        %v8178 = vpack.c.b16 %v7670, %v7666
        %v8179 = vpack.c.b16 %v7671, %v7667
        %v8180 = vpack.c.b16 %v7672, %v7668
        %v8181 = vpack.c.b16 %v7673, %v7669
        %v8182 = vpack.c.b16 %v7678, %v7674
        %v8183 = vpack.c.b16 %v7679, %v7675
        %v8184 = vpack.c.b16 %v7680, %v7676
        %v8185 = vpack.c.b16 %v7681, %v7677
        %v8186 = vpack.c.b16 %v7686, %v7682
        %v8187 = vpack.c.b16 %v7687, %v7683
        %v8188 = vpack.c.b16 %v7688, %v7684
        %v8189 = vpack.c.b16 %v7689, %v7685
        %v8190 = vpack.c.b16 %v7694, %v7690
        %v8191 = vpack.c.b16 %v7695, %v7691
        %v8192 = vpack.c.b16 %v7696, %v7692
        %v8193 = vpack.c.b16 %v7697, %v7693
        %v8194 = vpack.c.b16 %v7702, %v7698
        %v8195 = vpack.c.b16 %v7703, %v7699
        %v8196 = vpack.c.b16 %v7704, %v7700
        %v8197 = vpack.c.b16 %v7705, %v7701
        %v8198 = vpack.c.b16 %v7710, %v7706
        %v8199 = vpack.c.b16 %v7711, %v7707
        %v8200 = vpack.c.b16 %v7712, %v7708
        %v8201 = vpack.c.b16 %v7713, %v7709
        %v8202 = vpack.c.b16 %v7718, %v7714
        %v8203 = vpack.c.b16 %v7719, %v7715
        %v8204 = vpack.c.b16 %v7720, %v7716
        %v8205 = vpack.c.b16 %v7721, %v7717
        %v8206 = vpack.c.b16 %v7726, %v7722
        %v8207 = vpack.c.b16 %v7727, %v7723
        %v8208 = vpack.c.b16 %v7728, %v7724
        %v8209 = vpack.c.b16 %v7729, %v7725
        %v8210 = vpack.c.b16 %v7734, %v7730
        %v8211 = vpack.c.b16 %v7735, %v7731
        %v8212 = vpack.c.b16 %v7736, %v7732
        %v8213 = vpack.c.b16 %v7737, %v7733
        %v8214 = vpack.c.b16 %v7742, %v7738
        %v8215 = vpack.c.b16 %v7743, %v7739
        %v8216 = vpack.c.b16 %v7744, %v7740
        %v8217 = vpack.c.b16 %v7745, %v7741
        %v8218 = vpack.c.b16 %v7750, %v7746
        %v8219 = vpack.c.b16 %v7751, %v7747
        %v8220 = vpack.c.b16 %v7752, %v7748
        %v8221 = vpack.c.b16 %v7753, %v7749
        %v8222 = vpack.c.b16 %v7758, %v7754
        %v8223 = vpack.c.b16 %v7759, %v7755
        %v8224 = vpack.c.b16 %v7760, %v7756
        %v8225 = vpack.c.b16 %v7761, %v7757
        %v8226 = vpack.c.b16 %v7766, %v7762
        %v8227 = vpack.c.b16 %v7767, %v7763
        %v8228 = vpack.c.b16 %v7768, %v7764
        %v8229 = vpack.c.b16 %v7769, %v7765
        %v8230 = vpack.c.b16 %v7774, %v7770
        %v8231 = vpack.c.b16 %v7775, %v7771
        %v8232 = vpack.c.b16 %v7776, %v7772
        %v8233 = vpack.c.b16 %v7777, %v7773
        %v8234 = vpack.c.b16 %v7782, %v7778
        %v8235 = vpack.c.b16 %v7783, %v7779
        %v8236 = vpack.c.b16 %v7784, %v7780
        %v8237 = vpack.c.b16 %v7785, %v7781
        %v8238 = vpack.c.b16 %v7790, %v7786
        %v8239 = vpack.c.b16 %v7791, %v7787
        %v8240 = vpack.c.b16 %v7792, %v7788
        %v8241 = vpack.c.b16 %v7793, %v7789
        %v8242 = vpack.c.b16 %v7798, %v7794
        %v8243 = vpack.c.b16 %v7799, %v7795
        %v8244 = vpack.c.b16 %v7800, %v7796
        %v8245 = vpack.c.b16 %v7801, %v7797
        %v8246 = vpack.c.b16 %v7806, %v7802
        %v8247 = vpack.c.b16 %v7807, %v7803
        %v8248 = vpack.c.b16 %v7808, %v7804
        %v8249 = vpack.c.b16 %v7809, %v7805
        %v8250 = vpack.c.b16 %v7814, %v7810
        %v8251 = vpack.c.b16 %v7815, %v7811
        %v8252 = vpack.c.b16 %v7816, %v7812
        %v8253 = vpack.c.b16 %v7817, %v7813
        %v8254 = vpack.c.b16 %v7822, %v7818
        %v8255 = vpack.c.b16 %v7823, %v7819
        %v8256 = vpack.c.b16 %v7824, %v7820
        %v8257 = vpack.c.b16 %v7825, %v7821
        %v8258 = vpack.c.b16 %v7830, %v7826
        %v8259 = vpack.c.b16 %v7831, %v7827
        %v8260 = vpack.c.b16 %v7832, %v7828
        %v8261 = vpack.c.b16 %v7833, %v7829
        %v8262 = vpack.c.b16 %v7838, %v7834
        %v8263 = vpack.c.b16 %v7839, %v7835
        %v8264 = vpack.c.b16 %v7840, %v7836
        %v8265 = vpack.c.b16 %v7841, %v7837
        %v8266 = vpack.c.b16 %v7846, %v7842
        %v8267 = vpack.c.b16 %v7847, %v7843
        %v8268 = vpack.c.b16 %v7848, %v7844
        %v8269 = vpack.c.b16 %v7849, %v7845
        %v8270 = vpack.c.b16 %v7854, %v7850
        %v8271 = vpack.c.b16 %v7855, %v7851
        %v8272 = vpack.c.b16 %v7856, %v7852
        %v8273 = vpack.c.b16 %v7857, %v7853
        %v8274 = vpack.c.b16 %v7862, %v7858
        %v8275 = vpack.c.b16 %v7863, %v7859
        %v8276 = vpack.c.b16 %v7864, %v7860
        %v8277 = vpack.c.b16 %v7865, %v7861
        %v8278 = vpack.c.b16 %v7870, %v7866
        %v8279 = vpack.c.b16 %v7871, %v7867
        %v8280 = vpack.c.b16 %v7872, %v7868
        %v8281 = vpack.c.b16 %v7873, %v7869
        %v8282 = vpack.c.b16 %v7878, %v7874
        %v8283 = vpack.c.b16 %v7879, %v7875
        %v8284 = vpack.c.b16 %v7880, %v7876
        %v8285 = vpack.c.b16 %v7881, %v7877
        %v8286 = vpack.c.b16 %v7886, %v7882
        %v8287 = vpack.c.b16 %v7887, %v7883
        %v8288 = vpack.c.b16 %v7888, %v7884
        %v8289 = vpack.c.b16 %v7889, %v7885
        %v8290 = vpack.c.b16 %v7894, %v7890
        %v8291 = vpack.c.b16 %v7895, %v7891
        %v8292 = vpack.c.b16 %v7896, %v7892
        %v8293 = vpack.c.b16 %v7897, %v7893
        %v8294 = vpack.c.b16 %v7902, %v7898
        %v8295 = vpack.c.b16 %v7903, %v7899
        %v8296 = vpack.c.b16 %v7904, %v7900
        %v8297 = vpack.c.b16 %v7905, %v7901
        %v8298 = vpack.c.b16 %v7910, %v7906
        %v8299 = vpack.c.b16 %v7911, %v7907
        %v8300 = vpack.c.b16 %v7912, %v7908
        %v8301 = vpack.c.b16 %v7913, %v7909
        %v8302 = vpack.c.b16 %v7918, %v7914
        %v8303 = vpack.c.b16 %v7919, %v7915
        %v8304 = vpack.c.b16 %v7920, %v7916
        %v8305 = vpack.c.b16 %v7921, %v7917
        %v8306 = vpack.c.b16 %v7926, %v7922
        %v8307 = vpack.c.b16 %v7927, %v7923
        %v8308 = vpack.c.b16 %v7928, %v7924
        %v8309 = vpack.c.b16 %v7929, %v7925
        %v8310 = vpack.c.b16 %v7934, %v7930
        %v8311 = vpack.c.b16 %v7935, %v7931
        %v8312 = vpack.c.b16 %v7936, %v7932
        %v8313 = vpack.c.b16 %v7937, %v7933
        %v8314 = vpack.c.b16 %v7942, %v7938
        %v8315 = vpack.c.b16 %v7943, %v7939
        %v8316 = vpack.c.b16 %v7944, %v7940
        %v8317 = vpack.c.b16 %v7945, %v7941
        %v8318 = vpack.c.b16 %v7950, %v7946
        %v8319 = vpack.c.b16 %v7951, %v7947
        %v8320 = vpack.c.b16 %v7952, %v7948
        %v8321 = vpack.c.b16 %v7953, %v7949
        %v8322 = vpack.c.b16 %v7958, %v7954
        %v8323 = vpack.c.b16 %v7959, %v7955
        %v8324 = vpack.c.b16 %v7960, %v7956
        %v8325 = vpack.c.b16 %v7961, %v7957
        %v8326 = vpack.c.b16 %v7966, %v7962
        %v8327 = vpack.c.b16 %v7967, %v7963
        %v8328 = vpack.c.b16 %v7968, %v7964
        %v8329 = vpack.c.b16 %v7969, %v7965
        %v8330 = vpack.c.b16 %v7974, %v7970
        %v8331 = vpack.c.b16 %v7975, %v7971
        %v8332 = vpack.c.b16 %v7976, %v7972
        %v8333 = vpack.c.b16 %v7977, %v7973
        %v8334 = vpack.c.b16 %v7982, %v7978
        %v8335 = vpack.c.b16 %v7983, %v7979
        %v8336 = vpack.c.b16 %v7984, %v7980
        %v8337 = vpack.c.b16 %v7985, %v7981
        %v8338 = vpack.c.b16 %v7990, %v7986
        %v8339 = vpack.c.b16 %v7991, %v7987
        %v8340 = vpack.c.b16 %v7992, %v7988
        %v8341 = vpack.c.b16 %v7993, %v7989
        %v8342 = vpack.c.b16 %v7998, %v7994
        %v8343 = vpack.c.b16 %v7999, %v7995
        %v8344 = vpack.c.b16 %v8000, %v7996
        %v8345 = vpack.c.b16 %v8001, %v7997
        %v8346 = vpack.c.b16 %v8006, %v8002
        %v8347 = vpack.c.b16 %v8007, %v8003
        %v8348 = vpack.c.b16 %v8008, %v8004
        %v8349 = vpack.c.b16 %v8009, %v8005
        %v8350 = vpack.c.b16 %v8014, %v8010
        %v8351 = vpack.c.b16 %v8015, %v8011
        %v8352 = vpack.c.b16 %v8016, %v8012
        %v8353 = vpack.c.b16 %v8017, %v8013
        %v8354 = vpack.c.b16 %v8022, %v8018
        %v8355 = vpack.c.b16 %v8023, %v8019
        %v8356 = vpack.c.b16 %v8024, %v8020
        %v8357 = vpack.c.b16 %v8025, %v8021
        %v8358 = vpack.c.b16 %v8030, %v8026
        %v8359 = vpack.c.b16 %v8031, %v8027
        %v8360 = vpack.c.b16 %v8032, %v8028
        %v8361 = vpack.c.b16 %v8033, %v8029
        %v8362 = vpack.c.b16 %v8038, %v8034
        %v8363 = vpack.c.b16 %v8039, %v8035
        %v8364 = vpack.c.b16 %v8040, %v8036
        %v8365 = vpack.c.b16 %v8041, %v8037
        %v8366 = vpack.c.b16 %v8046, %v8042
        %v8367 = vpack.c.b16 %v8047, %v8043
        %v8368 = vpack.c.b16 %v8048, %v8044
        %v8369 = vpack.c.b16 %v8049, %v8045
        %v8370 = vpack.c.b16 %v8054, %v8050
        %v8371 = vpack.c.b16 %v8055, %v8051
        %v8372 = vpack.c.b16 %v8056, %v8052
        %v8373 = vpack.c.b16 %v8057, %v8053
        %v8374 = vpack.c.b16 %v8062, %v8058
        %v8375 = vpack.c.b16 %v8063, %v8059
        %v8376 = vpack.c.b16 %v8064, %v8060
        %v8377 = vpack.c.b16 %v8065, %v8061
        %v8378 = vpack.c.b16 %v8070, %v8066
        %v8379 = vpack.c.b16 %v8071, %v8067
        %v8380 = vpack.c.b16 %v8072, %v8068
        %v8381 = vpack.c.b16 %v8073, %v8069
        %v8382 = vpack.c.b16 %v8078, %v8074
        %v8383 = vpack.c.b16 %v8079, %v8075
        %v8384 = vpack.c.b16 %v8080, %v8076
        %v8385 = vpack.c.b16 %v8081, %v8077
        %v8386 = vpack.c.b16 %v8086, %v8082
        %v8387 = vpack.c.b16 %v8087, %v8083
        %v8388 = vpack.c.b16 %v8088, %v8084
        %v8389 = vpack.c.b16 %v8089, %v8085
        %v8390 = vpack.c.b16 %v8094, %v8090
        %v8391 = vpack.c.b16 %v8095, %v8091
        %v8392 = vpack.c.b16 %v8096, %v8092
        %v8393 = vpack.c.b16 %v8097, %v8093
        %v8394 = vpack.c.b16 %v8102, %v8098
        %v8395 = vpack.c.b16 %v8103, %v8099
        %v8396 = vpack.c.b16 %v8104, %v8100
        %v8397 = vpack.c.b16 %v8105, %v8101
        %v8398 = vpack.c.b16 %v8110, %v8106
        %v8399 = vpack.c.b16 %v8111, %v8107
        %v8400 = vpack.c.b16 %v8112, %v8108
        %v8401 = vpack.c.b16 %v8113, %v8109
        %v8402 = vpack.c.b16 %v8118, %v8114
        %v8403 = vpack.c.b16 %v8119, %v8115
        %v8404 = vpack.c.b16 %v8120, %v8116
        %v8405 = vpack.c.b16 %v8121, %v8117
        %v8406 = vpack.c.b16 %v8126, %v8122
        %v8407 = vpack.c.b16 %v8127, %v8123
        %v8408 = vpack.c.b16 %v8128, %v8124
        %v8409 = vpack.c.b16 %v8129, %v8125
        %v8410 = vpack.c.b16 %v8134, %v8130
        %v8411 = vpack.c.b16 %v8135, %v8131
        %v8412 = vpack.c.b16 %v8136, %v8132
        %v8413 = vpack.c.b16 %v8137, %v8133
        %v8414 = vpack.c.b16 %v8142, %v8138
        %v8415 = vpack.c.b16 %v8143, %v8139
        %v8416 = vpack.c.b16 %v8144, %v8140
        %v8417 = vpack.c.b16 %v8145, %v8141
        %v8418 = vpack.c.b16 %v8150, %v8146
        %v8419 = vpack.c.b16 %v8151, %v8147
        %v8420 = vpack.c.b16 %v8152, %v8148
        %v8421 = vpack.c.b16 %v8153, %v8149
        %v8422 = vpack.c.b16 %v8158, %v8154
        %v8423 = vpack.c.b16 %v8159, %v8155
        %v8424 = vpack.c.b16 %v8160, %v8156
        %v8425 = vpack.c.b16 %v8161, %v8157
        %v8426 = vpack.c.b16 %v8166, %v8162
        %v8427 = vpack.c.b16 %v8167, %v8163
        %v8428 = vpack.c.b16 %v8168, %v8164
        %v8429 = vpack.c.b16 %v8169, %v8165
        %v8430 = vpack.c.b16 %v8174, %v8170
        %v8431 = vpack.c.b16 %v8175, %v8171
        %v8432 = vpack.c.b16 %v8176, %v8172
        %v8433 = vpack.c.b16 %v8177, %v8173
        %v8691 = vperm.slane %v7409, 0
        %v8692 = vperm.slane %v7409, 1
        %v8693 = vperm.slane %v7409, 2
        %v8694 = vperm.slane %v7409, 3
        %8699 = vmatpush.bf16.msra.mxu0 %v8206
        %8700 = vmatpush.bf16.msra.mxu0 %v8202
        %8701 = vmatpush.bf16.msra.mxu0 %v8198
        %8702 = vmatpush.bf16.msra.mxu0 %v8194
        %8703 = vmatpush.bf16.msra.mxu0 %v8190
        %8704 = vmatpush.bf16.msra.mxu0 %v8186
        %8705 = vmatpush.bf16.msra.mxu0 %v8182
        %8706 = vmatpush.bf16.msra.mxu0 %v8178
        %8707 = vmatmul.bf16.gmra.mxu0 %v7145
        %v8708 = vpop.f32.mrf.mxu0
        %v8709 = vadd.f32 %v8691, %v8708
        %v8710 = vpop.f32.mrf.mxu0
        %8711 = vdwg.mxu0
        %8712 = vmatpush.bf16.msra.mxu0 %v8238
        %8713 = vmatpush.bf16.msra.mxu0 %v8234
        %8714 = vmatpush.bf16.msra.mxu0 %v8230
        %8715 = vmatpush.bf16.msra.mxu0 %v8226
        %8716 = vmatpush.bf16.msra.mxu0 %v8222
        %8717 = vmatpush.bf16.msra.mxu0 %v8218
        %8718 = vmatpush.bf16.msra.mxu0 %v8214
        %8719 = vmatpush.bf16.msra.mxu0 %v8210
        %8720 = vmatmul.bf16.gmra.mxu0 %v7146
        %v8721 = vpop.f32.mrf.mxu0
        %v8722 = vadd.f32 %v8709, %v8721
        %v8723 = vpop.f32.mrf.mxu0
        %8724 = vdwg.mxu0
        %8725 = vmatpush.bf16.msra.mxu0 %v8270
        %8726 = vmatpush.bf16.msra.mxu0 %v8266
        %8727 = vmatpush.bf16.msra.mxu0 %v8262
        %8728 = vmatpush.bf16.msra.mxu0 %v8258
        %8729 = vmatpush.bf16.msra.mxu0 %v8254
        %8730 = vmatpush.bf16.msra.mxu0 %v8250
        %8731 = vmatpush.bf16.msra.mxu0 %v8246
        %8732 = vmatpush.bf16.msra.mxu0 %v8242
        %8733 = vmatmul.bf16.gmra.mxu0 %v7147
        %v8734 = vpop.f32.mrf.mxu0
        %v8735 = vadd.f32 %v8722, %v8734
        %v8736 = vpop.f32.mrf.mxu0
        %8737 = vdwg.mxu0
        %8738 = vmatpush.bf16.msra.mxu0 %v8302
        %8739 = vmatpush.bf16.msra.mxu0 %v8298
        %8740 = vmatpush.bf16.msra.mxu0 %v8294
        %8741 = vmatpush.bf16.msra.mxu0 %v8290
        %8742 = vmatpush.bf16.msra.mxu0 %v8286
        %8743 = vmatpush.bf16.msra.mxu0 %v8282
        %8744 = vmatpush.bf16.msra.mxu0 %v8278
        %8745 = vmatpush.bf16.msra.mxu0 %v8274
        %8746 = vmatmul.bf16.gmra.mxu0 %v7148
        %v8747 = vpop.f32.mrf.mxu0
        %v8748 = vadd.f32 %v8735, %v8747
        %v8749 = vpop.f32.mrf.mxu0
        %8750 = vdwg.mxu0
        %8751 = vmatpush.bf16.msra.mxu0 %v8334
        %8752 = vmatpush.bf16.msra.mxu0 %v8330
        %8753 = vmatpush.bf16.msra.mxu0 %v8326
        %8754 = vmatpush.bf16.msra.mxu0 %v8322
        %8755 = vmatpush.bf16.msra.mxu0 %v8318
        %8756 = vmatpush.bf16.msra.mxu0 %v8314
        %8757 = vmatpush.bf16.msra.mxu0 %v8310
        %8758 = vmatpush.bf16.msra.mxu0 %v8306
        %8759 = vmatmul.bf16.gmra.mxu0 %v7149
        %v8760 = vpop.f32.mrf.mxu0
        %v8761 = vadd.f32 %v8748, %v8760
        %v8762 = vpop.f32.mrf.mxu0
        %8763 = vdwg.mxu0
        %8764 = vmatpush.bf16.msra.mxu0 %v8366
        %8765 = vmatpush.bf16.msra.mxu0 %v8362
        %8766 = vmatpush.bf16.msra.mxu0 %v8358
        %8767 = vmatpush.bf16.msra.mxu0 %v8354
        %8768 = vmatpush.bf16.msra.mxu0 %v8350
        %8769 = vmatpush.bf16.msra.mxu0 %v8346
        %8770 = vmatpush.bf16.msra.mxu0 %v8342
        %8771 = vmatpush.bf16.msra.mxu0 %v8338
        %8772 = vmatmul.bf16.gmra.mxu0 %v7150
        %v8773 = vpop.f32.mrf.mxu0
        %v8774 = vadd.f32 %v8761, %v8773
        %v8775 = vpop.f32.mrf.mxu0
        %8776 = vdwg.mxu0
        %8777 = vmatpush.bf16.msra.mxu0 %v8398
        %8778 = vmatpush.bf16.msra.mxu0 %v8394
        %8779 = vmatpush.bf16.msra.mxu0 %v8390
        %8780 = vmatpush.bf16.msra.mxu0 %v8386
        %8781 = vmatpush.bf16.msra.mxu0 %v8382
        %8782 = vmatpush.bf16.msra.mxu0 %v8378
        %8783 = vmatpush.bf16.msra.mxu0 %v8374
        %8784 = vmatpush.bf16.msra.mxu0 %v8370
        %8785 = vmatmul.bf16.gmra.mxu0 %v7151
        %v8786 = vpop.f32.mrf.mxu0
        %v8787 = vadd.f32 %v8774, %v8786
        %v8788 = vpop.f32.mrf.mxu0
        %8789 = vdwg.mxu0
        %8790 = vmatpush.bf16.msra.mxu0 %v8430
        %8791 = vmatpush.bf16.msra.mxu0 %v8426
        %8792 = vmatpush.bf16.msra.mxu0 %v8422
        %8793 = vmatpush.bf16.msra.mxu0 %v8418
        %8794 = vmatpush.bf16.msra.mxu0 %v8414
        %8795 = vmatpush.bf16.msra.mxu0 %v8410
        %8796 = vmatpush.bf16.msra.mxu0 %v8406
        %8797 = vmatpush.bf16.msra.mxu0 %v8402
        %8798 = vmatmul.bf16.gmra.mxu0 %v7152
        %v8799 = vpop.f32.mrf.mxu0
        %v8800 = vadd.f32 %v8787, %v8799
        %v8801 = vpop.f32.mrf.mxu0
        %8802 = vdwg.mxu0
        %8803 = vmatpush.bf16.msra.mxu0 %v8207
        %8804 = vmatpush.bf16.msra.mxu0 %v8203
        %8805 = vmatpush.bf16.msra.mxu0 %v8199
        %8806 = vmatpush.bf16.msra.mxu0 %v8195
        %8807 = vmatpush.bf16.msra.mxu0 %v8191
        %8808 = vmatpush.bf16.msra.mxu0 %v8187
        %8809 = vmatpush.bf16.msra.mxu0 %v8183
        %8810 = vmatpush.bf16.msra.mxu0 %v8179
        %8811 = vmatmul.bf16.gmra.mxu0 %v7145
        %v8812 = vpop.f32.mrf.mxu0
        %v8813 = vadd.f32 %v8692, %v8812
        %v8814 = vpop.f32.mrf.mxu0
        %8815 = vdwg.mxu0
        %8816 = vmatpush.bf16.msra.mxu0 %v8239
        %8817 = vmatpush.bf16.msra.mxu0 %v8235
        %8818 = vmatpush.bf16.msra.mxu0 %v8231
        %8819 = vmatpush.bf16.msra.mxu0 %v8227
        %8820 = vmatpush.bf16.msra.mxu0 %v8223
        %8821 = vmatpush.bf16.msra.mxu0 %v8219
        %8822 = vmatpush.bf16.msra.mxu0 %v8215
        %8823 = vmatpush.bf16.msra.mxu0 %v8211
        %8824 = vmatmul.bf16.gmra.mxu0 %v7146
        %v8825 = vpop.f32.mrf.mxu0
        %v8826 = vadd.f32 %v8813, %v8825
        %v8827 = vpop.f32.mrf.mxu0
        %8828 = vdwg.mxu0
        %8829 = vmatpush.bf16.msra.mxu0 %v8271
        %8830 = vmatpush.bf16.msra.mxu0 %v8267
        %8831 = vmatpush.bf16.msra.mxu0 %v8263
        %8832 = vmatpush.bf16.msra.mxu0 %v8259
        %8833 = vmatpush.bf16.msra.mxu0 %v8255
        %8834 = vmatpush.bf16.msra.mxu0 %v8251
        %8835 = vmatpush.bf16.msra.mxu0 %v8247
        %8836 = vmatpush.bf16.msra.mxu0 %v8243
        %8837 = vmatmul.bf16.gmra.mxu0 %v7147
        %v8838 = vpop.f32.mrf.mxu0
        %v8839 = vadd.f32 %v8826, %v8838
        %v8840 = vpop.f32.mrf.mxu0
        %8841 = vdwg.mxu0
        %8842 = vmatpush.bf16.msra.mxu0 %v8303
        %8843 = vmatpush.bf16.msra.mxu0 %v8299
        %8844 = vmatpush.bf16.msra.mxu0 %v8295
        %8845 = vmatpush.bf16.msra.mxu0 %v8291
        %8846 = vmatpush.bf16.msra.mxu0 %v8287
        %8847 = vmatpush.bf16.msra.mxu0 %v8283
        %8848 = vmatpush.bf16.msra.mxu0 %v8279
        %8849 = vmatpush.bf16.msra.mxu0 %v8275
        %8850 = vmatmul.bf16.gmra.mxu0 %v7148
        %v8851 = vpop.f32.mrf.mxu0
        %v8852 = vadd.f32 %v8839, %v8851
        %v8853 = vpop.f32.mrf.mxu0
        %8854 = vdwg.mxu0
        %8855 = vmatpush.bf16.msra.mxu0 %v8335
        %8856 = vmatpush.bf16.msra.mxu0 %v8331
        %8857 = vmatpush.bf16.msra.mxu0 %v8327
        %8858 = vmatpush.bf16.msra.mxu0 %v8323
        %8859 = vmatpush.bf16.msra.mxu0 %v8319
        %8860 = vmatpush.bf16.msra.mxu0 %v8315
        %8861 = vmatpush.bf16.msra.mxu0 %v8311
        %8862 = vmatpush.bf16.msra.mxu0 %v8307
        %8863 = vmatmul.bf16.gmra.mxu0 %v7149
        %v8864 = vpop.f32.mrf.mxu0
        %v8865 = vadd.f32 %v8852, %v8864
        %v8866 = vpop.f32.mrf.mxu0
        %8867 = vdwg.mxu0
        %8868 = vmatpush.bf16.msra.mxu0 %v8367
        %8869 = vmatpush.bf16.msra.mxu0 %v8363
        %8870 = vmatpush.bf16.msra.mxu0 %v8359
        %8871 = vmatpush.bf16.msra.mxu0 %v8355
        %8872 = vmatpush.bf16.msra.mxu0 %v8351
        %8873 = vmatpush.bf16.msra.mxu0 %v8347
        %8874 = vmatpush.bf16.msra.mxu0 %v8343
        %8875 = vmatpush.bf16.msra.mxu0 %v8339
        %8876 = vmatmul.bf16.gmra.mxu0 %v7150
        %v8877 = vpop.f32.mrf.mxu0
        %v8878 = vadd.f32 %v8865, %v8877
        %v8879 = vpop.f32.mrf.mxu0
        %8880 = vdwg.mxu0
        %8881 = vmatpush.bf16.msra.mxu0 %v8399
        %8882 = vmatpush.bf16.msra.mxu0 %v8395
        %8883 = vmatpush.bf16.msra.mxu0 %v8391
        %8884 = vmatpush.bf16.msra.mxu0 %v8387
        %8885 = vmatpush.bf16.msra.mxu0 %v8383
        %8886 = vmatpush.bf16.msra.mxu0 %v8379
        %8887 = vmatpush.bf16.msra.mxu0 %v8375
        %8888 = vmatpush.bf16.msra.mxu0 %v8371
        %8889 = vmatmul.bf16.gmra.mxu0 %v7151
        %v8890 = vpop.f32.mrf.mxu0
        %v8891 = vadd.f32 %v8878, %v8890
        %v8892 = vpop.f32.mrf.mxu0
        %8893 = vdwg.mxu0
        %8894 = vmatpush.bf16.msra.mxu0 %v8431
        %8895 = vmatpush.bf16.msra.mxu0 %v8427
        %8896 = vmatpush.bf16.msra.mxu0 %v8423
        %8897 = vmatpush.bf16.msra.mxu0 %v8419
        %8898 = vmatpush.bf16.msra.mxu0 %v8415
        %8899 = vmatpush.bf16.msra.mxu0 %v8411
        %8900 = vmatpush.bf16.msra.mxu0 %v8407
        %8901 = vmatpush.bf16.msra.mxu0 %v8403
        %8902 = vmatmul.bf16.gmra.mxu0 %v7152
        %v8903 = vpop.f32.mrf.mxu0
        %v8904 = vadd.f32 %v8891, %v8903
        %v8905 = vpop.f32.mrf.mxu0
        %8906 = vdwg.mxu0
        %8907 = vmatpush.bf16.msra.mxu0 %v8208
        %8908 = vmatpush.bf16.msra.mxu0 %v8204
        %8909 = vmatpush.bf16.msra.mxu0 %v8200
        %8910 = vmatpush.bf16.msra.mxu0 %v8196
        %8911 = vmatpush.bf16.msra.mxu0 %v8192
        %8912 = vmatpush.bf16.msra.mxu0 %v8188
        %8913 = vmatpush.bf16.msra.mxu0 %v8184
        %8914 = vmatpush.bf16.msra.mxu0 %v8180
        %8915 = vmatmul.bf16.gmra.mxu0 %v7145
        %v8916 = vpop.f32.mrf.mxu0
        %v8917 = vadd.f32 %v8693, %v8916
        %v8918 = vpop.f32.mrf.mxu0
        %8919 = vdwg.mxu0
        %8920 = vmatpush.bf16.msra.mxu0 %v8240
        %8921 = vmatpush.bf16.msra.mxu0 %v8236
        %8922 = vmatpush.bf16.msra.mxu0 %v8232
        %8923 = vmatpush.bf16.msra.mxu0 %v8228
        %8924 = vmatpush.bf16.msra.mxu0 %v8224
        %8925 = vmatpush.bf16.msra.mxu0 %v8220
        %8926 = vmatpush.bf16.msra.mxu0 %v8216
        %8927 = vmatpush.bf16.msra.mxu0 %v8212
        %8928 = vmatmul.bf16.gmra.mxu0 %v7146
        %v8929 = vpop.f32.mrf.mxu0
        %v8930 = vadd.f32 %v8917, %v8929
        %v8931 = vpop.f32.mrf.mxu0
        %8932 = vdwg.mxu0
        %8933 = vmatpush.bf16.msra.mxu0 %v8272
        %8934 = vmatpush.bf16.msra.mxu0 %v8268
        %8935 = vmatpush.bf16.msra.mxu0 %v8264
        %8936 = vmatpush.bf16.msra.mxu0 %v8260
        %8937 = vmatpush.bf16.msra.mxu0 %v8256
        %8938 = vmatpush.bf16.msra.mxu0 %v8252
        %8939 = vmatpush.bf16.msra.mxu0 %v8248
        %8940 = vmatpush.bf16.msra.mxu0 %v8244
        %8941 = vmatmul.bf16.gmra.mxu0 %v7147
        %v8942 = vpop.f32.mrf.mxu0
        %v8943 = vadd.f32 %v8930, %v8942
        %v8944 = vpop.f32.mrf.mxu0
        %8945 = vdwg.mxu0
        %8946 = vmatpush.bf16.msra.mxu0 %v8304
        %8947 = vmatpush.bf16.msra.mxu0 %v8300
        %8948 = vmatpush.bf16.msra.mxu0 %v8296
        %8949 = vmatpush.bf16.msra.mxu0 %v8292
        %8950 = vmatpush.bf16.msra.mxu0 %v8288
        %8951 = vmatpush.bf16.msra.mxu0 %v8284
        %8952 = vmatpush.bf16.msra.mxu0 %v8280
        %8953 = vmatpush.bf16.msra.mxu0 %v8276
        %8954 = vmatmul.bf16.gmra.mxu0 %v7148
        %v8955 = vpop.f32.mrf.mxu0
        %v8956 = vadd.f32 %v8943, %v8955
        %v8957 = vpop.f32.mrf.mxu0
        %8958 = vdwg.mxu0
        %8959 = vmatpush.bf16.msra.mxu0 %v8336
        %8960 = vmatpush.bf16.msra.mxu0 %v8332
        %8961 = vmatpush.bf16.msra.mxu0 %v8328
        %8962 = vmatpush.bf16.msra.mxu0 %v8324
        %8963 = vmatpush.bf16.msra.mxu0 %v8320
        %8964 = vmatpush.bf16.msra.mxu0 %v8316
        %8965 = vmatpush.bf16.msra.mxu0 %v8312
        %8966 = vmatpush.bf16.msra.mxu0 %v8308
        %8967 = vmatmul.bf16.gmra.mxu0 %v7149
        %v8968 = vpop.f32.mrf.mxu0
        %v8969 = vadd.f32 %v8956, %v8968
        %v8970 = vpop.f32.mrf.mxu0
        %8971 = vdwg.mxu0
        %8972 = vmatpush.bf16.msra.mxu0 %v8368
        %8973 = vmatpush.bf16.msra.mxu0 %v8364
        %8974 = vmatpush.bf16.msra.mxu0 %v8360
        %8975 = vmatpush.bf16.msra.mxu0 %v8356
        %8976 = vmatpush.bf16.msra.mxu0 %v8352
        %8977 = vmatpush.bf16.msra.mxu0 %v8348
        %8978 = vmatpush.bf16.msra.mxu0 %v8344
        %8979 = vmatpush.bf16.msra.mxu0 %v8340
        %8980 = vmatmul.bf16.gmra.mxu0 %v7150
        %v8981 = vpop.f32.mrf.mxu0
        %v8982 = vadd.f32 %v8969, %v8981
        %v8983 = vpop.f32.mrf.mxu0
        %8984 = vdwg.mxu0
        %8985 = vmatpush.bf16.msra.mxu0 %v8400
        %8986 = vmatpush.bf16.msra.mxu0 %v8396
        %8987 = vmatpush.bf16.msra.mxu0 %v8392
        %8988 = vmatpush.bf16.msra.mxu0 %v8388
        %8989 = vmatpush.bf16.msra.mxu0 %v8384
        %8990 = vmatpush.bf16.msra.mxu0 %v8380
        %8991 = vmatpush.bf16.msra.mxu0 %v8376
        %8992 = vmatpush.bf16.msra.mxu0 %v8372
        %8993 = vmatmul.bf16.gmra.mxu0 %v7151
        %v8994 = vpop.f32.mrf.mxu0
        %v8995 = vadd.f32 %v8982, %v8994
        %v8996 = vpop.f32.mrf.mxu0
        %8997 = vdwg.mxu0
        %8998 = vmatpush.bf16.msra.mxu0 %v8432
        %8999 = vmatpush.bf16.msra.mxu0 %v8428
        %9000 = vmatpush.bf16.msra.mxu0 %v8424
        %9001 = vmatpush.bf16.msra.mxu0 %v8420
        %9002 = vmatpush.bf16.msra.mxu0 %v8416
        %9003 = vmatpush.bf16.msra.mxu0 %v8412
        %9004 = vmatpush.bf16.msra.mxu0 %v8408
        %9005 = vmatpush.bf16.msra.mxu0 %v8404
        %9006 = vmatmul.bf16.gmra.mxu0 %v7152
        %v9007 = vpop.f32.mrf.mxu0
        %v9008 = vadd.f32 %v8995, %v9007
        %v9009 = vpop.f32.mrf.mxu0
        %9010 = vdwg.mxu0
        %9011 = vmatpush.bf16.msra.mxu0 %v8209
        %9012 = vmatpush.bf16.msra.mxu0 %v8205
        %9013 = vmatpush.bf16.msra.mxu0 %v8201
        %9014 = vmatpush.bf16.msra.mxu0 %v8197
        %9015 = vmatpush.bf16.msra.mxu0 %v8193
        %9016 = vmatpush.bf16.msra.mxu0 %v8189
        %9017 = vmatpush.bf16.msra.mxu0 %v8185
        %9018 = vmatpush.bf16.msra.mxu0 %v8181
        %9019 = vmatmul.bf16.gmra.mxu0 %v7145
        %v9020 = vpop.f32.mrf.mxu0
        %v9021 = vadd.f32 %v8694, %v9020
        %v9022 = vpop.f32.mrf.mxu0
        %9023 = vdwg.mxu0
        %9024 = vmatpush.bf16.msra.mxu0 %v8241
        %9025 = vmatpush.bf16.msra.mxu0 %v8237
        %9026 = vmatpush.bf16.msra.mxu0 %v8233
        %9027 = vmatpush.bf16.msra.mxu0 %v8229
        %9028 = vmatpush.bf16.msra.mxu0 %v8225
        %9029 = vmatpush.bf16.msra.mxu0 %v8221
        %9030 = vmatpush.bf16.msra.mxu0 %v8217
        %9031 = vmatpush.bf16.msra.mxu0 %v8213
        %9032 = vmatmul.bf16.gmra.mxu0 %v7146
        %v9033 = vpop.f32.mrf.mxu0
        %v9034 = vadd.f32 %v9021, %v9033
        %v9035 = vpop.f32.mrf.mxu0
        %9036 = vdwg.mxu0
        %9037 = vmatpush.bf16.msra.mxu0 %v8273
        %9038 = vmatpush.bf16.msra.mxu0 %v8269
        %9039 = vmatpush.bf16.msra.mxu0 %v8265
        %9040 = vmatpush.bf16.msra.mxu0 %v8261
        %9041 = vmatpush.bf16.msra.mxu0 %v8257
        %9042 = vmatpush.bf16.msra.mxu0 %v8253
        %9043 = vmatpush.bf16.msra.mxu0 %v8249
        %9044 = vmatpush.bf16.msra.mxu0 %v8245
        %9045 = vmatmul.bf16.gmra.mxu0 %v7147
        %v9046 = vpop.f32.mrf.mxu0
        %v9047 = vadd.f32 %v9034, %v9046
        %v9048 = vpop.f32.mrf.mxu0
        %9049 = vdwg.mxu0
        %9050 = vmatpush.bf16.msra.mxu0 %v8305
        %9051 = vmatpush.bf16.msra.mxu0 %v8301
        %9052 = vmatpush.bf16.msra.mxu0 %v8297
        %9053 = vmatpush.bf16.msra.mxu0 %v8293
        %9054 = vmatpush.bf16.msra.mxu0 %v8289
        %9055 = vmatpush.bf16.msra.mxu0 %v8285
        %9056 = vmatpush.bf16.msra.mxu0 %v8281
        %9057 = vmatpush.bf16.msra.mxu0 %v8277
        %9058 = vmatmul.bf16.gmra.mxu0 %v7148
        %v9059 = vpop.f32.mrf.mxu0
        %v9060 = vadd.f32 %v9047, %v9059
        %v9061 = vpop.f32.mrf.mxu0
        %9062 = vdwg.mxu0
        %9063 = vmatpush.bf16.msra.mxu0 %v8337
        %9064 = vmatpush.bf16.msra.mxu0 %v8333
        %9065 = vmatpush.bf16.msra.mxu0 %v8329
        %9066 = vmatpush.bf16.msra.mxu0 %v8325
        %9067 = vmatpush.bf16.msra.mxu0 %v8321
        %9068 = vmatpush.bf16.msra.mxu0 %v8317
        %9069 = vmatpush.bf16.msra.mxu0 %v8313
        %9070 = vmatpush.bf16.msra.mxu0 %v8309
        %9071 = vmatmul.bf16.gmra.mxu0 %v7149
        %v9072 = vpop.f32.mrf.mxu0
        %v9073 = vadd.f32 %v9060, %v9072
        %v9074 = vpop.f32.mrf.mxu0
        %9075 = vdwg.mxu0
        %9076 = vmatpush.bf16.msra.mxu0 %v8369
        %9077 = vmatpush.bf16.msra.mxu0 %v8365
        %9078 = vmatpush.bf16.msra.mxu0 %v8361
        %9079 = vmatpush.bf16.msra.mxu0 %v8357
        %9080 = vmatpush.bf16.msra.mxu0 %v8353
        %9081 = vmatpush.bf16.msra.mxu0 %v8349
        %9082 = vmatpush.bf16.msra.mxu0 %v8345
        %9083 = vmatpush.bf16.msra.mxu0 %v8341
        %9084 = vmatmul.bf16.gmra.mxu0 %v7150
        %v9085 = vpop.f32.mrf.mxu0
        %v9086 = vadd.f32 %v9073, %v9085
        %v9087 = vpop.f32.mrf.mxu0
        %9088 = vdwg.mxu0
        %9089 = vmatpush.bf16.msra.mxu0 %v8401
        %9090 = vmatpush.bf16.msra.mxu0 %v8397
        %9091 = vmatpush.bf16.msra.mxu0 %v8393
        %9092 = vmatpush.bf16.msra.mxu0 %v8389
        %9093 = vmatpush.bf16.msra.mxu0 %v8385
        %9094 = vmatpush.bf16.msra.mxu0 %v8381
        %9095 = vmatpush.bf16.msra.mxu0 %v8377
        %9096 = vmatpush.bf16.msra.mxu0 %v8373
        %9097 = vmatmul.bf16.gmra.mxu0 %v7151
        %v9098 = vpop.f32.mrf.mxu0
        %v9099 = vadd.f32 %v9086, %v9098
        %v9100 = vpop.f32.mrf.mxu0
        %9101 = vdwg.mxu0
        %9102 = vmatpush.bf16.msra.mxu0 %v8433
        %9103 = vmatpush.bf16.msra.mxu0 %v8429
        %9104 = vmatpush.bf16.msra.mxu0 %v8425
        %9105 = vmatpush.bf16.msra.mxu0 %v8421
        %9106 = vmatpush.bf16.msra.mxu0 %v8417
        %9107 = vmatpush.bf16.msra.mxu0 %v8413
        %9108 = vmatpush.bf16.msra.mxu0 %v8409
        %9109 = vmatpush.bf16.msra.mxu0 %v8405
        %9110 = vmatmul.bf16.gmra.mxu0 %v7152
        %v9111 = vpop.f32.mrf.mxu0
        %v9112 = vadd.f32 %v9099, %v9111
        %v9113 = vpop.f32.mrf.mxu0
        %9114 = vdwg.mxu0
        %vm9115 = vcmp.ge.f32.partialorder %v8800, 0.0
        %vm9116 = vcmp.ge.f32.partialorder %v8904, 0.0
        %vm9117 = vcmp.ge.f32.partialorder %v9008, 0.0
        %vm9118 = vcmp.ge.f32.partialorder %v9112, 0.0
        %v9119 = vmul.f32 %v8800, 0.01
        %v9120 = vmul.f32 %v8904, 0.01
        %v9121 = vmul.f32 %v9008, 0.01
        %v9122 = vmul.f32 %v9112, 0.01
        %v9123 = vsel %vm9115, %v8800, %v9119
        %v9124 = vsel %vm9116, %v8904, %v9120
        %v9125 = vsel %vm9117, %v9008, %v9121
        %v9126 = vsel %vm9118, %v9112, %v9122
        %v9127 = vpack.c.bf16 %v9123, %v9123
        %v9128 = vpack.c.bf16 %v9124, %v9124
        %v9129 = vpack.c.bf16 %v9125, %v9125
        %v9130 = vpack.c.bf16 %v9126, %v9126
        %v9131 = vld [vmem:[%s63] sm:$0xf]
        %v9132 = vld [vmem:[%s63 + $0x4] sm:$0xf]
        %v9133 = vld [vmem:[%s63 + $0x8] sm:$0xf]
        %v9134 = vld [vmem:[%s63 + $0xc] sm:$0xf]
        %v9135 = vld [vmem:[%s63 + $0x10] sm:$0xf]
        %v9136 = vld [vmem:[%s63 + $0x14] sm:$0xf]
        %v9137 = vld [vmem:[%s63 + $0x18] sm:$0xf]
        %v9138 = vld [vmem:[%s63 + $0x1c] sm:$0xf]
        %v9139 = vld [vmem:[%s63 + $0x20] sm:$0xf]
        %v9140 = vld [vmem:[%s63 + $0x24] sm:$0xf]
        %v9141 = vld [vmem:[%s63 + $0x28] sm:$0xf]
        %v9142 = vld [vmem:[%s63 + $0x2c] sm:$0xf]
        %v9143 = vld [vmem:[%s63 + $0x30] sm:$0xf]
        %v9144 = vld [vmem:[%s63 + $0x34] sm:$0xf]
        %v9145 = vld [vmem:[%s63 + $0x38] sm:$0xf]
        %v9146 = vld [vmem:[%s63 + $0x3c] sm:$0xf]
        %v9147 = vld [vmem:[%s63 + $0x40] sm:$0xf]
        %v9148 = vld [vmem:[%s63 + $0x44] sm:$0xf]
        %v9149 = vld [vmem:[%s63 + $0x48] sm:$0xf]
        %v9150 = vld [vmem:[%s63 + $0x4c] sm:$0xf]
        %v9151 = vld [vmem:[%s63 + $0x50] sm:$0xf]
        %v9152 = vld [vmem:[%s63 + $0x54] sm:$0xf]
        %v9153 = vld [vmem:[%s63 + $0x58] sm:$0xf]
        %v9154 = vld [vmem:[%s63 + $0x5c] sm:$0xf]
        %v9155 = vld [vmem:[%s63 + $0x60] sm:$0xf]
        %v9156 = vld [vmem:[%s63 + $0x64] sm:$0xf]
        %v9157 = vld [vmem:[%s63 + $0x68] sm:$0xf]
        %v9158 = vld [vmem:[%s63 + $0x6c] sm:$0xf]
        %v9159 = vld [vmem:[%s63 + $0x70] sm:$0xf]
        %v9160 = vld [vmem:[%s63 + $0x74] sm:$0xf]
        %v9161 = vld [vmem:[%s63 + $0x78] sm:$0xf]
        %v9162 = vld [vmem:[%s63 + $0x7c] sm:$0xf]
        %v9163 = vld [vmem:[%s63 + $0x80] sm:$0xf]
        %v9164 = vld [vmem:[%s63 + $0x84] sm:$0xf]
        %v9165 = vld [vmem:[%s63 + $0x88] sm:$0xf]
        %v9166 = vld [vmem:[%s63 + $0x8c] sm:$0xf]
        %v9167 = vld [vmem:[%s63 + $0x90] sm:$0xf]
        %v9168 = vld [vmem:[%s63 + $0x94] sm:$0xf]
        %v9169 = vld [vmem:[%s63 + $0x98] sm:$0xf]
        %v9170 = vld [vmem:[%s63 + $0x9c] sm:$0xf]
        %v9171 = vld [vmem:[%s63 + $0xa0] sm:$0xf]
        %v9172 = vld [vmem:[%s63 + $0xa4] sm:$0xf]
        %v9173 = vld [vmem:[%s63 + $0xa8] sm:$0xf]
        %v9174 = vld [vmem:[%s63 + $0xac] sm:$0xf]
        %v9175 = vld [vmem:[%s63 + $0xb0] sm:$0xf]
        %v9176 = vld [vmem:[%s63 + $0xb4] sm:$0xf]
        %v9177 = vld [vmem:[%s63 + $0xb8] sm:$0xf]
        %v9178 = vld [vmem:[%s63 + $0xbc] sm:$0xf]
        %v9179 = vld [vmem:[%s63 + $0xc0] sm:$0xf]
        %v9180 = vld [vmem:[%s63 + $0xc4] sm:$0xf]
        %v9181 = vld [vmem:[%s63 + $0xc8] sm:$0xf]
        %v9182 = vld [vmem:[%s63 + $0xcc] sm:$0xf]
        %v9183 = vld [vmem:[%s63 + $0xd0] sm:$0xf]
        %v9184 = vld [vmem:[%s63 + $0xd4] sm:$0xf]
        %v9185 = vld [vmem:[%s63 + $0xd8] sm:$0xf]
        %v9186 = vld [vmem:[%s63 + $0xdc] sm:$0xf]
        %v9187 = vld [vmem:[%s63 + $0xe0] sm:$0xf]
        %v9188 = vld [vmem:[%s63 + $0xe4] sm:$0xf]
        %v9189 = vld [vmem:[%s63 + $0xe8] sm:$0xf]
        %v9190 = vld [vmem:[%s63 + $0xec] sm:$0xf]
        %v9191 = vld [vmem:[%s63 + $0xf0] sm:$0xf]
        %v9192 = vld [vmem:[%s63 + $0xf4] sm:$0xf]
        %v9193 = vld [vmem:[%s63 + $0xf8] sm:$0xf]
        %v9194 = vld [vmem:[%s63 + $0xfc] sm:$0xf]
        %v9195 = vld [vmem:[%s65] sm:$0x1]
        %v9260 = vunpack.c.l.b16 %v9131
        %v9261 = vunpack.c.l.b16 %v9132
        %v9262 = vunpack.c.l.b16 %v9133
        %v9263 = vunpack.c.l.b16 %v9134
        %v9264 = vunpack.c.l.b16 %v9135
        %v9265 = vunpack.c.l.b16 %v9136
        %v9266 = vunpack.c.l.b16 %v9137
        %v9267 = vunpack.c.l.b16 %v9138
        %v9268 = vunpack.c.l.b16 %v9139
        %v9269 = vunpack.c.l.b16 %v9140
        %v9270 = vunpack.c.l.b16 %v9141
        %v9271 = vunpack.c.l.b16 %v9142
        %v9272 = vunpack.c.l.b16 %v9143
        %v9273 = vunpack.c.l.b16 %v9144
        %v9274 = vunpack.c.l.b16 %v9145
        %v9275 = vunpack.c.l.b16 %v9146
        %v9276 = vunpack.c.l.b16 %v9147
        %v9277 = vunpack.c.l.b16 %v9148
        %v9278 = vunpack.c.l.b16 %v9149
        %v9279 = vunpack.c.l.b16 %v9150
        %v9280 = vunpack.c.l.b16 %v9151
        %v9281 = vunpack.c.l.b16 %v9152
        %v9282 = vunpack.c.l.b16 %v9153
        %v9283 = vunpack.c.l.b16 %v9154
        %v9284 = vunpack.c.l.b16 %v9155
        %v9285 = vunpack.c.l.b16 %v9156
        %v9286 = vunpack.c.l.b16 %v9157
        %v9287 = vunpack.c.l.b16 %v9158
        %v9288 = vunpack.c.l.b16 %v9159
        %v9289 = vunpack.c.l.b16 %v9160
        %v9290 = vunpack.c.l.b16 %v9161
        %v9291 = vunpack.c.l.b16 %v9162
        %v9292 = vunpack.c.l.b16 %v9163
        %v9293 = vunpack.c.l.b16 %v9164
        %v9294 = vunpack.c.l.b16 %v9165
        %v9295 = vunpack.c.l.b16 %v9166
        %v9296 = vunpack.c.l.b16 %v9167
        %v9297 = vunpack.c.l.b16 %v9168
        %v9298 = vunpack.c.l.b16 %v9169
        %v9299 = vunpack.c.l.b16 %v9170
        %v9300 = vunpack.c.l.b16 %v9171
        %v9301 = vunpack.c.l.b16 %v9172
        %v9302 = vunpack.c.l.b16 %v9173
        %v9303 = vunpack.c.l.b16 %v9174
        %v9304 = vunpack.c.l.b16 %v9175
        %v9305 = vunpack.c.l.b16 %v9176
        %v9306 = vunpack.c.l.b16 %v9177
        %v9307 = vunpack.c.l.b16 %v9178
        %v9308 = vunpack.c.l.b16 %v9179
        %v9309 = vunpack.c.l.b16 %v9180
        %v9310 = vunpack.c.l.b16 %v9181
        %v9311 = vunpack.c.l.b16 %v9182
        %v9312 = vunpack.c.l.b16 %v9183
        %v9313 = vunpack.c.l.b16 %v9184
        %v9314 = vunpack.c.l.b16 %v9185
        %v9315 = vunpack.c.l.b16 %v9186
        %v9316 = vunpack.c.l.b16 %v9187
        %v9317 = vunpack.c.l.b16 %v9188
        %v9318 = vunpack.c.l.b16 %v9189
        %v9319 = vunpack.c.l.b16 %v9190
        %v9320 = vunpack.c.l.b16 %v9191
        %v9321 = vunpack.c.l.b16 %v9192
        %v9322 = vunpack.c.l.b16 %v9193
        %v9323 = vunpack.c.l.b16 %v9194
        %v9324 = vpack.c.b16 %v9261, %v9260
        %v9325 = vpack.c.b16 %v9263, %v9262
        %v9326 = vpack.c.b16 %v9265, %v9264
        %v9327 = vpack.c.b16 %v9267, %v9266
        %v9328 = vpack.c.b16 %v9269, %v9268
        %v9329 = vpack.c.b16 %v9271, %v9270
        %v9330 = vpack.c.b16 %v9273, %v9272
        %v9331 = vpack.c.b16 %v9275, %v9274
        %v9332 = vpack.c.b16 %v9277, %v9276
        %v9333 = vpack.c.b16 %v9279, %v9278
        %v9334 = vpack.c.b16 %v9281, %v9280
        %v9335 = vpack.c.b16 %v9283, %v9282
        %v9336 = vpack.c.b16 %v9285, %v9284
        %v9337 = vpack.c.b16 %v9287, %v9286
        %v9338 = vpack.c.b16 %v9289, %v9288
        %v9339 = vpack.c.b16 %v9291, %v9290
        %v9340 = vpack.c.b16 %v9293, %v9292
        %v9341 = vpack.c.b16 %v9295, %v9294
        %v9342 = vpack.c.b16 %v9297, %v9296
        %v9343 = vpack.c.b16 %v9299, %v9298
        %v9344 = vpack.c.b16 %v9301, %v9300
        %v9345 = vpack.c.b16 %v9303, %v9302
        %v9346 = vpack.c.b16 %v9305, %v9304
        %v9347 = vpack.c.b16 %v9307, %v9306
        %v9348 = vpack.c.b16 %v9309, %v9308
        %v9349 = vpack.c.b16 %v9311, %v9310
        %v9350 = vpack.c.b16 %v9313, %v9312
        %v9351 = vpack.c.b16 %v9315, %v9314
        %v9352 = vpack.c.b16 %v9317, %v9316
        %v9353 = vpack.c.b16 %v9319, %v9318
        %v9354 = vpack.c.b16 %v9321, %v9320
        %v9355 = vpack.c.b16 %v9323, %v9322
        %9388 = vmatpush.bf16.msra.mxu0 %v9331
        %9389 = vmatpush.bf16.msra.mxu0 %v9330
        %9390 = vmatpush.bf16.msra.mxu0 %v9329
        %9391 = vmatpush.bf16.msra.mxu0 %v9328
        %9392 = vmatpush.bf16.msra.mxu0 %v9327
        %9393 = vmatpush.bf16.msra.mxu0 %v9326
        %9394 = vmatpush.bf16.msra.mxu0 %v9325
        %9395 = vmatpush.bf16.msra.mxu0 %v9324
        %9396 = vmatmul.bf16.gmra.mxu0 %v9127
        %v9397 = vpop.f32.mrf.mxu0
        %v9398 = vadd.f32 %v9195, %v9397
        %v9399 = vpop.f32.mrf.mxu0
        %9400 = vdwg.mxu0
        %9401 = vmatpush.bf16.msra.mxu0 %v9339
        %9402 = vmatpush.bf16.msra.mxu0 %v9338
        %9403 = vmatpush.bf16.msra.mxu0 %v9337
        %9404 = vmatpush.bf16.msra.mxu0 %v9336
        %9405 = vmatpush.bf16.msra.mxu0 %v9335
        %9406 = vmatpush.bf16.msra.mxu0 %v9334
        %9407 = vmatpush.bf16.msra.mxu0 %v9333
        %9408 = vmatpush.bf16.msra.mxu0 %v9332
        %9409 = vmatmul.bf16.gmra.mxu0 %v9128
        %v9410 = vpop.f32.mrf.mxu0
        %v9411 = vadd.f32 %v9398, %v9410
        %v9412 = vpop.f32.mrf.mxu0
        %9413 = vdwg.mxu0
        %9414 = vmatpush.bf16.msra.mxu0 %v9347
        %9415 = vmatpush.bf16.msra.mxu0 %v9346
        %9416 = vmatpush.bf16.msra.mxu0 %v9345
        %9417 = vmatpush.bf16.msra.mxu0 %v9344
        %9418 = vmatpush.bf16.msra.mxu0 %v9343
        %9419 = vmatpush.bf16.msra.mxu0 %v9342
        %9420 = vmatpush.bf16.msra.mxu0 %v9341
        %9421 = vmatpush.bf16.msra.mxu0 %v9340
        %9422 = vmatmul.bf16.gmra.mxu0 %v9129
        %v9423 = vpop.f32.mrf.mxu0
        %v9424 = vadd.f32 %v9411, %v9423
        %v9425 = vpop.f32.mrf.mxu0
        %9426 = vdwg.mxu0
        %9427 = vmatpush.bf16.msra.mxu0 %v9355
        %9428 = vmatpush.bf16.msra.mxu0 %v9354
        %9429 = vmatpush.bf16.msra.mxu0 %v9353
        %9430 = vmatpush.bf16.msra.mxu0 %v9352
        %9431 = vmatpush.bf16.msra.mxu0 %v9351
        %9432 = vmatpush.bf16.msra.mxu0 %v9350
        %9433 = vmatpush.bf16.msra.mxu0 %v9349
        %9434 = vmatpush.bf16.msra.mxu0 %v9348
        %9435 = vmatmul.bf16.gmra.mxu0 %v9130
        %v9436 = vpop.f32.mrf.mxu0
        %v9437 = vadd.f32 %v9424, %v9436
        %v9438 = vpop.f32.mrf.mxu0
        %9439 = vdwg.mxu0
        %9440 = vst [vmem:[%s1353] sm:$0x1] %v9437
        %s9441 = sand.u32 %s808, 1
        %s9442 = scalar_lea.sflag [#allocation4], %s9441
        %s9443 = sand.u32 %s808, 1
        %s9444 = scalar_lea.vmem [#allocation35], %s9443
        // Predicated region
        $region237: #{forward.1} parent=151 // pred_check
          %p9445 = pneg %p818
        $region238: #{forward.1} parent=151 // pred_check_branch
          %9447 = sbr.rel (%p9445) target = $region240
        $region239: #{forward.1} parent=151 // pred_region
          %9449 = vsyncadd %s9442, 0
          %s9450 = scalar_lea.hbm %s67, %s92
          %s9452 = sshll.u32 %s9444, 4
          %s9453 = int_to_ptr.vmem [resolvable:$true] %s9452
          %s9454 = sshll.u32 %s9450, 4
          %s9455 = int_to_ptr.hbm [resolvable:$true] %s9454
          %9457 = dma.vmem_to_hbm [thread:$0]  %s9453, 16, %s9455, %s9442
        $region240: #{forward.1} parent=151 // pred_fallthru
          _
      $region152: #{forward.1} parent=5 // pred_fallthru
        _
      %p9458 = scmp.le.s32.totalorder 2, %s87
      // Predicated region
      $region241: #{forward.1} parent=5 // pred_check
        %p9459 = pneg %p9458
      $region242: #{forward.1} parent=5 // pred_check_branch
        %9461 = sbr.rel (%p9459) target = $region244
      $region243: #{forward.1} parent=5 // pred_region
        %s9462 = ssub.s32 %s87, 2
        // Predicated region
        $region245: #{forward.1} parent=243 // pred_check
          %p9463 = pneg %p824
        $region246: #{forward.1} parent=243 // pred_check_branch
          %9465 = sbr.rel (%p9463) target = $region248
        $region247: #{forward.1} parent=243 // pred_region
          %s9466 = sand.u32 %s809, 1
          %s9467 = scalar_lea.sflag [#allocation4], %s9466
          %s9468 = sand.u32 %s809, 1
          %s9469 = scalar_lea.vmem [#allocation35], %s9468
          %9471 = dma.done %s9467, 16
        $region248: #{forward.1} parent=243 // pred_fallthru
          _
      $region244: #{forward.1} parent=5 // pred_fallthru
        _
    $region6: #{forward.1} parent=1 // loop_footer
      %s91 = sadd.s32 1, %s87
    $region7: #{forward.1} parent=1 // loop_footer_branch
      %86 = sbr.rel target = $region3
    $region8: #{forward.1} parent=1 // loop_exit
      _
    %9472 = vsyncpa [#allocation3], 1
    %s9473 = scalar_lea.sflag [#allocation3], 1
    %9474 = vsyncpa %s9473, 1
    %9475 = vsyncpa [#allocation6], 1
    %9476 = vsyncpa [#allocation9], 1
    %9477 = vsyncpa [#allocation12], 1
    %9478 = vsyncpa [#allocation15], 1
    %9479 = vsyncpa [#allocation18], 1
    %9480 = vsyncpa [#allocation21], 1
    %9481 = vsyncpa [#allocation24], 1
    %9482 = vsyncpa [#allocation27], 1
    %9483 = vsyncpa [#allocation30], 1
    %9484 = vsyncpa [#allocation33], 1
    %9485 = vsyncpa [#allocation4], 1
    %s9486 = scalar_lea.sflag [#allocation4], 1
    %9487 = vsyncpa %s9486, 1

</llo_original>
